<compile_context>
chip_gen: v5e
topology: v5e:2x2
jax: 0.10.0
libtpu: 0.0.40
codegen_flags: <defaults>
</compile_context>

<pallas_src>
import functools

import jax
import jax.numpy as jnp
from jax.experimental import pallas as pl
from jax.experimental.pallas import tpu as pltpu

# Sizes hard-coded inside LstmModel.__init__
STATE_EMBED = 512    # state_embed_sz
TARGET_EMBED = 512   # target_embed_sz
HIDDEN = 512         # navi_arch_out_sz (LSTMCell hidden size)

VMEM_LIMIT_BYTES = 32 * 1024 * 1024


def _round_up(x, m):
    return ((x + m - 1) // m) * m


def lstm_rollout_kernel(
    fc_ref, glove_ref, hx0_ref, cx0_ref,
    ws_ref, bs_ref, wt_ref, bt_ref,
    wg_ref, bg_ref, wh_ref, bh_ref,
    head_ref, hx_out_ref, cx_out_ref,
    h_sc, c_sc,
):
    f32 = jnp.float32
    bf16 = jnp.bfloat16
    step = pl.program_id(0)

    # Load the initial hidden state into the VMEM-carried recurrent state.
    @pl.when(step == 0)
    def _():
        h_sc[...] = hx0_ref[...]
        c_sc[...] = cx0_ref[...]

    # state / target embeddings + ReLU: bf16 x bf16 MXU matmuls, f32 accum.
    s = jnp.dot(fc_ref[0], ws_ref[...], preferred_element_type=f32) + bs_ref[...]
    s = jnp.maximum(s, 0.0)
    t = jnp.dot(glove_ref[0], wt_ref[...], preferred_element_type=f32) + bt_ref[...]
    t = jnp.maximum(t, 0.0)

    # Fused LSTMCell gate matmul: the PyTorch cat([s, t]) and the three matmuls
    # (x@W_ih, hx@W_hh) collapse into one [B,1536]@[1536,4H] bf16 matmul.
    x = jnp.concatenate(
        [s.astype(bf16), t.astype(bf16), h_sc[...].astype(bf16)], axis=1)
    gates = jnp.dot(x, wg_ref[...], preferred_element_type=f32) + bg_ref[...]

    # PyTorch gate ordering (i, f, g, o); elementwise kept in f32 (v5e-safe).
    i_g = jax.nn.sigmoid(gates[:, 0 * HIDDEN:1 * HIDDEN])
    f_g = jax.nn.sigmoid(gates[:, 1 * HIDDEN:2 * HIDDEN])
    g_g = jnp.tanh(gates[:, 2 * HIDDEN:3 * HIDDEN])
    o_g = jax.nn.sigmoid(gates[:, 3 * HIDDEN:4 * HIDDEN])

    c_new = f_g * c_sc[...] + i_g * g_g
    h_new = o_g * jnp.tanh(c_new)

    # Fused actor + critic head on ReLU(hx): one lane-dense (>=128) matmul.
    xr = jnp.maximum(h_new, 0.0).astype(bf16)
    head_ref[0] = jnp.dot(xr, wh_ref[...], preferred_element_type=f32) + bh_ref[...]
    hx_out_ref[0] = h_new
    cx_out_ref[0] = c_new

    # Carry the recurrent state to the next grid step.
    h_sc[...] = h_new
    c_sc[...] = c_new


def _const_spec(shape):
    nd = len(shape)
    return pl.BlockSpec(shape, lambda t, nd=nd: (0,) * nd)


def _step_spec(shape):
    # shape = (T, B, N); one (1, B, N) slab per grid step along the time axis.
    return pl.BlockSpec((1,) + tuple(shape[1:]), lambda t: (t, 0, 0))


def prepare_params(params, action_sz):
    """Convert PyTorch-layout f32 params into the kernel layout.

    - weights cast to bf16 (biases stay f32)
    - state_sz / target_sz contraction dims zero-padded to multiples of 128
    - [wih_state; wih_target; whh] fused into one [1536, 4H] gate weight
    - bih + bhh folded into one gate bias
    - actor + critic weights fused into one lane-padded [HIDDEN, >=128] matrix
    """
    bf16 = jnp.bfloat16
    state_sz = params["ws"].shape[0]
    target_sz = params["wt"].shape[0]
    sp = _round_up(state_sz, 128)
    tp = _round_up(target_sz, 128)
    head_n = _round_up(action_sz + 1, 128)

    ws = jnp.zeros((sp, STATE_EMBED), jnp.float32).at[:state_sz].set(params["ws"])
    wt = jnp.zeros((tp, TARGET_EMBED), jnp.float32).at[:target_sz].set(params["wt"])

    wg = jnp.concatenate([params["wih"], params["whh"]], axis=0)   # [1536, 4H]

    wh = jnp.zeros((HIDDEN, head_n), jnp.float32)
    wh = wh.at[:, :action_sz].set(params["wa"])
    wh = wh.at[:, action_sz:action_sz + 1].set(params["wc"])
    bh = jnp.zeros((1, head_n), jnp.float32)
    bh = bh.at[:, :action_sz].set(params["ba"])
    bh = bh.at[:, action_sz:action_sz + 1].set(params["bc"])

    return dict(
        ws=ws.astype(bf16), bs=params["bs"],
        wt=wt.astype(bf16), bt=params["bt"],
        wg=wg.astype(bf16), bg=params["bih"] + params["bhh"],
        wh=wh.astype(bf16), bh=bh,
    )


@functools.partial(jax.jit, static_argnames=("action_sz",))
def lstm_model_rollout(fc_seq, glove_seq, hidden, prep, *, action_sz):
    """Run T LSTM steps in ONE pallas_call (weights DMA'd once, grid=(T,))."""
    hx, cx = hidden
    T, B, state_sz = fc_seq.shape
    target_sz = glove_seq.shape[-1]

    Bp = _round_up(max(B, 8), 8)          # f32 sublane multiple
    sp = prep["ws"].shape[0]
    tp = prep["wt"].shape[0]
    head_n = prep["wh"].shape[1]

    bf16 = jnp.bfloat16
    fc = jnp.zeros((T, Bp, sp), bf16).at[:, :B, :state_sz].set(fc_seq.astype(bf16))
    glove = jnp.zeros((T, Bp, tp), bf16).at[:, :B, :target_sz].set(glove_seq.astype(bf16))
    hx_p = jnp.zeros((Bp, HIDDEN), jnp.float32).at[:B].set(hx)
    cx_p = jnp.zeros((Bp, HIDDEN), jnp.float32).at[:B].set(cx)

    args = (
        fc, glove, hx_p, cx_p,
        prep["ws"], prep["bs"], prep["wt"], prep["bt"],
        prep["wg"], prep["bg"], prep["wh"], prep["bh"],
    )
    in_specs = [_step_spec(fc.shape), _step_spec(glove.shape)] + [
        _const_spec(a.shape) for a in args[2:]
    ]

    out_shapes = (
        jax.ShapeDtypeStruct((T, Bp, head_n), jnp.float32),  # fused policy|value
        jax.ShapeDtypeStruct((T, Bp, HIDDEN), jnp.float32),  # hx per step
        jax.ShapeDtypeStruct((T, Bp, HIDDEN), jnp.float32),  # cx per step
    )
    out_specs = tuple(_step_spec(s.shape) for s in out_shapes)

    head, hx_seq, cx_seq = pl.pallas_call(
        lstm_rollout_kernel,
        out_shape=out_shapes,
        grid=(T,),
        in_specs=in_specs,
        out_specs=out_specs,
        scratch_shapes=[
            pltpu.VMEM((Bp, HIDDEN), jnp.float32),   # h carry
            pltpu.VMEM((Bp, HIDDEN), jnp.float32),   # c carry
        ],
        compiler_params=pltpu.CompilerParams(
            dimension_semantics=("arbitrary",),      # recurrence => sequential
            vmem_limit_bytes=VMEM_LIMIT_BYTES,
        ),
    )(*args)

    return dict(
        policy=head[:, :B, :action_sz],
        value=head[:, :B, action_sz:action_sz + 1],
        hx=hx_seq[:, :B],
        cx=cx_seq[:, :B],
    )


def lstm_model_forward(model_input, prep, *, action_sz):
    """Single-step forward with the exact semantics of LstmModel.forward."""
    out = lstm_model_rollout(
        model_input["fc"][None], model_input["glove"][None],
        model_input["hidden"], prep, action_sz=action_sz)
    return dict(
        policy=out["policy"][0],
        value=out["value"][0],
        hidden=(out["hx"][0], out["cx"][0]),
    )


def init_params(key, action_sz, state_sz, target_sz):
    """Deterministic synthetic parameters (PyTorch-like uniform init), f32,
    stored [in_features, out_features] so y = x @ W + b."""
    ks = jax.random.split(key, 12)

    def unif(k, shape, fan_in):
        bound = 1.0 / jnp.sqrt(jnp.float32(fan_in))
        return jax.random.uniform(k, shape, jnp.float32, -bound, bound)

    middle = STATE_EMBED + TARGET_EMBED  # 1024, LSTMCell input size
    return dict(
        ws=unif(ks[0], (state_sz, STATE_EMBED), state_sz),
        bs=unif(ks[1], (1, STATE_EMBED), state_sz),
        wt=unif(ks[2], (target_sz, TARGET_EMBED), target_sz),
        bt=unif(ks[3], (1, TARGET_EMBED), target_sz),
        wih=unif(ks[4], (middle, 4 * HIDDEN), HIDDEN),
        whh=unif(ks[5], (HIDDEN, 4 * HIDDEN), HIDDEN),
        bih=unif(ks[6], (1, 4 * HIDDEN), HIDDEN),
        bhh=unif(ks[7], (1, 4 * HIDDEN), HIDDEN),
        wa=unif(ks[8], (HIDDEN, action_sz), HIDDEN),
        ba=unif(ks[9], (1, action_sz), HIDDEN),
        wc=unif(ks[10], (HIDDEN, 1), HIDDEN),
        bc=unif(ks[11], (1, 1), HIDDEN),
    )


def reference_forward_bf16(model_input, prep, action_sz):
    """Pure-JAX single-step reference using the same bf16 weights / activation
    casts as the kernel (f32 accumulation everywhere)."""
    f32, bf16 = jnp.float32, jnp.bfloat16
    fc = model_input["fc"]
    glove = model_input["glove"]
    hx, cx = model_input["hidden"]
    sp = prep["ws"].shape[0]
    tp = prep["wt"].shape[0]
    fc = jnp.pad(fc.astype(bf16), ((0, 0), (0, sp - fc.shape[1])))
    glove = jnp.pad(glove.astype(bf16), ((0, 0), (0, tp - glove.shape[1])))
    s = jnp.maximum(jnp.dot(fc, prep["ws"], preferred_element_type=f32) + prep["bs"], 0.0)
    t = jnp.maximum(jnp.dot(glove, prep["wt"], preferred_element_type=f32) + prep["bt"], 0.0)
    x = jnp.concatenate([s.astype(bf16), t.astype(bf16), hx.astype(bf16)], axis=1)
    gates = jnp.dot(x, prep["wg"], preferred_element_type=f32) + prep["bg"]
    i, f, g, o = jnp.split(gates, 4, axis=1)
    i, f, o = jax.nn.sigmoid(i), jax.nn.sigmoid(f), jax.nn.sigmoid(o)
    g = jnp.tanh(g)
    c = f * cx + i * g
    h = o * jnp.tanh(c)
    xr = jnp.maximum(h, 0.0).astype(bf16)
    head = jnp.dot(xr, prep["wh"], preferred_element_type=f32) + prep["bh"]
    return dict(policy=head[:, :action_sz],
                value=head[:, action_sz:action_sz + 1],
                hidden=(h, c))


def reference_forward_original(model_input, params):
    """Pure-JAX reference mirroring the PyTorch forward with full-f32 weights
    (loose sanity check of the bf16 quantization)."""
    fc = model_input["fc"]
    glove = model_input["glove"]
    hx, cx = model_input["hidden"]
    s = jax.nn.relu(fc @ params["ws"] + params["bs"])
    t = jax.nn.relu(glove @ params["wt"] + params["bt"])
    x = jnp.concatenate([s, t], axis=1)
    gates = x @ params["wih"] + params["bih"] + hx @ params["whh"] + params["bhh"]
    i, f, g, o = jnp.split(gates, 4, axis=1)
    i, f, o = jax.nn.sigmoid(i), jax.nn.sigmoid(f), jax.nn.sigmoid(o)
    g = jnp.tanh(g)
    c = f * cx + i * g
    h = o * jnp.tanh(c)
    xr = jax.nn.relu(h)
    return dict(policy=xr @ params["wa"] + params["ba"],
                value=xr @ params["wc"] + params["bc"],
                hidden=(h, c))


def _assert_close(name, got, want, rtol, atol):
    if got.shape != want.shape:
        raise AssertionError(f"shape mismatch in {name}: {got.shape} vs {want.shape}")
    if not jnp.allclose(got, want, rtol=rtol, atol=atol):
        err = jnp.max(jnp.abs(got - want))
        raise AssertionError(f"mismatch in {name} (max abs err {err})")


if __name__ == "__main__":
    # Small, deterministic example consistent with the module's forward.
    B = 2
    action_sz = 8
    state_sz = 256    # constructor arg (default 2048), kept small
    target_sz = 300   # module default; exercises the 300 -> 384 lane padding

    key = jax.random.PRNGKey(0)
    (k_params, k_fc, k_glove, k_hx, k_cx,
     k_seq_fc, k_seq_gl) = jax.random.split(key, 7)

    params = init_params(k_params, action_sz, state_sz, target_sz)
    prep = prepare_params(params, action_sz)

    model_input = dict(
        fc=jax.random.normal(k_fc, (B, state_sz), jnp.float32),
        glove=jax.random.normal(k_glove, (B, target_sz), jnp.float32),
        hidden=(
            jax.random.normal(k_hx, (B, HIDDEN), jnp.float32),
            jax.random.normal(k_cx, (B, HIDDEN), jnp.float32),
        ),
    )

    # --- single step: exact LstmModel.forward semantics (T = 1) ---
    out = lstm_model_forward(model_input, prep, action_sz=action_sz)
    jax.block_until_ready(out)

    ref = reference_forward_bf16(model_input, prep, action_sz)
    _assert_close("policy", out["policy"], ref["policy"], 2e-2, 2e-2)
    _assert_close("value", out["value"], ref["value"], 2e-2, 2e-2)
    _assert_close("hx", out["hidden"][0], ref["hidden"][0], 2e-2, 2e-2)
    _assert_close("cx", out["hidden"][1], ref["hidden"][1], 2e-2, 2e-2)

    ref32 = reference_forward_original(model_input, params)
    _assert_close("policy(f32)", out["policy"], ref32["policy"], 5e-2, 5e-2)
    _assert_close("value(f32)", out["value"], ref32["value"], 5e-2, 5e-2)
    _assert_close("hx(f32)", out["hidden"][0], ref32["hidden"][0], 5e-2, 5e-2)
    _assert_close("cx(f32)", out["hidden"][1], ref32["hidden"][1], 5e-2, 5e-2)

    # --- multi-step rollout: time loop inside the kernel, weights DMA'd once ---
    T = 4
    fc_seq = jax.random.normal(k_seq_fc, (T, B, state_sz), jnp.float32)
    gl_seq = jax.random.normal(k_seq_gl, (T, B, target_sz), jnp.float32)
    roll = lstm_model_rollout(fc_seq, gl_seq, model_input["hidden"], prep,
                              action_sz=action_sz)
    jax.block_until_ready(roll)

    hx, cx = model_input["hidden"]
    for step in range(T):
        mi = dict(fc=fc_seq[step], glove=gl_seq[step], hidden=(hx, cx))
        r = reference_forward_bf16(mi, prep, action_sz)
        _assert_close(f"roll.policy[{step}]", roll["policy"][step], r["policy"], 2e-2, 2e-2)
        _assert_close(f"roll.value[{step}]", roll["value"][step], r["value"], 2e-2, 2e-2)
        _assert_close(f"roll.hx[{step}]", roll["hx"][step], r["hidden"][0], 2e-2, 2e-2)
        _assert_close(f"roll.cx[{step}]", roll["cx"][step], r["hidden"][1], 2e-2, 2e-2)
        hx, cx = r["hidden"]

    print("KERNEL_OK")
</pallas_src>

<mosaic_0001>
module attributes {stable_mosaic.version = 11 : i64} {
  func.func @lstm_rollout_kernel(%arg0: i32, %arg1: memref<1x8x256xbf16, #tpu.memory_space<vmem>>, %arg2: memref<1x8x384xbf16, #tpu.memory_space<vmem>>, %arg3: memref<8x512xf32, #tpu.memory_space<vmem>>, %arg4: memref<8x512xf32, #tpu.memory_space<vmem>>, %arg5: memref<256x512xbf16, #tpu.memory_space<vmem>>, %arg6: memref<1x512xf32, #tpu.memory_space<vmem>>, %arg7: memref<384x512xbf16, #tpu.memory_space<vmem>>, %arg8: memref<1x512xf32, #tpu.memory_space<vmem>>, %arg9: memref<1536x2048xbf16, #tpu.memory_space<vmem>>, %arg10: memref<1x2048xf32, #tpu.memory_space<vmem>>, %arg11: memref<512x128xbf16, #tpu.memory_space<vmem>>, %arg12: memref<1x128xf32, #tpu.memory_space<vmem>>, %arg13: memref<1x8x128xf32, #tpu.memory_space<vmem>>, %arg14: memref<1x8x512xf32, #tpu.memory_space<vmem>>, %arg15: memref<1x8x512xf32, #tpu.memory_space<vmem>>, %arg16: memref<8x512xf32, #tpu.memory_space<vmem>>, %arg17: memref<8x512xf32, #tpu.memory_space<vmem>>) attributes {dimension_semantics = [#tpu.dimension_semantics<arbitrary>], iteration_bounds = array<i64: 1>, scalar_prefetch = 0 : i64, scratch_operands = 2 : i64, tpu.core_type = #tpu.core_type<tc>, window_params = [{transform_indices = @transform_0, window_bounds = array<i64: 1, 8, 256>}, {transform_indices = @transform_1, window_bounds = array<i64: 1, 8, 384>}, {pipeline_mode = #tpu.pipeline_mode<synchronous>, transform_indices = @transform_2, window_bounds = array<i64: 8, 512>}, {pipeline_mode = #tpu.pipeline_mode<synchronous>, transform_indices = @transform_3, window_bounds = array<i64: 8, 512>}, {pipeline_mode = #tpu.pipeline_mode<synchronous>, transform_indices = @transform_4, window_bounds = array<i64: 256, 512>}, {pipeline_mode = #tpu.pipeline_mode<synchronous>, transform_indices = @transform_5, window_bounds = array<i64: 1, 512>}, {pipeline_mode = #tpu.pipeline_mode<synchronous>, transform_indices = @transform_6, window_bounds = array<i64: 384, 512>}, {pipeline_mode = #tpu.pipeline_mode<synchronous>, transform_indices = @transform_7, window_bounds = array<i64: 1, 512>}, {pipeline_mode = #tpu.pipeline_mode<synchronous>, transform_indices = @transform_8, window_bounds = array<i64: 1536, 2048>}, {pipeline_mode = #tpu.pipeline_mode<synchronous>, transform_indices = @transform_9, window_bounds = array<i64: 1, 2048>}, {pipeline_mode = #tpu.pipeline_mode<synchronous>, transform_indices = @transform_10, window_bounds = array<i64: 512, 128>}, {pipeline_mode = #tpu.pipeline_mode<synchronous>, transform_indices = @transform_11, window_bounds = array<i64: 1, 128>}, {transform_indices = @transform_12, window_bounds = array<i64: 1, 8, 128>}, {transform_indices = @transform_13, window_bounds = array<i64: 1, 8, 512>}, {transform_indices = @transform_14, window_bounds = array<i64: 1, 8, 512>}]} {
    %c0_i32 = arith.constant 0 : i32
    %0 = arith.cmpi eq, %arg0, %c0_i32 : i32
    %1 = arith.extui %0 : i1 to i32
    %c0_i32_0 = arith.constant 0 : i32
    %2 = arith.cmpi ne, %1, %c0_i32_0 : i32
    scf.if %2 {
      %c0_48 = arith.constant 0 : index
      %c0_49 = arith.constant 0 : index
      %76 = vector.load %arg3[%c0_48, %c0_49] : memref<8x512xf32, #tpu.memory_space<vmem>>, vector<8x512xf32>
      %c0_50 = arith.constant 0 : index
      %c0_51 = arith.constant 0 : index
      %77 = vector.load %arg16[%c0_50, %c0_51] : memref<8x512xf32, #tpu.memory_space<vmem>>, vector<8x512xf32>
      tpu.vector_store %arg16[%c0_50, %c0_51], %76 {strides = array<i32>} : memref<8x512xf32, #tpu.memory_space<vmem>>, vector<8x512xf32>,
      %c0_52 = arith.constant 0 : index
      %c0_53 = arith.constant 0 : index
      %78 = vector.load %arg4[%c0_52, %c0_53] : memref<8x512xf32, #tpu.memory_space<vmem>>, vector<8x512xf32>
      %c0_54 = arith.constant 0 : index
      %c0_55 = arith.constant 0 : index
      %79 = vector.load %arg17[%c0_54, %c0_55] : memref<8x512xf32, #tpu.memory_space<vmem>>, vector<8x512xf32>
      tpu.vector_store %arg17[%c0_54, %c0_55], %78 {strides = array<i32>} : memref<8x512xf32, #tpu.memory_space<vmem>>, vector<8x512xf32>,
    } else {
    }
    %c0 = arith.constant 0 : index
    %c0_1 = arith.constant 0 : index
    %c0_2 = arith.constant 0 : index
    %3 = vector.load %arg1[%c0, %c0_1, %c0_2] : memref<1x8x256xbf16, #tpu.memory_space<vmem>>, vector<1x8x256xbf16>
    %4 = vector.shape_cast %3 : vector<1x8x256xbf16> to vector<8x256xbf16>
    %c0_3 = arith.constant 0 : index
    %c0_4 = arith.constant 0 : index
    %5 = vector.load %arg5[%c0_3, %c0_4] : memref<256x512xbf16, #tpu.memory_space<vmem>>, vector<256x512xbf16>
    %cst = arith.constant dense<0.000000e+00> : vector<8x512xf32>
    %6 = tpu.matmul %4, %5, %cst {dimension_numbers = #tpu.dot_dimension_numbers<[1], [0], [0], [1], [0, 0, 1, 1], [], []>} : vector<8x256xbf16>, vector<256x512xbf16>, vector<8x512xf32> -> vector<8x512xf32>
    %c0_5 = arith.constant 0 : index
    %c0_6 = arith.constant 0 : index
    %7 = vector.load %arg6[%c0_5, %c0_6] : memref<1x512xf32, #tpu.memory_space<vmem>>, vector<1x512xf32>
    %8 = vector.broadcast %7 : vector<1x512xf32> to vector<8x512xf32>
    %9 = arith.addf %6, %8 : vector<8x512xf32>
    %cst_7 = arith.constant 0.000000e+00 : f32
    %10 = vector.broadcast %cst_7 : f32 to vector<8x512xf32>
    %11 = arith.maximumf %9, %10 : vector<8x512xf32>
    %c0_8 = arith.constant 0 : index
    %c0_9 = arith.constant 0 : index
    %c0_10 = arith.constant 0 : index
    %12 = vector.load %arg2[%c0_8, %c0_9, %c0_10] : memref<1x8x384xbf16, #tpu.memory_space<vmem>>, vector<1x8x384xbf16>
    %13 = vector.shape_cast %12 : vector<1x8x384xbf16> to vector<8x384xbf16>
    %c0_11 = arith.constant 0 : index
    %c0_12 = arith.constant 0 : index
    %14 = vector.load %arg7[%c0_11, %c0_12] : memref<384x512xbf16, #tpu.memory_space<vmem>>, vector<384x512xbf16>
    %cst_13 = arith.constant dense<0.000000e+00> : vector<8x512xf32>
    %15 = tpu.matmul %13, %14, %cst_13 {dimension_numbers = #tpu.dot_dimension_numbers<[1], [0], [0], [1], [0, 0, 1, 1], [], []>} : vector<8x384xbf16>, vector<384x512xbf16>, vector<8x512xf32> -> vector<8x512xf32>
    %c0_14 = arith.constant 0 : index
    %c0_15 = arith.constant 0 : index
    %16 = vector.load %arg8[%c0_14, %c0_15] : memref<1x512xf32, #tpu.memory_space<vmem>>, vector<1x512xf32>
    %17 = vector.broadcast %16 : vector<1x512xf32> to vector<8x512xf32>
    %18 = arith.addf %15, %17 : vector<8x512xf32>
    %cst_16 = arith.constant 0.000000e+00 : f32
    %19 = vector.broadcast %cst_16 : f32 to vector<8x512xf32>
    %20 = arith.maximumf %18, %19 : vector<8x512xf32>
    %21 = arith.truncf %11 : vector<8x512xf32> to vector<8x512xbf16>
    %22 = arith.truncf %20 : vector<8x512xf32> to vector<8x512xbf16>
    %c0_17 = arith.constant 0 : index
    %c0_18 = arith.constant 0 : index
    %23 = vector.load %arg16[%c0_17, %c0_18] : memref<8x512xf32, #tpu.memory_space<vmem>>, vector<8x512xf32>
    %24 = arith.truncf %23 : vector<8x512xf32> to vector<8x512xbf16>
    %25 = tpu.concatenate %21, %22, %24 in 1 : vector<8x512xbf16>, vector<8x512xbf16>, vector<8x512xbf16> -> vector<8x1536xbf16>
    %c0_19 = arith.constant 0 : index
    %c0_20 = arith.constant 0 : index
    %26 = vector.load %arg9[%c0_19, %c0_20] : memref<1536x2048xbf16, #tpu.memory_space<vmem>>, vector<1536x2048xbf16>
    %cst_21 = arith.constant dense<0.000000e+00> : vector<8x2048xf32>
    %27 = tpu.matmul %25, %26, %cst_21 {dimension_numbers = #tpu.dot_dimension_numbers<[1], [0], [0], [1], [0, 0, 1, 1], [], []>} : vector<8x1536xbf16>, vector<1536x2048xbf16>, vector<8x2048xf32> -> vector<8x2048xf32>
    %c0_22 = arith.constant 0 : index
    %c0_23 = arith.constant 0 : index
    %28 = vector.load %arg10[%c0_22, %c0_23] : memref<1x2048xf32, #tpu.memory_space<vmem>>, vector<1x2048xf32>
    %29 = vector.broadcast %28 : vector<1x2048xf32> to vector<8x2048xf32>
    %30 = arith.addf %27, %29 : vector<8x2048xf32>
    %31 = vector.extract_strided_slice %30 {offsets = [0, 0], sizes = [8, 512], strides = [1, 1]} : vector<8x2048xf32> to vector<8x512xf32>
    %32 = arith.negf %31 : vector<8x512xf32>
    %33 = math.exp %32 : vector<8x512xf32>
    %cst_24 = arith.constant 1.000000e+00 : f32
    %34 = vector.broadcast %cst_24 : f32 to vector<8x512xf32>
    %35 = arith.addf %34, %33 : vector<8x512xf32>
    %36 = arith.divf %34, %35 : vector<8x512xf32>
    %37 = vector.extract_strided_slice %30 {offsets = [0, 512], sizes = [8, 512], strides = [1, 1]} : vector<8x2048xf32> to vector<8x512xf32>
    %38 = arith.negf %37 : vector<8x512xf32>
    %39 = math.exp %38 : vector<8x512xf32>
    %cst_25 = arith.constant 1.000000e+00 : f32
    %40 = vector.broadcast %cst_25 : f32 to vector<8x512xf32>
    %41 = arith.addf %40, %39 : vector<8x512xf32>
    %42 = arith.divf %40, %41 : vector<8x512xf32>
    %43 = vector.extract_strided_slice %30 {offsets = [0, 1024], sizes = [8, 512], strides = [1, 1]} : vector<8x2048xf32> to vector<8x512xf32>
    %44 = math.tanh %43 : vector<8x512xf32>
    %45 = vector.extract_strided_slice %30 {offsets = [0, 1536], sizes = [8, 512], strides = [1, 1]} : vector<8x2048xf32> to vector<8x512xf32>
    %46 = arith.negf %45 : vector<8x512xf32>
    %47 = math.exp %46 : vector<8x512xf32>
    %cst_26 = arith.constant 1.000000e+00 : f32
    %48 = vector.broadcast %cst_26 : f32 to vector<8x512xf32>
    %49 = arith.addf %48, %47 : vector<8x512xf32>
    %50 = arith.divf %48, %49 : vector<8x512xf32>
    %c0_27 = arith.constant 0 : index
    %c0_28 = arith.constant 0 : index
    %51 = vector.load %arg17[%c0_27, %c0_28] : memref<8x512xf32, #tpu.memory_space<vmem>>, vector<8x512xf32>
    %52 = arith.mulf %42, %51 : vector<8x512xf32>
    %53 = arith.mulf %36, %44 : vector<8x512xf32>
    %54 = arith.addf %52, %53 : vector<8x512xf32>
    %55 = math.tanh %54 : vector<8x512xf32>
    %56 = arith.mulf %50, %55 : vector<8x512xf32>
    %cst_29 = arith.constant 0.000000e+00 : f32
    %57 = vector.broadcast %cst_29 : f32 to vector<8x512xf32>
    %58 = arith.maximumf %56, %57 : vector<8x512xf32>
    %59 = arith.truncf %58 : vector<8x512xf32> to vector<8x512xbf16>
    %c0_30 = arith.constant 0 : index
    %c0_31 = arith.constant 0 : index
    %60 = vector.load %arg11[%c0_30, %c0_31] : memref<512x128xbf16, #tpu.memory_space<vmem>>, vector<512x128xbf16>
    %cst_32 = arith.constant dense<0.000000e+00> : vector<8x128xf32>
    %61 = tpu.matmul %59, %60, %cst_32 {dimension_numbers = #tpu.dot_dimension_numbers<[1], [0], [0], [1], [0, 0, 1, 1], [], []>} : vector<8x512xbf16>, vector<512x128xbf16>, vector<8x128xf32> -> vector<8x128xf32>
    %c0_33 = arith.constant 0 : index
    %c0_34 = arith.constant 0 : index
    %62 = vector.load %arg12[%c0_33, %c0_34] : memref<1x128xf32, #tpu.memory_space<vmem>>, vector<1x128xf32>
    %63 = vector.broadcast %62 : vector<1x128xf32> to vector<8x128xf32>
    %64 = arith.addf %61, %63 : vector<8x128xf32>
    %c0_35 = arith.constant 0 : index
    %c0_36 = arith.constant 0 : index
    %c0_37 = arith.constant 0 : index
    %65 = vector.load %arg13[%c0_35, %c0_36, %c0_37] : memref<1x8x128xf32, #tpu.memory_space<vmem>>, vector<1x8x128xf32>
    %66 = vector.shape_cast %65 : vector<1x8x128xf32> to vector<8x128xf32>
    %67 = vector.shape_cast %64 : vector<8x128xf32> to vector<1x8x128xf32>
    tpu.vector_store %arg13[%c0_35, %c0_36, %c0_37], %67 {strides = array<i32>} : memref<1x8x128xf32, #tpu.memory_space<vmem>>, vector<1x8x128xf32>,
    %c0_38 = arith.constant 0 : index
    %c0_39 = arith.constant 0 : index
    %c0_40 = arith.constant 0 : index
    %68 = vector.load %arg14[%c0_38, %c0_39, %c0_40] : memref<1x8x512xf32, #tpu.memory_space<vmem>>, vector<1x8x512xf32>
    %69 = vector.shape_cast %68 : vector<1x8x512xf32> to vector<8x512xf32>
    %70 = vector.shape_cast %56 : vector<8x512xf32> to vector<1x8x512xf32>
    tpu.vector_store %arg14[%c0_38, %c0_39, %c0_40], %70 {strides = array<i32>} : memref<1x8x512xf32, #tpu.memory_space<vmem>>, vector<1x8x512xf32>,
    %c0_41 = arith.constant 0 : index
    %c0_42 = arith.constant 0 : index
    %c0_43 = arith.constant 0 : index
    %71 = vector.load %arg15[%c0_41, %c0_42, %c0_43] : memref<1x8x512xf32, #tpu.memory_space<vmem>>, vector<1x8x512xf32>
    %72 = vector.shape_cast %71 : vector<1x8x512xf32> to vector<8x512xf32>
    %73 = vector.shape_cast %54 : vector<8x512xf32> to vector<1x8x512xf32>
    tpu.vector_store %arg15[%c0_41, %c0_42, %c0_43], %73 {strides = array<i32>} : memref<1x8x512xf32, #tpu.memory_space<vmem>>, vector<1x8x512xf32>,
    %c0_44 = arith.constant 0 : index
    %c0_45 = arith.constant 0 : index
    %74 = vector.load %arg16[%c0_44, %c0_45] : memref<8x512xf32, #tpu.memory_space<vmem>>, vector<8x512xf32>
    tpu.vector_store %arg16[%c0_44, %c0_45], %56 {strides = array<i32>} : memref<8x512xf32, #tpu.memory_space<vmem>>, vector<8x512xf32>,
    %c0_46 = arith.constant 0 : index
    %c0_47 = arith.constant 0 : index
    %75 = vector.load %arg17[%c0_46, %c0_47] : memref<8x512xf32, #tpu.memory_space<vmem>>, vector<8x512xf32>
    tpu.vector_store %arg17[%c0_46, %c0_47], %54 {strides = array<i32>} : memref<8x512xf32, #tpu.memory_space<vmem>>, vector<8x512xf32>,
    return
  }
  func.func @transform_0(%arg0: i32) -> (i32, i32, i32) {
    %c0_i32 = arith.constant 0 : i32
    %c0_i32_0 = arith.constant 0 : i32
    %c0_i32_1 = arith.constant 0 : i32
    return %arg0, %c0_i32, %c0_i32_0 : i32, i32, i32
  }
  func.func @transform_1(%arg0: i32) -> (i32, i32, i32) {
    %c0_i32 = arith.constant 0 : i32
    %c0_i32_0 = arith.constant 0 : i32
    %c0_i32_1 = arith.constant 0 : i32
    return %arg0, %c0_i32, %c0_i32_0 : i32, i32, i32
  }
  func.func @transform_2(%arg0: i32) -> (i32, i32) {
    %c0_i32 = arith.constant 0 : i32
    %c0_i32_0 = arith.constant 0 : i32
    %c0_i32_1 = arith.constant 0 : i32
    return %c0_i32, %c0_i32_0 : i32, i32
  }
  func.func @transform_3(%arg0: i32) -> (i32, i32) {
    %c0_i32 = arith.constant 0 : i32
    %c0_i32_0 = arith.constant 0 : i32
    %c0_i32_1 = arith.constant 0 : i32
    return %c0_i32, %c0_i32_0 : i32, i32
  }
  func.func @transform_4(%arg0: i32) -> (i32, i32) {
    %c0_i32 = arith.constant 0 : i32
    %c0_i32_0 = arith.constant 0 : i32
    %c0_i32_1 = arith.constant 0 : i32
    return %c0_i32, %c0_i32_0 : i32, i32
  }
  func.func @transform_5(%arg0: i32) -> (i32, i32) {
    %c0_i32 = arith.constant 0 : i32
    %c0_i32_0 = arith.constant 0 : i32
    %c0_i32_1 = arith.constant 0 : i32
    return %c0_i32, %c0_i32_0 : i32, i32
  }
  func.func @transform_6(%arg0: i32) -> (i32, i32) {
    %c0_i32 = arith.constant 0 : i32
    %c0_i32_0 = arith.constant 0 : i32
    %c0_i32_1 = arith.constant 0 : i32
    return %c0_i32, %c0_i32_0 : i32, i32
  }
  func.func @transform_7(%arg0: i32) -> (i32, i32) {
    %c0_i32 = arith.constant 0 : i32
    %c0_i32_0 = arith.constant 0 : i32
    %c0_i32_1 = arith.constant 0 : i32
    return %c0_i32, %c0_i32_0 : i32, i32
  }
  func.func @transform_8(%arg0: i32) -> (i32, i32) {
    %c0_i32 = arith.constant 0 : i32
    %c0_i32_0 = arith.constant 0 : i32
    %c0_i32_1 = arith.constant 0 : i32
    return %c0_i32, %c0_i32_0 : i32, i32
  }
  func.func @transform_9(%arg0: i32) -> (i32, i32) {
    %c0_i32 = arith.constant 0 : i32
    %c0_i32_0 = arith.constant 0 : i32
    %c0_i32_1 = arith.constant 0 : i32
    return %c0_i32, %c0_i32_0 : i32, i32
  }
  func.func @transform_10(%arg0: i32) -> (i32, i32) {
    %c0_i32 = arith.constant 0 : i32
    %c0_i32_0 = arith.constant 0 : i32
    %c0_i32_1 = arith.constant 0 : i32
    return %c0_i32, %c0_i32_0 : i32, i32
  }
  func.func @transform_11(%arg0: i32) -> (i32, i32) {
    %c0_i32 = arith.constant 0 : i32
    %c0_i32_0 = arith.constant 0 : i32
    %c0_i32_1 = arith.constant 0 : i32
    return %c0_i32, %c0_i32_0 : i32, i32
  }
  func.func @transform_12(%arg0: i32) -> (i32, i32, i32) {
    %c0_i32 = arith.constant 0 : i32
    %c0_i32_0 = arith.constant 0 : i32
    %c0_i32_1 = arith.constant 0 : i32
    return %arg0, %c0_i32, %c0_i32_0 : i32, i32, i32
  }
  func.func @transform_13(%arg0: i32) -> (i32, i32, i32) {
    %c0_i32 = arith.constant 0 : i32
    %c0_i32_0 = arith.constant 0 : i32
    %c0_i32_1 = arith.constant 0 : i32
    return %arg0, %c0_i32, %c0_i32_0 : i32, i32, i32
  }
  func.func @transform_14(%arg0: i32) -> (i32, i32, i32) {
    %c0_i32 = arith.constant 0 : i32
    %c0_i32_0 = arith.constant 0 : i32
    %c0_i32_1 = arith.constant 0 : i32
    return %arg0, %c0_i32, %c0_i32_0 : i32, i32, i32
  }
}

</mosaic_0001>

<llo_original>
// kernel: lstm_model_rollout.1
$region0: #{lstm_model_rollout.1}
  #allocation0 [shape = 'u32[]', space=smem, size = 0x4, offset = 0x4, fixed_abs, tag = 'smem constant byte address 0x4 - core index']
  #allocation1 [shape = 'u32[72,128]{1,0:T(1,128)}', space=vmem, size = 0x9000, scoped, tag = 'internal scratch']
  #allocation2 [shape = 'f32[8,512]{1,0:T(8,128)}', space=vmem, size = 0x4000, scoped, tag = 'scratch operand']
  #allocation3 [shape = 'f32[8,512]{1,0:T(8,128)}', space=vmem, size = 0x4000, scoped, tag = 'scratch operand']
  %s0 = inlined_call_operand.vmem [shape: bf16[1,8,256], index: 0, kind: input, shape index: {}]
  %s1 = inlined_call_operand.vmem [shape: bf16[1,8,384], index: 1, kind: input, shape index: {}]
  %s2 = inlined_call_operand.vmem [shape: f32[8,512], index: 2, kind: input, shape index: {}]
  %s3 = inlined_call_operand.vmem [shape: f32[8,512], index: 3, kind: input, shape index: {}]
  %s4 = inlined_call_operand.hbm [shape: bf16[256,512], index: 4, kind: input, shape index: {}]
  %s5 = inlined_call_operand.hbm [shape: f32[1,512], index: 5, kind: input, shape index: {}]
  %s6 = inlined_call_operand.hbm [shape: bf16[384,512], index: 6, kind: input, shape index: {}]
  %s7 = inlined_call_operand.hbm [shape: f32[1,512], index: 7, kind: input, shape index: {}]
  %s8 = inlined_call_operand.hbm [shape: bf16[1536,2048], index: 8, kind: input, shape index: {}]
  %s9 = inlined_call_operand.hbm [shape: f32[1,2048], index: 9, kind: input, shape index: {}]
  %s10 = inlined_call_operand.hbm [shape: bf16[512,128], index: 10, kind: input, shape index: {}]
  %s11 = inlined_call_operand.hbm [shape: f32[1,128], index: 11, kind: input, shape index: {}]
  %s12 = inlined_call_operand.vmem [shape: f32[1,8,128], index: 12, kind: output, shape index: {0}]
  %s13 = inlined_call_operand.vmem [shape: f32[1,8,512], index: 13, kind: output, shape index: {1}]
  %s14 = inlined_call_operand.vmem [shape: f32[1,8,512], index: 14, kind: output, shape index: {2}]
  %15 = xla_tuple %s12, %s13, %s14
  %s16 = sld [smem:[#allocation0]]
  $region110: #{lstm_model_rollout.1} parent=0
    _
  %s18 = ssub.s32 1, %s16
  %s19 = scalar_select 0, %s18, %s16
  $region1: #{lstm_model_rollout.1} parent=0
    #allocation4 [shape = 'u8[262144]{0}', space=vmem, size = 0x40000, scoped, tag = 'input window, operand 4, single buffered']
    #allocation5 [shape = 's32[1]{0}', space=sflag, size = 0x4, scoped, tag = 'scoped memory for lstm_model_rollout.1']
    #allocation6 [shape = 'u8[2048]{0}', space=vmem, size = 0x800, scoped, tag = 'input window, operand 5, single buffered']
    #allocation7 [shape = 's32[1]{0}', space=sflag, size = 0x4, scoped, tag = 'scoped memory for lstm_model_rollout.1']
    #allocation8 [shape = 'u8[393216]{0}', space=vmem, size = 0x60000, scoped, tag = 'input window, operand 6, single buffered']
    #allocation9 [shape = 'u8[2048]{0}', space=vmem, size = 0x800, scoped, tag = 'input window, operand 7, single buffered']
    #allocation10 [shape = 's32[1]{0}', space=sflag, size = 0x4, scoped, tag = 'scoped memory for lstm_model_rollout.1']
    #allocation11 [shape = 'u8[6291456]{0}', space=vmem, size = 0x600000, scoped, tag = 'input window, operand 8, single buffered']
    #allocation12 [shape = 'u8[8192]{0}', space=vmem, size = 0x2000, scoped, tag = 'input window, operand 9, single buffered']
    #allocation13 [shape = 's32[1]{0}', space=sflag, size = 0x4, scoped, tag = 'scoped memory for lstm_model_rollout.1']
    #allocation14 [shape = 'u8[131072]{0}', space=vmem, size = 0x20000, scoped, tag = 'input window, operand 10, single buffered']
    #allocation15 [shape = 'u8[512]{0}', space=vmem, size = 0x400, scoped, tag = 'input window, operand 11, single buffered']
    #allocation16 [shape = 's32[1]{0}', space=sflag, size = 0x4, scoped, tag = 'scoped memory for lstm_model_rollout.1']
    %20 = vsyncpa [#allocation5], 0
    %21 = vsyncpa [#allocation7], 0
    %22 = vsyncpa [#allocation10], 0
    %23 = vsyncpa [#allocation13], 0
    %24 = vsyncpa [#allocation16], 0
    // Predicated region
    $region2: #{lstm_model_rollout.1} parent=1 // pred_check
      _
    $region3: #{lstm_model_rollout.1} parent=1 // pred_check_branch
      %26 = sbr.rel (0) target = $region5
    $region4: #{lstm_model_rollout.1} parent=1 // pred_region
      _
    $region5: #{lstm_model_rollout.1} parent=1 // pred_fallthru
      _
    // Predicated region
    $region6: #{lstm_model_rollout.1} parent=1 // pred_check
      _
    $region7: #{lstm_model_rollout.1} parent=1 // pred_check_branch
      %28 = sbr.rel (0) target = $region9
    $region8: #{lstm_model_rollout.1} parent=1 // pred_region
      _
    $region9: #{lstm_model_rollout.1} parent=1 // pred_fallthru
      _
    // Predicated region
    $region10: #{lstm_model_rollout.1} parent=1 // pred_check
      _
    $region11: #{lstm_model_rollout.1} parent=1 // pred_check_branch
      %30 = sbr.rel (0) target = $region13
    $region12: #{lstm_model_rollout.1} parent=1 // pred_region
      _
    $region13: #{lstm_model_rollout.1} parent=1 // pred_fallthru
      _
    // Predicated region
    $region14: #{lstm_model_rollout.1} parent=1 // pred_check
      _
    $region15: #{lstm_model_rollout.1} parent=1 // pred_check_branch
      %32 = sbr.rel (0) target = $region17
    $region16: #{lstm_model_rollout.1} parent=1 // pred_region
      _
    $region17: #{lstm_model_rollout.1} parent=1 // pred_fallthru
      _
    // Predicated region
    $region18: #{lstm_model_rollout.1} parent=1 // pred_check
      _
    $region19: #{lstm_model_rollout.1} parent=1 // pred_check_branch
      %34 = sbr.rel (0) target = $region21
    $region20: #{lstm_model_rollout.1} parent=1 // pred_region
      %36 = vsyncadd [#allocation5], 0
      %s37 = sshll.u32 %s4, 4
      %s38 = int_to_ptr.hbm [resolvable:$true] %s37
      %s39 = sshll.u32 [#allocation4], 4
      %s40 = int_to_ptr.vmem [resolvable:$true] %s39
      %45 = dma.hbm_to_vmem [thread:$0]  %s38, 8192, %s40, [#allocation5], 256, 256, 16
    $region21: #{lstm_model_rollout.1} parent=1 // pred_fallthru
      _
    // Predicated region
    $region22: #{lstm_model_rollout.1} parent=1 // pred_check
      _
    $region23: #{lstm_model_rollout.1} parent=1 // pred_check_branch
      %47 = sbr.rel (0) target = $region25
    $region24: #{lstm_model_rollout.1} parent=1 // pred_region
      %49 = vsyncadd [#allocation7], 0
      %s51 = sshll.u32 %s5, 4
      %s52 = int_to_ptr.hbm [resolvable:$true] %s51
      %s53 = sshll.u32 [#allocation6], 4
      %s54 = int_to_ptr.vmem [resolvable:$true] %s53
      %56 = dma.hbm_to_vmem [thread:$0]  %s52, 64, %s54, [#allocation7]
    $region25: #{lstm_model_rollout.1} parent=1 // pred_fallthru
      _
    // Predicated region
    $region26: #{lstm_model_rollout.1} parent=1 // pred_check
      _
    $region27: #{lstm_model_rollout.1} parent=1 // pred_check_branch
      %58 = sbr.rel (0) target = $region29
    $region28: #{lstm_model_rollout.1} parent=1 // pred_region
      %60 = vsyncadd [#allocation7], 0
      %s61 = sshll.u32 %s6, 4
      %s62 = int_to_ptr.hbm [resolvable:$true] %s61
      %s63 = sshll.u32 [#allocation8], 4
      %s64 = int_to_ptr.vmem [resolvable:$true] %s63
      %69 = dma.hbm_to_vmem [thread:$0]  %s62, 12288, %s64, [#allocation7], 256, 256, 16
    $region29: #{lstm_model_rollout.1} parent=1 // pred_fallthru
      _
    // Predicated region
    $region30: #{lstm_model_rollout.1} parent=1 // pred_check
      _
    $region31: #{lstm_model_rollout.1} parent=1 // pred_check_branch
      %71 = sbr.rel (0) target = $region33
    $region32: #{lstm_model_rollout.1} parent=1 // pred_region
      %73 = vsyncadd [#allocation10], 0
      %s75 = sshll.u32 %s7, 4
      %s76 = int_to_ptr.hbm [resolvable:$true] %s75
      %s77 = sshll.u32 [#allocation9], 4
      %s78 = int_to_ptr.vmem [resolvable:$true] %s77
      %80 = dma.hbm_to_vmem [thread:$0]  %s76, 64, %s78, [#allocation10]
    $region33: #{lstm_model_rollout.1} parent=1 // pred_fallthru
      _
    // Predicated region
    $region34: #{lstm_model_rollout.1} parent=1 // pred_check
      _
    $region35: #{lstm_model_rollout.1} parent=1 // pred_check_branch
      %82 = sbr.rel (0) target = $region37
    $region36: #{lstm_model_rollout.1} parent=1 // pred_region
      %84 = vsyncadd [#allocation10], 0
      %s85 = sshll.u32 %s8, 4
      %s86 = int_to_ptr.hbm [resolvable:$true] %s85
      %s87 = sshll.u32 [#allocation11], 4
      %s88 = int_to_ptr.vmem [resolvable:$true] %s87
      %93 = dma.hbm_to_vmem [thread:$0]  %s86, 196608, %s88, [#allocation10], 1024, 1024, 64
    $region37: #{lstm_model_rollout.1} parent=1 // pred_fallthru
      _
    // Predicated region
    $region38: #{lstm_model_rollout.1} parent=1 // pred_check
      _
    $region39: #{lstm_model_rollout.1} parent=1 // pred_check_branch
      %95 = sbr.rel (0) target = $region41
    $region40: #{lstm_model_rollout.1} parent=1 // pred_region
      %97 = vsyncadd [#allocation13], 0
      %s99 = sshll.u32 %s9, 4
      %s100 = int_to_ptr.hbm [resolvable:$true] %s99
      %s101 = sshll.u32 [#allocation12], 4
      %s102 = int_to_ptr.vmem [resolvable:$true] %s101
      %104 = dma.hbm_to_vmem [thread:$0]  %s100, 256, %s102, [#allocation13]
    $region41: #{lstm_model_rollout.1} parent=1 // pred_fallthru
      _
    // Predicated region
    $region42: #{lstm_model_rollout.1} parent=1 // pred_check
      _
    $region43: #{lstm_model_rollout.1} parent=1 // pred_check_branch
      %106 = sbr.rel (0) target = $region45
    $region44: #{lstm_model_rollout.1} parent=1 // pred_region
      %108 = vsyncadd [#allocation13], 0
      %s109 = sshll.u32 %s10, 4
      %s110 = int_to_ptr.hbm [resolvable:$true] %s109
      %s111 = sshll.u32 [#allocation14], 4
      %s112 = int_to_ptr.vmem [resolvable:$true] %s111
      %117 = dma.hbm_to_vmem [thread:$0]  %s110, 4096, %s112, [#allocation13], 64, 64, 4
    $region45: #{lstm_model_rollout.1} parent=1 // pred_fallthru
      _
    // Predicated region
    $region46: #{lstm_model_rollout.1} parent=1 // pred_check
      _
    $region47: #{lstm_model_rollout.1} parent=1 // pred_check_branch
      %119 = sbr.rel (0) target = $region49
    $region48: #{lstm_model_rollout.1} parent=1 // pred_region
      %121 = vsyncadd [#allocation16], 0
      %s123 = sshll.u32 %s11, 4
      %s124 = int_to_ptr.hbm [resolvable:$true] %s123
      %s125 = sshll.u32 [#allocation15], 4
      %s126 = int_to_ptr.vmem [resolvable:$true] %s125
      %128 = dma.hbm_to_vmem [thread:$0]  %s124, 16, %s126, [#allocation16]
    $region49: #{lstm_model_rollout.1} parent=1 // pred_fallthru
      _
    // Predicated region
    $region50: #{lstm_model_rollout.1} parent=1 // pred_check
      _
    $region51: #{lstm_model_rollout.1} parent=1 // pred_check_branch
      %130 = sbr.rel (0) target = $region53
    $region52: #{lstm_model_rollout.1} parent=1 // pred_region
      %132 = dma.done [#allocation5], 8192
    $region53: #{lstm_model_rollout.1} parent=1 // pred_fallthru
      _
    // Predicated region
    $region54: #{lstm_model_rollout.1} parent=1 // pred_check
      _
    $region55: #{lstm_model_rollout.1} parent=1 // pred_check_branch
      %134 = sbr.rel (0) target = $region57
    $region56: #{lstm_model_rollout.1} parent=1 // pred_region
      %136 = dma.done [#allocation7], 64
    $region57: #{lstm_model_rollout.1} parent=1 // pred_fallthru
      _
    // Predicated region
    $region58: #{lstm_model_rollout.1} parent=1 // pred_check
      _
    $region59: #{lstm_model_rollout.1} parent=1 // pred_check_branch
      %138 = sbr.rel (0) target = $region61
    $region60: #{lstm_model_rollout.1} parent=1 // pred_region
      %140 = dma.done [#allocation7], 12288
    $region61: #{lstm_model_rollout.1} parent=1 // pred_fallthru
      _
    // Predicated region
    $region62: #{lstm_model_rollout.1} parent=1 // pred_check
      _
    $region63: #{lstm_model_rollout.1} parent=1 // pred_check_branch
      %142 = sbr.rel (0) target = $region65
    $region64: #{lstm_model_rollout.1} parent=1 // pred_region
      %144 = dma.done [#allocation10], 64
    $region65: #{lstm_model_rollout.1} parent=1 // pred_fallthru
      _
    // Predicated region
    $region66: #{lstm_model_rollout.1} parent=1 // pred_check
      _
    $region67: #{lstm_model_rollout.1} parent=1 // pred_check_branch
      %146 = sbr.rel (0) target = $region69
    $region68: #{lstm_model_rollout.1} parent=1 // pred_region
      %148 = dma.done [#allocation10], 196608
    $region69: #{lstm_model_rollout.1} parent=1 // pred_fallthru
      _
    // Predicated region
    $region70: #{lstm_model_rollout.1} parent=1 // pred_check
      _
    $region71: #{lstm_model_rollout.1} parent=1 // pred_check_branch
      %150 = sbr.rel (0) target = $region73
    $region72: #{lstm_model_rollout.1} parent=1 // pred_region
      %152 = dma.done [#allocation13], 256
    $region73: #{lstm_model_rollout.1} parent=1 // pred_fallthru
      _
    // Predicated region
    $region74: #{lstm_model_rollout.1} parent=1 // pred_check
      _
    $region75: #{lstm_model_rollout.1} parent=1 // pred_check_branch
      %154 = sbr.rel (0) target = $region77
    $region76: #{lstm_model_rollout.1} parent=1 // pred_region
      %156 = dma.done [#allocation13], 4096
    $region77: #{lstm_model_rollout.1} parent=1 // pred_fallthru
      _
    // Predicated region
    $region78: #{lstm_model_rollout.1} parent=1 // pred_check
      _
    $region79: #{lstm_model_rollout.1} parent=1 // pred_check_branch
      %158 = sbr.rel (0) target = $region81
    $region80: #{lstm_model_rollout.1} parent=1 // pred_region
      %160 = dma.done [#allocation16], 16
    $region81: #{lstm_model_rollout.1} parent=1 // pred_fallthru
      _
    %p161 = scmp.eq.s32.totalorder 0, 0
    // Predicated region
    $region82: #{lstm_model_rollout.1} parent=1 // pred_check
      %p162 = pneg %p161
    $region83: #{lstm_model_rollout.1} parent=1 // pred_check_branch
      %164 = sbr.rel (%p162) target = $region85
    $region84: #{lstm_model_rollout.1} parent=1 // pred_region
      %v165 = vld [vmem:[%s2] sm:$0xff]
      %v166 = vld [vmem:[%s2 + $0x8] sm:$0xff]
      %v167 = vld [vmem:[%s2 + $0x10] sm:$0xff]
      %v168 = vld [vmem:[%s2 + $0x18] sm:$0xff]
      %169 = vst [vmem:[#allocation2] sm:$0xff] %v165
      %170 = vst [vmem:[#allocation2 + $0x8] sm:$0xff] %v166
      %171 = vst [vmem:[#allocation2 + $0x10] sm:$0xff] %v167
      %172 = vst [vmem:[#allocation2 + $0x18] sm:$0xff] %v168
      %v173 = vld [vmem:[%s3] sm:$0xff]
      %v174 = vld [vmem:[%s3 + $0x8] sm:$0xff]
      %v175 = vld [vmem:[%s3 + $0x10] sm:$0xff]
      %v176 = vld [vmem:[%s3 + $0x18] sm:$0xff]
      %177 = vst [vmem:[#allocation3] sm:$0xff] %v173
      %178 = vst [vmem:[#allocation3 + $0x8] sm:$0xff] %v174
      %179 = vst [vmem:[#allocation3 + $0x10] sm:$0xff] %v175
      %180 = vst [vmem:[#allocation3 + $0x18] sm:$0xff] %v176
    $region85: #{lstm_model_rollout.1} parent=1 // pred_fallthru
      _
    %v181 = vld [vmem:[%s0] sm:$0xff]
    %v182 = vld [vmem:[#allocation4] sm:$0xff]
    %v183 = vld [vmem:[#allocation4 + $0x8] sm:$0xff]
    %v184 = vld [vmem:[#allocation4 + $0x10] sm:$0xff]
    %v185 = vld [vmem:[#allocation4 + $0x18] sm:$0xff]
    %v186 = vld [vmem:[#allocation4 + $0x20] sm:$0xff]
    %v187 = vld [vmem:[#allocation4 + $0x28] sm:$0xff]
    %v188 = vld [vmem:[#allocation4 + $0x30] sm:$0xff]
    %v189 = vld [vmem:[#allocation4 + $0x38] sm:$0xff]
    %v190 = vld [vmem:[#allocation4 + $0x40] sm:$0xff]
    %v191 = vld [vmem:[#allocation4 + $0x48] sm:$0xff]
    %v192 = vld [vmem:[#allocation4 + $0x50] sm:$0xff]
    %v193 = vld [vmem:[#allocation4 + $0x58] sm:$0xff]
    %v194 = vld [vmem:[#allocation4 + $0x60] sm:$0xff]
    %v195 = vld [vmem:[#allocation4 + $0x68] sm:$0xff]
    %v196 = vld [vmem:[#allocation4 + $0x70] sm:$0xff]
    %v197 = vld [vmem:[#allocation4 + $0x78] sm:$0xff]
    %v198 = vld [vmem:[#allocation4 + $0x80] sm:$0xff]
    %v199 = vld [vmem:[#allocation4 + $0x88] sm:$0xff]
    %v200 = vld [vmem:[#allocation4 + $0x90] sm:$0xff]
    %v201 = vld [vmem:[#allocation4 + $0x98] sm:$0xff]
    %v202 = vld [vmem:[#allocation4 + $0xa0] sm:$0xff]
    %v203 = vld [vmem:[#allocation4 + $0xa8] sm:$0xff]
    %v204 = vld [vmem:[#allocation4 + $0xb0] sm:$0xff]
    %v205 = vld [vmem:[#allocation4 + $0xb8] sm:$0xff]
    %v206 = vld [vmem:[#allocation4 + $0xc0] sm:$0xff]
    %v207 = vld [vmem:[#allocation4 + $0xc8] sm:$0xff]
    %v208 = vld [vmem:[#allocation4 + $0xd0] sm:$0xff]
    %v209 = vld [vmem:[#allocation4 + $0xd8] sm:$0xff]
    %v210 = vld [vmem:[#allocation4 + $0xe0] sm:$0xff]
    %v211 = vld [vmem:[#allocation4 + $0xe8] sm:$0xff]
    %v212 = vld [vmem:[#allocation4 + $0xf0] sm:$0xff]
    %v213 = vld [vmem:[#allocation4 + $0xf8] sm:$0xff]
    %v214 = vld [vmem:[#allocation4 + $0x100] sm:$0xff]
    %v215 = vld [vmem:[#allocation4 + $0x108] sm:$0xff]
    %v216 = vld [vmem:[#allocation4 + $0x110] sm:$0xff]
    %v217 = vld [vmem:[#allocation4 + $0x118] sm:$0xff]
    %v218 = vld [vmem:[#allocation4 + $0x120] sm:$0xff]
    %v219 = vld [vmem:[#allocation4 + $0x128] sm:$0xff]
    %v220 = vld [vmem:[#allocation4 + $0x130] sm:$0xff]
    %v221 = vld [vmem:[#allocation4 + $0x138] sm:$0xff]
    %v222 = vld [vmem:[#allocation4 + $0x140] sm:$0xff]
    %v223 = vld [vmem:[#allocation4 + $0x148] sm:$0xff]
    %v224 = vld [vmem:[#allocation4 + $0x150] sm:$0xff]
    %v225 = vld [vmem:[#allocation4 + $0x158] sm:$0xff]
    %v226 = vld [vmem:[#allocation4 + $0x160] sm:$0xff]
    %v227 = vld [vmem:[#allocation4 + $0x168] sm:$0xff]
    %v228 = vld [vmem:[#allocation4 + $0x170] sm:$0xff]
    %v229 = vld [vmem:[#allocation4 + $0x178] sm:$0xff]
    %v230 = vld [vmem:[#allocation4 + $0x180] sm:$0xff]
    %v231 = vld [vmem:[#allocation4 + $0x188] sm:$0xff]
    %v232 = vld [vmem:[#allocation4 + $0x190] sm:$0xff]
    %v233 = vld [vmem:[#allocation4 + $0x198] sm:$0xff]
    %v234 = vld [vmem:[#allocation4 + $0x1a0] sm:$0xff]
    %v235 = vld [vmem:[#allocation4 + $0x1a8] sm:$0xff]
    %v236 = vld [vmem:[#allocation4 + $0x1b0] sm:$0xff]
    %v237 = vld [vmem:[#allocation4 + $0x1b8] sm:$0xff]
    %v238 = vld [vmem:[#allocation4 + $0x1c0] sm:$0xff]
    %v239 = vld [vmem:[#allocation4 + $0x1c8] sm:$0xff]
    %v240 = vld [vmem:[#allocation4 + $0x1d0] sm:$0xff]
    %v241 = vld [vmem:[#allocation4 + $0x1d8] sm:$0xff]
    %v242 = vld [vmem:[#allocation4 + $0x1e0] sm:$0xff]
    %v243 = vld [vmem:[#allocation4 + $0x1e8] sm:$0xff]
    %v244 = vld [vmem:[#allocation4 + $0x1f0] sm:$0xff]
    %v245 = vld [vmem:[#allocation4 + $0x1f8] sm:$0xff]
    %v246 = vld [vmem:[#allocation6] sm:$0xf]
    %v248 = vperm.slane %v246, 0
    %v249 = vperm.slane %v246, 1
    %v250 = vperm.slane %v246, 2
    %v251 = vperm.slane %v246, 3
    %v257 = vunpack.c.l.b16 %v181
    %v258 = vunpack.c.h.b16 %v181
    %v259 = vpack.c.b16 %v257, %v257
    %v260 = vpack.c.b16 %v258, %v258
    %v327 = vunpack.c.l.b16 %v182
    %v328 = vunpack.c.h.b16 %v182
    %v329 = vunpack.c.l.b16 %v183
    %v330 = vunpack.c.h.b16 %v183
    %v331 = vunpack.c.l.b16 %v184
    %v332 = vunpack.c.h.b16 %v184
    %v333 = vunpack.c.l.b16 %v185
    %v334 = vunpack.c.h.b16 %v185
    %v335 = vunpack.c.l.b16 %v186
    %v336 = vunpack.c.h.b16 %v186
    %v337 = vunpack.c.l.b16 %v187
    %v338 = vunpack.c.h.b16 %v187
    %v339 = vunpack.c.l.b16 %v188
    %v340 = vunpack.c.h.b16 %v188
    %v341 = vunpack.c.l.b16 %v189
    %v342 = vunpack.c.h.b16 %v189
    %v343 = vunpack.c.l.b16 %v190
    %v344 = vunpack.c.h.b16 %v190
    %v345 = vunpack.c.l.b16 %v191
    %v346 = vunpack.c.h.b16 %v191
    %v347 = vunpack.c.l.b16 %v192
    %v348 = vunpack.c.h.b16 %v192
    %v349 = vunpack.c.l.b16 %v193
    %v350 = vunpack.c.h.b16 %v193
    %v351 = vunpack.c.l.b16 %v194
    %v352 = vunpack.c.h.b16 %v194
    %v353 = vunpack.c.l.b16 %v195
    %v354 = vunpack.c.h.b16 %v195
    %v355 = vunpack.c.l.b16 %v196
    %v356 = vunpack.c.h.b16 %v196
    %v357 = vunpack.c.l.b16 %v197
    %v358 = vunpack.c.h.b16 %v197
    %v359 = vunpack.c.l.b16 %v198
    %v360 = vunpack.c.h.b16 %v198
    %v361 = vunpack.c.l.b16 %v199
    %v362 = vunpack.c.h.b16 %v199
    %v363 = vunpack.c.l.b16 %v200
    %v364 = vunpack.c.h.b16 %v200
    %v365 = vunpack.c.l.b16 %v201
    %v366 = vunpack.c.h.b16 %v201
    %v367 = vunpack.c.l.b16 %v202
    %v368 = vunpack.c.h.b16 %v202
    %v369 = vunpack.c.l.b16 %v203
    %v370 = vunpack.c.h.b16 %v203
    %v371 = vunpack.c.l.b16 %v204
    %v372 = vunpack.c.h.b16 %v204
    %v373 = vunpack.c.l.b16 %v205
    %v374 = vunpack.c.h.b16 %v205
    %v375 = vunpack.c.l.b16 %v206
    %v376 = vunpack.c.h.b16 %v206
    %v377 = vunpack.c.l.b16 %v207
    %v378 = vunpack.c.h.b16 %v207
    %v379 = vunpack.c.l.b16 %v208
    %v380 = vunpack.c.h.b16 %v208
    %v381 = vunpack.c.l.b16 %v209
    %v382 = vunpack.c.h.b16 %v209
    %v383 = vunpack.c.l.b16 %v210
    %v384 = vunpack.c.h.b16 %v210
    %v385 = vunpack.c.l.b16 %v211
    %v386 = vunpack.c.h.b16 %v211
    %v387 = vunpack.c.l.b16 %v212
    %v388 = vunpack.c.h.b16 %v212
    %v389 = vunpack.c.l.b16 %v213
    %v390 = vunpack.c.h.b16 %v213
    %v391 = vunpack.c.l.b16 %v214
    %v392 = vunpack.c.h.b16 %v214
    %v393 = vunpack.c.l.b16 %v215
    %v394 = vunpack.c.h.b16 %v215
    %v395 = vunpack.c.l.b16 %v216
    %v396 = vunpack.c.h.b16 %v216
    %v397 = vunpack.c.l.b16 %v217
    %v398 = vunpack.c.h.b16 %v217
    %v399 = vunpack.c.l.b16 %v218
    %v400 = vunpack.c.h.b16 %v218
    %v401 = vunpack.c.l.b16 %v219
    %v402 = vunpack.c.h.b16 %v219
    %v403 = vunpack.c.l.b16 %v220
    %v404 = vunpack.c.h.b16 %v220
    %v405 = vunpack.c.l.b16 %v221
    %v406 = vunpack.c.h.b16 %v221
    %v407 = vunpack.c.l.b16 %v222
    %v408 = vunpack.c.h.b16 %v222
    %v409 = vunpack.c.l.b16 %v223
    %v410 = vunpack.c.h.b16 %v223
    %v411 = vunpack.c.l.b16 %v224
    %v412 = vunpack.c.h.b16 %v224
    %v413 = vunpack.c.l.b16 %v225
    %v414 = vunpack.c.h.b16 %v225
    %v415 = vunpack.c.l.b16 %v226
    %v416 = vunpack.c.h.b16 %v226
    %v417 = vunpack.c.l.b16 %v227
    %v418 = vunpack.c.h.b16 %v227
    %v419 = vunpack.c.l.b16 %v228
    %v420 = vunpack.c.h.b16 %v228
    %v421 = vunpack.c.l.b16 %v229
    %v422 = vunpack.c.h.b16 %v229
    %v423 = vunpack.c.l.b16 %v230
    %v424 = vunpack.c.h.b16 %v230
    %v425 = vunpack.c.l.b16 %v231
    %v426 = vunpack.c.h.b16 %v231
    %v427 = vunpack.c.l.b16 %v232
    %v428 = vunpack.c.h.b16 %v232
    %v429 = vunpack.c.l.b16 %v233
    %v430 = vunpack.c.h.b16 %v233
    %v431 = vunpack.c.l.b16 %v234
    %v432 = vunpack.c.h.b16 %v234
    %v433 = vunpack.c.l.b16 %v235
    %v434 = vunpack.c.h.b16 %v235
    %v435 = vunpack.c.l.b16 %v236
    %v436 = vunpack.c.h.b16 %v236
    %v437 = vunpack.c.l.b16 %v237
    %v438 = vunpack.c.h.b16 %v237
    %v439 = vunpack.c.l.b16 %v238
    %v440 = vunpack.c.h.b16 %v238
    %v441 = vunpack.c.l.b16 %v239
    %v442 = vunpack.c.h.b16 %v239
    %v443 = vunpack.c.l.b16 %v240
    %v444 = vunpack.c.h.b16 %v240
    %v445 = vunpack.c.l.b16 %v241
    %v446 = vunpack.c.h.b16 %v241
    %v447 = vunpack.c.l.b16 %v242
    %v448 = vunpack.c.h.b16 %v242
    %v449 = vunpack.c.l.b16 %v243
    %v450 = vunpack.c.h.b16 %v243
    %v451 = vunpack.c.l.b16 %v244
    %v452 = vunpack.c.h.b16 %v244
    %v453 = vunpack.c.l.b16 %v245
    %v454 = vunpack.c.h.b16 %v245
    %v455 = vpack.c.b16 %v331, %v327
    %v456 = vpack.c.b16 %v332, %v328
    %v457 = vpack.c.b16 %v333, %v329
    %v458 = vpack.c.b16 %v334, %v330
    %v459 = vpack.c.b16 %v339, %v335
    %v460 = vpack.c.b16 %v340, %v336
    %v461 = vpack.c.b16 %v341, %v337
    %v462 = vpack.c.b16 %v342, %v338
    %v463 = vpack.c.b16 %v347, %v343
    %v464 = vpack.c.b16 %v348, %v344
    %v465 = vpack.c.b16 %v349, %v345
    %v466 = vpack.c.b16 %v350, %v346
    %v467 = vpack.c.b16 %v355, %v351
    %v468 = vpack.c.b16 %v356, %v352
    %v469 = vpack.c.b16 %v357, %v353
    %v470 = vpack.c.b16 %v358, %v354
    %v471 = vpack.c.b16 %v363, %v359
    %v472 = vpack.c.b16 %v364, %v360
    %v473 = vpack.c.b16 %v365, %v361
    %v474 = vpack.c.b16 %v366, %v362
    %v475 = vpack.c.b16 %v371, %v367
    %v476 = vpack.c.b16 %v372, %v368
    %v477 = vpack.c.b16 %v373, %v369
    %v478 = vpack.c.b16 %v374, %v370
    %v479 = vpack.c.b16 %v379, %v375
    %v480 = vpack.c.b16 %v380, %v376
    %v481 = vpack.c.b16 %v381, %v377
    %v482 = vpack.c.b16 %v382, %v378
    %v483 = vpack.c.b16 %v387, %v383
    %v484 = vpack.c.b16 %v388, %v384
    %v485 = vpack.c.b16 %v389, %v385
    %v486 = vpack.c.b16 %v390, %v386
    %v487 = vpack.c.b16 %v395, %v391
    %v488 = vpack.c.b16 %v396, %v392
    %v489 = vpack.c.b16 %v397, %v393
    %v490 = vpack.c.b16 %v398, %v394
    %v491 = vpack.c.b16 %v403, %v399
    %v492 = vpack.c.b16 %v404, %v400
    %v493 = vpack.c.b16 %v405, %v401
    %v494 = vpack.c.b16 %v406, %v402
    %v495 = vpack.c.b16 %v411, %v407
    %v496 = vpack.c.b16 %v412, %v408
    %v497 = vpack.c.b16 %v413, %v409
    %v498 = vpack.c.b16 %v414, %v410
    %v499 = vpack.c.b16 %v419, %v415
    %v500 = vpack.c.b16 %v420, %v416
    %v501 = vpack.c.b16 %v421, %v417
    %v502 = vpack.c.b16 %v422, %v418
    %v503 = vpack.c.b16 %v427, %v423
    %v504 = vpack.c.b16 %v428, %v424
    %v505 = vpack.c.b16 %v429, %v425
    %v506 = vpack.c.b16 %v430, %v426
    %v507 = vpack.c.b16 %v435, %v431
    %v508 = vpack.c.b16 %v436, %v432
    %v509 = vpack.c.b16 %v437, %v433
    %v510 = vpack.c.b16 %v438, %v434
    %v511 = vpack.c.b16 %v443, %v439
    %v512 = vpack.c.b16 %v444, %v440
    %v513 = vpack.c.b16 %v445, %v441
    %v514 = vpack.c.b16 %v446, %v442
    %v515 = vpack.c.b16 %v451, %v447
    %v516 = vpack.c.b16 %v452, %v448
    %v517 = vpack.c.b16 %v453, %v449
    %v518 = vpack.c.b16 %v454, %v450
    %583 = vmatpush.bf16.msra.mxu0 %v483
    %584 = vmatpush.bf16.msra.mxu0 %v479
    %585 = vmatpush.bf16.msra.mxu0 %v475
    %586 = vmatpush.bf16.msra.mxu0 %v471
    %587 = vmatpush.bf16.msra.mxu0 %v467
    %588 = vmatpush.bf16.msra.mxu0 %v463
    %589 = vmatpush.bf16.msra.mxu0 %v459
    %590 = vmatpush.bf16.msra.mxu0 %v455
    %591 = vmatmul.bf16.gmra.mxu0 %v259
    %v592 = vpop.f32.mrf.mxu0
    %v593 = vadd.f32 %v248, %v592
    %v594 = vpop.f32.mrf.mxu0
    %595 = vdwg.mxu0
    %596 = vmatpush.bf16.msra.mxu0 %v515
    %597 = vmatpush.bf16.msra.mxu0 %v511
    %598 = vmatpush.bf16.msra.mxu0 %v507
    %599 = vmatpush.bf16.msra.mxu0 %v503
    %600 = vmatpush.bf16.msra.mxu0 %v499
    %601 = vmatpush.bf16.msra.mxu0 %v495
    %602 = vmatpush.bf16.msra.mxu0 %v491
    %603 = vmatpush.bf16.msra.mxu0 %v487
    %604 = vmatmul.bf16.gmra.mxu0 %v260
    %v605 = vpop.f32.mrf.mxu0
    %v606 = vadd.f32 %v593, %v605
    %v607 = vpop.f32.mrf.mxu0
    %608 = vdwg.mxu0
    %609 = vmatpush.bf16.msra.mxu0 %v484
    %610 = vmatpush.bf16.msra.mxu0 %v480
    %611 = vmatpush.bf16.msra.mxu0 %v476
    %612 = vmatpush.bf16.msra.mxu0 %v472
    %613 = vmatpush.bf16.msra.mxu0 %v468
    %614 = vmatpush.bf16.msra.mxu0 %v464
    %615 = vmatpush.bf16.msra.mxu0 %v460
    %616 = vmatpush.bf16.msra.mxu0 %v456
    %617 = vmatmul.bf16.gmra.mxu0 %v259
    %v618 = vpop.f32.mrf.mxu0
    %v619 = vadd.f32 %v249, %v618
    %v620 = vpop.f32.mrf.mxu0
    %621 = vdwg.mxu0
    %622 = vmatpush.bf16.msra.mxu0 %v516
    %623 = vmatpush.bf16.msra.mxu0 %v512
    %624 = vmatpush.bf16.msra.mxu0 %v508
    %625 = vmatpush.bf16.msra.mxu0 %v504
    %626 = vmatpush.bf16.msra.mxu0 %v500
    %627 = vmatpush.bf16.msra.mxu0 %v496
    %628 = vmatpush.bf16.msra.mxu0 %v492
    %629 = vmatpush.bf16.msra.mxu0 %v488
    %630 = vmatmul.bf16.gmra.mxu0 %v260
    %v631 = vpop.f32.mrf.mxu0
    %v632 = vadd.f32 %v619, %v631
    %v633 = vpop.f32.mrf.mxu0
    %634 = vdwg.mxu0
    %635 = vmatpush.bf16.msra.mxu0 %v485
    %636 = vmatpush.bf16.msra.mxu0 %v481
    %637 = vmatpush.bf16.msra.mxu0 %v477
    %638 = vmatpush.bf16.msra.mxu0 %v473
    %639 = vmatpush.bf16.msra.mxu0 %v469
    %640 = vmatpush.bf16.msra.mxu0 %v465
    %641 = vmatpush.bf16.msra.mxu0 %v461
    %642 = vmatpush.bf16.msra.mxu0 %v457
    %643 = vmatmul.bf16.gmra.mxu0 %v259
    %v644 = vpop.f32.mrf.mxu0
    %v645 = vadd.f32 %v250, %v644
    %v646 = vpop.f32.mrf.mxu0
    %647 = vdwg.mxu0
    %648 = vmatpush.bf16.msra.mxu0 %v517
    %649 = vmatpush.bf16.msra.mxu0 %v513
    %650 = vmatpush.bf16.msra.mxu0 %v509
    %651 = vmatpush.bf16.msra.mxu0 %v505
    %652 = vmatpush.bf16.msra.mxu0 %v501
    %653 = vmatpush.bf16.msra.mxu0 %v497
    %654 = vmatpush.bf16.msra.mxu0 %v493
    %655 = vmatpush.bf16.msra.mxu0 %v489
    %656 = vmatmul.bf16.gmra.mxu0 %v260
    %v657 = vpop.f32.mrf.mxu0
    %v658 = vadd.f32 %v645, %v657
    %v659 = vpop.f32.mrf.mxu0
    %660 = vdwg.mxu0
    %661 = vmatpush.bf16.msra.mxu0 %v486
    %662 = vmatpush.bf16.msra.mxu0 %v482
    %663 = vmatpush.bf16.msra.mxu0 %v478
    %664 = vmatpush.bf16.msra.mxu0 %v474
    %665 = vmatpush.bf16.msra.mxu0 %v470
    %666 = vmatpush.bf16.msra.mxu0 %v466
    %667 = vmatpush.bf16.msra.mxu0 %v462
    %668 = vmatpush.bf16.msra.mxu0 %v458
    %669 = vmatmul.bf16.gmra.mxu0 %v259
    %v670 = vpop.f32.mrf.mxu0
    %v671 = vadd.f32 %v251, %v670
    %v672 = vpop.f32.mrf.mxu0
    %673 = vdwg.mxu0
    %674 = vmatpush.bf16.msra.mxu0 %v518
    %675 = vmatpush.bf16.msra.mxu0 %v514
    %676 = vmatpush.bf16.msra.mxu0 %v510
    %677 = vmatpush.bf16.msra.mxu0 %v506
    %678 = vmatpush.bf16.msra.mxu0 %v502
    %679 = vmatpush.bf16.msra.mxu0 %v498
    %680 = vmatpush.bf16.msra.mxu0 %v494
    %681 = vmatpush.bf16.msra.mxu0 %v490
    %682 = vmatmul.bf16.gmra.mxu0 %v260
    %v683 = vpop.f32.mrf.mxu0
    %v684 = vadd.f32 %v671, %v683
    %v685 = vpop.f32.mrf.mxu0
    %686 = vdwg.mxu0
    %v687 = vmax.f32 %v606, 0.0
    %v688 = vmax.f32 %v632, 0.0
    %v689 = vmax.f32 %v658, 0.0
    %v690 = vmax.f32 %v684, 0.0
    %v691 = vld [vmem:[%s1] sm:$0xff]
    %v692 = vld [vmem:[%s1 + $0x8] sm:$0xf]
    %v693 = vld [vmem:[#allocation8] sm:$0xff]
    %v694 = vld [vmem:[#allocation8 + $0x8] sm:$0xff]
    %v695 = vld [vmem:[#allocation8 + $0x10] sm:$0xff]
    %v696 = vld [vmem:[#allocation8 + $0x18] sm:$0xff]
    %v697 = vld [vmem:[#allocation8 + $0x20] sm:$0xff]
    %v698 = vld [vmem:[#allocation8 + $0x28] sm:$0xff]
    %v699 = vld [vmem:[#allocation8 + $0x30] sm:$0xff]
    %v700 = vld [vmem:[#allocation8 + $0x38] sm:$0xff]
    %v701 = vld [vmem:[#allocation8 + $0x40] sm:$0xff]
    %v702 = vld [vmem:[#allocation8 + $0x48] sm:$0xff]
    %v703 = vld [vmem:[#allocation8 + $0x50] sm:$0xff]
    %v704 = vld [vmem:[#allocation8 + $0x58] sm:$0xff]
    %v705 = vld [vmem:[#allocation8 + $0x60] sm:$0xff]
    %v706 = vld [vmem:[#allocation8 + $0x68] sm:$0xff]
    %v707 = vld [vmem:[#allocation8 + $0x70] sm:$0xff]
    %v708 = vld [vmem:[#allocation8 + $0x78] sm:$0xff]
    %v709 = vld [vmem:[#allocation8 + $0x80] sm:$0xff]
    %v710 = vld [vmem:[#allocation8 + $0x88] sm:$0xff]
    %v711 = vld [vmem:[#allocation8 + $0x90] sm:$0xff]
    %v712 = vld [vmem:[#allocation8 + $0x98] sm:$0xff]
    %v713 = vld [vmem:[#allocation8 + $0xa0] sm:$0xff]
    %v714 = vld [vmem:[#allocation8 + $0xa8] sm:$0xff]
    %v715 = vld [vmem:[#allocation8 + $0xb0] sm:$0xff]
    %v716 = vld [vmem:[#allocation8 + $0xb8] sm:$0xff]
    %v717 = vld [vmem:[#allocation8 + $0xc0] sm:$0xff]
    %v718 = vld [vmem:[#allocation8 + $0xc8] sm:$0xff]
    %v719 = vld [vmem:[#allocation8 + $0xd0] sm:$0xff]
    %v720 = vld [vmem:[#allocation8 + $0xd8] sm:$0xff]
    %v721 = vld [vmem:[#allocation8 + $0xe0] sm:$0xff]
    %v722 = vld [vmem:[#allocation8 + $0xe8] sm:$0xff]
    %v723 = vld [vmem:[#allocation8 + $0xf0] sm:$0xff]
    %v724 = vld [vmem:[#allocation8 + $0xf8] sm:$0xff]
    %v725 = vld [vmem:[#allocation8 + $0x100] sm:$0xff]
    %v726 = vld [vmem:[#allocation8 + $0x108] sm:$0xff]
    %v727 = vld [vmem:[#allocation8 + $0x110] sm:$0xff]
    %v728 = vld [vmem:[#allocation8 + $0x118] sm:$0xff]
    %v729 = vld [vmem:[#allocation8 + $0x120] sm:$0xff]
    %v730 = vld [vmem:[#allocation8 + $0x128] sm:$0xff]
    %v731 = vld [vmem:[#allocation8 + $0x130] sm:$0xff]
    %v732 = vld [vmem:[#allocation8 + $0x138] sm:$0xff]
    %v733 = vld [vmem:[#allocation8 + $0x140] sm:$0xff]
    %v734 = vld [vmem:[#allocation8 + $0x148] sm:$0xff]
    %v735 = vld [vmem:[#allocation8 + $0x150] sm:$0xff]
    %v736 = vld [vmem:[#allocation8 + $0x158] sm:$0xff]
    %v737 = vld [vmem:[#allocation8 + $0x160] sm:$0xff]
    %v738 = vld [vmem:[#allocation8 + $0x168] sm:$0xff]
    %v739 = vld [vmem:[#allocation8 + $0x170] sm:$0xff]
    %v740 = vld [vmem:[#allocation8 + $0x178] sm:$0xff]
    %v741 = vld [vmem:[#allocation8 + $0x180] sm:$0xff]
    %v742 = vld [vmem:[#allocation8 + $0x188] sm:$0xff]
    %v743 = vld [vmem:[#allocation8 + $0x190] sm:$0xff]
    %v744 = vld [vmem:[#allocation8 + $0x198] sm:$0xff]
    %v745 = vld [vmem:[#allocation8 + $0x1a0] sm:$0xff]
    %v746 = vld [vmem:[#allocation8 + $0x1a8] sm:$0xff]
    %v747 = vld [vmem:[#allocation8 + $0x1b0] sm:$0xff]
    %v748 = vld [vmem:[#allocation8 + $0x1b8] sm:$0xff]
    %v749 = vld [vmem:[#allocation8 + $0x1c0] sm:$0xff]
    %v750 = vld [vmem:[#allocation8 + $0x1c8] sm:$0xff]
    %v751 = vld [vmem:[#allocation8 + $0x1d0] sm:$0xff]
    %v752 = vld [vmem:[#allocation8 + $0x1d8] sm:$0xff]
    %v753 = vld [vmem:[#allocation8 + $0x1e0] sm:$0xff]
    %v754 = vld [vmem:[#allocation8 + $0x1e8] sm:$0xff]
    %v755 = vld [vmem:[#allocation8 + $0x1f0] sm:$0xff]
    %v756 = vld [vmem:[#allocation8 + $0x1f8] sm:$0xff]
    %v757 = vld [vmem:[#allocation8 + $0x200] sm:$0xff]
    %v758 = vld [vmem:[#allocation8 + $0x208] sm:$0xff]
    %v759 = vld [vmem:[#allocation8 + $0x210] sm:$0xff]
    %v760 = vld [vmem:[#allocation8 + $0x218] sm:$0xff]
    %v761 = vld [vmem:[#allocation8 + $0x220] sm:$0xff]
    %v762 = vld [vmem:[#allocation8 + $0x228] sm:$0xff]
    %v763 = vld [vmem:[#allocation8 + $0x230] sm:$0xff]
    %v764 = vld [vmem:[#allocation8 + $0x238] sm:$0xff]
    %v765 = vld [vmem:[#allocation8 + $0x240] sm:$0xff]
    %v766 = vld [vmem:[#allocation8 + $0x248] sm:$0xff]
    %v767 = vld [vmem:[#allocation8 + $0x250] sm:$0xff]
    %v768 = vld [vmem:[#allocation8 + $0x258] sm:$0xff]
    %v769 = vld [vmem:[#allocation8 + $0x260] sm:$0xff]
    %v770 = vld [vmem:[#allocation8 + $0x268] sm:$0xff]
    %v771 = vld [vmem:[#allocation8 + $0x270] sm:$0xff]
    %v772 = vld [vmem:[#allocation8 + $0x278] sm:$0xff]
    %v773 = vld [vmem:[#allocation8 + $0x280] sm:$0xff]
    %v774 = vld [vmem:[#allocation8 + $0x288] sm:$0xff]
    %v775 = vld [vmem:[#allocation8 + $0x290] sm:$0xff]
    %v776 = vld [vmem:[#allocation8 + $0x298] sm:$0xff]
    %v777 = vld [vmem:[#allocation8 + $0x2a0] sm:$0xff]
    %v778 = vld [vmem:[#allocation8 + $0x2a8] sm:$0xff]
    %v779 = vld [vmem:[#allocation8 + $0x2b0] sm:$0xff]
    %v780 = vld [vmem:[#allocation8 + $0x2b8] sm:$0xff]
    %v781 = vld [vmem:[#allocation8 + $0x2c0] sm:$0xff]
    %v782 = vld [vmem:[#allocation8 + $0x2c8] sm:$0xff]
    %v783 = vld [vmem:[#allocation8 + $0x2d0] sm:$0xff]
    %v784 = vld [vmem:[#allocation8 + $0x2d8] sm:$0xff]
    %v785 = vld [vmem:[#allocation8 + $0x2e0] sm:$0xff]
    %v786 = vld [vmem:[#allocation8 + $0x2e8] sm:$0xff]
    %v787 = vld [vmem:[#allocation8 + $0x2f0] sm:$0xff]
    %v788 = vld [vmem:[#allocation8 + $0x2f8] sm:$0xff]
    %v789 = vld [vmem:[#allocation9] sm:$0xf]
    %v791 = vperm.slane %v789, 0
    %v792 = vperm.slane %v789, 1
    %v793 = vperm.slane %v789, 2
    %v794 = vperm.slane %v789, 3
    %v801 = vunpack.c.l.b16 %v691
    %v802 = vunpack.c.h.b16 %v691
    %v803 = vunpack.c.l.b16 %v692
    %v804 = vpack.c.b16 %v801, %v801
    %v805 = vpack.c.b16 %v802, %v802
    %v806 = vpack.c.b16 %v803, %v803
    %v906 = vunpack.c.l.b16 %v693
    %v907 = vunpack.c.h.b16 %v693
    %v908 = vunpack.c.l.b16 %v694
    %v909 = vunpack.c.h.b16 %v694
    %v910 = vunpack.c.l.b16 %v695
    %v911 = vunpack.c.h.b16 %v695
    %v912 = vunpack.c.l.b16 %v696
    %v913 = vunpack.c.h.b16 %v696
    %v914 = vunpack.c.l.b16 %v697
    %v915 = vunpack.c.h.b16 %v697
    %v916 = vunpack.c.l.b16 %v698
    %v917 = vunpack.c.h.b16 %v698
    %v918 = vunpack.c.l.b16 %v699
    %v919 = vunpack.c.h.b16 %v699
    %v920 = vunpack.c.l.b16 %v700
    %v921 = vunpack.c.h.b16 %v700
    %v922 = vunpack.c.l.b16 %v701
    %v923 = vunpack.c.h.b16 %v701
    %v924 = vunpack.c.l.b16 %v702
    %v925 = vunpack.c.h.b16 %v702
    %v926 = vunpack.c.l.b16 %v703
    %v927 = vunpack.c.h.b16 %v703
    %v928 = vunpack.c.l.b16 %v704
    %v929 = vunpack.c.h.b16 %v704
    %v930 = vunpack.c.l.b16 %v705
    %v931 = vunpack.c.h.b16 %v705
    %v932 = vunpack.c.l.b16 %v706
    %v933 = vunpack.c.h.b16 %v706
    %v934 = vunpack.c.l.b16 %v707
    %v935 = vunpack.c.h.b16 %v707
    %v936 = vunpack.c.l.b16 %v708
    %v937 = vunpack.c.h.b16 %v708
    %v938 = vunpack.c.l.b16 %v709
    %v939 = vunpack.c.h.b16 %v709
    %v940 = vunpack.c.l.b16 %v710
    %v941 = vunpack.c.h.b16 %v710
    %v942 = vunpack.c.l.b16 %v711
    %v943 = vunpack.c.h.b16 %v711
    %v944 = vunpack.c.l.b16 %v712
    %v945 = vunpack.c.h.b16 %v712
    %v946 = vunpack.c.l.b16 %v713
    %v947 = vunpack.c.h.b16 %v713
    %v948 = vunpack.c.l.b16 %v714
    %v949 = vunpack.c.h.b16 %v714
    %v950 = vunpack.c.l.b16 %v715
    %v951 = vunpack.c.h.b16 %v715
    %v952 = vunpack.c.l.b16 %v716
    %v953 = vunpack.c.h.b16 %v716
    %v954 = vunpack.c.l.b16 %v717
    %v955 = vunpack.c.h.b16 %v717
    %v956 = vunpack.c.l.b16 %v718
    %v957 = vunpack.c.h.b16 %v718
    %v958 = vunpack.c.l.b16 %v719
    %v959 = vunpack.c.h.b16 %v719
    %v960 = vunpack.c.l.b16 %v720
    %v961 = vunpack.c.h.b16 %v720
    %v962 = vunpack.c.l.b16 %v721
    %v963 = vunpack.c.h.b16 %v721
    %v964 = vunpack.c.l.b16 %v722
    %v965 = vunpack.c.h.b16 %v722
    %v966 = vunpack.c.l.b16 %v723
    %v967 = vunpack.c.h.b16 %v723
    %v968 = vunpack.c.l.b16 %v724
    %v969 = vunpack.c.h.b16 %v724
    %v970 = vunpack.c.l.b16 %v725
    %v971 = vunpack.c.h.b16 %v725
    %v972 = vunpack.c.l.b16 %v726
    %v973 = vunpack.c.h.b16 %v726
    %v974 = vunpack.c.l.b16 %v727
    %v975 = vunpack.c.h.b16 %v727
    %v976 = vunpack.c.l.b16 %v728
    %v977 = vunpack.c.h.b16 %v728
    %v978 = vunpack.c.l.b16 %v729
    %v979 = vunpack.c.h.b16 %v729
    %v980 = vunpack.c.l.b16 %v730
    %v981 = vunpack.c.h.b16 %v730
    %v982 = vunpack.c.l.b16 %v731
    %v983 = vunpack.c.h.b16 %v731
    %v984 = vunpack.c.l.b16 %v732
    %v985 = vunpack.c.h.b16 %v732
    %v986 = vunpack.c.l.b16 %v733
    %v987 = vunpack.c.h.b16 %v733
    %v988 = vunpack.c.l.b16 %v734
    %v989 = vunpack.c.h.b16 %v734
    %v990 = vunpack.c.l.b16 %v735
    %v991 = vunpack.c.h.b16 %v735
    %v992 = vunpack.c.l.b16 %v736
    %v993 = vunpack.c.h.b16 %v736
    %v994 = vunpack.c.l.b16 %v737
    %v995 = vunpack.c.h.b16 %v737
    %v996 = vunpack.c.l.b16 %v738
    %v997 = vunpack.c.h.b16 %v738
    %v998 = vunpack.c.l.b16 %v739
    %v999 = vunpack.c.h.b16 %v739
    %v1000 = vunpack.c.l.b16 %v740
    %v1001 = vunpack.c.h.b16 %v740
    %v1002 = vunpack.c.l.b16 %v741
    %v1003 = vunpack.c.h.b16 %v741
    %v1004 = vunpack.c.l.b16 %v742
    %v1005 = vunpack.c.h.b16 %v742
    %v1006 = vunpack.c.l.b16 %v743
    %v1007 = vunpack.c.h.b16 %v743
    %v1008 = vunpack.c.l.b16 %v744
    %v1009 = vunpack.c.h.b16 %v744
    %v1010 = vunpack.c.l.b16 %v745
    %v1011 = vunpack.c.h.b16 %v745
    %v1012 = vunpack.c.l.b16 %v746
    %v1013 = vunpack.c.h.b16 %v746
    %v1014 = vunpack.c.l.b16 %v747
    %v1015 = vunpack.c.h.b16 %v747
    %v1016 = vunpack.c.l.b16 %v748
    %v1017 = vunpack.c.h.b16 %v748
    %v1018 = vunpack.c.l.b16 %v749
    %v1019 = vunpack.c.h.b16 %v749
    %v1020 = vunpack.c.l.b16 %v750
    %v1021 = vunpack.c.h.b16 %v750
    %v1022 = vunpack.c.l.b16 %v751
    %v1023 = vunpack.c.h.b16 %v751
    %v1024 = vunpack.c.l.b16 %v752
    %v1025 = vunpack.c.h.b16 %v752
    %v1026 = vunpack.c.l.b16 %v753
    %v1027 = vunpack.c.h.b16 %v753
    %v1028 = vunpack.c.l.b16 %v754
    %v1029 = vunpack.c.h.b16 %v754
    %v1030 = vunpack.c.l.b16 %v755
    %v1031 = vunpack.c.h.b16 %v755
    %v1032 = vunpack.c.l.b16 %v756
    %v1033 = vunpack.c.h.b16 %v756
    %v1034 = vunpack.c.l.b16 %v757
    %v1035 = vunpack.c.h.b16 %v757
    %v1036 = vunpack.c.l.b16 %v758
    %v1037 = vunpack.c.h.b16 %v758
    %v1038 = vunpack.c.l.b16 %v759
    %v1039 = vunpack.c.h.b16 %v759
    %v1040 = vunpack.c.l.b16 %v760
    %v1041 = vunpack.c.h.b16 %v760
    %v1042 = vunpack.c.l.b16 %v761
    %v1043 = vunpack.c.h.b16 %v761
    %v1044 = vunpack.c.l.b16 %v762
    %v1045 = vunpack.c.h.b16 %v762
    %v1046 = vunpack.c.l.b16 %v763
    %v1047 = vunpack.c.h.b16 %v763
    %v1048 = vunpack.c.l.b16 %v764
    %v1049 = vunpack.c.h.b16 %v764
    %v1050 = vunpack.c.l.b16 %v765
    %v1051 = vunpack.c.h.b16 %v765
    %v1052 = vunpack.c.l.b16 %v766
    %v1053 = vunpack.c.h.b16 %v766
    %v1054 = vunpack.c.l.b16 %v767
    %v1055 = vunpack.c.h.b16 %v767
    %v1056 = vunpack.c.l.b16 %v768
    %v1057 = vunpack.c.h.b16 %v768
    %v1058 = vunpack.c.l.b16 %v769
    %v1059 = vunpack.c.h.b16 %v769
    %v1060 = vunpack.c.l.b16 %v770
    %v1061 = vunpack.c.h.b16 %v770
    %v1062 = vunpack.c.l.b16 %v771
    %v1063 = vunpack.c.h.b16 %v771
    %v1064 = vunpack.c.l.b16 %v772
    %v1065 = vunpack.c.h.b16 %v772
    %v1066 = vunpack.c.l.b16 %v773
    %v1067 = vunpack.c.h.b16 %v773
    %v1068 = vunpack.c.l.b16 %v774
    %v1069 = vunpack.c.h.b16 %v774
    %v1070 = vunpack.c.l.b16 %v775
    %v1071 = vunpack.c.h.b16 %v775
    %v1072 = vunpack.c.l.b16 %v776
    %v1073 = vunpack.c.h.b16 %v776
    %v1074 = vunpack.c.l.b16 %v777
    %v1075 = vunpack.c.h.b16 %v777
    %v1076 = vunpack.c.l.b16 %v778
    %v1077 = vunpack.c.h.b16 %v778
    %v1078 = vunpack.c.l.b16 %v779
    %v1079 = vunpack.c.h.b16 %v779
    %v1080 = vunpack.c.l.b16 %v780
    %v1081 = vunpack.c.h.b16 %v780
    %v1082 = vunpack.c.l.b16 %v781
    %v1083 = vunpack.c.h.b16 %v781
    %v1084 = vunpack.c.l.b16 %v782
    %v1085 = vunpack.c.h.b16 %v782
    %v1086 = vunpack.c.l.b16 %v783
    %v1087 = vunpack.c.h.b16 %v783
    %v1088 = vunpack.c.l.b16 %v784
    %v1089 = vunpack.c.h.b16 %v784
    %v1090 = vunpack.c.l.b16 %v785
    %v1091 = vunpack.c.h.b16 %v785
    %v1092 = vunpack.c.l.b16 %v786
    %v1093 = vunpack.c.h.b16 %v786
    %v1094 = vunpack.c.l.b16 %v787
    %v1095 = vunpack.c.h.b16 %v787
    %v1096 = vunpack.c.l.b16 %v788
    %v1097 = vunpack.c.h.b16 %v788
    %v1098 = vpack.c.b16 %v910, %v906
    %v1099 = vpack.c.b16 %v911, %v907
    %v1100 = vpack.c.b16 %v912, %v908
    %v1101 = vpack.c.b16 %v913, %v909
    %v1102 = vpack.c.b16 %v918, %v914
    %v1103 = vpack.c.b16 %v919, %v915
    %v1104 = vpack.c.b16 %v920, %v916
    %v1105 = vpack.c.b16 %v921, %v917
    %v1106 = vpack.c.b16 %v926, %v922
    %v1107 = vpack.c.b16 %v927, %v923
    %v1108 = vpack.c.b16 %v928, %v924
    %v1109 = vpack.c.b16 %v929, %v925
    %v1110 = vpack.c.b16 %v934, %v930
    %v1111 = vpack.c.b16 %v935, %v931
    %v1112 = vpack.c.b16 %v936, %v932
    %v1113 = vpack.c.b16 %v937, %v933
    %v1114 = vpack.c.b16 %v942, %v938
    %v1115 = vpack.c.b16 %v943, %v939
    %v1116 = vpack.c.b16 %v944, %v940
    %v1117 = vpack.c.b16 %v945, %v941
    %v1118 = vpack.c.b16 %v950, %v946
    %v1119 = vpack.c.b16 %v951, %v947
    %v1120 = vpack.c.b16 %v952, %v948
    %v1121 = vpack.c.b16 %v953, %v949
    %v1122 = vpack.c.b16 %v958, %v954
    %v1123 = vpack.c.b16 %v959, %v955
    %v1124 = vpack.c.b16 %v960, %v956
    %v1125 = vpack.c.b16 %v961, %v957
    %v1126 = vpack.c.b16 %v966, %v962
    %v1127 = vpack.c.b16 %v967, %v963
    %v1128 = vpack.c.b16 %v968, %v964
    %v1129 = vpack.c.b16 %v969, %v965
    %v1130 = vpack.c.b16 %v974, %v970
    %v1131 = vpack.c.b16 %v975, %v971
    %v1132 = vpack.c.b16 %v976, %v972
    %v1133 = vpack.c.b16 %v977, %v973
    %v1134 = vpack.c.b16 %v982, %v978
    %v1135 = vpack.c.b16 %v983, %v979
    %v1136 = vpack.c.b16 %v984, %v980
    %v1137 = vpack.c.b16 %v985, %v981
    %v1138 = vpack.c.b16 %v990, %v986
    %v1139 = vpack.c.b16 %v991, %v987
    %v1140 = vpack.c.b16 %v992, %v988
    %v1141 = vpack.c.b16 %v993, %v989
    %v1142 = vpack.c.b16 %v998, %v994
    %v1143 = vpack.c.b16 %v999, %v995
    %v1144 = vpack.c.b16 %v1000, %v996
    %v1145 = vpack.c.b16 %v1001, %v997
    %v1146 = vpack.c.b16 %v1006, %v1002
    %v1147 = vpack.c.b16 %v1007, %v1003
    %v1148 = vpack.c.b16 %v1008, %v1004
    %v1149 = vpack.c.b16 %v1009, %v1005
    %v1150 = vpack.c.b16 %v1014, %v1010
    %v1151 = vpack.c.b16 %v1015, %v1011
    %v1152 = vpack.c.b16 %v1016, %v1012
    %v1153 = vpack.c.b16 %v1017, %v1013
    %v1154 = vpack.c.b16 %v1022, %v1018
    %v1155 = vpack.c.b16 %v1023, %v1019
    %v1156 = vpack.c.b16 %v1024, %v1020
    %v1157 = vpack.c.b16 %v1025, %v1021
    %v1158 = vpack.c.b16 %v1030, %v1026
    %v1159 = vpack.c.b16 %v1031, %v1027
    %v1160 = vpack.c.b16 %v1032, %v1028
    %v1161 = vpack.c.b16 %v1033, %v1029
    %v1162 = vpack.c.b16 %v1038, %v1034
    %v1163 = vpack.c.b16 %v1039, %v1035
    %v1164 = vpack.c.b16 %v1040, %v1036
    %v1165 = vpack.c.b16 %v1041, %v1037
    %v1166 = vpack.c.b16 %v1046, %v1042
    %v1167 = vpack.c.b16 %v1047, %v1043
    %v1168 = vpack.c.b16 %v1048, %v1044
    %v1169 = vpack.c.b16 %v1049, %v1045
    %v1170 = vpack.c.b16 %v1054, %v1050
    %v1171 = vpack.c.b16 %v1055, %v1051
    %v1172 = vpack.c.b16 %v1056, %v1052
    %v1173 = vpack.c.b16 %v1057, %v1053
    %v1174 = vpack.c.b16 %v1062, %v1058
    %v1175 = vpack.c.b16 %v1063, %v1059
    %v1176 = vpack.c.b16 %v1064, %v1060
    %v1177 = vpack.c.b16 %v1065, %v1061
    %v1178 = vpack.c.b16 %v1070, %v1066
    %v1179 = vpack.c.b16 %v1071, %v1067
    %v1180 = vpack.c.b16 %v1072, %v1068
    %v1181 = vpack.c.b16 %v1073, %v1069
    %v1182 = vpack.c.b16 %v1078, %v1074
    %v1183 = vpack.c.b16 %v1079, %v1075
    %v1184 = vpack.c.b16 %v1080, %v1076
    %v1185 = vpack.c.b16 %v1081, %v1077
    %v1186 = vpack.c.b16 %v1086, %v1082
    %v1187 = vpack.c.b16 %v1087, %v1083
    %v1188 = vpack.c.b16 %v1088, %v1084
    %v1189 = vpack.c.b16 %v1089, %v1085
    %v1190 = vpack.c.b16 %v1094, %v1090
    %v1191 = vpack.c.b16 %v1095, %v1091
    %v1192 = vpack.c.b16 %v1096, %v1092
    %v1193 = vpack.c.b16 %v1097, %v1093
    %1290 = vmatpush.bf16.msra.mxu0 %v1126
    %1291 = vmatpush.bf16.msra.mxu0 %v1122
    %1292 = vmatpush.bf16.msra.mxu0 %v1118
    %1293 = vmatpush.bf16.msra.mxu0 %v1114
    %1294 = vmatpush.bf16.msra.mxu0 %v1110
    %1295 = vmatpush.bf16.msra.mxu0 %v1106
    %1296 = vmatpush.bf16.msra.mxu0 %v1102
    %1297 = vmatpush.bf16.msra.mxu0 %v1098
    %1298 = vmatmul.bf16.gmra.mxu0 %v804
    %v1299 = vpop.f32.mrf.mxu0
    %v1300 = vadd.f32 %v791, %v1299
    %v1301 = vpop.f32.mrf.mxu0
    %1302 = vdwg.mxu0
    %1303 = vmatpush.bf16.msra.mxu0 %v1158
    %1304 = vmatpush.bf16.msra.mxu0 %v1154
    %1305 = vmatpush.bf16.msra.mxu0 %v1150
    %1306 = vmatpush.bf16.msra.mxu0 %v1146
    %1307 = vmatpush.bf16.msra.mxu0 %v1142
    %1308 = vmatpush.bf16.msra.mxu0 %v1138
    %1309 = vmatpush.bf16.msra.mxu0 %v1134
    %1310 = vmatpush.bf16.msra.mxu0 %v1130
    %1311 = vmatmul.bf16.gmra.mxu0 %v805
    %v1312 = vpop.f32.mrf.mxu0
    %v1313 = vadd.f32 %v1300, %v1312
    %v1314 = vpop.f32.mrf.mxu0
    %1315 = vdwg.mxu0
    %1316 = vmatpush.bf16.msra.mxu0 %v1190
    %1317 = vmatpush.bf16.msra.mxu0 %v1186
    %1318 = vmatpush.bf16.msra.mxu0 %v1182
    %1319 = vmatpush.bf16.msra.mxu0 %v1178
    %1320 = vmatpush.bf16.msra.mxu0 %v1174
    %1321 = vmatpush.bf16.msra.mxu0 %v1170
    %1322 = vmatpush.bf16.msra.mxu0 %v1166
    %1323 = vmatpush.bf16.msra.mxu0 %v1162
    %1324 = vmatmul.bf16.gmra.mxu0 %v806
    %v1325 = vpop.f32.mrf.mxu0
    %v1326 = vadd.f32 %v1313, %v1325
    %v1327 = vpop.f32.mrf.mxu0
    %1328 = vdwg.mxu0
    %1329 = vmatpush.bf16.msra.mxu0 %v1127
    %1330 = vmatpush.bf16.msra.mxu0 %v1123
    %1331 = vmatpush.bf16.msra.mxu0 %v1119
    %1332 = vmatpush.bf16.msra.mxu0 %v1115
    %1333 = vmatpush.bf16.msra.mxu0 %v1111
    %1334 = vmatpush.bf16.msra.mxu0 %v1107
    %1335 = vmatpush.bf16.msra.mxu0 %v1103
    %1336 = vmatpush.bf16.msra.mxu0 %v1099
    %1337 = vmatmul.bf16.gmra.mxu0 %v804
    %v1338 = vpop.f32.mrf.mxu0
    %v1339 = vadd.f32 %v792, %v1338
    %v1340 = vpop.f32.mrf.mxu0
    %1341 = vdwg.mxu0
    %1342 = vmatpush.bf16.msra.mxu0 %v1159
    %1343 = vmatpush.bf16.msra.mxu0 %v1155
    %1344 = vmatpush.bf16.msra.mxu0 %v1151
    %1345 = vmatpush.bf16.msra.mxu0 %v1147
    %1346 = vmatpush.bf16.msra.mxu0 %v1143
    %1347 = vmatpush.bf16.msra.mxu0 %v1139
    %1348 = vmatpush.bf16.msra.mxu0 %v1135
    %1349 = vmatpush.bf16.msra.mxu0 %v1131
    %1350 = vmatmul.bf16.gmra.mxu0 %v805
    %v1351 = vpop.f32.mrf.mxu0
    %v1352 = vadd.f32 %v1339, %v1351
    %v1353 = vpop.f32.mrf.mxu0
    %1354 = vdwg.mxu0
    %1355 = vmatpush.bf16.msra.mxu0 %v1191
    %1356 = vmatpush.bf16.msra.mxu0 %v1187
    %1357 = vmatpush.bf16.msra.mxu0 %v1183
    %1358 = vmatpush.bf16.msra.mxu0 %v1179
    %1359 = vmatpush.bf16.msra.mxu0 %v1175
    %1360 = vmatpush.bf16.msra.mxu0 %v1171
    %1361 = vmatpush.bf16.msra.mxu0 %v1167
    %1362 = vmatpush.bf16.msra.mxu0 %v1163
    %1363 = vmatmul.bf16.gmra.mxu0 %v806
    %v1364 = vpop.f32.mrf.mxu0
    %v1365 = vadd.f32 %v1352, %v1364
    %v1366 = vpop.f32.mrf.mxu0
    %1367 = vdwg.mxu0
    %1368 = vmatpush.bf16.msra.mxu0 %v1128
    %1369 = vmatpush.bf16.msra.mxu0 %v1124
    %1370 = vmatpush.bf16.msra.mxu0 %v1120
    %1371 = vmatpush.bf16.msra.mxu0 %v1116
    %1372 = vmatpush.bf16.msra.mxu0 %v1112
    %1373 = vmatpush.bf16.msra.mxu0 %v1108
    %1374 = vmatpush.bf16.msra.mxu0 %v1104
    %1375 = vmatpush.bf16.msra.mxu0 %v1100
    %1376 = vmatmul.bf16.gmra.mxu0 %v804
    %v1377 = vpop.f32.mrf.mxu0
    %v1378 = vadd.f32 %v793, %v1377
    %v1379 = vpop.f32.mrf.mxu0
    %1380 = vdwg.mxu0
    %1381 = vmatpush.bf16.msra.mxu0 %v1160
    %1382 = vmatpush.bf16.msra.mxu0 %v1156
    %1383 = vmatpush.bf16.msra.mxu0 %v1152
    %1384 = vmatpush.bf16.msra.mxu0 %v1148
    %1385 = vmatpush.bf16.msra.mxu0 %v1144
    %1386 = vmatpush.bf16.msra.mxu0 %v1140
    %1387 = vmatpush.bf16.msra.mxu0 %v1136
    %1388 = vmatpush.bf16.msra.mxu0 %v1132
    %1389 = vmatmul.bf16.gmra.mxu0 %v805
    %v1390 = vpop.f32.mrf.mxu0
    %v1391 = vadd.f32 %v1378, %v1390
    %v1392 = vpop.f32.mrf.mxu0
    %1393 = vdwg.mxu0
    %1394 = vmatpush.bf16.msra.mxu0 %v1192
    %1395 = vmatpush.bf16.msra.mxu0 %v1188
    %1396 = vmatpush.bf16.msra.mxu0 %v1184
    %1397 = vmatpush.bf16.msra.mxu0 %v1180
    %1398 = vmatpush.bf16.msra.mxu0 %v1176
    %1399 = vmatpush.bf16.msra.mxu0 %v1172
    %1400 = vmatpush.bf16.msra.mxu0 %v1168
    %1401 = vmatpush.bf16.msra.mxu0 %v1164
    %1402 = vmatmul.bf16.gmra.mxu0 %v806
    %v1403 = vpop.f32.mrf.mxu0
    %v1404 = vadd.f32 %v1391, %v1403
    %v1405 = vpop.f32.mrf.mxu0
    %1406 = vdwg.mxu0
    %1407 = vmatpush.bf16.msra.mxu0 %v1129
    %1408 = vmatpush.bf16.msra.mxu0 %v1125
    %1409 = vmatpush.bf16.msra.mxu0 %v1121
    %1410 = vmatpush.bf16.msra.mxu0 %v1117
    %1411 = vmatpush.bf16.msra.mxu0 %v1113
    %1412 = vmatpush.bf16.msra.mxu0 %v1109
    %1413 = vmatpush.bf16.msra.mxu0 %v1105
    %1414 = vmatpush.bf16.msra.mxu0 %v1101
    %1415 = vmatmul.bf16.gmra.mxu0 %v804
    %v1416 = vpop.f32.mrf.mxu0
    %v1417 = vadd.f32 %v794, %v1416
    %v1418 = vpop.f32.mrf.mxu0
    %1419 = vdwg.mxu0
    %1420 = vmatpush.bf16.msra.mxu0 %v1161
    %1421 = vmatpush.bf16.msra.mxu0 %v1157
    %1422 = vmatpush.bf16.msra.mxu0 %v1153
    %1423 = vmatpush.bf16.msra.mxu0 %v1149
    %1424 = vmatpush.bf16.msra.mxu0 %v1145
    %1425 = vmatpush.bf16.msra.mxu0 %v1141
    %1426 = vmatpush.bf16.msra.mxu0 %v1137
    %1427 = vmatpush.bf16.msra.mxu0 %v1133
    %1428 = vmatmul.bf16.gmra.mxu0 %v805
    %v1429 = vpop.f32.mrf.mxu0
    %v1430 = vadd.f32 %v1417, %v1429
    %v1431 = vpop.f32.mrf.mxu0
    %1432 = vdwg.mxu0
    %1433 = vmatpush.bf16.msra.mxu0 %v1193
    %1434 = vmatpush.bf16.msra.mxu0 %v1189
    %1435 = vmatpush.bf16.msra.mxu0 %v1185
    %1436 = vmatpush.bf16.msra.mxu0 %v1181
    %1437 = vmatpush.bf16.msra.mxu0 %v1177
    %1438 = vmatpush.bf16.msra.mxu0 %v1173
    %1439 = vmatpush.bf16.msra.mxu0 %v1169
    %1440 = vmatpush.bf16.msra.mxu0 %v1165
    %1441 = vmatmul.bf16.gmra.mxu0 %v806
    %v1442 = vpop.f32.mrf.mxu0
    %v1443 = vadd.f32 %v1430, %v1442
    %v1444 = vpop.f32.mrf.mxu0
    %1445 = vdwg.mxu0
    %v1446 = vmax.f32 %v1326, 0.0
    %v1447 = vmax.f32 %v1365, 0.0
    %v1448 = vmax.f32 %v1404, 0.0
    %v1449 = vmax.f32 %v1443, 0.0
    %v1450 = vpack.c.bf16 %v688, %v687
    %v1451 = vpack.c.bf16 %v690, %v689
    %v1452 = vpack.c.bf16 %v1447, %v1446
    %v1453 = vpack.c.bf16 %v1449, %v1448
    %v1454 = vld [vmem:[#allocation2] sm:$0xff]
    %v1455 = vld [vmem:[#allocation2 + $0x8] sm:$0xff]
    %v1456 = vld [vmem:[#allocation2 + $0x10] sm:$0xff]
    %v1457 = vld [vmem:[#allocation2 + $0x18] sm:$0xff]
    %v1458 = vpack.c.bf16 %v1455, %v1454
    %v1459 = vpack.c.bf16 %v1457, %v1456
    %v1462 = vunpack.c.l.b16 %v1450
    %v1463 = vunpack.c.h.b16 %v1450
    %v1464 = vunpack.c.l.b16 %v1451
    %v1465 = vunpack.c.h.b16 %v1451
    %v1466 = vpack.c.b16 %v1462, %v1462
    %v1467 = vpack.c.b16 %v1463, %v1463
    %v1468 = vpack.c.b16 %v1464, %v1464
    %v1469 = vpack.c.b16 %v1465, %v1465
    %v1476 = vunpack.c.l.b16 %v1452
    %v1477 = vunpack.c.h.b16 %v1452
    %v1478 = vunpack.c.l.b16 %v1453
    %v1479 = vunpack.c.h.b16 %v1453
    %v1480 = vpack.c.b16 %v1476, %v1476
    %v1481 = vpack.c.b16 %v1477, %v1477
    %v1482 = vpack.c.b16 %v1478, %v1478
    %v1483 = vpack.c.b16 %v1479, %v1479
    %v1490 = vunpack.c.l.b16 %v1458
    %v1491 = vunpack.c.h.b16 %v1458
    %v1492 = vunpack.c.l.b16 %v1459
    %v1493 = vunpack.c.h.b16 %v1459
    %v1494 = vpack.c.b16 %v1490, %v1490
    %v1495 = vpack.c.b16 %v1491, %v1491
    %v1496 = vpack.c.b16 %v1492, %v1492
    %v1497 = vpack.c.b16 %v1493, %v1493
    %v1502 = vld [vmem:[#allocation11] sm:$0xff]
    %v1503 = vld [vmem:[#allocation11 + $0x8] sm:$0xff]
    %v1504 = vld [vmem:[#allocation11 + $0x10] sm:$0xff]
    %v1505 = vld [vmem:[#allocation11 + $0x18] sm:$0xff]
    %v1506 = vld [vmem:[#allocation11 + $0x20] sm:$0xff]
    %v1507 = vld [vmem:[#allocation11 + $0x28] sm:$0xff]
    %v1508 = vld [vmem:[#allocation11 + $0x30] sm:$0xff]
    %v1509 = vld [vmem:[#allocation11 + $0x38] sm:$0xff]
    %v1510 = vld [vmem:[#allocation11 + $0x40] sm:$0xff]
    %v1511 = vld [vmem:[#allocation11 + $0x48] sm:$0xff]
    %v1512 = vld [vmem:[#allocation11 + $0x50] sm:$0xff]
    %v1513 = vld [vmem:[#allocation11 + $0x58] sm:$0xff]
    %v1514 = vld [vmem:[#allocation11 + $0x60] sm:$0xff]
    %v1515 = vld [vmem:[#allocation11 + $0x68] sm:$0xff]
    %v1516 = vld [vmem:[#allocation11 + $0x70] sm:$0xff]
    %v1517 = vld [vmem:[#allocation11 + $0x78] sm:$0xff]
    %v1518 = vld [vmem:[#allocation11 + $0x80] sm:$0xff]
    %v1519 = vld [vmem:[#allocation11 + $0x88] sm:$0xff]
    %v1520 = vld [vmem:[#allocation11 + $0x90] sm:$0xff]
    %v1521 = vld [vmem:[#allocation11 + $0x98] sm:$0xff]
    %v1522 = vld [vmem:[#allocation11 + $0xa0] sm:$0xff]
    %v1523 = vld [vmem:[#allocation11 + $0xa8] sm:$0xff]
    %v1524 = vld [vmem:[#allocation11 + $0xb0] sm:$0xff]
    %v1525 = vld [vmem:[#allocation11 + $0xb8] sm:$0xff]
    %v1526 = vld [vmem:[#allocation11 + $0xc0] sm:$0xff]
    %v1527 = vld [vmem:[#allocation11 + $0xc8] sm:$0xff]
    %v1528 = vld [vmem:[#allocation11 + $0xd0] sm:$0xff]
    %v1529 = vld [vmem:[#allocation11 + $0xd8] sm:$0xff]
    %v1530 = vld [vmem:[#allocation11 + $0xe0] sm:$0xff]
    %v1531 = vld [vmem:[#allocation11 + $0xe8] sm:$0xff]
    %v1532 = vld [vmem:[#allocation11 + $0xf0] sm:$0xff]
    %v1533 = vld [vmem:[#allocation11 + $0xf8] sm:$0xff]
    %v1534 = vld [vmem:[#allocation11 + $0x100] sm:$0xff]
    %v1535 = vld [vmem:[#allocation11 + $0x108] sm:$0xff]
    %v1536 = vld [vmem:[#allocation11 + $0x110] sm:$0xff]
    %v1537 = vld [vmem:[#allocation11 + $0x118] sm:$0xff]
    %v1538 = vld [vmem:[#allocation11 + $0x120] sm:$0xff]
    %v1539 = vld [vmem:[#allocation11 + $0x128] sm:$0xff]
    %v1540 = vld [vmem:[#allocation11 + $0x130] sm:$0xff]
    %v1541 = vld [vmem:[#allocation11 + $0x138] sm:$0xff]
    %v1542 = vld [vmem:[#allocation11 + $0x140] sm:$0xff]
    %v1543 = vld [vmem:[#allocation11 + $0x148] sm:$0xff]
    %v1544 = vld [vmem:[#allocation11 + $0x150] sm:$0xff]
    %v1545 = vld [vmem:[#allocation11 + $0x158] sm:$0xff]
    %v1546 = vld [vmem:[#allocation11 + $0x160] sm:$0xff]
    %v1547 = vld [vmem:[#allocation11 + $0x168] sm:$0xff]
    %v1548 = vld [vmem:[#allocation11 + $0x170] sm:$0xff]
    %v1549 = vld [vmem:[#allocation11 + $0x178] sm:$0xff]
    %v1550 = vld [vmem:[#allocation11 + $0x180] sm:$0xff]
    %v1551 = vld [vmem:[#allocation11 + $0x188] sm:$0xff]
    %v1552 = vld [vmem:[#allocation11 + $0x190] sm:$0xff]
    %v1553 = vld [vmem:[#allocation11 + $0x198] sm:$0xff]
    %v1554 = vld [vmem:[#allocation11 + $0x1a0] sm:$0xff]
    %v1555 = vld [vmem:[#allocation11 + $0x1a8] sm:$0xff]
    %v1556 = vld [vmem:[#allocation11 + $0x1b0] sm:$0xff]
    %v1557 = vld [vmem:[#allocation11 + $0x1b8] sm:$0xff]
    %v1558 = vld [vmem:[#allocation11 + $0x1c0] sm:$0xff]
    %v1559 = vld [vmem:[#allocation11 + $0x1c8] sm:$0xff]
    %v1560 = vld [vmem:[#allocation11 + $0x1d0] sm:$0xff]
    %v1561 = vld [vmem:[#allocation11 + $0x1d8] sm:$0xff]
    %v1562 = vld [vmem:[#allocation11 + $0x1e0] sm:$0xff]
    %v1563 = vld [vmem:[#allocation11 + $0x1e8] sm:$0xff]
    %v1564 = vld [vmem:[#allocation11 + $0x1f0] sm:$0xff]
    %v1565 = vld [vmem:[#allocation11 + $0x1f8] sm:$0xff]
    %v1566 = vld [vmem:[#allocation11 + $0x200] sm:$0xff]
    %v1567 = vld [vmem:[#allocation11 + $0x208] sm:$0xff]
    %v1568 = vld [vmem:[#allocation11 + $0x210] sm:$0xff]
    %v1569 = vld [vmem:[#allocation11 + $0x218] sm:$0xff]
    %v1570 = vld [vmem:[#allocation11 + $0x220] sm:$0xff]
    %v1571 = vld [vmem:[#allocation11 + $0x228] sm:$0xff]
    %v1572 = vld [vmem:[#allocation11 + $0x230] sm:$0xff]
    %v1573 = vld [vmem:[#allocation11 + $0x238] sm:$0xff]
    %v1574 = vld [vmem:[#allocation11 + $0x240] sm:$0xff]
    %v1575 = vld [vmem:[#allocation11 + $0x248] sm:$0xff]
    %v1576 = vld [vmem:[#allocation11 + $0x250] sm:$0xff]
    %v1577 = vld [vmem:[#allocation11 + $0x258] sm:$0xff]
    %v1578 = vld [vmem:[#allocation11 + $0x260] sm:$0xff]
    %v1579 = vld [vmem:[#allocation11 + $0x268] sm:$0xff]
    %v1580 = vld [vmem:[#allocation11 + $0x270] sm:$0xff]
    %v1581 = vld [vmem:[#allocation11 + $0x278] sm:$0xff]
    %v1582 = vld [vmem:[#allocation11 + $0x280] sm:$0xff]
    %v1583 = vld [vmem:[#allocation11 + $0x288] sm:$0xff]
    %v1584 = vld [vmem:[#allocation11 + $0x290] sm:$0xff]
    %v1585 = vld [vmem:[#allocation11 + $0x298] sm:$0xff]
    %v1586 = vld [vmem:[#allocation11 + $0x2a0] sm:$0xff]
    %v1587 = vld [vmem:[#allocation11 + $0x2a8] sm:$0xff]
    %v1588 = vld [vmem:[#allocation11 + $0x2b0] sm:$0xff]
    %v1589 = vld [vmem:[#allocation11 + $0x2b8] sm:$0xff]
    %v1590 = vld [vmem:[#allocation11 + $0x2c0] sm:$0xff]
    %v1591 = vld [vmem:[#allocation11 + $0x2c8] sm:$0xff]
    %v1592 = vld [vmem:[#allocation11 + $0x2d0] sm:$0xff]
    %v1593 = vld [vmem:[#allocation11 + $0x2d8] sm:$0xff]
    %v1594 = vld [vmem:[#allocation11 + $0x2e0] sm:$0xff]
    %v1595 = vld [vmem:[#allocation11 + $0x2e8] sm:$0xff]
    %v1596 = vld [vmem:[#allocation11 + $0x2f0] sm:$0xff]
    %v1597 = vld [vmem:[#allocation11 + $0x2f8] sm:$0xff]
    %v1598 = vld [vmem:[#allocation11 + $0x300] sm:$0xff]
    %v1599 = vld [vmem:[#allocation11 + $0x308] sm:$0xff]
    %v1600 = vld [vmem:[#allocation11 + $0x310] sm:$0xff]
    %v1601 = vld [vmem:[#allocation11 + $0x318] sm:$0xff]
    %v1602 = vld [vmem:[#allocation11 + $0x320] sm:$0xff]
    %v1603 = vld [vmem:[#allocation11 + $0x328] sm:$0xff]
    %v1604 = vld [vmem:[#allocation11 + $0x330] sm:$0xff]
    %v1605 = vld [vmem:[#allocation11 + $0x338] sm:$0xff]
    %v1606 = vld [vmem:[#allocation11 + $0x340] sm:$0xff]
    %v1607 = vld [vmem:[#allocation11 + $0x348] sm:$0xff]
    %v1608 = vld [vmem:[#allocation11 + $0x350] sm:$0xff]
    %v1609 = vld [vmem:[#allocation11 + $0x358] sm:$0xff]
    %v1610 = vld [vmem:[#allocation11 + $0x360] sm:$0xff]
    %v1611 = vld [vmem:[#allocation11 + $0x368] sm:$0xff]
    %v1612 = vld [vmem:[#allocation11 + $0x370] sm:$0xff]
    %v1613 = vld [vmem:[#allocation11 + $0x378] sm:$0xff]
    %v1614 = vld [vmem:[#allocation11 + $0x380] sm:$0xff]
    %v1615 = vld [vmem:[#allocation11 + $0x388] sm:$0xff]
    %v1616 = vld [vmem:[#allocation11 + $0x390] sm:$0xff]
    %v1617 = vld [vmem:[#allocation11 + $0x398] sm:$0xff]
    %v1618 = vld [vmem:[#allocation11 + $0x3a0] sm:$0xff]
    %v1619 = vld [vmem:[#allocation11 + $0x3a8] sm:$0xff]
    %v1620 = vld [vmem:[#allocation11 + $0x3b0] sm:$0xff]
    %v1621 = vld [vmem:[#allocation11 + $0x3b8] sm:$0xff]
    %v1622 = vld [vmem:[#allocation11 + $0x3c0] sm:$0xff]
    %v1623 = vld [vmem:[#allocation11 + $0x3c8] sm:$0xff]
    %v1624 = vld [vmem:[#allocation11 + $0x3d0] sm:$0xff]
    %v1625 = vld [vmem:[#allocation11 + $0x3d8] sm:$0xff]
    %v1626 = vld [vmem:[#allocation11 + $0x3e0] sm:$0xff]
    %v1627 = vld [vmem:[#allocation11 + $0x3e8] sm:$0xff]
    %v1628 = vld [vmem:[#allocation11 + $0x3f0] sm:$0xff]
    %v1629 = vld [vmem:[#allocation11 + $0x3f8] sm:$0xff]
    %v1630 = vld [vmem:[#allocation11 + $0x400] sm:$0xff]
    %v1631 = vld [vmem:[#allocation11 + $0x408] sm:$0xff]
    %v1632 = vld [vmem:[#allocation11 + $0x410] sm:$0xff]
    %v1633 = vld [vmem:[#allocation11 + $0x418] sm:$0xff]
    %v1634 = vld [vmem:[#allocation11 + $0x420] sm:$0xff]
    %v1635 = vld [vmem:[#allocation11 + $0x428] sm:$0xff]
    %v1636 = vld [vmem:[#allocation11 + $0x430] sm:$0xff]
    %v1637 = vld [vmem:[#allocation11 + $0x438] sm:$0xff]
    %v1638 = vld [vmem:[#allocation11 + $0x440] sm:$0xff]
    %v1639 = vld [vmem:[#allocation11 + $0x448] sm:$0xff]
    %v1640 = vld [vmem:[#allocation11 + $0x450] sm:$0xff]
    %v1641 = vld [vmem:[#allocation11 + $0x458] sm:$0xff]
    %v1642 = vld [vmem:[#allocation11 + $0x460] sm:$0xff]
    %v1643 = vld [vmem:[#allocation11 + $0x468] sm:$0xff]
    %v1644 = vld [vmem:[#allocation11 + $0x470] sm:$0xff]
    %v1645 = vld [vmem:[#allocation11 + $0x478] sm:$0xff]
    %v1646 = vld [vmem:[#allocation11 + $0x480] sm:$0xff]
    %v1647 = vld [vmem:[#allocation11 + $0x488] sm:$0xff]
    %v1648 = vld [vmem:[#allocation11 + $0x490] sm:$0xff]
    %v1649 = vld [vmem:[#allocation11 + $0x498] sm:$0xff]
    %v1650 = vld [vmem:[#allocation11 + $0x4a0] sm:$0xff]
    %v1651 = vld [vmem:[#allocation11 + $0x4a8] sm:$0xff]
    %v1652 = vld [vmem:[#allocation11 + $0x4b0] sm:$0xff]
    %v1653 = vld [vmem:[#allocation11 + $0x4b8] sm:$0xff]
    %v1654 = vld [vmem:[#allocation11 + $0x4c0] sm:$0xff]
    %v1655 = vld [vmem:[#allocation11 + $0x4c8] sm:$0xff]
    %v1656 = vld [vmem:[#allocation11 + $0x4d0] sm:$0xff]
    %v1657 = vld [vmem:[#allocation11 + $0x4d8] sm:$0xff]
    %v1658 = vld [vmem:[#allocation11 + $0x4e0] sm:$0xff]
    %v1659 = vld [vmem:[#allocation11 + $0x4e8] sm:$0xff]
    %v1660 = vld [vmem:[#allocation11 + $0x4f0] sm:$0xff]
    %v1661 = vld [vmem:[#allocation11 + $0x4f8] sm:$0xff]
    %v1662 = vld [vmem:[#allocation11 + $0x500] sm:$0xff]
    %v1663 = vld [vmem:[#allocation11 + $0x508] sm:$0xff]
    %v1664 = vld [vmem:[#allocation11 + $0x510] sm:$0xff]
    %v1665 = vld [vmem:[#allocation11 + $0x518] sm:$0xff]
    %v1666 = vld [vmem:[#allocation11 + $0x520] sm:$0xff]
    %v1667 = vld [vmem:[#allocation11 + $0x528] sm:$0xff]
    %v1668 = vld [vmem:[#allocation11 + $0x530] sm:$0xff]
    %v1669 = vld [vmem:[#allocation11 + $0x538] sm:$0xff]
    %v1670 = vld [vmem:[#allocation11 + $0x540] sm:$0xff]
    %v1671 = vld [vmem:[#allocation11 + $0x548] sm:$0xff]
    %v1672 = vld [vmem:[#allocation11 + $0x550] sm:$0xff]
    %v1673 = vld [vmem:[#allocation11 + $0x558] sm:$0xff]
    %v1674 = vld [vmem:[#allocation11 + $0x560] sm:$0xff]
    %v1675 = vld [vmem:[#allocation11 + $0x568] sm:$0xff]
    %v1676 = vld [vmem:[#allocation11 + $0x570] sm:$0xff]
    %v1677 = vld [vmem:[#allocation11 + $0x578] sm:$0xff]
    %v1678 = vld [vmem:[#allocation11 + $0x580] sm:$0xff]
    %v1679 = vld [vmem:[#allocation11 + $0x588] sm:$0xff]
    %v1680 = vld [vmem:[#allocation11 + $0x590] sm:$0xff]
    %v1681 = vld [vmem:[#allocation11 + $0x598] sm:$0xff]
    %v1682 = vld [vmem:[#allocation11 + $0x5a0] sm:$0xff]
    %v1683 = vld [vmem:[#allocation11 + $0x5a8] sm:$0xff]
    %v1684 = vld [vmem:[#allocation11 + $0x5b0] sm:$0xff]
    %v1685 = vld [vmem:[#allocation11 + $0x5b8] sm:$0xff]
    %v1686 = vld [vmem:[#allocation11 + $0x5c0] sm:$0xff]
    %v1687 = vld [vmem:[#allocation11 + $0x5c8] sm:$0xff]
    %v1688 = vld [vmem:[#allocation11 + $0x5d0] sm:$0xff]
    %v1689 = vld [vmem:[#allocation11 + $0x5d8] sm:$0xff]
    %v1690 = vld [vmem:[#allocation11 + $0x5e0] sm:$0xff]
    %v1691 = vld [vmem:[#allocation11 + $0x5e8] sm:$0xff]
    %v1692 = vld [vmem:[#allocation11 + $0x5f0] sm:$0xff]
    %v1693 = vld [vmem:[#allocation11 + $0x5f8] sm:$0xff]
    %v1694 = vld [vmem:[#allocation11 + $0x600] sm:$0xff]
    %v1695 = vld [vmem:[#allocation11 + $0x608] sm:$0xff]
    %v1696 = vld [vmem:[#allocation11 + $0x610] sm:$0xff]
    %v1697 = vld [vmem:[#allocation11 + $0x618] sm:$0xff]
    %v1698 = vld [vmem:[#allocation11 + $0x620] sm:$0xff]
    %v1699 = vld [vmem:[#allocation11 + $0x628] sm:$0xff]
    %v1700 = vld [vmem:[#allocation11 + $0x630] sm:$0xff]
    %v1701 = vld [vmem:[#allocation11 + $0x638] sm:$0xff]
    %v1702 = vld [vmem:[#allocation11 + $0x640] sm:$0xff]
    %v1703 = vld [vmem:[#allocation11 + $0x648] sm:$0xff]
    %v1704 = vld [vmem:[#allocation11 + $0x650] sm:$0xff]
    %v1705 = vld [vmem:[#allocation11 + $0x658] sm:$0xff]
    %v1706 = vld [vmem:[#allocation11 + $0x660] sm:$0xff]
    %v1707 = vld [vmem:[#allocation11 + $0x668] sm:$0xff]
    %v1708 = vld [vmem:[#allocation11 + $0x670] sm:$0xff]
    %v1709 = vld [vmem:[#allocation11 + $0x678] sm:$0xff]
    %v1710 = vld [vmem:[#allocation11 + $0x680] sm:$0xff]
    %v1711 = vld [vmem:[#allocation11 + $0x688] sm:$0xff]
    %v1712 = vld [vmem:[#allocation11 + $0x690] sm:$0xff]
    %v1713 = vld [vmem:[#allocation11 + $0x698] sm:$0xff]
    %v1714 = vld [vmem:[#allocation11 + $0x6a0] sm:$0xff]
    %v1715 = vld [vmem:[#allocation11 + $0x6a8] sm:$0xff]
    %v1716 = vld [vmem:[#allocation11 + $0x6b0] sm:$0xff]
    %v1717 = vld [vmem:[#allocation11 + $0x6b8] sm:$0xff]
    %v1718 = vld [vmem:[#allocation11 + $0x6c0] sm:$0xff]
    %v1719 = vld [vmem:[#allocation11 + $0x6c8] sm:$0xff]
    %v1720 = vld [vmem:[#allocation11 + $0x6d0] sm:$0xff]
    %v1721 = vld [vmem:[#allocation11 + $0x6d8] sm:$0xff]
    %v1722 = vld [vmem:[#allocation11 + $0x6e0] sm:$0xff]
    %v1723 = vld [vmem:[#allocation11 + $0x6e8] sm:$0xff]
    %v1724 = vld [vmem:[#allocation11 + $0x6f0] sm:$0xff]
    %v1725 = vld [vmem:[#allocation11 + $0x6f8] sm:$0xff]
    %v1726 = vld [vmem:[#allocation11 + $0x700] sm:$0xff]
    %v1727 = vld [vmem:[#allocation11 + $0x708] sm:$0xff]
    %v1728 = vld [vmem:[#allocation11 + $0x710] sm:$0xff]
    %v1729 = vld [vmem:[#allocation11 + $0x718] sm:$0xff]
    %v1730 = vld [vmem:[#allocation11 + $0x720] sm:$0xff]
    %v1731 = vld [vmem:[#allocation11 + $0x728] sm:$0xff]
    %v1732 = vld [vmem:[#allocation11 + $0x730] sm:$0xff]
    %v1733 = vld [vmem:[#allocation11 + $0x738] sm:$0xff]
    %v1734 = vld [vmem:[#allocation11 + $0x740] sm:$0xff]
    %v1735 = vld [vmem:[#allocation11 + $0x748] sm:$0xff]
    %v1736 = vld [vmem:[#allocation11 + $0x750] sm:$0xff]
    %v1737 = vld [vmem:[#allocation11 + $0x758] sm:$0xff]
    %v1738 = vld [vmem:[#allocation11 + $0x760] sm:$0xff]
    %v1739 = vld [vmem:[#allocation11 + $0x768] sm:$0xff]
    %v1740 = vld [vmem:[#allocation11 + $0x770] sm:$0xff]
    %v1741 = vld [vmem:[#allocation11 + $0x778] sm:$0xff]
    %v1742 = vld [vmem:[#allocation11 + $0x780] sm:$0xff]
    %v1743 = vld [vmem:[#allocation11 + $0x788] sm:$0xff]
    %v1744 = vld [vmem:[#allocation11 + $0x790] sm:$0xff]
    %v1745 = vld [vmem:[#allocation11 + $0x798] sm:$0xff]
    %v1746 = vld [vmem:[#allocation11 + $0x7a0] sm:$0xff]
    %v1747 = vld [vmem:[#allocation11 + $0x7a8] sm:$0xff]
    %v1748 = vld [vmem:[#allocation11 + $0x7b0] sm:$0xff]
    %v1749 = vld [vmem:[#allocation11 + $0x7b8] sm:$0xff]
    %v1750 = vld [vmem:[#allocation11 + $0x7c0] sm:$0xff]
    %v1751 = vld [vmem:[#allocation11 + $0x7c8] sm:$0xff]
    %v1752 = vld [vmem:[#allocation11 + $0x7d0] sm:$0xff]
    %v1753 = vld [vmem:[#allocation11 + $0x7d8] sm:$0xff]
    %v1754 = vld [vmem:[#allocation11 + $0x7e0] sm:$0xff]
    %v1755 = vld [vmem:[#allocation11 + $0x7e8] sm:$0xff]
    %v1756 = vld [vmem:[#allocation11 + $0x7f0] sm:$0xff]
    %v1757 = vld [vmem:[#allocation11 + $0x7f8] sm:$0xff]
    %v1758 = vld [vmem:[#allocation11 + $0x800] sm:$0xff]
    %v1759 = vld [vmem:[#allocation11 + $0x808] sm:$0xff]
    %v1760 = vld [vmem:[#allocation11 + $0x810] sm:$0xff]
    %v1761 = vld [vmem:[#allocation11 + $0x818] sm:$0xff]
    %v1762 = vld [vmem:[#allocation11 + $0x820] sm:$0xff]
    %v1763 = vld [vmem:[#allocation11 + $0x828] sm:$0xff]
    %v1764 = vld [vmem:[#allocation11 + $0x830] sm:$0xff]
    %v1765 = vld [vmem:[#allocation11 + $0x838] sm:$0xff]
    %v1766 = vld [vmem:[#allocation11 + $0x840] sm:$0xff]
    %v1767 = vld [vmem:[#allocation11 + $0x848] sm:$0xff]
    %v1768 = vld [vmem:[#allocation11 + $0x850] sm:$0xff]
    %v1769 = vld [vmem:[#allocation11 + $0x858] sm:$0xff]
    %v1770 = vld [vmem:[#allocation11 + $0x860] sm:$0xff]
    %v1771 = vld [vmem:[#allocation11 + $0x868] sm:$0xff]
    %v1772 = vld [vmem:[#allocation11 + $0x870] sm:$0xff]
    %v1773 = vld [vmem:[#allocation11 + $0x878] sm:$0xff]
    %v1774 = vld [vmem:[#allocation11 + $0x880] sm:$0xff]
    %v1775 = vld [vmem:[#allocation11 + $0x888] sm:$0xff]
    %v1776 = vld [vmem:[#allocation11 + $0x890] sm:$0xff]
    %v1777 = vld [vmem:[#allocation11 + $0x898] sm:$0xff]
    %v1778 = vld [vmem:[#allocation11 + $0x8a0] sm:$0xff]
    %v1779 = vld [vmem:[#allocation11 + $0x8a8] sm:$0xff]
    %v1780 = vld [vmem:[#allocation11 + $0x8b0] sm:$0xff]
    %v1781 = vld [vmem:[#allocation11 + $0x8b8] sm:$0xff]
    %v1782 = vld [vmem:[#allocation11 + $0x8c0] sm:$0xff]
    %v1783 = vld [vmem:[#allocation11 + $0x8c8] sm:$0xff]
    %v1784 = vld [vmem:[#allocation11 + $0x8d0] sm:$0xff]
    %v1785 = vld [vmem:[#allocation11 + $0x8d8] sm:$0xff]
    %v1786 = vld [vmem:[#allocation11 + $0x8e0] sm:$0xff]
    %v1787 = vld [vmem:[#allocation11 + $0x8e8] sm:$0xff]
    %v1788 = vld [vmem:[#allocation11 + $0x8f0] sm:$0xff]
    %v1789 = vld [vmem:[#allocation11 + $0x8f8] sm:$0xff]
    %v1790 = vld [vmem:[#allocation11 + $0x900] sm:$0xff]
    %v1791 = vld [vmem:[#allocation11 + $0x908] sm:$0xff]
    %v1792 = vld [vmem:[#allocation11 + $0x910] sm:$0xff]
    %v1793 = vld [vmem:[#allocation11 + $0x918] sm:$0xff]
    %v1794 = vld [vmem:[#allocation11 + $0x920] sm:$0xff]
    %v1795 = vld [vmem:[#allocation11 + $0x928] sm:$0xff]
    %v1796 = vld [vmem:[#allocation11 + $0x930] sm:$0xff]
    %v1797 = vld [vmem:[#allocation11 + $0x938] sm:$0xff]
    %v1798 = vld [vmem:[#allocation11 + $0x940] sm:$0xff]
    %v1799 = vld [vmem:[#allocation11 + $0x948] sm:$0xff]
    %v1800 = vld [vmem:[#allocation11 + $0x950] sm:$0xff]
    %v1801 = vld [vmem:[#allocation11 + $0x958] sm:$0xff]
    %v1802 = vld [vmem:[#allocation11 + $0x960] sm:$0xff]
    %v1803 = vld [vmem:[#allocation11 + $0x968] sm:$0xff]
    %v1804 = vld [vmem:[#allocation11 + $0x970] sm:$0xff]
    %v1805 = vld [vmem:[#allocation11 + $0x978] sm:$0xff]
    %v1806 = vld [vmem:[#allocation11 + $0x980] sm:$0xff]
    %v1807 = vld [vmem:[#allocation11 + $0x988] sm:$0xff]
    %v1808 = vld [vmem:[#allocation11 + $0x990] sm:$0xff]
    %v1809 = vld [vmem:[#allocation11 + $0x998] sm:$0xff]
    %v1810 = vld [vmem:[#allocation11 + $0x9a0] sm:$0xff]
    %v1811 = vld [vmem:[#allocation11 + $0x9a8] sm:$0xff]
    %v1812 = vld [vmem:[#allocation11 + $0x9b0] sm:$0xff]
    %v1813 = vld [vmem:[#allocation11 + $0x9b8] sm:$0xff]
    %v1814 = vld [vmem:[#allocation11 + $0x9c0] sm:$0xff]
    %v1815 = vld [vmem:[#allocation11 + $0x9c8] sm:$0xff]
    %v1816 = vld [vmem:[#allocation11 + $0x9d0] sm:$0xff]
    %v1817 = vld [vmem:[#allocation11 + $0x9d8] sm:$0xff]
    %v1818 = vld [vmem:[#allocation11 + $0x9e0] sm:$0xff]
    %v1819 = vld [vmem:[#allocation11 + $0x9e8] sm:$0xff]
    %v1820 = vld [vmem:[#allocation11 + $0x9f0] sm:$0xff]
    %v1821 = vld [vmem:[#allocation11 + $0x9f8] sm:$0xff]
    %v1822 = vld [vmem:[#allocation11 + $0xa00] sm:$0xff]
    %v1823 = vld [vmem:[#allocation11 + $0xa08] sm:$0xff]
    %v1824 = vld [vmem:[#allocation11 + $0xa10] sm:$0xff]
    %v1825 = vld [vmem:[#allocation11 + $0xa18] sm:$0xff]
    %v1826 = vld [vmem:[#allocation11 + $0xa20] sm:$0xff]
    %v1827 = vld [vmem:[#allocation11 + $0xa28] sm:$0xff]
    %v1828 = vld [vmem:[#allocation11 + $0xa30] sm:$0xff]
    %v1829 = vld [vmem:[#allocation11 + $0xa38] sm:$0xff]
    %v1830 = vld [vmem:[#allocation11 + $0xa40] sm:$0xff]
    %v1831 = vld [vmem:[#allocation11 + $0xa48] sm:$0xff]
    %v1832 = vld [vmem:[#allocation11 + $0xa50] sm:$0xff]
    %v1833 = vld [vmem:[#allocation11 + $0xa58] sm:$0xff]
    %v1834 = vld [vmem:[#allocation11 + $0xa60] sm:$0xff]
    %v1835 = vld [vmem:[#allocation11 + $0xa68] sm:$0xff]
    %v1836 = vld [vmem:[#allocation11 + $0xa70] sm:$0xff]
    %v1837 = vld [vmem:[#allocation11 + $0xa78] sm:$0xff]
    %v1838 = vld [vmem:[#allocation11 + $0xa80] sm:$0xff]
    %v1839 = vld [vmem:[#allocation11 + $0xa88] sm:$0xff]
    %v1840 = vld [vmem:[#allocation11 + $0xa90] sm:$0xff]
    %v1841 = vld [vmem:[#allocation11 + $0xa98] sm:$0xff]
    %v1842 = vld [vmem:[#allocation11 + $0xaa0] sm:$0xff]
    %v1843 = vld [vmem:[#allocation11 + $0xaa8] sm:$0xff]
    %v1844 = vld [vmem:[#allocation11 + $0xab0] sm:$0xff]
    %v1845 = vld [vmem:[#allocation11 + $0xab8] sm:$0xff]
    %v1846 = vld [vmem:[#allocation11 + $0xac0] sm:$0xff]
    %v1847 = vld [vmem:[#allocation11 + $0xac8] sm:$0xff]
    %v1848 = vld [vmem:[#allocation11 + $0xad0] sm:$0xff]
    %v1849 = vld [vmem:[#allocation11 + $0xad8] sm:$0xff]
    %v1850 = vld [vmem:[#allocation11 + $0xae0] sm:$0xff]
    %v1851 = vld [vmem:[#allocation11 + $0xae8] sm:$0xff]
    %v1852 = vld [vmem:[#allocation11 + $0xaf0] sm:$0xff]
    %v1853 = vld [vmem:[#allocation11 + $0xaf8] sm:$0xff]
    %v1854 = vld [vmem:[#allocation11 + $0xb00] sm:$0xff]
    %v1855 = vld [vmem:[#allocation11 + $0xb08] sm:$0xff]
    %v1856 = vld [vmem:[#allocation11 + $0xb10] sm:$0xff]
    %v1857 = vld [vmem:[#allocation11 + $0xb18] sm:$0xff]
    %v1858 = vld [vmem:[#allocation11 + $0xb20] sm:$0xff]
    %v1859 = vld [vmem:[#allocation11 + $0xb28] sm:$0xff]
    %v1860 = vld [vmem:[#allocation11 + $0xb30] sm:$0xff]
    %v1861 = vld [vmem:[#allocation11 + $0xb38] sm:$0xff]
    %v1862 = vld [vmem:[#allocation11 + $0xb40] sm:$0xff]
    %v1863 = vld [vmem:[#allocation11 + $0xb48] sm:$0xff]
    %v1864 = vld [vmem:[#allocation11 + $0xb50] sm:$0xff]
    %v1865 = vld [vmem:[#allocation11 + $0xb58] sm:$0xff]
    %v1866 = vld [vmem:[#allocation11 + $0xb60] sm:$0xff]
    %v1867 = vld [vmem:[#allocation11 + $0xb68] sm:$0xff]
    %v1868 = vld [vmem:[#allocation11 + $0xb70] sm:$0xff]
    %v1869 = vld [vmem:[#allocation11 + $0xb78] sm:$0xff]
    %v1870 = vld [vmem:[#allocation11 + $0xb80] sm:$0xff]
    %v1871 = vld [vmem:[#allocation11 + $0xb88] sm:$0xff]
    %v1872 = vld [vmem:[#allocation11 + $0xb90] sm:$0xff]
    %v1873 = vld [vmem:[#allocation11 + $0xb98] sm:$0xff]
    %v1874 = vld [vmem:[#allocation11 + $0xba0] sm:$0xff]
    %v1875 = vld [vmem:[#allocation11 + $0xba8] sm:$0xff]
    %v1876 = vld [vmem:[#allocation11 + $0xbb0] sm:$0xff]
    %v1877 = vld [vmem:[#allocation11 + $0xbb8] sm:$0xff]
    %v1878 = vld [vmem:[#allocation11 + $0xbc0] sm:$0xff]
    %v1879 = vld [vmem:[#allocation11 + $0xbc8] sm:$0xff]
    %v1880 = vld [vmem:[#allocation11 + $0xbd0] sm:$0xff]
    %v1881 = vld [vmem:[#allocation11 + $0xbd8] sm:$0xff]
    %v1882 = vld [vmem:[#allocation11 + $0xbe0] sm:$0xff]
    %v1883 = vld [vmem:[#allocation11 + $0xbe8] sm:$0xff]
    %v1884 = vld [vmem:[#allocation11 + $0xbf0] sm:$0xff]
    %v1885 = vld [vmem:[#allocation11 + $0xbf8] sm:$0xff]
    %v1886 = vld [vmem:[#allocation11 + $0xc00] sm:$0xff]
    %v1887 = vld [vmem:[#allocation11 + $0xc08] sm:$0xff]
    %v1888 = vld [vmem:[#allocation11 + $0xc10] sm:$0xff]
    %v1889 = vld [vmem:[#allocation11 + $0xc18] sm:$0xff]
    %v1890 = vld [vmem:[#allocation11 + $0xc20] sm:$0xff]
    %v1891 = vld [vmem:[#allocation11 + $0xc28] sm:$0xff]
    %v1892 = vld [vmem:[#allocation11 + $0xc30] sm:$0xff]
    %v1893 = vld [vmem:[#allocation11 + $0xc38] sm:$0xff]
    %v1894 = vld [vmem:[#allocation11 + $0xc40] sm:$0xff]
    %v1895 = vld [vmem:[#allocation11 + $0xc48] sm:$0xff]
    %v1896 = vld [vmem:[#allocation11 + $0xc50] sm:$0xff]
    %v1897 = vld [vmem:[#allocation11 + $0xc58] sm:$0xff]
    %v1898 = vld [vmem:[#allocation11 + $0xc60] sm:$0xff]
    %v1899 = vld [vmem:[#allocation11 + $0xc68] sm:$0xff]
    %v1900 = vld [vmem:[#allocation11 + $0xc70] sm:$0xff]
    %v1901 = vld [vmem:[#allocation11 + $0xc78] sm:$0xff]
    %v1902 = vld [vmem:[#allocation11 + $0xc80] sm:$0xff]
    %v1903 = vld [vmem:[#allocation11 + $0xc88] sm:$0xff]
    %v1904 = vld [vmem:[#allocation11 + $0xc90] sm:$0xff]
    %v1905 = vld [vmem:[#allocation11 + $0xc98] sm:$0xff]
    %v1906 = vld [vmem:[#allocation11 + $0xca0] sm:$0xff]
    %v1907 = vld [vmem:[#allocation11 + $0xca8] sm:$0xff]
    %v1908 = vld [vmem:[#allocation11 + $0xcb0] sm:$0xff]
    %v1909 = vld [vmem:[#allocation11 + $0xcb8] sm:$0xff]
    %v1910 = vld [vmem:[#allocation11 + $0xcc0] sm:$0xff]
    %v1911 = vld [vmem:[#allocation11 + $0xcc8] sm:$0xff]
    %v1912 = vld [vmem:[#allocation11 + $0xcd0] sm:$0xff]
    %v1913 = vld [vmem:[#allocation11 + $0xcd8] sm:$0xff]
    %v1914 = vld [vmem:[#allocation11 + $0xce0] sm:$0xff]
    %v1915 = vld [vmem:[#allocation11 + $0xce8] sm:$0xff]
    %v1916 = vld [vmem:[#allocation11 + $0xcf0] sm:$0xff]
    %v1917 = vld [vmem:[#allocation11 + $0xcf8] sm:$0xff]
    %v1918 = vld [vmem:[#allocation11 + $0xd00] sm:$0xff]
    %v1919 = vld [vmem:[#allocation11 + $0xd08] sm:$0xff]
    %v1920 = vld [vmem:[#allocation11 + $0xd10] sm:$0xff]
    %v1921 = vld [vmem:[#allocation11 + $0xd18] sm:$0xff]
    %v1922 = vld [vmem:[#allocation11 + $0xd20] sm:$0xff]
    %v1923 = vld [vmem:[#allocation11 + $0xd28] sm:$0xff]
    %v1924 = vld [vmem:[#allocation11 + $0xd30] sm:$0xff]
    %v1925 = vld [vmem:[#allocation11 + $0xd38] sm:$0xff]
    %v1926 = vld [vmem:[#allocation11 + $0xd40] sm:$0xff]
    %v1927 = vld [vmem:[#allocation11 + $0xd48] sm:$0xff]
    %v1928 = vld [vmem:[#allocation11 + $0xd50] sm:$0xff]
    %v1929 = vld [vmem:[#allocation11 + $0xd58] sm:$0xff]
    %v1930 = vld [vmem:[#allocation11 + $0xd60] sm:$0xff]
    %v1931 = vld [vmem:[#allocation11 + $0xd68] sm:$0xff]
    %v1932 = vld [vmem:[#allocation11 + $0xd70] sm:$0xff]
    %v1933 = vld [vmem:[#allocation11 + $0xd78] sm:$0xff]
    %v1934 = vld [vmem:[#allocation11 + $0xd80] sm:$0xff]
    %v1935 = vld [vmem:[#allocation11 + $0xd88] sm:$0xff]
    %v1936 = vld [vmem:[#allocation11 + $0xd90] sm:$0xff]
    %v1937 = vld [vmem:[#allocation11 + $0xd98] sm:$0xff]
    %v1938 = vld [vmem:[#allocation11 + $0xda0] sm:$0xff]
    %v1939 = vld [vmem:[#allocation11 + $0xda8] sm:$0xff]
    %v1940 = vld [vmem:[#allocation11 + $0xdb0] sm:$0xff]
    %v1941 = vld [vmem:[#allocation11 + $0xdb8] sm:$0xff]
    %v1942 = vld [vmem:[#allocation11 + $0xdc0] sm:$0xff]
    %v1943 = vld [vmem:[#allocation11 + $0xdc8] sm:$0xff]
    %v1944 = vld [vmem:[#allocation11 + $0xdd0] sm:$0xff]
    %v1945 = vld [vmem:[#allocation11 + $0xdd8] sm:$0xff]
    %v1946 = vld [vmem:[#allocation11 + $0xde0] sm:$0xff]
    %v1947 = vld [vmem:[#allocation11 + $0xde8] sm:$0xff]
    %v1948 = vld [vmem:[#allocation11 + $0xdf0] sm:$0xff]
    %v1949 = vld [vmem:[#allocation11 + $0xdf8] sm:$0xff]
    %v1950 = vld [vmem:[#allocation11 + $0xe00] sm:$0xff]
    %v1951 = vld [vmem:[#allocation11 + $0xe08] sm:$0xff]
    %v1952 = vld [vmem:[#allocation11 + $0xe10] sm:$0xff]
    %v1953 = vld [vmem:[#allocation11 + $0xe18] sm:$0xff]
    %v1954 = vld [vmem:[#allocation11 + $0xe20] sm:$0xff]
    %v1955 = vld [vmem:[#allocation11 + $0xe28] sm:$0xff]
    %v1956 = vld [vmem:[#allocation11 + $0xe30] sm:$0xff]
    %v1957 = vld [vmem:[#allocation11 + $0xe38] sm:$0xff]
    %v1958 = vld [vmem:[#allocation11 + $0xe40] sm:$0xff]
    %v1959 = vld [vmem:[#allocation11 + $0xe48] sm:$0xff]
    %v1960 = vld [vmem:[#allocation11 + $0xe50] sm:$0xff]
    %v1961 = vld [vmem:[#allocation11 + $0xe58] sm:$0xff]
    %v1962 = vld [vmem:[#allocation11 + $0xe60] sm:$0xff]
    %v1963 = vld [vmem:[#allocation11 + $0xe68] sm:$0xff]
    %v1964 = vld [vmem:[#allocation11 + $0xe70] sm:$0xff]
    %v1965 = vld [vmem:[#allocation11 + $0xe78] sm:$0xff]
    %v1966 = vld [vmem:[#allocation11 + $0xe80] sm:$0xff]
    %v1967 = vld [vmem:[#allocation11 + $0xe88] sm:$0xff]
    %v1968 = vld [vmem:[#allocation11 + $0xe90] sm:$0xff]
    %v1969 = vld [vmem:[#allocation11 + $0xe98] sm:$0xff]
    %v1970 = vld [vmem:[#allocation11 + $0xea0] sm:$0xff]
    %v1971 = vld [vmem:[#allocation11 + $0xea8] sm:$0xff]
    %v1972 = vld [vmem:[#allocation11 + $0xeb0] sm:$0xff]
    %v1973 = vld [vmem:[#allocation11 + $0xeb8] sm:$0xff]
    %v1974 = vld [vmem:[#allocation11 + $0xec0] sm:$0xff]
    %v1975 = vld [vmem:[#allocation11 + $0xec8] sm:$0xff]
    %v1976 = vld [vmem:[#allocation11 + $0xed0] sm:$0xff]
    %v1977 = vld [vmem:[#allocation11 + $0xed8] sm:$0xff]
    %v1978 = vld [vmem:[#allocation11 + $0xee0] sm:$0xff]
    %v1979 = vld [vmem:[#allocation11 + $0xee8] sm:$0xff]
    %v1980 = vld [vmem:[#allocation11 + $0xef0] sm:$0xff]
    %v1981 = vld [vmem:[#allocation11 + $0xef8] sm:$0xff]
    %v1982 = vld [vmem:[#allocation11 + $0xf00] sm:$0xff]
    %v1983 = vld [vmem:[#allocation11 + $0xf08] sm:$0xff]
    %v1984 = vld [vmem:[#allocation11 + $0xf10] sm:$0xff]
    %v1985 = vld [vmem:[#allocation11 + $0xf18] sm:$0xff]
    %v1986 = vld [vmem:[#allocation11 + $0xf20] sm:$0xff]
    %v1987 = vld [vmem:[#allocation11 + $0xf28] sm:$0xff]
    %v1988 = vld [vmem:[#allocation11 + $0xf30] sm:$0xff]
    %v1989 = vld [vmem:[#allocation11 + $0xf38] sm:$0xff]
    %v1990 = vld [vmem:[#allocation11 + $0xf40] sm:$0xff]
    %v1991 = vld [vmem:[#allocation11 + $0xf48] sm:$0xff]
    %v1992 = vld [vmem:[#allocation11 + $0xf50] sm:$0xff]
    %v1993 = vld [vmem:[#allocation11 + $0xf58] sm:$0xff]
    %v1994 = vld [vmem:[#allocation11 + $0xf60] sm:$0xff]
    %v1995 = vld [vmem:[#allocation11 + $0xf68] sm:$0xff]
    %v1996 = vld [vmem:[#allocation11 + $0xf70] sm:$0xff]
    %v1997 = vld [vmem:[#allocation11 + $0xf78] sm:$0xff]
    %v1998 = vld [vmem:[#allocation11 + $0xf80] sm:$0xff]
    %v1999 = vld [vmem:[#allocation11 + $0xf88] sm:$0xff]
    %v2000 = vld [vmem:[#allocation11 + $0xf90] sm:$0xff]
    %v2001 = vld [vmem:[#allocation11 + $0xf98] sm:$0xff]
    %v2002 = vld [vmem:[#allocation11 + $0xfa0] sm:$0xff]
    %v2003 = vld [vmem:[#allocation11 + $0xfa8] sm:$0xff]
    %v2004 = vld [vmem:[#allocation11 + $0xfb0] sm:$0xff]
    %v2005 = vld [vmem:[#allocation11 + $0xfb8] sm:$0xff]
    %v2006 = vld [vmem:[#allocation11 + $0xfc0] sm:$0xff]
    %v2007 = vld [vmem:[#allocation11 + $0xfc8] sm:$0xff]
    %v2008 = vld [vmem:[#allocation11 + $0xfd0] sm:$0xff]
    %v2009 = vld [vmem:[#allocation11 + $0xfd8] sm:$0xff]
    %v2010 = vld [vmem:[#allocation11 + $0xfe0] sm:$0xff]
    %v2011 = vld [vmem:[#allocation11 + $0xfe8] sm:$0xff]
    %v2012 = vld [vmem:[#allocation11 + $0xff0] sm:$0xff]
    %v2013 = vld [vmem:[#allocation11 + $0xff8] sm:$0xff]
    %v2014 = vld [vmem:[#allocation11 + $0x1000] sm:$0xff]
    %v2015 = vld [vmem:[#allocation11 + $0x1008] sm:$0xff]
    %v2016 = vld [vmem:[#allocation11 + $0x1010] sm:$0xff]
    %v2017 = vld [vmem:[#allocation11 + $0x1018] sm:$0xff]
    %v2018 = vld [vmem:[#allocation11 + $0x1020] sm:$0xff]
    %v2019 = vld [vmem:[#allocation11 + $0x1028] sm:$0xff]
    %v2020 = vld [vmem:[#allocation11 + $0x1030] sm:$0xff]
    %v2021 = vld [vmem:[#allocation11 + $0x1038] sm:$0xff]
    %v2022 = vld [vmem:[#allocation11 + $0x1040] sm:$0xff]
    %v2023 = vld [vmem:[#allocation11 + $0x1048] sm:$0xff]
    %v2024 = vld [vmem:[#allocation11 + $0x1050] sm:$0xff]
    %v2025 = vld [vmem:[#allocation11 + $0x1058] sm:$0xff]
    %v2026 = vld [vmem:[#allocation11 + $0x1060] sm:$0xff]
    %v2027 = vld [vmem:[#allocation11 + $0x1068] sm:$0xff]
    %v2028 = vld [vmem:[#allocation11 + $0x1070] sm:$0xff]
    %v2029 = vld [vmem:[#allocation11 + $0x1078] sm:$0xff]
    %v2030 = vld [vmem:[#allocation11 + $0x1080] sm:$0xff]
    %v2031 = vld [vmem:[#allocation11 + $0x1088] sm:$0xff]
    %v2032 = vld [vmem:[#allocation11 + $0x1090] sm:$0xff]
    %v2033 = vld [vmem:[#allocation11 + $0x1098] sm:$0xff]
    %v2034 = vld [vmem:[#allocation11 + $0x10a0] sm:$0xff]
    %v2035 = vld [vmem:[#allocation11 + $0x10a8] sm:$0xff]
    %v2036 = vld [vmem:[#allocation11 + $0x10b0] sm:$0xff]
    %v2037 = vld [vmem:[#allocation11 + $0x10b8] sm:$0xff]
    %v2038 = vld [vmem:[#allocation11 + $0x10c0] sm:$0xff]
    %v2039 = vld [vmem:[#allocation11 + $0x10c8] sm:$0xff]
    %v2040 = vld [vmem:[#allocation11 + $0x10d0] sm:$0xff]
    %v2041 = vld [vmem:[#allocation11 + $0x10d8] sm:$0xff]
    %v2042 = vld [vmem:[#allocation11 + $0x10e0] sm:$0xff]
    %v2043 = vld [vmem:[#allocation11 + $0x10e8] sm:$0xff]
    %v2044 = vld [vmem:[#allocation11 + $0x10f0] sm:$0xff]
    %v2045 = vld [vmem:[#allocation11 + $0x10f8] sm:$0xff]
    %v2046 = vld [vmem:[#allocation11 + $0x1100] sm:$0xff]
    %v2047 = vld [vmem:[#allocation11 + $0x1108] sm:$0xff]
    %v2048 = vld [vmem:[#allocation11 + $0x1110] sm:$0xff]
    %v2049 = vld [vmem:[#allocation11 + $0x1118] sm:$0xff]
    %v2050 = vld [vmem:[#allocation11 + $0x1120] sm:$0xff]
    %v2051 = vld [vmem:[#allocation11 + $0x1128] sm:$0xff]
    %v2052 = vld [vmem:[#allocation11 + $0x1130] sm:$0xff]
    %v2053 = vld [vmem:[#allocation11 + $0x1138] sm:$0xff]
    %v2054 = vld [vmem:[#allocation11 + $0x1140] sm:$0xff]
    %v2055 = vld [vmem:[#allocation11 + $0x1148] sm:$0xff]
    %v2056 = vld [vmem:[#allocation11 + $0x1150] sm:$0xff]
    %v2057 = vld [vmem:[#allocation11 + $0x1158] sm:$0xff]
    %v2058 = vld [vmem:[#allocation11 + $0x1160] sm:$0xff]
    %v2059 = vld [vmem:[#allocation11 + $0x1168] sm:$0xff]
    %v2060 = vld [vmem:[#allocation11 + $0x1170] sm:$0xff]
    %v2061 = vld [vmem:[#allocation11 + $0x1178] sm:$0xff]
    %v2062 = vld [vmem:[#allocation11 + $0x1180] sm:$0xff]
    %v2063 = vld [vmem:[#allocation11 + $0x1188] sm:$0xff]
    %v2064 = vld [vmem:[#allocation11 + $0x1190] sm:$0xff]
    %v2065 = vld [vmem:[#allocation11 + $0x1198] sm:$0xff]
    %v2066 = vld [vmem:[#allocation11 + $0x11a0] sm:$0xff]
    %v2067 = vld [vmem:[#allocation11 + $0x11a8] sm:$0xff]
    %v2068 = vld [vmem:[#allocation11 + $0x11b0] sm:$0xff]
    %v2069 = vld [vmem:[#allocation11 + $0x11b8] sm:$0xff]
    %v2070 = vld [vmem:[#allocation11 + $0x11c0] sm:$0xff]
    %v2071 = vld [vmem:[#allocation11 + $0x11c8] sm:$0xff]
    %v2072 = vld [vmem:[#allocation11 + $0x11d0] sm:$0xff]
    %v2073 = vld [vmem:[#allocation11 + $0x11d8] sm:$0xff]
    %v2074 = vld [vmem:[#allocation11 + $0x11e0] sm:$0xff]
    %v2075 = vld [vmem:[#allocation11 + $0x11e8] sm:$0xff]
    %v2076 = vld [vmem:[#allocation11 + $0x11f0] sm:$0xff]
    %v2077 = vld [vmem:[#allocation11 + $0x11f8] sm:$0xff]
    %v2078 = vld [vmem:[#allocation11 + $0x1200] sm:$0xff]
    %v2079 = vld [vmem:[#allocation11 + $0x1208] sm:$0xff]
    %v2080 = vld [vmem:[#allocation11 + $0x1210] sm:$0xff]
    %v2081 = vld [vmem:[#allocation11 + $0x1218] sm:$0xff]
    %v2082 = vld [vmem:[#allocation11 + $0x1220] sm:$0xff]
    %v2083 = vld [vmem:[#allocation11 + $0x1228] sm:$0xff]
    %v2084 = vld [vmem:[#allocation11 + $0x1230] sm:$0xff]
    %v2085 = vld [vmem:[#allocation11 + $0x1238] sm:$0xff]
    %v2086 = vld [vmem:[#allocation11 + $0x1240] sm:$0xff]
    %v2087 = vld [vmem:[#allocation11 + $0x1248] sm:$0xff]
    %v2088 = vld [vmem:[#allocation11 + $0x1250] sm:$0xff]
    %v2089 = vld [vmem:[#allocation11 + $0x1258] sm:$0xff]
    %v2090 = vld [vmem:[#allocation11 + $0x1260] sm:$0xff]
    %v2091 = vld [vmem:[#allocation11 + $0x1268] sm:$0xff]
    %v2092 = vld [vmem:[#allocation11 + $0x1270] sm:$0xff]
    %v2093 = vld [vmem:[#allocation11 + $0x1278] sm:$0xff]
    %v2094 = vld [vmem:[#allocation11 + $0x1280] sm:$0xff]
    %v2095 = vld [vmem:[#allocation11 + $0x1288] sm:$0xff]
    %v2096 = vld [vmem:[#allocation11 + $0x1290] sm:$0xff]
    %v2097 = vld [vmem:[#allocation11 + $0x1298] sm:$0xff]
    %v2098 = vld [vmem:[#allocation11 + $0x12a0] sm:$0xff]
    %v2099 = vld [vmem:[#allocation11 + $0x12a8] sm:$0xff]
    %v2100 = vld [vmem:[#allocation11 + $0x12b0] sm:$0xff]
    %v2101 = vld [vmem:[#allocation11 + $0x12b8] sm:$0xff]
    %v2102 = vld [vmem:[#allocation11 + $0x12c0] sm:$0xff]
    %v2103 = vld [vmem:[#allocation11 + $0x12c8] sm:$0xff]
    %v2104 = vld [vmem:[#allocation11 + $0x12d0] sm:$0xff]
    %v2105 = vld [vmem:[#allocation11 + $0x12d8] sm:$0xff]
    %v2106 = vld [vmem:[#allocation11 + $0x12e0] sm:$0xff]
    %v2107 = vld [vmem:[#allocation11 + $0x12e8] sm:$0xff]
    %v2108 = vld [vmem:[#allocation11 + $0x12f0] sm:$0xff]
    %v2109 = vld [vmem:[#allocation11 + $0x12f8] sm:$0xff]
    %v2110 = vld [vmem:[#allocation11 + $0x1300] sm:$0xff]
    %v2111 = vld [vmem:[#allocation11 + $0x1308] sm:$0xff]
    %v2112 = vld [vmem:[#allocation11 + $0x1310] sm:$0xff]
    %v2113 = vld [vmem:[#allocation11 + $0x1318] sm:$0xff]
    %v2114 = vld [vmem:[#allocation11 + $0x1320] sm:$0xff]
    %v2115 = vld [vmem:[#allocation11 + $0x1328] sm:$0xff]
    %v2116 = vld [vmem:[#allocation11 + $0x1330] sm:$0xff]
    %v2117 = vld [vmem:[#allocation11 + $0x1338] sm:$0xff]
    %v2118 = vld [vmem:[#allocation11 + $0x1340] sm:$0xff]
    %v2119 = vld [vmem:[#allocation11 + $0x1348] sm:$0xff]
    %v2120 = vld [vmem:[#allocation11 + $0x1350] sm:$0xff]
    %v2121 = vld [vmem:[#allocation11 + $0x1358] sm:$0xff]
    %v2122 = vld [vmem:[#allocation11 + $0x1360] sm:$0xff]
    %v2123 = vld [vmem:[#allocation11 + $0x1368] sm:$0xff]
    %v2124 = vld [vmem:[#allocation11 + $0x1370] sm:$0xff]
    %v2125 = vld [vmem:[#allocation11 + $0x1378] sm:$0xff]
    %v2126 = vld [vmem:[#allocation11 + $0x1380] sm:$0xff]
    %v2127 = vld [vmem:[#allocation11 + $0x1388] sm:$0xff]
    %v2128 = vld [vmem:[#allocation11 + $0x1390] sm:$0xff]
    %v2129 = vld [vmem:[#allocation11 + $0x1398] sm:$0xff]
    %v2130 = vld [vmem:[#allocation11 + $0x13a0] sm:$0xff]
    %v2131 = vld [vmem:[#allocation11 + $0x13a8] sm:$0xff]
    %v2132 = vld [vmem:[#allocation11 + $0x13b0] sm:$0xff]
    %v2133 = vld [vmem:[#allocation11 + $0x13b8] sm:$0xff]
    %v2134 = vld [vmem:[#allocation11 + $0x13c0] sm:$0xff]
    %v2135 = vld [vmem:[#allocation11 + $0x13c8] sm:$0xff]
    %v2136 = vld [vmem:[#allocation11 + $0x13d0] sm:$0xff]
    %v2137 = vld [vmem:[#allocation11 + $0x13d8] sm:$0xff]
    %v2138 = vld [vmem:[#allocation11 + $0x13e0] sm:$0xff]
    %v2139 = vld [vmem:[#allocation11 + $0x13e8] sm:$0xff]
    %v2140 = vld [vmem:[#allocation11 + $0x13f0] sm:$0xff]
    %v2141 = vld [vmem:[#allocation11 + $0x13f8] sm:$0xff]
    %v2142 = vld [vmem:[#allocation11 + $0x1400] sm:$0xff]
    %v2143 = vld [vmem:[#allocation11 + $0x1408] sm:$0xff]
    %v2144 = vld [vmem:[#allocation11 + $0x1410] sm:$0xff]
    %v2145 = vld [vmem:[#allocation11 + $0x1418] sm:$0xff]
    %v2146 = vld [vmem:[#allocation11 + $0x1420] sm:$0xff]
    %v2147 = vld [vmem:[#allocation11 + $0x1428] sm:$0xff]
    %v2148 = vld [vmem:[#allocation11 + $0x1430] sm:$0xff]
    %v2149 = vld [vmem:[#allocation11 + $0x1438] sm:$0xff]
    %v2150 = vld [vmem:[#allocation11 + $0x1440] sm:$0xff]
    %v2151 = vld [vmem:[#allocation11 + $0x1448] sm:$0xff]
    %v2152 = vld [vmem:[#allocation11 + $0x1450] sm:$0xff]
    %v2153 = vld [vmem:[#allocation11 + $0x1458] sm:$0xff]
    %v2154 = vld [vmem:[#allocation11 + $0x1460] sm:$0xff]
    %v2155 = vld [vmem:[#allocation11 + $0x1468] sm:$0xff]
    %v2156 = vld [vmem:[#allocation11 + $0x1470] sm:$0xff]
    %v2157 = vld [vmem:[#allocation11 + $0x1478] sm:$0xff]
    %v2158 = vld [vmem:[#allocation11 + $0x1480] sm:$0xff]
    %v2159 = vld [vmem:[#allocation11 + $0x1488] sm:$0xff]
    %v2160 = vld [vmem:[#allocation11 + $0x1490] sm:$0xff]
    %v2161 = vld [vmem:[#allocation11 + $0x1498] sm:$0xff]
    %v2162 = vld [vmem:[#allocation11 + $0x14a0] sm:$0xff]
    %v2163 = vld [vmem:[#allocation11 + $0x14a8] sm:$0xff]
    %v2164 = vld [vmem:[#allocation11 + $0x14b0] sm:$0xff]
    %v2165 = vld [vmem:[#allocation11 + $0x14b8] sm:$0xff]
    %v2166 = vld [vmem:[#allocation11 + $0x14c0] sm:$0xff]
    %v2167 = vld [vmem:[#allocation11 + $0x14c8] sm:$0xff]
    %v2168 = vld [vmem:[#allocation11 + $0x14d0] sm:$0xff]
    %v2169 = vld [vmem:[#allocation11 + $0x14d8] sm:$0xff]
    %v2170 = vld [vmem:[#allocation11 + $0x14e0] sm:$0xff]
    %v2171 = vld [vmem:[#allocation11 + $0x14e8] sm:$0xff]
    %v2172 = vld [vmem:[#allocation11 + $0x14f0] sm:$0xff]
    %v2173 = vld [vmem:[#allocation11 + $0x14f8] sm:$0xff]
    %v2174 = vld [vmem:[#allocation11 + $0x1500] sm:$0xff]
    %v2175 = vld [vmem:[#allocation11 + $0x1508] sm:$0xff]
    %v2176 = vld [vmem:[#allocation11 + $0x1510] sm:$0xff]
    %v2177 = vld [vmem:[#allocation11 + $0x1518] sm:$0xff]
    %v2178 = vld [vmem:[#allocation11 + $0x1520] sm:$0xff]
    %v2179 = vld [vmem:[#allocation11 + $0x1528] sm:$0xff]
    %v2180 = vld [vmem:[#allocation11 + $0x1530] sm:$0xff]
    %v2181 = vld [vmem:[#allocation11 + $0x1538] sm:$0xff]
    %v2182 = vld [vmem:[#allocation11 + $0x1540] sm:$0xff]
    %v2183 = vld [vmem:[#allocation11 + $0x1548] sm:$0xff]
    %v2184 = vld [vmem:[#allocation11 + $0x1550] sm:$0xff]
    %v2185 = vld [vmem:[#allocation11 + $0x1558] sm:$0xff]
    %v2186 = vld [vmem:[#allocation11 + $0x1560] sm:$0xff]
    %v2187 = vld [vmem:[#allocation11 + $0x1568] sm:$0xff]
    %v2188 = vld [vmem:[#allocation11 + $0x1570] sm:$0xff]
    %v2189 = vld [vmem:[#allocation11 + $0x1578] sm:$0xff]
    %v2190 = vld [vmem:[#allocation11 + $0x1580] sm:$0xff]
    %v2191 = vld [vmem:[#allocation11 + $0x1588] sm:$0xff]
    %v2192 = vld [vmem:[#allocation11 + $0x1590] sm:$0xff]
    %v2193 = vld [vmem:[#allocation11 + $0x1598] sm:$0xff]
    %v2194 = vld [vmem:[#allocation11 + $0x15a0] sm:$0xff]
    %v2195 = vld [vmem:[#allocation11 + $0x15a8] sm:$0xff]
    %v2196 = vld [vmem:[#allocation11 + $0x15b0] sm:$0xff]
    %v2197 = vld [vmem:[#allocation11 + $0x15b8] sm:$0xff]
    %v2198 = vld [vmem:[#allocation11 + $0x15c0] sm:$0xff]
    %v2199 = vld [vmem:[#allocation11 + $0x15c8] sm:$0xff]
    %v2200 = vld [vmem:[#allocation11 + $0x15d0] sm:$0xff]
    %v2201 = vld [vmem:[#allocation11 + $0x15d8] sm:$0xff]
    %v2202 = vld [vmem:[#allocation11 + $0x15e0] sm:$0xff]
    %v2203 = vld [vmem:[#allocation11 + $0x15e8] sm:$0xff]
    %v2204 = vld [vmem:[#allocation11 + $0x15f0] sm:$0xff]
    %v2205 = vld [vmem:[#allocation11 + $0x15f8] sm:$0xff]
    %v2206 = vld [vmem:[#allocation11 + $0x1600] sm:$0xff]
    %v2207 = vld [vmem:[#allocation11 + $0x1608] sm:$0xff]
    %v2208 = vld [vmem:[#allocation11 + $0x1610] sm:$0xff]
    %v2209 = vld [vmem:[#allocation11 + $0x1618] sm:$0xff]
    %v2210 = vld [vmem:[#allocation11 + $0x1620] sm:$0xff]
    %v2211 = vld [vmem:[#allocation11 + $0x1628] sm:$0xff]
    %v2212 = vld [vmem:[#allocation11 + $0x1630] sm:$0xff]
    %v2213 = vld [vmem:[#allocation11 + $0x1638] sm:$0xff]
    %v2214 = vld [vmem:[#allocation11 + $0x1640] sm:$0xff]
    %v2215 = vld [vmem:[#allocation11 + $0x1648] sm:$0xff]
    %v2216 = vld [vmem:[#allocation11 + $0x1650] sm:$0xff]
    %v2217 = vld [vmem:[#allocation11 + $0x1658] sm:$0xff]
    %v2218 = vld [vmem:[#allocation11 + $0x1660] sm:$0xff]
    %v2219 = vld [vmem:[#allocation11 + $0x1668] sm:$0xff]
    %v2220 = vld [vmem:[#allocation11 + $0x1670] sm:$0xff]
    %v2221 = vld [vmem:[#allocation11 + $0x1678] sm:$0xff]
    %v2222 = vld [vmem:[#allocation11 + $0x1680] sm:$0xff]
    %v2223 = vld [vmem:[#allocation11 + $0x1688] sm:$0xff]
    %v2224 = vld [vmem:[#allocation11 + $0x1690] sm:$0xff]
    %v2225 = vld [vmem:[#allocation11 + $0x1698] sm:$0xff]
    %v2226 = vld [vmem:[#allocation11 + $0x16a0] sm:$0xff]
    %v2227 = vld [vmem:[#allocation11 + $0x16a8] sm:$0xff]
    %v2228 = vld [vmem:[#allocation11 + $0x16b0] sm:$0xff]
    %v2229 = vld [vmem:[#allocation11 + $0x16b8] sm:$0xff]
    %v2230 = vld [vmem:[#allocation11 + $0x16c0] sm:$0xff]
    %v2231 = vld [vmem:[#allocation11 + $0x16c8] sm:$0xff]
    %v2232 = vld [vmem:[#allocation11 + $0x16d0] sm:$0xff]
    %v2233 = vld [vmem:[#allocation11 + $0x16d8] sm:$0xff]
    %v2234 = vld [vmem:[#allocation11 + $0x16e0] sm:$0xff]
    %v2235 = vld [vmem:[#allocation11 + $0x16e8] sm:$0xff]
    %v2236 = vld [vmem:[#allocation11 + $0x16f0] sm:$0xff]
    %v2237 = vld [vmem:[#allocation11 + $0x16f8] sm:$0xff]
    %v2238 = vld [vmem:[#allocation11 + $0x1700] sm:$0xff]
    %v2239 = vld [vmem:[#allocation11 + $0x1708] sm:$0xff]
    %v2240 = vld [vmem:[#allocation11 + $0x1710] sm:$0xff]
    %v2241 = vld [vmem:[#allocation11 + $0x1718] sm:$0xff]
    %v2242 = vld [vmem:[#allocation11 + $0x1720] sm:$0xff]
    %v2243 = vld [vmem:[#allocation11 + $0x1728] sm:$0xff]
    %v2244 = vld [vmem:[#allocation11 + $0x1730] sm:$0xff]
    %v2245 = vld [vmem:[#allocation11 + $0x1738] sm:$0xff]
    %v2246 = vld [vmem:[#allocation11 + $0x1740] sm:$0xff]
    %v2247 = vld [vmem:[#allocation11 + $0x1748] sm:$0xff]
    %v2248 = vld [vmem:[#allocation11 + $0x1750] sm:$0xff]
    %v2249 = vld [vmem:[#allocation11 + $0x1758] sm:$0xff]
    %v2250 = vld [vmem:[#allocation11 + $0x1760] sm:$0xff]
    %v2251 = vld [vmem:[#allocation11 + $0x1768] sm:$0xff]
    %v2252 = vld [vmem:[#allocation11 + $0x1770] sm:$0xff]
    %v2253 = vld [vmem:[#allocation11 + $0x1778] sm:$0xff]
    %v2254 = vld [vmem:[#allocation11 + $0x1780] sm:$0xff]
    %v2255 = vld [vmem:[#allocation11 + $0x1788] sm:$0xff]
    %v2256 = vld [vmem:[#allocation11 + $0x1790] sm:$0xff]
    %v2257 = vld [vmem:[#allocation11 + $0x1798] sm:$0xff]
    %v2258 = vld [vmem:[#allocation11 + $0x17a0] sm:$0xff]
    %v2259 = vld [vmem:[#allocation11 + $0x17a8] sm:$0xff]
    %v2260 = vld [vmem:[#allocation11 + $0x17b0] sm:$0xff]
    %v2261 = vld [vmem:[#allocation11 + $0x17b8] sm:$0xff]
    %v2262 = vld [vmem:[#allocation11 + $0x17c0] sm:$0xff]
    %v2263 = vld [vmem:[#allocation11 + $0x17c8] sm:$0xff]
    %v2264 = vld [vmem:[#allocation11 + $0x17d0] sm:$0xff]
    %v2265 = vld [vmem:[#allocation11 + $0x17d8] sm:$0xff]
    %v2266 = vld [vmem:[#allocation11 + $0x17e0] sm:$0xff]
    %v2267 = vld [vmem:[#allocation11 + $0x17e8] sm:$0xff]
    %v2268 = vld [vmem:[#allocation11 + $0x17f0] sm:$0xff]
    %v2269 = vld [vmem:[#allocation11 + $0x17f8] sm:$0xff]
    %v2270 = vld [vmem:[#allocation11 + $0x1800] sm:$0xff]
    %v2271 = vld [vmem:[#allocation11 + $0x1808] sm:$0xff]
    %v2272 = vld [vmem:[#allocation11 + $0x1810] sm:$0xff]
    %v2273 = vld [vmem:[#allocation11 + $0x1818] sm:$0xff]
    %v2274 = vld [vmem:[#allocation11 + $0x1820] sm:$0xff]
    %v2275 = vld [vmem:[#allocation11 + $0x1828] sm:$0xff]
    %v2276 = vld [vmem:[#allocation11 + $0x1830] sm:$0xff]
    %v2277 = vld [vmem:[#allocation11 + $0x1838] sm:$0xff]
    %v2278 = vld [vmem:[#allocation11 + $0x1840] sm:$0xff]
    %v2279 = vld [vmem:[#allocation11 + $0x1848] sm:$0xff]
    %v2280 = vld [vmem:[#allocation11 + $0x1850] sm:$0xff]
    %v2281 = vld [vmem:[#allocation11 + $0x1858] sm:$0xff]
    %v2282 = vld [vmem:[#allocation11 + $0x1860] sm:$0xff]
    %v2283 = vld [vmem:[#allocation11 + $0x1868] sm:$0xff]
    %v2284 = vld [vmem:[#allocation11 + $0x1870] sm:$0xff]
    %v2285 = vld [vmem:[#allocation11 + $0x1878] sm:$0xff]
    %v2286 = vld [vmem:[#allocation11 + $0x1880] sm:$0xff]
    %v2287 = vld [vmem:[#allocation11 + $0x1888] sm:$0xff]
    %v2288 = vld [vmem:[#allocation11 + $0x1890] sm:$0xff]
    %v2289 = vld [vmem:[#allocation11 + $0x1898] sm:$0xff]
    %v2290 = vld [vmem:[#allocation11 + $0x18a0] sm:$0xff]
    %v2291 = vld [vmem:[#allocation11 + $0x18a8] sm:$0xff]
    %v2292 = vld [vmem:[#allocation11 + $0x18b0] sm:$0xff]
    %v2293 = vld [vmem:[#allocation11 + $0x18b8] sm:$0xff]
    %v2294 = vld [vmem:[#allocation11 + $0x18c0] sm:$0xff]
    %v2295 = vld [vmem:[#allocation11 + $0x18c8] sm:$0xff]
    %v2296 = vld [vmem:[#allocation11 + $0x18d0] sm:$0xff]
    %v2297 = vld [vmem:[#allocation11 + $0x18d8] sm:$0xff]
    %v2298 = vld [vmem:[#allocation11 + $0x18e0] sm:$0xff]
    %v2299 = vld [vmem:[#allocation11 + $0x18e8] sm:$0xff]
    %v2300 = vld [vmem:[#allocation11 + $0x18f0] sm:$0xff]
    %v2301 = vld [vmem:[#allocation11 + $0x18f8] sm:$0xff]
    %v2302 = vld [vmem:[#allocation11 + $0x1900] sm:$0xff]
    %v2303 = vld [vmem:[#allocation11 + $0x1908] sm:$0xff]
    %v2304 = vld [vmem:[#allocation11 + $0x1910] sm:$0xff]
    %v2305 = vld [vmem:[#allocation11 + $0x1918] sm:$0xff]
    %v2306 = vld [vmem:[#allocation11 + $0x1920] sm:$0xff]
    %v2307 = vld [vmem:[#allocation11 + $0x1928] sm:$0xff]
    %v2308 = vld [vmem:[#allocation11 + $0x1930] sm:$0xff]
    %v2309 = vld [vmem:[#allocation11 + $0x1938] sm:$0xff]
    %v2310 = vld [vmem:[#allocation11 + $0x1940] sm:$0xff]
    %v2311 = vld [vmem:[#allocation11 + $0x1948] sm:$0xff]
    %v2312 = vld [vmem:[#allocation11 + $0x1950] sm:$0xff]
    %v2313 = vld [vmem:[#allocation11 + $0x1958] sm:$0xff]
    %v2314 = vld [vmem:[#allocation11 + $0x1960] sm:$0xff]
    %v2315 = vld [vmem:[#allocation11 + $0x1968] sm:$0xff]
    %v2316 = vld [vmem:[#allocation11 + $0x1970] sm:$0xff]
    %v2317 = vld [vmem:[#allocation11 + $0x1978] sm:$0xff]
    %v2318 = vld [vmem:[#allocation11 + $0x1980] sm:$0xff]
    %v2319 = vld [vmem:[#allocation11 + $0x1988] sm:$0xff]
    %v2320 = vld [vmem:[#allocation11 + $0x1990] sm:$0xff]
    %v2321 = vld [vmem:[#allocation11 + $0x1998] sm:$0xff]
    %v2322 = vld [vmem:[#allocation11 + $0x19a0] sm:$0xff]
    %v2323 = vld [vmem:[#allocation11 + $0x19a8] sm:$0xff]
    %v2324 = vld [vmem:[#allocation11 + $0x19b0] sm:$0xff]
    %v2325 = vld [vmem:[#allocation11 + $0x19b8] sm:$0xff]
    %v2326 = vld [vmem:[#allocation11 + $0x19c0] sm:$0xff]
    %v2327 = vld [vmem:[#allocation11 + $0x19c8] sm:$0xff]
    %v2328 = vld [vmem:[#allocation11 + $0x19d0] sm:$0xff]
    %v2329 = vld [vmem:[#allocation11 + $0x19d8] sm:$0xff]
    %v2330 = vld [vmem:[#allocation11 + $0x19e0] sm:$0xff]
    %v2331 = vld [vmem:[#allocation11 + $0x19e8] sm:$0xff]
    %v2332 = vld [vmem:[#allocation11 + $0x19f0] sm:$0xff]
    %v2333 = vld [vmem:[#allocation11 + $0x19f8] sm:$0xff]
    %v2334 = vld [vmem:[#allocation11 + $0x1a00] sm:$0xff]
    %v2335 = vld [vmem:[#allocation11 + $0x1a08] sm:$0xff]
    %v2336 = vld [vmem:[#allocation11 + $0x1a10] sm:$0xff]
    %v2337 = vld [vmem:[#allocation11 + $0x1a18] sm:$0xff]
    %v2338 = vld [vmem:[#allocation11 + $0x1a20] sm:$0xff]
    %v2339 = vld [vmem:[#allocation11 + $0x1a28] sm:$0xff]
    %v2340 = vld [vmem:[#allocation11 + $0x1a30] sm:$0xff]
    %v2341 = vld [vmem:[#allocation11 + $0x1a38] sm:$0xff]
    %v2342 = vld [vmem:[#allocation11 + $0x1a40] sm:$0xff]
    %v2343 = vld [vmem:[#allocation11 + $0x1a48] sm:$0xff]
    %v2344 = vld [vmem:[#allocation11 + $0x1a50] sm:$0xff]
    %v2345 = vld [vmem:[#allocation11 + $0x1a58] sm:$0xff]
    %v2346 = vld [vmem:[#allocation11 + $0x1a60] sm:$0xff]
    %v2347 = vld [vmem:[#allocation11 + $0x1a68] sm:$0xff]
    %v2348 = vld [vmem:[#allocation11 + $0x1a70] sm:$0xff]
    %v2349 = vld [vmem:[#allocation11 + $0x1a78] sm:$0xff]
    %v2350 = vld [vmem:[#allocation11 + $0x1a80] sm:$0xff]
    %v2351 = vld [vmem:[#allocation11 + $0x1a88] sm:$0xff]
    %v2352 = vld [vmem:[#allocation11 + $0x1a90] sm:$0xff]
    %v2353 = vld [vmem:[#allocation11 + $0x1a98] sm:$0xff]
    %v2354 = vld [vmem:[#allocation11 + $0x1aa0] sm:$0xff]
    %v2355 = vld [vmem:[#allocation11 + $0x1aa8] sm:$0xff]
    %v2356 = vld [vmem:[#allocation11 + $0x1ab0] sm:$0xff]
    %v2357 = vld [vmem:[#allocation11 + $0x1ab8] sm:$0xff]
    %v2358 = vld [vmem:[#allocation11 + $0x1ac0] sm:$0xff]
    %v2359 = vld [vmem:[#allocation11 + $0x1ac8] sm:$0xff]
    %v2360 = vld [vmem:[#allocation11 + $0x1ad0] sm:$0xff]
    %v2361 = vld [vmem:[#allocation11 + $0x1ad8] sm:$0xff]
    %v2362 = vld [vmem:[#allocation11 + $0x1ae0] sm:$0xff]
    %v2363 = vld [vmem:[#allocation11 + $0x1ae8] sm:$0xff]
    %v2364 = vld [vmem:[#allocation11 + $0x1af0] sm:$0xff]
    %v2365 = vld [vmem:[#allocation11 + $0x1af8] sm:$0xff]
    %v2366 = vld [vmem:[#allocation11 + $0x1b00] sm:$0xff]
    %v2367 = vld [vmem:[#allocation11 + $0x1b08] sm:$0xff]
    %v2368 = vld [vmem:[#allocation11 + $0x1b10] sm:$0xff]
    %v2369 = vld [vmem:[#allocation11 + $0x1b18] sm:$0xff]
    %v2370 = vld [vmem:[#allocation11 + $0x1b20] sm:$0xff]
    %v2371 = vld [vmem:[#allocation11 + $0x1b28] sm:$0xff]
    %v2372 = vld [vmem:[#allocation11 + $0x1b30] sm:$0xff]
    %v2373 = vld [vmem:[#allocation11 + $0x1b38] sm:$0xff]
    %v2374 = vld [vmem:[#allocation11 + $0x1b40] sm:$0xff]
    %v2375 = vld [vmem:[#allocation11 + $0x1b48] sm:$0xff]
    %v2376 = vld [vmem:[#allocation11 + $0x1b50] sm:$0xff]
    %v2377 = vld [vmem:[#allocation11 + $0x1b58] sm:$0xff]
    %v2378 = vld [vmem:[#allocation11 + $0x1b60] sm:$0xff]
    %v2379 = vld [vmem:[#allocation11 + $0x1b68] sm:$0xff]
    %v2380 = vld [vmem:[#allocation11 + $0x1b70] sm:$0xff]
    %v2381 = vld [vmem:[#allocation11 + $0x1b78] sm:$0xff]
    %v2382 = vld [vmem:[#allocation11 + $0x1b80] sm:$0xff]
    %v2383 = vld [vmem:[#allocation11 + $0x1b88] sm:$0xff]
    %v2384 = vld [vmem:[#allocation11 + $0x1b90] sm:$0xff]
    %v2385 = vld [vmem:[#allocation11 + $0x1b98] sm:$0xff]
    %v2386 = vld [vmem:[#allocation11 + $0x1ba0] sm:$0xff]
    %v2387 = vld [vmem:[#allocation11 + $0x1ba8] sm:$0xff]
    %v2388 = vld [vmem:[#allocation11 + $0x1bb0] sm:$0xff]
    %v2389 = vld [vmem:[#allocation11 + $0x1bb8] sm:$0xff]
    %v2390 = vld [vmem:[#allocation11 + $0x1bc0] sm:$0xff]
    %v2391 = vld [vmem:[#allocation11 + $0x1bc8] sm:$0xff]
    %v2392 = vld [vmem:[#allocation11 + $0x1bd0] sm:$0xff]
    %v2393 = vld [vmem:[#allocation11 + $0x1bd8] sm:$0xff]
    %v2394 = vld [vmem:[#allocation11 + $0x1be0] sm:$0xff]
    %v2395 = vld [vmem:[#allocation11 + $0x1be8] sm:$0xff]
    %v2396 = vld [vmem:[#allocation11 + $0x1bf0] sm:$0xff]
    %v2397 = vld [vmem:[#allocation11 + $0x1bf8] sm:$0xff]
    %v2398 = vld [vmem:[#allocation11 + $0x1c00] sm:$0xff]
    %v2399 = vld [vmem:[#allocation11 + $0x1c08] sm:$0xff]
    %v2400 = vld [vmem:[#allocation11 + $0x1c10] sm:$0xff]
    %v2401 = vld [vmem:[#allocation11 + $0x1c18] sm:$0xff]
    %v2402 = vld [vmem:[#allocation11 + $0x1c20] sm:$0xff]
    %v2403 = vld [vmem:[#allocation11 + $0x1c28] sm:$0xff]
    %v2404 = vld [vmem:[#allocation11 + $0x1c30] sm:$0xff]
    %v2405 = vld [vmem:[#allocation11 + $0x1c38] sm:$0xff]
    %v2406 = vld [vmem:[#allocation11 + $0x1c40] sm:$0xff]
    %v2407 = vld [vmem:[#allocation11 + $0x1c48] sm:$0xff]
    %v2408 = vld [vmem:[#allocation11 + $0x1c50] sm:$0xff]
    %v2409 = vld [vmem:[#allocation11 + $0x1c58] sm:$0xff]
    %v2410 = vld [vmem:[#allocation11 + $0x1c60] sm:$0xff]
    %v2411 = vld [vmem:[#allocation11 + $0x1c68] sm:$0xff]
    %v2412 = vld [vmem:[#allocation11 + $0x1c70] sm:$0xff]
    %v2413 = vld [vmem:[#allocation11 + $0x1c78] sm:$0xff]
    %v2414 = vld [vmem:[#allocation11 + $0x1c80] sm:$0xff]
    %v2415 = vld [vmem:[#allocation11 + $0x1c88] sm:$0xff]
    %v2416 = vld [vmem:[#allocation11 + $0x1c90] sm:$0xff]
    %v2417 = vld [vmem:[#allocation11 + $0x1c98] sm:$0xff]
    %v2418 = vld [vmem:[#allocation11 + $0x1ca0] sm:$0xff]
    %v2419 = vld [vmem:[#allocation11 + $0x1ca8] sm:$0xff]
    %v2420 = vld [vmem:[#allocation11 + $0x1cb0] sm:$0xff]
    %v2421 = vld [vmem:[#allocation11 + $0x1cb8] sm:$0xff]
    %v2422 = vld [vmem:[#allocation11 + $0x1cc0] sm:$0xff]
    %v2423 = vld [vmem:[#allocation11 + $0x1cc8] sm:$0xff]
    %v2424 = vld [vmem:[#allocation11 + $0x1cd0] sm:$0xff]
    %v2425 = vld [vmem:[#allocation11 + $0x1cd8] sm:$0xff]
    %v2426 = vld [vmem:[#allocation11 + $0x1ce0] sm:$0xff]
    %v2427 = vld [vmem:[#allocation11 + $0x1ce8] sm:$0xff]
    %v2428 = vld [vmem:[#allocation11 + $0x1cf0] sm:$0xff]
    %v2429 = vld [vmem:[#allocation11 + $0x1cf8] sm:$0xff]
    %v2430 = vld [vmem:[#allocation11 + $0x1d00] sm:$0xff]
    %v2431 = vld [vmem:[#allocation11 + $0x1d08] sm:$0xff]
    %v2432 = vld [vmem:[#allocation11 + $0x1d10] sm:$0xff]
    %v2433 = vld [vmem:[#allocation11 + $0x1d18] sm:$0xff]
    %v2434 = vld [vmem:[#allocation11 + $0x1d20] sm:$0xff]
    %v2435 = vld [vmem:[#allocation11 + $0x1d28] sm:$0xff]
    %v2436 = vld [vmem:[#allocation11 + $0x1d30] sm:$0xff]
    %v2437 = vld [vmem:[#allocation11 + $0x1d38] sm:$0xff]
    %v2438 = vld [vmem:[#allocation11 + $0x1d40] sm:$0xff]
    %v2439 = vld [vmem:[#allocation11 + $0x1d48] sm:$0xff]
    %v2440 = vld [vmem:[#allocation11 + $0x1d50] sm:$0xff]
    %v2441 = vld [vmem:[#allocation11 + $0x1d58] sm:$0xff]
    %v2442 = vld [vmem:[#allocation11 + $0x1d60] sm:$0xff]
    %v2443 = vld [vmem:[#allocation11 + $0x1d68] sm:$0xff]
    %v2444 = vld [vmem:[#allocation11 + $0x1d70] sm:$0xff]
    %v2445 = vld [vmem:[#allocation11 + $0x1d78] sm:$0xff]
    %v2446 = vld [vmem:[#allocation11 + $0x1d80] sm:$0xff]
    %v2447 = vld [vmem:[#allocation11 + $0x1d88] sm:$0xff]
    %v2448 = vld [vmem:[#allocation11 + $0x1d90] sm:$0xff]
    %v2449 = vld [vmem:[#allocation11 + $0x1d98] sm:$0xff]
    %v2450 = vld [vmem:[#allocation11 + $0x1da0] sm:$0xff]
    %v2451 = vld [vmem:[#allocation11 + $0x1da8] sm:$0xff]
    %v2452 = vld [vmem:[#allocation11 + $0x1db0] sm:$0xff]
    %v2453 = vld [vmem:[#allocation11 + $0x1db8] sm:$0xff]
    %v2454 = vld [vmem:[#allocation11 + $0x1dc0] sm:$0xff]
    %v2455 = vld [vmem:[#allocation11 + $0x1dc8] sm:$0xff]
    %v2456 = vld [vmem:[#allocation11 + $0x1dd0] sm:$0xff]
    %v2457 = vld [vmem:[#allocation11 + $0x1dd8] sm:$0xff]
    %v2458 = vld [vmem:[#allocation11 + $0x1de0] sm:$0xff]
    %v2459 = vld [vmem:[#allocation11 + $0x1de8] sm:$0xff]
    %v2460 = vld [vmem:[#allocation11 + $0x1df0] sm:$0xff]
    %v2461 = vld [vmem:[#allocation11 + $0x1df8] sm:$0xff]
    %v2462 = vld [vmem:[#allocation11 + $0x1e00] sm:$0xff]
    %v2463 = vld [vmem:[#allocation11 + $0x1e08] sm:$0xff]
    %v2464 = vld [vmem:[#allocation11 + $0x1e10] sm:$0xff]
    %v2465 = vld [vmem:[#allocation11 + $0x1e18] sm:$0xff]
    %v2466 = vld [vmem:[#allocation11 + $0x1e20] sm:$0xff]
    %v2467 = vld [vmem:[#allocation11 + $0x1e28] sm:$0xff]
    %v2468 = vld [vmem:[#allocation11 + $0x1e30] sm:$0xff]
    %v2469 = vld [vmem:[#allocation11 + $0x1e38] sm:$0xff]
    %v2470 = vld [vmem:[#allocation11 + $0x1e40] sm:$0xff]
    %v2471 = vld [vmem:[#allocation11 + $0x1e48] sm:$0xff]
    %v2472 = vld [vmem:[#allocation11 + $0x1e50] sm:$0xff]
    %v2473 = vld [vmem:[#allocation11 + $0x1e58] sm:$0xff]
    %v2474 = vld [vmem:[#allocation11 + $0x1e60] sm:$0xff]
    %v2475 = vld [vmem:[#allocation11 + $0x1e68] sm:$0xff]
    %v2476 = vld [vmem:[#allocation11 + $0x1e70] sm:$0xff]
    %v2477 = vld [vmem:[#allocation11 + $0x1e78] sm:$0xff]
    %v2478 = vld [vmem:[#allocation11 + $0x1e80] sm:$0xff]
    %v2479 = vld [vmem:[#allocation11 + $0x1e88] sm:$0xff]
    %v2480 = vld [vmem:[#allocation11 + $0x1e90] sm:$0xff]
    %v2481 = vld [vmem:[#allocation11 + $0x1e98] sm:$0xff]
    %v2482 = vld [vmem:[#allocation11 + $0x1ea0] sm:$0xff]
    %v2483 = vld [vmem:[#allocation11 + $0x1ea8] sm:$0xff]
    %v2484 = vld [vmem:[#allocation11 + $0x1eb0] sm:$0xff]
    %v2485 = vld [vmem:[#allocation11 + $0x1eb8] sm:$0xff]
    %v2486 = vld [vmem:[#allocation11 + $0x1ec0] sm:$0xff]
    %v2487 = vld [vmem:[#allocation11 + $0x1ec8] sm:$0xff]
    %v2488 = vld [vmem:[#allocation11 + $0x1ed0] sm:$0xff]
    %v2489 = vld [vmem:[#allocation11 + $0x1ed8] sm:$0xff]
    %v2490 = vld [vmem:[#allocation11 + $0x1ee0] sm:$0xff]
    %v2491 = vld [vmem:[#allocation11 + $0x1ee8] sm:$0xff]
    %v2492 = vld [vmem:[#allocation11 + $0x1ef0] sm:$0xff]
    %v2493 = vld [vmem:[#allocation11 + $0x1ef8] sm:$0xff]
    %v2494 = vld [vmem:[#allocation11 + $0x1f00] sm:$0xff]
    %v2495 = vld [vmem:[#allocation11 + $0x1f08] sm:$0xff]
    %v2496 = vld [vmem:[#allocation11 + $0x1f10] sm:$0xff]
    %v2497 = vld [vmem:[#allocation11 + $0x1f18] sm:$0xff]
    %v2498 = vld [vmem:[#allocation11 + $0x1f20] sm:$0xff]
    %v2499 = vld [vmem:[#allocation11 + $0x1f28] sm:$0xff]
    %v2500 = vld [vmem:[#allocation11 + $0x1f30] sm:$0xff]
    %v2501 = vld [vmem:[#allocation11 + $0x1f38] sm:$0xff]
    %v2502 = vld [vmem:[#allocation11 + $0x1f40] sm:$0xff]
    %v2503 = vld [vmem:[#allocation11 + $0x1f48] sm:$0xff]
    %v2504 = vld [vmem:[#allocation11 + $0x1f50] sm:$0xff]
    %v2505 = vld [vmem:[#allocation11 + $0x1f58] sm:$0xff]
    %v2506 = vld [vmem:[#allocation11 + $0x1f60] sm:$0xff]
    %v2507 = vld [vmem:[#allocation11 + $0x1f68] sm:$0xff]
    %v2508 = vld [vmem:[#allocation11 + $0x1f70] sm:$0xff]
    %v2509 = vld [vmem:[#allocation11 + $0x1f78] sm:$0xff]
    %v2510 = vld [vmem:[#allocation11 + $0x1f80] sm:$0xff]
    %v2511 = vld [vmem:[#allocation11 + $0x1f88] sm:$0xff]
    %v2512 = vld [vmem:[#allocation11 + $0x1f90] sm:$0xff]
    %v2513 = vld [vmem:[#allocation11 + $0x1f98] sm:$0xff]
    %v2514 = vld [vmem:[#allocation11 + $0x1fa0] sm:$0xff]
    %v2515 = vld [vmem:[#allocation11 + $0x1fa8] sm:$0xff]
    %v2516 = vld [vmem:[#allocation11 + $0x1fb0] sm:$0xff]
    %v2517 = vld [vmem:[#allocation11 + $0x1fb8] sm:$0xff]
    %v2518 = vld [vmem:[#allocation11 + $0x1fc0] sm:$0xff]
    %v2519 = vld [vmem:[#allocation11 + $0x1fc8] sm:$0xff]
    %v2520 = vld [vmem:[#allocation11 + $0x1fd0] sm:$0xff]
    %v2521 = vld [vmem:[#allocation11 + $0x1fd8] sm:$0xff]
    %v2522 = vld [vmem:[#allocation11 + $0x1fe0] sm:$0xff]
    %v2523 = vld [vmem:[#allocation11 + $0x1fe8] sm:$0xff]
    %v2524 = vld [vmem:[#allocation11 + $0x1ff0] sm:$0xff]
    %v2525 = vld [vmem:[#allocation11 + $0x1ff8] sm:$0xff]
    %v2526 = vld [vmem:[#allocation11 + $0x2000] sm:$0xff]
    %v2527 = vld [vmem:[#allocation11 + $0x2008] sm:$0xff]
    %v2528 = vld [vmem:[#allocation11 + $0x2010] sm:$0xff]
    %v2529 = vld [vmem:[#allocation11 + $0x2018] sm:$0xff]
    %v2530 = vld [vmem:[#allocation11 + $0x2020] sm:$0xff]
    %v2531 = vld [vmem:[#allocation11 + $0x2028] sm:$0xff]
    %v2532 = vld [vmem:[#allocation11 + $0x2030] sm:$0xff]
    %v2533 = vld [vmem:[#allocation11 + $0x2038] sm:$0xff]
    %v2534 = vld [vmem:[#allocation11 + $0x2040] sm:$0xff]
    %v2535 = vld [vmem:[#allocation11 + $0x2048] sm:$0xff]
    %v2536 = vld [vmem:[#allocation11 + $0x2050] sm:$0xff]
    %v2537 = vld [vmem:[#allocation11 + $0x2058] sm:$0xff]
    %v2538 = vld [vmem:[#allocation11 + $0x2060] sm:$0xff]
    %v2539 = vld [vmem:[#allocation11 + $0x2068] sm:$0xff]
    %v2540 = vld [vmem:[#allocation11 + $0x2070] sm:$0xff]
    %v2541 = vld [vmem:[#allocation11 + $0x2078] sm:$0xff]
    %v2542 = vld [vmem:[#allocation11 + $0x2080] sm:$0xff]
    %v2543 = vld [vmem:[#allocation11 + $0x2088] sm:$0xff]
    %v2544 = vld [vmem:[#allocation11 + $0x2090] sm:$0xff]
    %v2545 = vld [vmem:[#allocation11 + $0x2098] sm:$0xff]
    %v2546 = vld [vmem:[#allocation11 + $0x20a0] sm:$0xff]
    %v2547 = vld [vmem:[#allocation11 + $0x20a8] sm:$0xff]
    %v2548 = vld [vmem:[#allocation11 + $0x20b0] sm:$0xff]
    %v2549 = vld [vmem:[#allocation11 + $0x20b8] sm:$0xff]
    %v2550 = vld [vmem:[#allocation11 + $0x20c0] sm:$0xff]
    %v2551 = vld [vmem:[#allocation11 + $0x20c8] sm:$0xff]
    %v2552 = vld [vmem:[#allocation11 + $0x20d0] sm:$0xff]
    %v2553 = vld [vmem:[#allocation11 + $0x20d8] sm:$0xff]
    %v2554 = vld [vmem:[#allocation11 + $0x20e0] sm:$0xff]
    %v2555 = vld [vmem:[#allocation11 + $0x20e8] sm:$0xff]
    %v2556 = vld [vmem:[#allocation11 + $0x20f0] sm:$0xff]
    %v2557 = vld [vmem:[#allocation11 + $0x20f8] sm:$0xff]
    %v2558 = vld [vmem:[#allocation11 + $0x2100] sm:$0xff]
    %v2559 = vld [vmem:[#allocation11 + $0x2108] sm:$0xff]
    %v2560 = vld [vmem:[#allocation11 + $0x2110] sm:$0xff]
    %v2561 = vld [vmem:[#allocation11 + $0x2118] sm:$0xff]
    %v2562 = vld [vmem:[#allocation11 + $0x2120] sm:$0xff]
    %v2563 = vld [vmem:[#allocation11 + $0x2128] sm:$0xff]
    %v2564 = vld [vmem:[#allocation11 + $0x2130] sm:$0xff]
    %v2565 = vld [vmem:[#allocation11 + $0x2138] sm:$0xff]
    %v2566 = vld [vmem:[#allocation11 + $0x2140] sm:$0xff]
    %v2567 = vld [vmem:[#allocation11 + $0x2148] sm:$0xff]
    %v2568 = vld [vmem:[#allocation11 + $0x2150] sm:$0xff]
    %v2569 = vld [vmem:[#allocation11 + $0x2158] sm:$0xff]
    %v2570 = vld [vmem:[#allocation11 + $0x2160] sm:$0xff]
    %v2571 = vld [vmem:[#allocation11 + $0x2168] sm:$0xff]
    %v2572 = vld [vmem:[#allocation11 + $0x2170] sm:$0xff]
    %v2573 = vld [vmem:[#allocation11 + $0x2178] sm:$0xff]
    %v2574 = vld [vmem:[#allocation11 + $0x2180] sm:$0xff]
    %v2575 = vld [vmem:[#allocation11 + $0x2188] sm:$0xff]
    %v2576 = vld [vmem:[#allocation11 + $0x2190] sm:$0xff]
    %v2577 = vld [vmem:[#allocation11 + $0x2198] sm:$0xff]
    %v2578 = vld [vmem:[#allocation11 + $0x21a0] sm:$0xff]
    %v2579 = vld [vmem:[#allocation11 + $0x21a8] sm:$0xff]
    %v2580 = vld [vmem:[#allocation11 + $0x21b0] sm:$0xff]
    %v2581 = vld [vmem:[#allocation11 + $0x21b8] sm:$0xff]
    %v2582 = vld [vmem:[#allocation11 + $0x21c0] sm:$0xff]
    %v2583 = vld [vmem:[#allocation11 + $0x21c8] sm:$0xff]
    %v2584 = vld [vmem:[#allocation11 + $0x21d0] sm:$0xff]
    %v2585 = vld [vmem:[#allocation11 + $0x21d8] sm:$0xff]
    %v2586 = vld [vmem:[#allocation11 + $0x21e0] sm:$0xff]
    %v2587 = vld [vmem:[#allocation11 + $0x21e8] sm:$0xff]
    %v2588 = vld [vmem:[#allocation11 + $0x21f0] sm:$0xff]
    %v2589 = vld [vmem:[#allocation11 + $0x21f8] sm:$0xff]
    %v2590 = vld [vmem:[#allocation11 + $0x2200] sm:$0xff]
    %v2591 = vld [vmem:[#allocation11 + $0x2208] sm:$0xff]
    %v2592 = vld [vmem:[#allocation11 + $0x2210] sm:$0xff]
    %v2593 = vld [vmem:[#allocation11 + $0x2218] sm:$0xff]
    %v2594 = vld [vmem:[#allocation11 + $0x2220] sm:$0xff]
    %v2595 = vld [vmem:[#allocation11 + $0x2228] sm:$0xff]
    %v2596 = vld [vmem:[#allocation11 + $0x2230] sm:$0xff]
    %v2597 = vld [vmem:[#allocation11 + $0x2238] sm:$0xff]
    %v2598 = vld [vmem:[#allocation11 + $0x2240] sm:$0xff]
    %v2599 = vld [vmem:[#allocation11 + $0x2248] sm:$0xff]
    %v2600 = vld [vmem:[#allocation11 + $0x2250] sm:$0xff]
    %v2601 = vld [vmem:[#allocation11 + $0x2258] sm:$0xff]
    %v2602 = vld [vmem:[#allocation11 + $0x2260] sm:$0xff]
    %v2603 = vld [vmem:[#allocation11 + $0x2268] sm:$0xff]
    %v2604 = vld [vmem:[#allocation11 + $0x2270] sm:$0xff]
    %v2605 = vld [vmem:[#allocation11 + $0x2278] sm:$0xff]
    %v2606 = vld [vmem:[#allocation11 + $0x2280] sm:$0xff]
    %v2607 = vld [vmem:[#allocation11 + $0x2288] sm:$0xff]
    %v2608 = vld [vmem:[#allocation11 + $0x2290] sm:$0xff]
    %v2609 = vld [vmem:[#allocation11 + $0x2298] sm:$0xff]
    %v2610 = vld [vmem:[#allocation11 + $0x22a0] sm:$0xff]
    %v2611 = vld [vmem:[#allocation11 + $0x22a8] sm:$0xff]
    %v2612 = vld [vmem:[#allocation11 + $0x22b0] sm:$0xff]
    %v2613 = vld [vmem:[#allocation11 + $0x22b8] sm:$0xff]
    %v2614 = vld [vmem:[#allocation11 + $0x22c0] sm:$0xff]
    %v2615 = vld [vmem:[#allocation11 + $0x22c8] sm:$0xff]
    %v2616 = vld [vmem:[#allocation11 + $0x22d0] sm:$0xff]
    %v2617 = vld [vmem:[#allocation11 + $0x22d8] sm:$0xff]
    %v2618 = vld [vmem:[#allocation11 + $0x22e0] sm:$0xff]
    %v2619 = vld [vmem:[#allocation11 + $0x22e8] sm:$0xff]
    %v2620 = vld [vmem:[#allocation11 + $0x22f0] sm:$0xff]
    %v2621 = vld [vmem:[#allocation11 + $0x22f8] sm:$0xff]
    %v2622 = vld [vmem:[#allocation11 + $0x2300] sm:$0xff]
    %v2623 = vld [vmem:[#allocation11 + $0x2308] sm:$0xff]
    %v2624 = vld [vmem:[#allocation11 + $0x2310] sm:$0xff]
    %v2625 = vld [vmem:[#allocation11 + $0x2318] sm:$0xff]
    %v2626 = vld [vmem:[#allocation11 + $0x2320] sm:$0xff]
    %v2627 = vld [vmem:[#allocation11 + $0x2328] sm:$0xff]
    %v2628 = vld [vmem:[#allocation11 + $0x2330] sm:$0xff]
    %v2629 = vld [vmem:[#allocation11 + $0x2338] sm:$0xff]
    %v2630 = vld [vmem:[#allocation11 + $0x2340] sm:$0xff]
    %v2631 = vld [vmem:[#allocation11 + $0x2348] sm:$0xff]
    %v2632 = vld [vmem:[#allocation11 + $0x2350] sm:$0xff]
    %v2633 = vld [vmem:[#allocation11 + $0x2358] sm:$0xff]
    %v2634 = vld [vmem:[#allocation11 + $0x2360] sm:$0xff]
    %v2635 = vld [vmem:[#allocation11 + $0x2368] sm:$0xff]
    %v2636 = vld [vmem:[#allocation11 + $0x2370] sm:$0xff]
    %v2637 = vld [vmem:[#allocation11 + $0x2378] sm:$0xff]
    %v2638 = vld [vmem:[#allocation11 + $0x2380] sm:$0xff]
    %v2639 = vld [vmem:[#allocation11 + $0x2388] sm:$0xff]
    %v2640 = vld [vmem:[#allocation11 + $0x2390] sm:$0xff]
    %v2641 = vld [vmem:[#allocation11 + $0x2398] sm:$0xff]
    %v2642 = vld [vmem:[#allocation11 + $0x23a0] sm:$0xff]
    %v2643 = vld [vmem:[#allocation11 + $0x23a8] sm:$0xff]
    %v2644 = vld [vmem:[#allocation11 + $0x23b0] sm:$0xff]
    %v2645 = vld [vmem:[#allocation11 + $0x23b8] sm:$0xff]
    %v2646 = vld [vmem:[#allocation11 + $0x23c0] sm:$0xff]
    %v2647 = vld [vmem:[#allocation11 + $0x23c8] sm:$0xff]
    %v2648 = vld [vmem:[#allocation11 + $0x23d0] sm:$0xff]
    %v2649 = vld [vmem:[#allocation11 + $0x23d8] sm:$0xff]
    %v2650 = vld [vmem:[#allocation11 + $0x23e0] sm:$0xff]
    %v2651 = vld [vmem:[#allocation11 + $0x23e8] sm:$0xff]
    %v2652 = vld [vmem:[#allocation11 + $0x23f0] sm:$0xff]
    %v2653 = vld [vmem:[#allocation11 + $0x23f8] sm:$0xff]
    %v2654 = vld [vmem:[#allocation11 + $0x2400] sm:$0xff]
    %v2655 = vld [vmem:[#allocation11 + $0x2408] sm:$0xff]
    %v2656 = vld [vmem:[#allocation11 + $0x2410] sm:$0xff]
    %v2657 = vld [vmem:[#allocation11 + $0x2418] sm:$0xff]
    %v2658 = vld [vmem:[#allocation11 + $0x2420] sm:$0xff]
    %v2659 = vld [vmem:[#allocation11 + $0x2428] sm:$0xff]
    %v2660 = vld [vmem:[#allocation11 + $0x2430] sm:$0xff]
    %v2661 = vld [vmem:[#allocation11 + $0x2438] sm:$0xff]
    %v2662 = vld [vmem:[#allocation11 + $0x2440] sm:$0xff]
    %v2663 = vld [vmem:[#allocation11 + $0x2448] sm:$0xff]
    %v2664 = vld [vmem:[#allocation11 + $0x2450] sm:$0xff]
    %v2665 = vld [vmem:[#allocation11 + $0x2458] sm:$0xff]
    %v2666 = vld [vmem:[#allocation11 + $0x2460] sm:$0xff]
    %v2667 = vld [vmem:[#allocation11 + $0x2468] sm:$0xff]
    %v2668 = vld [vmem:[#allocation11 + $0x2470] sm:$0xff]
    %v2669 = vld [vmem:[#allocation11 + $0x2478] sm:$0xff]
    %v2670 = vld [vmem:[#allocation11 + $0x2480] sm:$0xff]
    %v2671 = vld [vmem:[#allocation11 + $0x2488] sm:$0xff]
    %v2672 = vld [vmem:[#allocation11 + $0x2490] sm:$0xff]
    %v2673 = vld [vmem:[#allocation11 + $0x2498] sm:$0xff]
    %v2674 = vld [vmem:[#allocation11 + $0x24a0] sm:$0xff]
    %v2675 = vld [vmem:[#allocation11 + $0x24a8] sm:$0xff]
    %v2676 = vld [vmem:[#allocation11 + $0x24b0] sm:$0xff]
    %v2677 = vld [vmem:[#allocation11 + $0x24b8] sm:$0xff]
    %v2678 = vld [vmem:[#allocation11 + $0x24c0] sm:$0xff]
    %v2679 = vld [vmem:[#allocation11 + $0x24c8] sm:$0xff]
    %v2680 = vld [vmem:[#allocation11 + $0x24d0] sm:$0xff]
    %v2681 = vld [vmem:[#allocation11 + $0x24d8] sm:$0xff]
    %v2682 = vld [vmem:[#allocation11 + $0x24e0] sm:$0xff]
    %v2683 = vld [vmem:[#allocation11 + $0x24e8] sm:$0xff]
    %v2684 = vld [vmem:[#allocation11 + $0x24f0] sm:$0xff]
    %v2685 = vld [vmem:[#allocation11 + $0x24f8] sm:$0xff]
    %v2686 = vld [vmem:[#allocation11 + $0x2500] sm:$0xff]
    %v2687 = vld [vmem:[#allocation11 + $0x2508] sm:$0xff]
    %v2688 = vld [vmem:[#allocation11 + $0x2510] sm:$0xff]
    %v2689 = vld [vmem:[#allocation11 + $0x2518] sm:$0xff]
    %v2690 = vld [vmem:[#allocation11 + $0x2520] sm:$0xff]
    %v2691 = vld [vmem:[#allocation11 + $0x2528] sm:$0xff]
    %v2692 = vld [vmem:[#allocation11 + $0x2530] sm:$0xff]
    %v2693 = vld [vmem:[#allocation11 + $0x2538] sm:$0xff]
    %v2694 = vld [vmem:[#allocation11 + $0x2540] sm:$0xff]
    %v2695 = vld [vmem:[#allocation11 + $0x2548] sm:$0xff]
    %v2696 = vld [vmem:[#allocation11 + $0x2550] sm:$0xff]
    %v2697 = vld [vmem:[#allocation11 + $0x2558] sm:$0xff]
    %v2698 = vld [vmem:[#allocation11 + $0x2560] sm:$0xff]
    %v2699 = vld [vmem:[#allocation11 + $0x2568] sm:$0xff]
    %v2700 = vld [vmem:[#allocation11 + $0x2570] sm:$0xff]
    %v2701 = vld [vmem:[#allocation11 + $0x2578] sm:$0xff]
    %v2702 = vld [vmem:[#allocation11 + $0x2580] sm:$0xff]
    %v2703 = vld [vmem:[#allocation11 + $0x2588] sm:$0xff]
    %v2704 = vld [vmem:[#allocation11 + $0x2590] sm:$0xff]
    %v2705 = vld [vmem:[#allocation11 + $0x2598] sm:$0xff]
    %v2706 = vld [vmem:[#allocation11 + $0x25a0] sm:$0xff]
    %v2707 = vld [vmem:[#allocation11 + $0x25a8] sm:$0xff]
    %v2708 = vld [vmem:[#allocation11 + $0x25b0] sm:$0xff]
    %v2709 = vld [vmem:[#allocation11 + $0x25b8] sm:$0xff]
    %v2710 = vld [vmem:[#allocation11 + $0x25c0] sm:$0xff]
    %v2711 = vld [vmem:[#allocation11 + $0x25c8] sm:$0xff]
    %v2712 = vld [vmem:[#allocation11 + $0x25d0] sm:$0xff]
    %v2713 = vld [vmem:[#allocation11 + $0x25d8] sm:$0xff]
    %v2714 = vld [vmem:[#allocation11 + $0x25e0] sm:$0xff]
    %v2715 = vld [vmem:[#allocation11 + $0x25e8] sm:$0xff]
    %v2716 = vld [vmem:[#allocation11 + $0x25f0] sm:$0xff]
    %v2717 = vld [vmem:[#allocation11 + $0x25f8] sm:$0xff]
    %v2718 = vld [vmem:[#allocation11 + $0x2600] sm:$0xff]
    %v2719 = vld [vmem:[#allocation11 + $0x2608] sm:$0xff]
    %v2720 = vld [vmem:[#allocation11 + $0x2610] sm:$0xff]
    %v2721 = vld [vmem:[#allocation11 + $0x2618] sm:$0xff]
    %v2722 = vld [vmem:[#allocation11 + $0x2620] sm:$0xff]
    %v2723 = vld [vmem:[#allocation11 + $0x2628] sm:$0xff]
    %v2724 = vld [vmem:[#allocation11 + $0x2630] sm:$0xff]
    %v2725 = vld [vmem:[#allocation11 + $0x2638] sm:$0xff]
    %v2726 = vld [vmem:[#allocation11 + $0x2640] sm:$0xff]
    %v2727 = vld [vmem:[#allocation11 + $0x2648] sm:$0xff]
    %v2728 = vld [vmem:[#allocation11 + $0x2650] sm:$0xff]
    %v2729 = vld [vmem:[#allocation11 + $0x2658] sm:$0xff]
    %v2730 = vld [vmem:[#allocation11 + $0x2660] sm:$0xff]
    %v2731 = vld [vmem:[#allocation11 + $0x2668] sm:$0xff]
    %v2732 = vld [vmem:[#allocation11 + $0x2670] sm:$0xff]
    %v2733 = vld [vmem:[#allocation11 + $0x2678] sm:$0xff]
    %v2734 = vld [vmem:[#allocation11 + $0x2680] sm:$0xff]
    %v2735 = vld [vmem:[#allocation11 + $0x2688] sm:$0xff]
    %v2736 = vld [vmem:[#allocation11 + $0x2690] sm:$0xff]
    %v2737 = vld [vmem:[#allocation11 + $0x2698] sm:$0xff]
    %v2738 = vld [vmem:[#allocation11 + $0x26a0] sm:$0xff]
    %v2739 = vld [vmem:[#allocation11 + $0x26a8] sm:$0xff]
    %v2740 = vld [vmem:[#allocation11 + $0x26b0] sm:$0xff]
    %v2741 = vld [vmem:[#allocation11 + $0x26b8] sm:$0xff]
    %v2742 = vld [vmem:[#allocation11 + $0x26c0] sm:$0xff]
    %v2743 = vld [vmem:[#allocation11 + $0x26c8] sm:$0xff]
    %v2744 = vld [vmem:[#allocation11 + $0x26d0] sm:$0xff]
    %v2745 = vld [vmem:[#allocation11 + $0x26d8] sm:$0xff]
    %v2746 = vld [vmem:[#allocation11 + $0x26e0] sm:$0xff]
    %v2747 = vld [vmem:[#allocation11 + $0x26e8] sm:$0xff]
    %v2748 = vld [vmem:[#allocation11 + $0x26f0] sm:$0xff]
    %v2749 = vld [vmem:[#allocation11 + $0x26f8] sm:$0xff]
    %v2750 = vld [vmem:[#allocation11 + $0x2700] sm:$0xff]
    %v2751 = vld [vmem:[#allocation11 + $0x2708] sm:$0xff]
    %v2752 = vld [vmem:[#allocation11 + $0x2710] sm:$0xff]
    %v2753 = vld [vmem:[#allocation11 + $0x2718] sm:$0xff]
    %v2754 = vld [vmem:[#allocation11 + $0x2720] sm:$0xff]
    %v2755 = vld [vmem:[#allocation11 + $0x2728] sm:$0xff]
    %v2756 = vld [vmem:[#allocation11 + $0x2730] sm:$0xff]
    %v2757 = vld [vmem:[#allocation11 + $0x2738] sm:$0xff]
    %v2758 = vld [vmem:[#allocation11 + $0x2740] sm:$0xff]
    %v2759 = vld [vmem:[#allocation11 + $0x2748] sm:$0xff]
    %v2760 = vld [vmem:[#allocation11 + $0x2750] sm:$0xff]
    %v2761 = vld [vmem:[#allocation11 + $0x2758] sm:$0xff]
    %v2762 = vld [vmem:[#allocation11 + $0x2760] sm:$0xff]
    %v2763 = vld [vmem:[#allocation11 + $0x2768] sm:$0xff]
    %v2764 = vld [vmem:[#allocation11 + $0x2770] sm:$0xff]
    %v2765 = vld [vmem:[#allocation11 + $0x2778] sm:$0xff]
    %v2766 = vld [vmem:[#allocation11 + $0x2780] sm:$0xff]
    %v2767 = vld [vmem:[#allocation11 + $0x2788] sm:$0xff]
    %v2768 = vld [vmem:[#allocation11 + $0x2790] sm:$0xff]
    %v2769 = vld [vmem:[#allocation11 + $0x2798] sm:$0xff]
    %v2770 = vld [vmem:[#allocation11 + $0x27a0] sm:$0xff]
    %v2771 = vld [vmem:[#allocation11 + $0x27a8] sm:$0xff]
    %v2772 = vld [vmem:[#allocation11 + $0x27b0] sm:$0xff]
    %v2773 = vld [vmem:[#allocation11 + $0x27b8] sm:$0xff]
    %v2774 = vld [vmem:[#allocation11 + $0x27c0] sm:$0xff]
    %v2775 = vld [vmem:[#allocation11 + $0x27c8] sm:$0xff]
    %v2776 = vld [vmem:[#allocation11 + $0x27d0] sm:$0xff]
    %v2777 = vld [vmem:[#allocation11 + $0x27d8] sm:$0xff]
    %v2778 = vld [vmem:[#allocation11 + $0x27e0] sm:$0xff]
    %v2779 = vld [vmem:[#allocation11 + $0x27e8] sm:$0xff]
    %v2780 = vld [vmem:[#allocation11 + $0x27f0] sm:$0xff]
    %v2781 = vld [vmem:[#allocation11 + $0x27f8] sm:$0xff]
    %v2782 = vld [vmem:[#allocation11 + $0x2800] sm:$0xff]
    %v2783 = vld [vmem:[#allocation11 + $0x2808] sm:$0xff]
    %v2784 = vld [vmem:[#allocation11 + $0x2810] sm:$0xff]
    %v2785 = vld [vmem:[#allocation11 + $0x2818] sm:$0xff]
    %v2786 = vld [vmem:[#allocation11 + $0x2820] sm:$0xff]
    %v2787 = vld [vmem:[#allocation11 + $0x2828] sm:$0xff]
    %v2788 = vld [vmem:[#allocation11 + $0x2830] sm:$0xff]
    %v2789 = vld [vmem:[#allocation11 + $0x2838] sm:$0xff]
    %v2790 = vld [vmem:[#allocation11 + $0x2840] sm:$0xff]
    %v2791 = vld [vmem:[#allocation11 + $0x2848] sm:$0xff]
    %v2792 = vld [vmem:[#allocation11 + $0x2850] sm:$0xff]
    %v2793 = vld [vmem:[#allocation11 + $0x2858] sm:$0xff]
    %v2794 = vld [vmem:[#allocation11 + $0x2860] sm:$0xff]
    %v2795 = vld [vmem:[#allocation11 + $0x2868] sm:$0xff]
    %v2796 = vld [vmem:[#allocation11 + $0x2870] sm:$0xff]
    %v2797 = vld [vmem:[#allocation11 + $0x2878] sm:$0xff]
    %v2798 = vld [vmem:[#allocation11 + $0x2880] sm:$0xff]
    %v2799 = vld [vmem:[#allocation11 + $0x2888] sm:$0xff]
    %v2800 = vld [vmem:[#allocation11 + $0x2890] sm:$0xff]
    %v2801 = vld [vmem:[#allocation11 + $0x2898] sm:$0xff]
    %v2802 = vld [vmem:[#allocation11 + $0x28a0] sm:$0xff]
    %v2803 = vld [vmem:[#allocation11 + $0x28a8] sm:$0xff]
    %v2804 = vld [vmem:[#allocation11 + $0x28b0] sm:$0xff]
    %v2805 = vld [vmem:[#allocation11 + $0x28b8] sm:$0xff]
    %v2806 = vld [vmem:[#allocation11 + $0x28c0] sm:$0xff]
    %v2807 = vld [vmem:[#allocation11 + $0x28c8] sm:$0xff]
    %v2808 = vld [vmem:[#allocation11 + $0x28d0] sm:$0xff]
    %v2809 = vld [vmem:[#allocation11 + $0x28d8] sm:$0xff]
    %v2810 = vld [vmem:[#allocation11 + $0x28e0] sm:$0xff]
    %v2811 = vld [vmem:[#allocation11 + $0x28e8] sm:$0xff]
    %v2812 = vld [vmem:[#allocation11 + $0x28f0] sm:$0xff]
    %v2813 = vld [vmem:[#allocation11 + $0x28f8] sm:$0xff]
    %v2814 = vld [vmem:[#allocation11 + $0x2900] sm:$0xff]
    %v2815 = vld [vmem:[#allocation11 + $0x2908] sm:$0xff]
    %v2816 = vld [vmem:[#allocation11 + $0x2910] sm:$0xff]
    %v2817 = vld [vmem:[#allocation11 + $0x2918] sm:$0xff]
    %v2818 = vld [vmem:[#allocation11 + $0x2920] sm:$0xff]
    %v2819 = vld [vmem:[#allocation11 + $0x2928] sm:$0xff]
    %v2820 = vld [vmem:[#allocation11 + $0x2930] sm:$0xff]
    %v2821 = vld [vmem:[#allocation11 + $0x2938] sm:$0xff]
    %v2822 = vld [vmem:[#allocation11 + $0x2940] sm:$0xff]
    %v2823 = vld [vmem:[#allocation11 + $0x2948] sm:$0xff]
    %v2824 = vld [vmem:[#allocation11 + $0x2950] sm:$0xff]
    %v2825 = vld [vmem:[#allocation11 + $0x2958] sm:$0xff]
    %v2826 = vld [vmem:[#allocation11 + $0x2960] sm:$0xff]
    %v2827 = vld [vmem:[#allocation11 + $0x2968] sm:$0xff]
    %v2828 = vld [vmem:[#allocation11 + $0x2970] sm:$0xff]
    %v2829 = vld [vmem:[#allocation11 + $0x2978] sm:$0xff]
    %v2830 = vld [vmem:[#allocation11 + $0x2980] sm:$0xff]
    %v2831 = vld [vmem:[#allocation11 + $0x2988] sm:$0xff]
    %v2832 = vld [vmem:[#allocation11 + $0x2990] sm:$0xff]
    %v2833 = vld [vmem:[#allocation11 + $0x2998] sm:$0xff]
    %v2834 = vld [vmem:[#allocation11 + $0x29a0] sm:$0xff]
    %v2835 = vld [vmem:[#allocation11 + $0x29a8] sm:$0xff]
    %v2836 = vld [vmem:[#allocation11 + $0x29b0] sm:$0xff]
    %v2837 = vld [vmem:[#allocation11 + $0x29b8] sm:$0xff]
    %v2838 = vld [vmem:[#allocation11 + $0x29c0] sm:$0xff]
    %v2839 = vld [vmem:[#allocation11 + $0x29c8] sm:$0xff]
    %v2840 = vld [vmem:[#allocation11 + $0x29d0] sm:$0xff]
    %v2841 = vld [vmem:[#allocation11 + $0x29d8] sm:$0xff]
    %v2842 = vld [vmem:[#allocation11 + $0x29e0] sm:$0xff]
    %v2843 = vld [vmem:[#allocation11 + $0x29e8] sm:$0xff]
    %v2844 = vld [vmem:[#allocation11 + $0x29f0] sm:$0xff]
    %v2845 = vld [vmem:[#allocation11 + $0x29f8] sm:$0xff]
    %v2846 = vld [vmem:[#allocation11 + $0x2a00] sm:$0xff]
    %v2847 = vld [vmem:[#allocation11 + $0x2a08] sm:$0xff]
    %v2848 = vld [vmem:[#allocation11 + $0x2a10] sm:$0xff]
    %v2849 = vld [vmem:[#allocation11 + $0x2a18] sm:$0xff]
    %v2850 = vld [vmem:[#allocation11 + $0x2a20] sm:$0xff]
    %v2851 = vld [vmem:[#allocation11 + $0x2a28] sm:$0xff]
    %v2852 = vld [vmem:[#allocation11 + $0x2a30] sm:$0xff]
    %v2853 = vld [vmem:[#allocation11 + $0x2a38] sm:$0xff]
    %v2854 = vld [vmem:[#allocation11 + $0x2a40] sm:$0xff]
    %v2855 = vld [vmem:[#allocation11 + $0x2a48] sm:$0xff]
    %v2856 = vld [vmem:[#allocation11 + $0x2a50] sm:$0xff]
    %v2857 = vld [vmem:[#allocation11 + $0x2a58] sm:$0xff]
    %v2858 = vld [vmem:[#allocation11 + $0x2a60] sm:$0xff]
    %v2859 = vld [vmem:[#allocation11 + $0x2a68] sm:$0xff]
    %v2860 = vld [vmem:[#allocation11 + $0x2a70] sm:$0xff]
    %v2861 = vld [vmem:[#allocation11 + $0x2a78] sm:$0xff]
    %v2862 = vld [vmem:[#allocation11 + $0x2a80] sm:$0xff]
    %v2863 = vld [vmem:[#allocation11 + $0x2a88] sm:$0xff]
    %v2864 = vld [vmem:[#allocation11 + $0x2a90] sm:$0xff]
    %v2865 = vld [vmem:[#allocation11 + $0x2a98] sm:$0xff]
    %v2866 = vld [vmem:[#allocation11 + $0x2aa0] sm:$0xff]
    %v2867 = vld [vmem:[#allocation11 + $0x2aa8] sm:$0xff]
    %v2868 = vld [vmem:[#allocation11 + $0x2ab0] sm:$0xff]
    %v2869 = vld [vmem:[#allocation11 + $0x2ab8] sm:$0xff]
    %v2870 = vld [vmem:[#allocation11 + $0x2ac0] sm:$0xff]
    %v2871 = vld [vmem:[#allocation11 + $0x2ac8] sm:$0xff]
    %v2872 = vld [vmem:[#allocation11 + $0x2ad0] sm:$0xff]
    %v2873 = vld [vmem:[#allocation11 + $0x2ad8] sm:$0xff]
    %v2874 = vld [vmem:[#allocation11 + $0x2ae0] sm:$0xff]
    %v2875 = vld [vmem:[#allocation11 + $0x2ae8] sm:$0xff]
    %v2876 = vld [vmem:[#allocation11 + $0x2af0] sm:$0xff]
    %v2877 = vld [vmem:[#allocation11 + $0x2af8] sm:$0xff]
    %v2878 = vld [vmem:[#allocation11 + $0x2b00] sm:$0xff]
    %v2879 = vld [vmem:[#allocation11 + $0x2b08] sm:$0xff]
    %v2880 = vld [vmem:[#allocation11 + $0x2b10] sm:$0xff]
    %v2881 = vld [vmem:[#allocation11 + $0x2b18] sm:$0xff]
    %v2882 = vld [vmem:[#allocation11 + $0x2b20] sm:$0xff]
    %v2883 = vld [vmem:[#allocation11 + $0x2b28] sm:$0xff]
    %v2884 = vld [vmem:[#allocation11 + $0x2b30] sm:$0xff]
    %v2885 = vld [vmem:[#allocation11 + $0x2b38] sm:$0xff]
    %v2886 = vld [vmem:[#allocation11 + $0x2b40] sm:$0xff]
    %v2887 = vld [vmem:[#allocation11 + $0x2b48] sm:$0xff]
    %v2888 = vld [vmem:[#allocation11 + $0x2b50] sm:$0xff]
    %v2889 = vld [vmem:[#allocation11 + $0x2b58] sm:$0xff]
    %v2890 = vld [vmem:[#allocation11 + $0x2b60] sm:$0xff]
    %v2891 = vld [vmem:[#allocation11 + $0x2b68] sm:$0xff]
    %v2892 = vld [vmem:[#allocation11 + $0x2b70] sm:$0xff]
    %v2893 = vld [vmem:[#allocation11 + $0x2b78] sm:$0xff]
    %v2894 = vld [vmem:[#allocation11 + $0x2b80] sm:$0xff]
    %v2895 = vld [vmem:[#allocation11 + $0x2b88] sm:$0xff]
    %v2896 = vld [vmem:[#allocation11 + $0x2b90] sm:$0xff]
    %v2897 = vld [vmem:[#allocation11 + $0x2b98] sm:$0xff]
    %v2898 = vld [vmem:[#allocation11 + $0x2ba0] sm:$0xff]
    %v2899 = vld [vmem:[#allocation11 + $0x2ba8] sm:$0xff]
    %v2900 = vld [vmem:[#allocation11 + $0x2bb0] sm:$0xff]
    %v2901 = vld [vmem:[#allocation11 + $0x2bb8] sm:$0xff]
    %v2902 = vld [vmem:[#allocation11 + $0x2bc0] sm:$0xff]
    %v2903 = vld [vmem:[#allocation11 + $0x2bc8] sm:$0xff]
    %v2904 = vld [vmem:[#allocation11 + $0x2bd0] sm:$0xff]
    %v2905 = vld [vmem:[#allocation11 + $0x2bd8] sm:$0xff]
    %v2906 = vld [vmem:[#allocation11 + $0x2be0] sm:$0xff]
    %v2907 = vld [vmem:[#allocation11 + $0x2be8] sm:$0xff]
    %v2908 = vld [vmem:[#allocation11 + $0x2bf0] sm:$0xff]
    %v2909 = vld [vmem:[#allocation11 + $0x2bf8] sm:$0xff]
    %v2910 = vld [vmem:[#allocation11 + $0x2c00] sm:$0xff]
    %v2911 = vld [vmem:[#allocation11 + $0x2c08] sm:$0xff]
    %v2912 = vld [vmem:[#allocation11 + $0x2c10] sm:$0xff]
    %v2913 = vld [vmem:[#allocation11 + $0x2c18] sm:$0xff]
    %v2914 = vld [vmem:[#allocation11 + $0x2c20] sm:$0xff]
    %v2915 = vld [vmem:[#allocation11 + $0x2c28] sm:$0xff]
    %v2916 = vld [vmem:[#allocation11 + $0x2c30] sm:$0xff]
    %v2917 = vld [vmem:[#allocation11 + $0x2c38] sm:$0xff]
    %v2918 = vld [vmem:[#allocation11 + $0x2c40] sm:$0xff]
    %v2919 = vld [vmem:[#allocation11 + $0x2c48] sm:$0xff]
    %v2920 = vld [vmem:[#allocation11 + $0x2c50] sm:$0xff]
    %v2921 = vld [vmem:[#allocation11 + $0x2c58] sm:$0xff]
    %v2922 = vld [vmem:[#allocation11 + $0x2c60] sm:$0xff]
    %v2923 = vld [vmem:[#allocation11 + $0x2c68] sm:$0xff]
    %v2924 = vld [vmem:[#allocation11 + $0x2c70] sm:$0xff]
    %v2925 = vld [vmem:[#allocation11 + $0x2c78] sm:$0xff]
    %v2926 = vld [vmem:[#allocation11 + $0x2c80] sm:$0xff]
    %v2927 = vld [vmem:[#allocation11 + $0x2c88] sm:$0xff]
    %v2928 = vld [vmem:[#allocation11 + $0x2c90] sm:$0xff]
    %v2929 = vld [vmem:[#allocation11 + $0x2c98] sm:$0xff]
    %v2930 = vld [vmem:[#allocation11 + $0x2ca0] sm:$0xff]
    %v2931 = vld [vmem:[#allocation11 + $0x2ca8] sm:$0xff]
    %v2932 = vld [vmem:[#allocation11 + $0x2cb0] sm:$0xff]
    %v2933 = vld [vmem:[#allocation11 + $0x2cb8] sm:$0xff]
    %v2934 = vld [vmem:[#allocation11 + $0x2cc0] sm:$0xff]
    %v2935 = vld [vmem:[#allocation11 + $0x2cc8] sm:$0xff]
    %v2936 = vld [vmem:[#allocation11 + $0x2cd0] sm:$0xff]
    %v2937 = vld [vmem:[#allocation11 + $0x2cd8] sm:$0xff]
    %v2938 = vld [vmem:[#allocation11 + $0x2ce0] sm:$0xff]
    %v2939 = vld [vmem:[#allocation11 + $0x2ce8] sm:$0xff]
    %v2940 = vld [vmem:[#allocation11 + $0x2cf0] sm:$0xff]
    %v2941 = vld [vmem:[#allocation11 + $0x2cf8] sm:$0xff]
    %v2942 = vld [vmem:[#allocation11 + $0x2d00] sm:$0xff]
    %v2943 = vld [vmem:[#allocation11 + $0x2d08] sm:$0xff]
    %v2944 = vld [vmem:[#allocation11 + $0x2d10] sm:$0xff]
    %v2945 = vld [vmem:[#allocation11 + $0x2d18] sm:$0xff]
    %v2946 = vld [vmem:[#allocation11 + $0x2d20] sm:$0xff]
    %v2947 = vld [vmem:[#allocation11 + $0x2d28] sm:$0xff]
    %v2948 = vld [vmem:[#allocation11 + $0x2d30] sm:$0xff]
    %v2949 = vld [vmem:[#allocation11 + $0x2d38] sm:$0xff]
    %v2950 = vld [vmem:[#allocation11 + $0x2d40] sm:$0xff]
    %v2951 = vld [vmem:[#allocation11 + $0x2d48] sm:$0xff]
    %v2952 = vld [vmem:[#allocation11 + $0x2d50] sm:$0xff]
    %v2953 = vld [vmem:[#allocation11 + $0x2d58] sm:$0xff]
    %v2954 = vld [vmem:[#allocation11 + $0x2d60] sm:$0xff]
    %v2955 = vld [vmem:[#allocation11 + $0x2d68] sm:$0xff]
    %v2956 = vld [vmem:[#allocation11 + $0x2d70] sm:$0xff]
    %v2957 = vld [vmem:[#allocation11 + $0x2d78] sm:$0xff]
    %v2958 = vld [vmem:[#allocation11 + $0x2d80] sm:$0xff]
    %v2959 = vld [vmem:[#allocation11 + $0x2d88] sm:$0xff]
    %v2960 = vld [vmem:[#allocation11 + $0x2d90] sm:$0xff]
    %v2961 = vld [vmem:[#allocation11 + $0x2d98] sm:$0xff]
    %v2962 = vld [vmem:[#allocation11 + $0x2da0] sm:$0xff]
    %v2963 = vld [vmem:[#allocation11 + $0x2da8] sm:$0xff]
    %v2964 = vld [vmem:[#allocation11 + $0x2db0] sm:$0xff]
    %v2965 = vld [vmem:[#allocation11 + $0x2db8] sm:$0xff]
    %v2966 = vld [vmem:[#allocation11 + $0x2dc0] sm:$0xff]
    %v2967 = vld [vmem:[#allocation11 + $0x2dc8] sm:$0xff]
    %v2968 = vld [vmem:[#allocation11 + $0x2dd0] sm:$0xff]
    %v2969 = vld [vmem:[#allocation11 + $0x2dd8] sm:$0xff]
    %v2970 = vld [vmem:[#allocation11 + $0x2de0] sm:$0xff]
    %v2971 = vld [vmem:[#allocation11 + $0x2de8] sm:$0xff]
    %v2972 = vld [vmem:[#allocation11 + $0x2df0] sm:$0xff]
    %v2973 = vld [vmem:[#allocation11 + $0x2df8] sm:$0xff]
    %v2974 = vld [vmem:[#allocation11 + $0x2e00] sm:$0xff]
    %v2975 = vld [vmem:[#allocation11 + $0x2e08] sm:$0xff]
    %v2976 = vld [vmem:[#allocation11 + $0x2e10] sm:$0xff]
    %v2977 = vld [vmem:[#allocation11 + $0x2e18] sm:$0xff]
    %v2978 = vld [vmem:[#allocation11 + $0x2e20] sm:$0xff]
    %v2979 = vld [vmem:[#allocation11 + $0x2e28] sm:$0xff]
    %v2980 = vld [vmem:[#allocation11 + $0x2e30] sm:$0xff]
    %v2981 = vld [vmem:[#allocation11 + $0x2e38] sm:$0xff]
    %v2982 = vld [vmem:[#allocation11 + $0x2e40] sm:$0xff]
    %v2983 = vld [vmem:[#allocation11 + $0x2e48] sm:$0xff]
    %v2984 = vld [vmem:[#allocation11 + $0x2e50] sm:$0xff]
    %v2985 = vld [vmem:[#allocation11 + $0x2e58] sm:$0xff]
    %v2986 = vld [vmem:[#allocation11 + $0x2e60] sm:$0xff]
    %v2987 = vld [vmem:[#allocation11 + $0x2e68] sm:$0xff]
    %v2988 = vld [vmem:[#allocation11 + $0x2e70] sm:$0xff]
    %v2989 = vld [vmem:[#allocation11 + $0x2e78] sm:$0xff]
    %v2990 = vld [vmem:[#allocation11 + $0x2e80] sm:$0xff]
    %v2991 = vld [vmem:[#allocation11 + $0x2e88] sm:$0xff]
    %v2992 = vld [vmem:[#allocation11 + $0x2e90] sm:$0xff]
    %v2993 = vld [vmem:[#allocation11 + $0x2e98] sm:$0xff]
    %v2994 = vld [vmem:[#allocation11 + $0x2ea0] sm:$0xff]
    %v2995 = vld [vmem:[#allocation11 + $0x2ea8] sm:$0xff]
    %v2996 = vld [vmem:[#allocation11 + $0x2eb0] sm:$0xff]
    %v2997 = vld [vmem:[#allocation11 + $0x2eb8] sm:$0xff]
    %v2998 = vld [vmem:[#allocation11 + $0x2ec0] sm:$0xff]
    %v2999 = vld [vmem:[#allocation11 + $0x2ec8] sm:$0xff]
    %v3000 = vld [vmem:[#allocation11 + $0x2ed0] sm:$0xff]
    %v3001 = vld [vmem:[#allocation11 + $0x2ed8] sm:$0xff]
    %v3002 = vld [vmem:[#allocation11 + $0x2ee0] sm:$0xff]
    %v3003 = vld [vmem:[#allocation11 + $0x2ee8] sm:$0xff]
    %v3004 = vld [vmem:[#allocation11 + $0x2ef0] sm:$0xff]
    %v3005 = vld [vmem:[#allocation11 + $0x2ef8] sm:$0xff]
    %v3006 = vld [vmem:[#allocation11 + $0x2f00] sm:$0xff]
    %v3007 = vld [vmem:[#allocation11 + $0x2f08] sm:$0xff]
    %v3008 = vld [vmem:[#allocation11 + $0x2f10] sm:$0xff]
    %v3009 = vld [vmem:[#allocation11 + $0x2f18] sm:$0xff]
    %v3010 = vld [vmem:[#allocation11 + $0x2f20] sm:$0xff]
    %v3011 = vld [vmem:[#allocation11 + $0x2f28] sm:$0xff]
    %v3012 = vld [vmem:[#allocation11 + $0x2f30] sm:$0xff]
    %v3013 = vld [vmem:[#allocation11 + $0x2f38] sm:$0xff]
    %v3014 = vld [vmem:[#allocation11 + $0x2f40] sm:$0xff]
    %v3015 = vld [vmem:[#allocation11 + $0x2f48] sm:$0xff]
    %v3016 = vld [vmem:[#allocation11 + $0x2f50] sm:$0xff]
    %v3017 = vld [vmem:[#allocation11 + $0x2f58] sm:$0xff]
    %v3018 = vld [vmem:[#allocation11 + $0x2f60] sm:$0xff]
    %v3019 = vld [vmem:[#allocation11 + $0x2f68] sm:$0xff]
    %v3020 = vld [vmem:[#allocation11 + $0x2f70] sm:$0xff]
    %v3021 = vld [vmem:[#allocation11 + $0x2f78] sm:$0xff]
    %v3022 = vld [vmem:[#allocation11 + $0x2f80] sm:$0xff]
    %v3023 = vld [vmem:[#allocation11 + $0x2f88] sm:$0xff]
    %v3024 = vld [vmem:[#allocation11 + $0x2f90] sm:$0xff]
    %v3025 = vld [vmem:[#allocation11 + $0x2f98] sm:$0xff]
    %v3026 = vld [vmem:[#allocation11 + $0x2fa0] sm:$0xff]
    %v3027 = vld [vmem:[#allocation11 + $0x2fa8] sm:$0xff]
    %v3028 = vld [vmem:[#allocation11 + $0x2fb0] sm:$0xff]
    %v3029 = vld [vmem:[#allocation11 + $0x2fb8] sm:$0xff]
    %v3030 = vld [vmem:[#allocation11 + $0x2fc0] sm:$0xff]
    %v3031 = vld [vmem:[#allocation11 + $0x2fc8] sm:$0xff]
    %v3032 = vld [vmem:[#allocation11 + $0x2fd0] sm:$0xff]
    %v3033 = vld [vmem:[#allocation11 + $0x2fd8] sm:$0xff]
    %v3034 = vld [vmem:[#allocation11 + $0x2fe0] sm:$0xff]
    %v3035 = vld [vmem:[#allocation11 + $0x2fe8] sm:$0xff]
    %v3036 = vld [vmem:[#allocation11 + $0x2ff0] sm:$0xff]
    %v3037 = vld [vmem:[#allocation11 + $0x2ff8] sm:$0xff]
    %v3038 = vld [vmem:[#allocation12] sm:$0xff]
    %v3039 = vld [vmem:[#allocation12 + $0x8] sm:$0xff]
    %v3042 = vperm.slane %v3038, 0
    %v3043 = vperm.slane %v3038, 1
    %v3044 = vperm.slane %v3038, 2
    %v3045 = vperm.slane %v3038, 3
    %v3046 = vperm.slane %v3038, 4
    %v3047 = vperm.slane %v3038, 5
    %v3048 = vperm.slane %v3038, 6
    %v3049 = vperm.slane %v3038, 7
    %v3050 = vperm.slane %v3039, 0
    %v3051 = vperm.slane %v3039, 1
    %v3052 = vperm.slane %v3039, 2
    %v3053 = vperm.slane %v3039, 3
    %v3054 = vperm.slane %v3039, 4
    %v3055 = vperm.slane %v3039, 5
    %v3056 = vperm.slane %v3039, 6
    %v3057 = vperm.slane %v3039, 7
    %v4610 = vunpack.c.l.b16 %v1502
    %v4611 = vunpack.c.h.b16 %v1502
    %v4612 = vunpack.c.l.b16 %v1503
    %v4613 = vunpack.c.h.b16 %v1503
    %v4614 = vunpack.c.l.b16 %v1504
    %v4615 = vunpack.c.h.b16 %v1504
    %v4616 = vunpack.c.l.b16 %v1505
    %v4617 = vunpack.c.h.b16 %v1505
    %v4618 = vunpack.c.l.b16 %v1506
    %v4619 = vunpack.c.h.b16 %v1506
    %v4620 = vunpack.c.l.b16 %v1507
    %v4621 = vunpack.c.h.b16 %v1507
    %v4622 = vunpack.c.l.b16 %v1508
    %v4623 = vunpack.c.h.b16 %v1508
    %v4624 = vunpack.c.l.b16 %v1509
    %v4625 = vunpack.c.h.b16 %v1509
    %v4626 = vunpack.c.l.b16 %v1510
    %v4627 = vunpack.c.h.b16 %v1510
    %v4628 = vunpack.c.l.b16 %v1511
    %v4629 = vunpack.c.h.b16 %v1511
    %v4630 = vunpack.c.l.b16 %v1512
    %v4631 = vunpack.c.h.b16 %v1512
    %v4632 = vunpack.c.l.b16 %v1513
    %v4633 = vunpack.c.h.b16 %v1513
    %v4634 = vunpack.c.l.b16 %v1514
    %v4635 = vunpack.c.h.b16 %v1514
    %v4636 = vunpack.c.l.b16 %v1515
    %v4637 = vunpack.c.h.b16 %v1515
    %v4638 = vunpack.c.l.b16 %v1516
    %v4639 = vunpack.c.h.b16 %v1516
    %v4640 = vunpack.c.l.b16 %v1517
    %v4641 = vunpack.c.h.b16 %v1517
    %v4642 = vunpack.c.l.b16 %v1518
    %v4643 = vunpack.c.h.b16 %v1518
    %v4644 = vunpack.c.l.b16 %v1519
    %v4645 = vunpack.c.h.b16 %v1519
    %v4646 = vunpack.c.l.b16 %v1520
    %v4647 = vunpack.c.h.b16 %v1520
    %v4648 = vunpack.c.l.b16 %v1521
    %v4649 = vunpack.c.h.b16 %v1521
    %v4650 = vunpack.c.l.b16 %v1522
    %v4651 = vunpack.c.h.b16 %v1522
    %v4652 = vunpack.c.l.b16 %v1523
    %v4653 = vunpack.c.h.b16 %v1523
    %v4654 = vunpack.c.l.b16 %v1524
    %v4655 = vunpack.c.h.b16 %v1524
    %v4656 = vunpack.c.l.b16 %v1525
    %v4657 = vunpack.c.h.b16 %v1525
    %v4658 = vunpack.c.l.b16 %v1526
    %v4659 = vunpack.c.h.b16 %v1526
    %v4660 = vunpack.c.l.b16 %v1527
    %v4661 = vunpack.c.h.b16 %v1527
    %v4662 = vunpack.c.l.b16 %v1528
    %v4663 = vunpack.c.h.b16 %v1528
    %v4664 = vunpack.c.l.b16 %v1529
    %v4665 = vunpack.c.h.b16 %v1529
    %v4666 = vunpack.c.l.b16 %v1530
    %v4667 = vunpack.c.h.b16 %v1530
    %v4668 = vunpack.c.l.b16 %v1531
    %v4669 = vunpack.c.h.b16 %v1531
    %v4670 = vunpack.c.l.b16 %v1532
    %v4671 = vunpack.c.h.b16 %v1532
    %v4672 = vunpack.c.l.b16 %v1533
    %v4673 = vunpack.c.h.b16 %v1533
    %v4674 = vunpack.c.l.b16 %v1534
    %v4675 = vunpack.c.h.b16 %v1534
    %v4676 = vunpack.c.l.b16 %v1535
    %v4677 = vunpack.c.h.b16 %v1535
    %v4678 = vunpack.c.l.b16 %v1536
    %v4679 = vunpack.c.h.b16 %v1536
    %v4680 = vunpack.c.l.b16 %v1537
    %v4681 = vunpack.c.h.b16 %v1537
    %v4682 = vunpack.c.l.b16 %v1538
    %v4683 = vunpack.c.h.b16 %v1538
    %v4684 = vunpack.c.l.b16 %v1539
    %v4685 = vunpack.c.h.b16 %v1539
    %v4686 = vunpack.c.l.b16 %v1540
    %v4687 = vunpack.c.h.b16 %v1540
    %v4688 = vunpack.c.l.b16 %v1541
    %v4689 = vunpack.c.h.b16 %v1541
    %v4690 = vunpack.c.l.b16 %v1542
    %v4691 = vunpack.c.h.b16 %v1542
    %v4692 = vunpack.c.l.b16 %v1543
    %v4693 = vunpack.c.h.b16 %v1543
    %v4694 = vunpack.c.l.b16 %v1544
    %v4695 = vunpack.c.h.b16 %v1544
    %v4696 = vunpack.c.l.b16 %v1545
    %v4697 = vunpack.c.h.b16 %v1545
    %v4698 = vunpack.c.l.b16 %v1546
    %v4699 = vunpack.c.h.b16 %v1546
    %v4700 = vunpack.c.l.b16 %v1547
    %v4701 = vunpack.c.h.b16 %v1547
    %v4702 = vunpack.c.l.b16 %v1548
    %v4703 = vunpack.c.h.b16 %v1548
    %v4704 = vunpack.c.l.b16 %v1549
    %v4705 = vunpack.c.h.b16 %v1549
    %v4706 = vunpack.c.l.b16 %v1550
    %v4707 = vunpack.c.h.b16 %v1550
    %v4708 = vunpack.c.l.b16 %v1551
    %v4709 = vunpack.c.h.b16 %v1551
    %v4710 = vunpack.c.l.b16 %v1552
    %v4711 = vunpack.c.h.b16 %v1552
    %v4712 = vunpack.c.l.b16 %v1553
    %v4713 = vunpack.c.h.b16 %v1553
    %v4714 = vunpack.c.l.b16 %v1554
    %v4715 = vunpack.c.h.b16 %v1554
    %v4716 = vunpack.c.l.b16 %v1555
    %v4717 = vunpack.c.h.b16 %v1555
    %v4718 = vunpack.c.l.b16 %v1556
    %v4719 = vunpack.c.h.b16 %v1556
    %v4720 = vunpack.c.l.b16 %v1557
    %v4721 = vunpack.c.h.b16 %v1557
    %v4722 = vunpack.c.l.b16 %v1558
    %v4723 = vunpack.c.h.b16 %v1558
    %v4724 = vunpack.c.l.b16 %v1559
    %v4725 = vunpack.c.h.b16 %v1559
    %v4726 = vunpack.c.l.b16 %v1560
    %v4727 = vunpack.c.h.b16 %v1560
    %v4728 = vunpack.c.l.b16 %v1561
    %v4729 = vunpack.c.h.b16 %v1561
    %v4730 = vunpack.c.l.b16 %v1562
    %v4731 = vunpack.c.h.b16 %v1562
    %v4732 = vunpack.c.l.b16 %v1563
    %v4733 = vunpack.c.h.b16 %v1563
    %v4734 = vunpack.c.l.b16 %v1564
    %v4735 = vunpack.c.h.b16 %v1564
    %v4736 = vunpack.c.l.b16 %v1565
    %v4737 = vunpack.c.h.b16 %v1565
    %v4738 = vunpack.c.l.b16 %v1566
    %v4739 = vunpack.c.h.b16 %v1566
    %v4740 = vunpack.c.l.b16 %v1567
    %v4741 = vunpack.c.h.b16 %v1567
    %v4742 = vunpack.c.l.b16 %v1568
    %v4743 = vunpack.c.h.b16 %v1568
    %v4744 = vunpack.c.l.b16 %v1569
    %v4745 = vunpack.c.h.b16 %v1569
    %v4746 = vunpack.c.l.b16 %v1570
    %v4747 = vunpack.c.h.b16 %v1570
    %v4748 = vunpack.c.l.b16 %v1571
    %v4749 = vunpack.c.h.b16 %v1571
    %v4750 = vunpack.c.l.b16 %v1572
    %v4751 = vunpack.c.h.b16 %v1572
    %v4752 = vunpack.c.l.b16 %v1573
    %v4753 = vunpack.c.h.b16 %v1573
    %v4754 = vunpack.c.l.b16 %v1574
    %v4755 = vunpack.c.h.b16 %v1574
    %v4756 = vunpack.c.l.b16 %v1575
    %v4757 = vunpack.c.h.b16 %v1575
    %v4758 = vunpack.c.l.b16 %v1576
    %v4759 = vunpack.c.h.b16 %v1576
    %v4760 = vunpack.c.l.b16 %v1577
    %v4761 = vunpack.c.h.b16 %v1577
    %v4762 = vunpack.c.l.b16 %v1578
    %v4763 = vunpack.c.h.b16 %v1578
    %v4764 = vunpack.c.l.b16 %v1579
    %v4765 = vunpack.c.h.b16 %v1579
    %v4766 = vunpack.c.l.b16 %v1580
    %v4767 = vunpack.c.h.b16 %v1580
    %v4768 = vunpack.c.l.b16 %v1581
    %v4769 = vunpack.c.h.b16 %v1581
    %v4770 = vunpack.c.l.b16 %v1582
    %v4771 = vunpack.c.h.b16 %v1582
    %v4772 = vunpack.c.l.b16 %v1583
    %v4773 = vunpack.c.h.b16 %v1583
    %v4774 = vunpack.c.l.b16 %v1584
    %v4775 = vunpack.c.h.b16 %v1584
    %v4776 = vunpack.c.l.b16 %v1585
    %v4777 = vunpack.c.h.b16 %v1585
    %v4778 = vunpack.c.l.b16 %v1586
    %v4779 = vunpack.c.h.b16 %v1586
    %v4780 = vunpack.c.l.b16 %v1587
    %v4781 = vunpack.c.h.b16 %v1587
    %v4782 = vunpack.c.l.b16 %v1588
    %v4783 = vunpack.c.h.b16 %v1588
    %v4784 = vunpack.c.l.b16 %v1589
    %v4785 = vunpack.c.h.b16 %v1589
    %v4786 = vunpack.c.l.b16 %v1590
    %v4787 = vunpack.c.h.b16 %v1590
    %v4788 = vunpack.c.l.b16 %v1591
    %v4789 = vunpack.c.h.b16 %v1591
    %v4790 = vunpack.c.l.b16 %v1592
    %v4791 = vunpack.c.h.b16 %v1592
    %v4792 = vunpack.c.l.b16 %v1593
    %v4793 = vunpack.c.h.b16 %v1593
    %v4794 = vunpack.c.l.b16 %v1594
    %v4795 = vunpack.c.h.b16 %v1594
    %v4796 = vunpack.c.l.b16 %v1595
    %v4797 = vunpack.c.h.b16 %v1595
    %v4798 = vunpack.c.l.b16 %v1596
    %v4799 = vunpack.c.h.b16 %v1596
    %v4800 = vunpack.c.l.b16 %v1597
    %v4801 = vunpack.c.h.b16 %v1597
    %v4802 = vunpack.c.l.b16 %v1598
    %v4803 = vunpack.c.h.b16 %v1598
    %v4804 = vunpack.c.l.b16 %v1599
    %v4805 = vunpack.c.h.b16 %v1599
    %v4806 = vunpack.c.l.b16 %v1600
    %v4807 = vunpack.c.h.b16 %v1600
    %v4808 = vunpack.c.l.b16 %v1601
    %v4809 = vunpack.c.h.b16 %v1601
    %v4810 = vunpack.c.l.b16 %v1602
    %v4811 = vunpack.c.h.b16 %v1602
    %v4812 = vunpack.c.l.b16 %v1603
    %v4813 = vunpack.c.h.b16 %v1603
    %v4814 = vunpack.c.l.b16 %v1604
    %v4815 = vunpack.c.h.b16 %v1604
    %v4816 = vunpack.c.l.b16 %v1605
    %v4817 = vunpack.c.h.b16 %v1605
    %v4818 = vunpack.c.l.b16 %v1606
    %v4819 = vunpack.c.h.b16 %v1606
    %v4820 = vunpack.c.l.b16 %v1607
    %v4821 = vunpack.c.h.b16 %v1607
    %v4822 = vunpack.c.l.b16 %v1608
    %v4823 = vunpack.c.h.b16 %v1608
    %v4824 = vunpack.c.l.b16 %v1609
    %v4825 = vunpack.c.h.b16 %v1609
    %v4826 = vunpack.c.l.b16 %v1610
    %v4827 = vunpack.c.h.b16 %v1610
    %v4828 = vunpack.c.l.b16 %v1611
    %v4829 = vunpack.c.h.b16 %v1611
    %v4830 = vunpack.c.l.b16 %v1612
    %v4831 = vunpack.c.h.b16 %v1612
    %v4832 = vunpack.c.l.b16 %v1613
    %v4833 = vunpack.c.h.b16 %v1613
    %v4834 = vunpack.c.l.b16 %v1614
    %v4835 = vunpack.c.h.b16 %v1614
    %v4836 = vunpack.c.l.b16 %v1615
    %v4837 = vunpack.c.h.b16 %v1615
    %v4838 = vunpack.c.l.b16 %v1616
    %v4839 = vunpack.c.h.b16 %v1616
    %v4840 = vunpack.c.l.b16 %v1617
    %v4841 = vunpack.c.h.b16 %v1617
    %v4842 = vunpack.c.l.b16 %v1618
    %v4843 = vunpack.c.h.b16 %v1618
    %v4844 = vunpack.c.l.b16 %v1619
    %v4845 = vunpack.c.h.b16 %v1619
    %v4846 = vunpack.c.l.b16 %v1620
    %v4847 = vunpack.c.h.b16 %v1620
    %v4848 = vunpack.c.l.b16 %v1621
    %v4849 = vunpack.c.h.b16 %v1621
    %v4850 = vunpack.c.l.b16 %v1622
    %v4851 = vunpack.c.h.b16 %v1622
    %v4852 = vunpack.c.l.b16 %v1623
    %v4853 = vunpack.c.h.b16 %v1623
    %v4854 = vunpack.c.l.b16 %v1624
    %v4855 = vunpack.c.h.b16 %v1624
    %v4856 = vunpack.c.l.b16 %v1625
    %v4857 = vunpack.c.h.b16 %v1625
    %v4858 = vunpack.c.l.b16 %v1626
    %v4859 = vunpack.c.h.b16 %v1626
    %v4860 = vunpack.c.l.b16 %v1627
    %v4861 = vunpack.c.h.b16 %v1627
    %v4862 = vunpack.c.l.b16 %v1628
    %v4863 = vunpack.c.h.b16 %v1628
    %v4864 = vunpack.c.l.b16 %v1629
    %v4865 = vunpack.c.h.b16 %v1629
    %v4866 = vunpack.c.l.b16 %v1630
    %v4867 = vunpack.c.h.b16 %v1630
    %v4868 = vunpack.c.l.b16 %v1631
    %v4869 = vunpack.c.h.b16 %v1631
    %v4870 = vunpack.c.l.b16 %v1632
    %v4871 = vunpack.c.h.b16 %v1632
    %v4872 = vunpack.c.l.b16 %v1633
    %v4873 = vunpack.c.h.b16 %v1633
    %v4874 = vunpack.c.l.b16 %v1634
    %v4875 = vunpack.c.h.b16 %v1634
    %v4876 = vunpack.c.l.b16 %v1635
    %v4877 = vunpack.c.h.b16 %v1635
    %v4878 = vunpack.c.l.b16 %v1636
    %v4879 = vunpack.c.h.b16 %v1636
    %v4880 = vunpack.c.l.b16 %v1637
    %v4881 = vunpack.c.h.b16 %v1637
    %v4882 = vunpack.c.l.b16 %v1638
    %v4883 = vunpack.c.h.b16 %v1638
    %v4884 = vunpack.c.l.b16 %v1639
    %v4885 = vunpack.c.h.b16 %v1639
    %v4886 = vunpack.c.l.b16 %v1640
    %v4887 = vunpack.c.h.b16 %v1640
    %v4888 = vunpack.c.l.b16 %v1641
    %v4889 = vunpack.c.h.b16 %v1641
    %v4890 = vunpack.c.l.b16 %v1642
    %v4891 = vunpack.c.h.b16 %v1642
    %v4892 = vunpack.c.l.b16 %v1643
    %v4893 = vunpack.c.h.b16 %v1643
    %v4894 = vunpack.c.l.b16 %v1644
    %v4895 = vunpack.c.h.b16 %v1644
    %v4896 = vunpack.c.l.b16 %v1645
    %v4897 = vunpack.c.h.b16 %v1645
    %v4898 = vunpack.c.l.b16 %v1646
    %v4899 = vunpack.c.h.b16 %v1646
    %v4900 = vunpack.c.l.b16 %v1647
    %v4901 = vunpack.c.h.b16 %v1647
    %v4902 = vunpack.c.l.b16 %v1648
    %v4903 = vunpack.c.h.b16 %v1648
    %v4904 = vunpack.c.l.b16 %v1649
    %v4905 = vunpack.c.h.b16 %v1649
    %v4906 = vunpack.c.l.b16 %v1650
    %v4907 = vunpack.c.h.b16 %v1650
    %v4908 = vunpack.c.l.b16 %v1651
    %v4909 = vunpack.c.h.b16 %v1651
    %v4910 = vunpack.c.l.b16 %v1652
    %v4911 = vunpack.c.h.b16 %v1652
    %v4912 = vunpack.c.l.b16 %v1653
    %v4913 = vunpack.c.h.b16 %v1653
    %v4914 = vunpack.c.l.b16 %v1654
    %v4915 = vunpack.c.h.b16 %v1654
    %v4916 = vunpack.c.l.b16 %v1655
    %v4917 = vunpack.c.h.b16 %v1655
    %v4918 = vunpack.c.l.b16 %v1656
    %v4919 = vunpack.c.h.b16 %v1656
    %v4920 = vunpack.c.l.b16 %v1657
    %v4921 = vunpack.c.h.b16 %v1657
    %v4922 = vunpack.c.l.b16 %v1658
    %v4923 = vunpack.c.h.b16 %v1658
    %v4924 = vunpack.c.l.b16 %v1659
    %v4925 = vunpack.c.h.b16 %v1659
    %v4926 = vunpack.c.l.b16 %v1660
    %v4927 = vunpack.c.h.b16 %v1660
    %v4928 = vunpack.c.l.b16 %v1661
    %v4929 = vunpack.c.h.b16 %v1661
    %v4930 = vunpack.c.l.b16 %v1662
    %v4931 = vunpack.c.h.b16 %v1662
    %v4932 = vunpack.c.l.b16 %v1663
    %v4933 = vunpack.c.h.b16 %v1663
    %v4934 = vunpack.c.l.b16 %v1664
    %v4935 = vunpack.c.h.b16 %v1664
    %v4936 = vunpack.c.l.b16 %v1665
    %v4937 = vunpack.c.h.b16 %v1665
    %v4938 = vunpack.c.l.b16 %v1666
    %v4939 = vunpack.c.h.b16 %v1666
    %v4940 = vunpack.c.l.b16 %v1667
    %v4941 = vunpack.c.h.b16 %v1667
    %v4942 = vunpack.c.l.b16 %v1668
    %v4943 = vunpack.c.h.b16 %v1668
    %v4944 = vunpack.c.l.b16 %v1669
    %v4945 = vunpack.c.h.b16 %v1669
    %v4946 = vunpack.c.l.b16 %v1670
    %v4947 = vunpack.c.h.b16 %v1670
    %v4948 = vunpack.c.l.b16 %v1671
    %v4949 = vunpack.c.h.b16 %v1671
    %v4950 = vunpack.c.l.b16 %v1672
    %v4951 = vunpack.c.h.b16 %v1672
    %v4952 = vunpack.c.l.b16 %v1673
    %v4953 = vunpack.c.h.b16 %v1673
    %v4954 = vunpack.c.l.b16 %v1674
    %v4955 = vunpack.c.h.b16 %v1674
    %v4956 = vunpack.c.l.b16 %v1675
    %v4957 = vunpack.c.h.b16 %v1675
    %v4958 = vunpack.c.l.b16 %v1676
    %v4959 = vunpack.c.h.b16 %v1676
    %v4960 = vunpack.c.l.b16 %v1677
    %v4961 = vunpack.c.h.b16 %v1677
    %v4962 = vunpack.c.l.b16 %v1678
    %v4963 = vunpack.c.h.b16 %v1678
    %v4964 = vunpack.c.l.b16 %v1679
    %v4965 = vunpack.c.h.b16 %v1679
    %v4966 = vunpack.c.l.b16 %v1680
    %v4967 = vunpack.c.h.b16 %v1680
    %v4968 = vunpack.c.l.b16 %v1681
    %v4969 = vunpack.c.h.b16 %v1681
    %v4970 = vunpack.c.l.b16 %v1682
    %v4971 = vunpack.c.h.b16 %v1682
    %v4972 = vunpack.c.l.b16 %v1683
    %v4973 = vunpack.c.h.b16 %v1683
    %v4974 = vunpack.c.l.b16 %v1684
    %v4975 = vunpack.c.h.b16 %v1684
    %v4976 = vunpack.c.l.b16 %v1685
    %v4977 = vunpack.c.h.b16 %v1685
    %v4978 = vunpack.c.l.b16 %v1686
    %v4979 = vunpack.c.h.b16 %v1686
    %v4980 = vunpack.c.l.b16 %v1687
    %v4981 = vunpack.c.h.b16 %v1687
    %v4982 = vunpack.c.l.b16 %v1688
    %v4983 = vunpack.c.h.b16 %v1688
    %v4984 = vunpack.c.l.b16 %v1689
    %v4985 = vunpack.c.h.b16 %v1689
    %v4986 = vunpack.c.l.b16 %v1690
    %v4987 = vunpack.c.h.b16 %v1690
    %v4988 = vunpack.c.l.b16 %v1691
    %v4989 = vunpack.c.h.b16 %v1691
    %v4990 = vunpack.c.l.b16 %v1692
    %v4991 = vunpack.c.h.b16 %v1692
    %v4992 = vunpack.c.l.b16 %v1693
    %v4993 = vunpack.c.h.b16 %v1693
    %v4994 = vunpack.c.l.b16 %v1694
    %v4995 = vunpack.c.h.b16 %v1694
    %v4996 = vunpack.c.l.b16 %v1695
    %v4997 = vunpack.c.h.b16 %v1695
    %v4998 = vunpack.c.l.b16 %v1696
    %v4999 = vunpack.c.h.b16 %v1696
    %v5000 = vunpack.c.l.b16 %v1697
    %v5001 = vunpack.c.h.b16 %v1697
    %v5002 = vunpack.c.l.b16 %v1698
    %v5003 = vunpack.c.h.b16 %v1698
    %v5004 = vunpack.c.l.b16 %v1699
    %v5005 = vunpack.c.h.b16 %v1699
    %v5006 = vunpack.c.l.b16 %v1700
    %v5007 = vunpack.c.h.b16 %v1700
    %v5008 = vunpack.c.l.b16 %v1701
    %v5009 = vunpack.c.h.b16 %v1701
    %v5010 = vunpack.c.l.b16 %v1702
    %v5011 = vunpack.c.h.b16 %v1702
    %v5012 = vunpack.c.l.b16 %v1703
    %v5013 = vunpack.c.h.b16 %v1703
    %v5014 = vunpack.c.l.b16 %v1704
    %v5015 = vunpack.c.h.b16 %v1704
    %v5016 = vunpack.c.l.b16 %v1705
    %v5017 = vunpack.c.h.b16 %v1705
    %v5018 = vunpack.c.l.b16 %v1706
    %v5019 = vunpack.c.h.b16 %v1706
    %v5020 = vunpack.c.l.b16 %v1707
    %v5021 = vunpack.c.h.b16 %v1707
    %v5022 = vunpack.c.l.b16 %v1708
    %v5023 = vunpack.c.h.b16 %v1708
    %v5024 = vunpack.c.l.b16 %v1709
    %v5025 = vunpack.c.h.b16 %v1709
    %v5026 = vunpack.c.l.b16 %v1710
    %v5027 = vunpack.c.h.b16 %v1710
    %v5028 = vunpack.c.l.b16 %v1711
    %v5029 = vunpack.c.h.b16 %v1711
    %v5030 = vunpack.c.l.b16 %v1712
    %v5031 = vunpack.c.h.b16 %v1712
    %v5032 = vunpack.c.l.b16 %v1713
    %v5033 = vunpack.c.h.b16 %v1713
    %v5034 = vunpack.c.l.b16 %v1714
    %v5035 = vunpack.c.h.b16 %v1714
    %v5036 = vunpack.c.l.b16 %v1715
    %v5037 = vunpack.c.h.b16 %v1715
    %v5038 = vunpack.c.l.b16 %v1716
    %v5039 = vunpack.c.h.b16 %v1716
    %v5040 = vunpack.c.l.b16 %v1717
    %v5041 = vunpack.c.h.b16 %v1717
    %v5042 = vunpack.c.l.b16 %v1718
    %v5043 = vunpack.c.h.b16 %v1718
    %v5044 = vunpack.c.l.b16 %v1719
    %v5045 = vunpack.c.h.b16 %v1719
    %v5046 = vunpack.c.l.b16 %v1720
    %v5047 = vunpack.c.h.b16 %v1720
    %v5048 = vunpack.c.l.b16 %v1721
    %v5049 = vunpack.c.h.b16 %v1721
    %v5050 = vunpack.c.l.b16 %v1722
    %v5051 = vunpack.c.h.b16 %v1722
    %v5052 = vunpack.c.l.b16 %v1723
    %v5053 = vunpack.c.h.b16 %v1723
    %v5054 = vunpack.c.l.b16 %v1724
    %v5055 = vunpack.c.h.b16 %v1724
    %v5056 = vunpack.c.l.b16 %v1725
    %v5057 = vunpack.c.h.b16 %v1725
    %v5058 = vunpack.c.l.b16 %v1726
    %v5059 = vunpack.c.h.b16 %v1726
    %v5060 = vunpack.c.l.b16 %v1727
    %v5061 = vunpack.c.h.b16 %v1727
    %v5062 = vunpack.c.l.b16 %v1728
    %v5063 = vunpack.c.h.b16 %v1728
    %v5064 = vunpack.c.l.b16 %v1729
    %v5065 = vunpack.c.h.b16 %v1729
    %v5066 = vunpack.c.l.b16 %v1730
    %v5067 = vunpack.c.h.b16 %v1730
    %v5068 = vunpack.c.l.b16 %v1731
    %v5069 = vunpack.c.h.b16 %v1731
    %v5070 = vunpack.c.l.b16 %v1732
    %v5071 = vunpack.c.h.b16 %v1732
    %v5072 = vunpack.c.l.b16 %v1733
    %v5073 = vunpack.c.h.b16 %v1733
    %v5074 = vunpack.c.l.b16 %v1734
    %v5075 = vunpack.c.h.b16 %v1734
    %v5076 = vunpack.c.l.b16 %v1735
    %v5077 = vunpack.c.h.b16 %v1735
    %v5078 = vunpack.c.l.b16 %v1736
    %v5079 = vunpack.c.h.b16 %v1736
    %v5080 = vunpack.c.l.b16 %v1737
    %v5081 = vunpack.c.h.b16 %v1737
    %v5082 = vunpack.c.l.b16 %v1738
    %v5083 = vunpack.c.h.b16 %v1738
    %v5084 = vunpack.c.l.b16 %v1739
    %v5085 = vunpack.c.h.b16 %v1739
    %v5086 = vunpack.c.l.b16 %v1740
    %v5087 = vunpack.c.h.b16 %v1740
    %v5088 = vunpack.c.l.b16 %v1741
    %v5089 = vunpack.c.h.b16 %v1741
    %v5090 = vunpack.c.l.b16 %v1742
    %v5091 = vunpack.c.h.b16 %v1742
    %v5092 = vunpack.c.l.b16 %v1743
    %v5093 = vunpack.c.h.b16 %v1743
    %v5094 = vunpack.c.l.b16 %v1744
    %v5095 = vunpack.c.h.b16 %v1744
    %v5096 = vunpack.c.l.b16 %v1745
    %v5097 = vunpack.c.h.b16 %v1745
    %v5098 = vunpack.c.l.b16 %v1746
    %v5099 = vunpack.c.h.b16 %v1746
    %v5100 = vunpack.c.l.b16 %v1747
    %v5101 = vunpack.c.h.b16 %v1747
    %v5102 = vunpack.c.l.b16 %v1748
    %v5103 = vunpack.c.h.b16 %v1748
    %v5104 = vunpack.c.l.b16 %v1749
    %v5105 = vunpack.c.h.b16 %v1749
    %v5106 = vunpack.c.l.b16 %v1750
    %v5107 = vunpack.c.h.b16 %v1750
    %v5108 = vunpack.c.l.b16 %v1751
    %v5109 = vunpack.c.h.b16 %v1751
    %v5110 = vunpack.c.l.b16 %v1752
    %v5111 = vunpack.c.h.b16 %v1752
    %v5112 = vunpack.c.l.b16 %v1753
    %v5113 = vunpack.c.h.b16 %v1753
    %v5114 = vunpack.c.l.b16 %v1754
    %v5115 = vunpack.c.h.b16 %v1754
    %v5116 = vunpack.c.l.b16 %v1755
    %v5117 = vunpack.c.h.b16 %v1755
    %v5118 = vunpack.c.l.b16 %v1756
    %v5119 = vunpack.c.h.b16 %v1756
    %v5120 = vunpack.c.l.b16 %v1757
    %v5121 = vunpack.c.h.b16 %v1757
    %v5122 = vunpack.c.l.b16 %v1758
    %v5123 = vunpack.c.h.b16 %v1758
    %v5124 = vunpack.c.l.b16 %v1759
    %v5125 = vunpack.c.h.b16 %v1759
    %v5126 = vunpack.c.l.b16 %v1760
    %v5127 = vunpack.c.h.b16 %v1760
    %v5128 = vunpack.c.l.b16 %v1761
    %v5129 = vunpack.c.h.b16 %v1761
    %v5130 = vunpack.c.l.b16 %v1762
    %v5131 = vunpack.c.h.b16 %v1762
    %v5132 = vunpack.c.l.b16 %v1763
    %v5133 = vunpack.c.h.b16 %v1763
    %v5134 = vunpack.c.l.b16 %v1764
    %v5135 = vunpack.c.h.b16 %v1764
    %v5136 = vunpack.c.l.b16 %v1765
    %v5137 = vunpack.c.h.b16 %v1765
    %v5138 = vunpack.c.l.b16 %v1766
    %v5139 = vunpack.c.h.b16 %v1766
    %v5140 = vunpack.c.l.b16 %v1767
    %v5141 = vunpack.c.h.b16 %v1767
    %v5142 = vunpack.c.l.b16 %v1768
    %v5143 = vunpack.c.h.b16 %v1768
    %v5144 = vunpack.c.l.b16 %v1769
    %v5145 = vunpack.c.h.b16 %v1769
    %v5146 = vunpack.c.l.b16 %v1770
    %v5147 = vunpack.c.h.b16 %v1770
    %v5148 = vunpack.c.l.b16 %v1771
    %v5149 = vunpack.c.h.b16 %v1771
    %v5150 = vunpack.c.l.b16 %v1772
    %v5151 = vunpack.c.h.b16 %v1772
    %v5152 = vunpack.c.l.b16 %v1773
    %v5153 = vunpack.c.h.b16 %v1773
    %v5154 = vunpack.c.l.b16 %v1774
    %v5155 = vunpack.c.h.b16 %v1774
    %v5156 = vunpack.c.l.b16 %v1775
    %v5157 = vunpack.c.h.b16 %v1775
    %v5158 = vunpack.c.l.b16 %v1776
    %v5159 = vunpack.c.h.b16 %v1776
    %v5160 = vunpack.c.l.b16 %v1777
    %v5161 = vunpack.c.h.b16 %v1777
    %v5162 = vunpack.c.l.b16 %v1778
    %v5163 = vunpack.c.h.b16 %v1778
    %v5164 = vunpack.c.l.b16 %v1779
    %v5165 = vunpack.c.h.b16 %v1779
    %v5166 = vunpack.c.l.b16 %v1780
    %v5167 = vunpack.c.h.b16 %v1780
    %v5168 = vunpack.c.l.b16 %v1781
    %v5169 = vunpack.c.h.b16 %v1781
    %v5170 = vunpack.c.l.b16 %v1782
    %v5171 = vunpack.c.h.b16 %v1782
    %v5172 = vunpack.c.l.b16 %v1783
    %v5173 = vunpack.c.h.b16 %v1783
    %v5174 = vunpack.c.l.b16 %v1784
    %v5175 = vunpack.c.h.b16 %v1784
    %v5176 = vunpack.c.l.b16 %v1785
    %v5177 = vunpack.c.h.b16 %v1785
    %v5178 = vunpack.c.l.b16 %v1786
    %v5179 = vunpack.c.h.b16 %v1786
    %v5180 = vunpack.c.l.b16 %v1787
    %v5181 = vunpack.c.h.b16 %v1787
    %v5182 = vunpack.c.l.b16 %v1788
    %v5183 = vunpack.c.h.b16 %v1788
    %v5184 = vunpack.c.l.b16 %v1789
    %v5185 = vunpack.c.h.b16 %v1789
    %v5186 = vunpack.c.l.b16 %v1790
    %v5187 = vunpack.c.h.b16 %v1790
    %v5188 = vunpack.c.l.b16 %v1791
    %v5189 = vunpack.c.h.b16 %v1791
    %v5190 = vunpack.c.l.b16 %v1792
    %v5191 = vunpack.c.h.b16 %v1792
    %v5192 = vunpack.c.l.b16 %v1793
    %v5193 = vunpack.c.h.b16 %v1793
    %v5194 = vunpack.c.l.b16 %v1794
    %v5195 = vunpack.c.h.b16 %v1794
    %v5196 = vunpack.c.l.b16 %v1795
    %v5197 = vunpack.c.h.b16 %v1795
    %v5198 = vunpack.c.l.b16 %v1796
    %v5199 = vunpack.c.h.b16 %v1796
    %v5200 = vunpack.c.l.b16 %v1797
    %v5201 = vunpack.c.h.b16 %v1797
    %v5202 = vunpack.c.l.b16 %v1798
    %v5203 = vunpack.c.h.b16 %v1798
    %v5204 = vunpack.c.l.b16 %v1799
    %v5205 = vunpack.c.h.b16 %v1799
    %v5206 = vunpack.c.l.b16 %v1800
    %v5207 = vunpack.c.h.b16 %v1800
    %v5208 = vunpack.c.l.b16 %v1801
    %v5209 = vunpack.c.h.b16 %v1801
    %v5210 = vunpack.c.l.b16 %v1802
    %v5211 = vunpack.c.h.b16 %v1802
    %v5212 = vunpack.c.l.b16 %v1803
    %v5213 = vunpack.c.h.b16 %v1803
    %v5214 = vunpack.c.l.b16 %v1804
    %v5215 = vunpack.c.h.b16 %v1804
    %v5216 = vunpack.c.l.b16 %v1805
    %v5217 = vunpack.c.h.b16 %v1805
    %v5218 = vunpack.c.l.b16 %v1806
    %v5219 = vunpack.c.h.b16 %v1806
    %v5220 = vunpack.c.l.b16 %v1807
    %v5221 = vunpack.c.h.b16 %v1807
    %v5222 = vunpack.c.l.b16 %v1808
    %v5223 = vunpack.c.h.b16 %v1808
    %v5224 = vunpack.c.l.b16 %v1809
    %v5225 = vunpack.c.h.b16 %v1809
    %v5226 = vunpack.c.l.b16 %v1810
    %v5227 = vunpack.c.h.b16 %v1810
    %v5228 = vunpack.c.l.b16 %v1811
    %v5229 = vunpack.c.h.b16 %v1811
    %v5230 = vunpack.c.l.b16 %v1812
    %v5231 = vunpack.c.h.b16 %v1812
    %v5232 = vunpack.c.l.b16 %v1813
    %v5233 = vunpack.c.h.b16 %v1813
    %v5234 = vunpack.c.l.b16 %v1814
    %v5235 = vunpack.c.h.b16 %v1814
    %v5236 = vunpack.c.l.b16 %v1815
    %v5237 = vunpack.c.h.b16 %v1815
    %v5238 = vunpack.c.l.b16 %v1816
    %v5239 = vunpack.c.h.b16 %v1816
    %v5240 = vunpack.c.l.b16 %v1817
    %v5241 = vunpack.c.h.b16 %v1817
    %v5242 = vunpack.c.l.b16 %v1818
    %v5243 = vunpack.c.h.b16 %v1818
    %v5244 = vunpack.c.l.b16 %v1819
    %v5245 = vunpack.c.h.b16 %v1819
    %v5246 = vunpack.c.l.b16 %v1820
    %v5247 = vunpack.c.h.b16 %v1820
    %v5248 = vunpack.c.l.b16 %v1821
    %v5249 = vunpack.c.h.b16 %v1821
    %v5250 = vunpack.c.l.b16 %v1822
    %v5251 = vunpack.c.h.b16 %v1822
    %v5252 = vunpack.c.l.b16 %v1823
    %v5253 = vunpack.c.h.b16 %v1823
    %v5254 = vunpack.c.l.b16 %v1824
    %v5255 = vunpack.c.h.b16 %v1824
    %v5256 = vunpack.c.l.b16 %v1825
    %v5257 = vunpack.c.h.b16 %v1825
    %v5258 = vunpack.c.l.b16 %v1826
    %v5259 = vunpack.c.h.b16 %v1826
    %v5260 = vunpack.c.l.b16 %v1827
    %v5261 = vunpack.c.h.b16 %v1827
    %v5262 = vunpack.c.l.b16 %v1828
    %v5263 = vunpack.c.h.b16 %v1828
    %v5264 = vunpack.c.l.b16 %v1829
    %v5265 = vunpack.c.h.b16 %v1829
    %v5266 = vunpack.c.l.b16 %v1830
    %v5267 = vunpack.c.h.b16 %v1830
    %v5268 = vunpack.c.l.b16 %v1831
    %v5269 = vunpack.c.h.b16 %v1831
    %v5270 = vunpack.c.l.b16 %v1832
    %v5271 = vunpack.c.h.b16 %v1832
    %v5272 = vunpack.c.l.b16 %v1833
    %v5273 = vunpack.c.h.b16 %v1833
    %v5274 = vunpack.c.l.b16 %v1834
    %v5275 = vunpack.c.h.b16 %v1834
    %v5276 = vunpack.c.l.b16 %v1835
    %v5277 = vunpack.c.h.b16 %v1835
    %v5278 = vunpack.c.l.b16 %v1836
    %v5279 = vunpack.c.h.b16 %v1836
    %v5280 = vunpack.c.l.b16 %v1837
    %v5281 = vunpack.c.h.b16 %v1837
    %v5282 = vunpack.c.l.b16 %v1838
    %v5283 = vunpack.c.h.b16 %v1838
    %v5284 = vunpack.c.l.b16 %v1839
    %v5285 = vunpack.c.h.b16 %v1839
    %v5286 = vunpack.c.l.b16 %v1840
    %v5287 = vunpack.c.h.b16 %v1840
    %v5288 = vunpack.c.l.b16 %v1841
    %v5289 = vunpack.c.h.b16 %v1841
    %v5290 = vunpack.c.l.b16 %v1842
    %v5291 = vunpack.c.h.b16 %v1842
    %v5292 = vunpack.c.l.b16 %v1843
    %v5293 = vunpack.c.h.b16 %v1843
    %v5294 = vunpack.c.l.b16 %v1844
    %v5295 = vunpack.c.h.b16 %v1844
    %v5296 = vunpack.c.l.b16 %v1845
    %v5297 = vunpack.c.h.b16 %v1845
    %v5298 = vunpack.c.l.b16 %v1846
    %v5299 = vunpack.c.h.b16 %v1846
    %v5300 = vunpack.c.l.b16 %v1847
    %v5301 = vunpack.c.h.b16 %v1847
    %v5302 = vunpack.c.l.b16 %v1848
    %v5303 = vunpack.c.h.b16 %v1848
    %v5304 = vunpack.c.l.b16 %v1849
    %v5305 = vunpack.c.h.b16 %v1849
    %v5306 = vunpack.c.l.b16 %v1850
    %v5307 = vunpack.c.h.b16 %v1850
    %v5308 = vunpack.c.l.b16 %v1851
    %v5309 = vunpack.c.h.b16 %v1851
    %v5310 = vunpack.c.l.b16 %v1852
    %v5311 = vunpack.c.h.b16 %v1852
    %v5312 = vunpack.c.l.b16 %v1853
    %v5313 = vunpack.c.h.b16 %v1853
    %v5314 = vunpack.c.l.b16 %v1854
    %v5315 = vunpack.c.h.b16 %v1854
    %v5316 = vunpack.c.l.b16 %v1855
    %v5317 = vunpack.c.h.b16 %v1855
    %v5318 = vunpack.c.l.b16 %v1856
    %v5319 = vunpack.c.h.b16 %v1856
    %v5320 = vunpack.c.l.b16 %v1857
    %v5321 = vunpack.c.h.b16 %v1857
    %v5322 = vunpack.c.l.b16 %v1858
    %v5323 = vunpack.c.h.b16 %v1858
    %v5324 = vunpack.c.l.b16 %v1859
    %v5325 = vunpack.c.h.b16 %v1859
    %v5326 = vunpack.c.l.b16 %v1860
    %v5327 = vunpack.c.h.b16 %v1860
    %v5328 = vunpack.c.l.b16 %v1861
    %v5329 = vunpack.c.h.b16 %v1861
    %v5330 = vunpack.c.l.b16 %v1862
    %v5331 = vunpack.c.h.b16 %v1862
    %v5332 = vunpack.c.l.b16 %v1863
    %v5333 = vunpack.c.h.b16 %v1863
    %v5334 = vunpack.c.l.b16 %v1864
    %v5335 = vunpack.c.h.b16 %v1864
    %v5336 = vunpack.c.l.b16 %v1865
    %v5337 = vunpack.c.h.b16 %v1865
    %v5338 = vunpack.c.l.b16 %v1866
    %v5339 = vunpack.c.h.b16 %v1866
    %v5340 = vunpack.c.l.b16 %v1867
    %v5341 = vunpack.c.h.b16 %v1867
    %v5342 = vunpack.c.l.b16 %v1868
    %v5343 = vunpack.c.h.b16 %v1868
    %v5344 = vunpack.c.l.b16 %v1869
    %v5345 = vunpack.c.h.b16 %v1869
    %v5346 = vunpack.c.l.b16 %v1870
    %v5347 = vunpack.c.h.b16 %v1870
    %v5348 = vunpack.c.l.b16 %v1871
    %v5349 = vunpack.c.h.b16 %v1871
    %v5350 = vunpack.c.l.b16 %v1872
    %v5351 = vunpack.c.h.b16 %v1872
    %v5352 = vunpack.c.l.b16 %v1873
    %v5353 = vunpack.c.h.b16 %v1873
    %v5354 = vunpack.c.l.b16 %v1874
    %v5355 = vunpack.c.h.b16 %v1874
    %v5356 = vunpack.c.l.b16 %v1875
    %v5357 = vunpack.c.h.b16 %v1875
    %v5358 = vunpack.c.l.b16 %v1876
    %v5359 = vunpack.c.h.b16 %v1876
    %v5360 = vunpack.c.l.b16 %v1877
    %v5361 = vunpack.c.h.b16 %v1877
    %v5362 = vunpack.c.l.b16 %v1878
    %v5363 = vunpack.c.h.b16 %v1878
    %v5364 = vunpack.c.l.b16 %v1879
    %v5365 = vunpack.c.h.b16 %v1879
    %v5366 = vunpack.c.l.b16 %v1880
    %v5367 = vunpack.c.h.b16 %v1880
    %v5368 = vunpack.c.l.b16 %v1881
    %v5369 = vunpack.c.h.b16 %v1881
    %v5370 = vunpack.c.l.b16 %v1882
    %v5371 = vunpack.c.h.b16 %v1882
    %v5372 = vunpack.c.l.b16 %v1883
    %v5373 = vunpack.c.h.b16 %v1883
    %v5374 = vunpack.c.l.b16 %v1884
    %v5375 = vunpack.c.h.b16 %v1884
    %v5376 = vunpack.c.l.b16 %v1885
    %v5377 = vunpack.c.h.b16 %v1885
    %v5378 = vunpack.c.l.b16 %v1886
    %v5379 = vunpack.c.h.b16 %v1886
    %v5380 = vunpack.c.l.b16 %v1887
    %v5381 = vunpack.c.h.b16 %v1887
    %v5382 = vunpack.c.l.b16 %v1888
    %v5383 = vunpack.c.h.b16 %v1888
    %v5384 = vunpack.c.l.b16 %v1889
    %v5385 = vunpack.c.h.b16 %v1889
    %v5386 = vunpack.c.l.b16 %v1890
    %v5387 = vunpack.c.h.b16 %v1890
    %v5388 = vunpack.c.l.b16 %v1891
    %v5389 = vunpack.c.h.b16 %v1891
    %v5390 = vunpack.c.l.b16 %v1892
    %v5391 = vunpack.c.h.b16 %v1892
    %v5392 = vunpack.c.l.b16 %v1893
    %v5393 = vunpack.c.h.b16 %v1893
    %v5394 = vunpack.c.l.b16 %v1894
    %v5395 = vunpack.c.h.b16 %v1894
    %v5396 = vunpack.c.l.b16 %v1895
    %v5397 = vunpack.c.h.b16 %v1895
    %v5398 = vunpack.c.l.b16 %v1896
    %v5399 = vunpack.c.h.b16 %v1896
    %v5400 = vunpack.c.l.b16 %v1897
    %v5401 = vunpack.c.h.b16 %v1897
    %v5402 = vunpack.c.l.b16 %v1898
    %v5403 = vunpack.c.h.b16 %v1898
    %v5404 = vunpack.c.l.b16 %v1899
    %v5405 = vunpack.c.h.b16 %v1899
    %v5406 = vunpack.c.l.b16 %v1900
    %v5407 = vunpack.c.h.b16 %v1900
    %v5408 = vunpack.c.l.b16 %v1901
    %v5409 = vunpack.c.h.b16 %v1901
    %v5410 = vunpack.c.l.b16 %v1902
    %v5411 = vunpack.c.h.b16 %v1902
    %v5412 = vunpack.c.l.b16 %v1903
    %v5413 = vunpack.c.h.b16 %v1903
    %v5414 = vunpack.c.l.b16 %v1904
    %v5415 = vunpack.c.h.b16 %v1904
    %v5416 = vunpack.c.l.b16 %v1905
    %v5417 = vunpack.c.h.b16 %v1905
    %v5418 = vunpack.c.l.b16 %v1906
    %v5419 = vunpack.c.h.b16 %v1906
    %v5420 = vunpack.c.l.b16 %v1907
    %v5421 = vunpack.c.h.b16 %v1907
    %v5422 = vunpack.c.l.b16 %v1908
    %v5423 = vunpack.c.h.b16 %v1908
    %v5424 = vunpack.c.l.b16 %v1909
    %v5425 = vunpack.c.h.b16 %v1909
    %v5426 = vunpack.c.l.b16 %v1910
    %v5427 = vunpack.c.h.b16 %v1910
    %v5428 = vunpack.c.l.b16 %v1911
    %v5429 = vunpack.c.h.b16 %v1911
    %v5430 = vunpack.c.l.b16 %v1912
    %v5431 = vunpack.c.h.b16 %v1912
    %v5432 = vunpack.c.l.b16 %v1913
    %v5433 = vunpack.c.h.b16 %v1913
    %v5434 = vunpack.c.l.b16 %v1914
    %v5435 = vunpack.c.h.b16 %v1914
    %v5436 = vunpack.c.l.b16 %v1915
    %v5437 = vunpack.c.h.b16 %v1915
    %v5438 = vunpack.c.l.b16 %v1916
    %v5439 = vunpack.c.h.b16 %v1916
    %v5440 = vunpack.c.l.b16 %v1917
    %v5441 = vunpack.c.h.b16 %v1917
    %v5442 = vunpack.c.l.b16 %v1918
    %v5443 = vunpack.c.h.b16 %v1918
    %v5444 = vunpack.c.l.b16 %v1919
    %v5445 = vunpack.c.h.b16 %v1919
    %v5446 = vunpack.c.l.b16 %v1920
    %v5447 = vunpack.c.h.b16 %v1920
    %v5448 = vunpack.c.l.b16 %v1921
    %v5449 = vunpack.c.h.b16 %v1921
    %v5450 = vunpack.c.l.b16 %v1922
    %v5451 = vunpack.c.h.b16 %v1922
    %v5452 = vunpack.c.l.b16 %v1923
    %v5453 = vunpack.c.h.b16 %v1923
    %v5454 = vunpack.c.l.b16 %v1924
    %v5455 = vunpack.c.h.b16 %v1924
    %v5456 = vunpack.c.l.b16 %v1925
    %v5457 = vunpack.c.h.b16 %v1925
    %v5458 = vunpack.c.l.b16 %v1926
    %v5459 = vunpack.c.h.b16 %v1926
    %v5460 = vunpack.c.l.b16 %v1927
    %v5461 = vunpack.c.h.b16 %v1927
    %v5462 = vunpack.c.l.b16 %v1928
    %v5463 = vunpack.c.h.b16 %v1928
    %v5464 = vunpack.c.l.b16 %v1929
    %v5465 = vunpack.c.h.b16 %v1929
    %v5466 = vunpack.c.l.b16 %v1930
    %v5467 = vunpack.c.h.b16 %v1930
    %v5468 = vunpack.c.l.b16 %v1931
    %v5469 = vunpack.c.h.b16 %v1931
    %v5470 = vunpack.c.l.b16 %v1932
    %v5471 = vunpack.c.h.b16 %v1932
    %v5472 = vunpack.c.l.b16 %v1933
    %v5473 = vunpack.c.h.b16 %v1933
    %v5474 = vunpack.c.l.b16 %v1934
    %v5475 = vunpack.c.h.b16 %v1934
    %v5476 = vunpack.c.l.b16 %v1935
    %v5477 = vunpack.c.h.b16 %v1935
    %v5478 = vunpack.c.l.b16 %v1936
    %v5479 = vunpack.c.h.b16 %v1936
    %v5480 = vunpack.c.l.b16 %v1937
    %v5481 = vunpack.c.h.b16 %v1937
    %v5482 = vunpack.c.l.b16 %v1938
    %v5483 = vunpack.c.h.b16 %v1938
    %v5484 = vunpack.c.l.b16 %v1939
    %v5485 = vunpack.c.h.b16 %v1939
    %v5486 = vunpack.c.l.b16 %v1940
    %v5487 = vunpack.c.h.b16 %v1940
    %v5488 = vunpack.c.l.b16 %v1941
    %v5489 = vunpack.c.h.b16 %v1941
    %v5490 = vunpack.c.l.b16 %v1942
    %v5491 = vunpack.c.h.b16 %v1942
    %v5492 = vunpack.c.l.b16 %v1943
    %v5493 = vunpack.c.h.b16 %v1943
    %v5494 = vunpack.c.l.b16 %v1944
    %v5495 = vunpack.c.h.b16 %v1944
    %v5496 = vunpack.c.l.b16 %v1945
    %v5497 = vunpack.c.h.b16 %v1945
    %v5498 = vunpack.c.l.b16 %v1946
    %v5499 = vunpack.c.h.b16 %v1946
    %v5500 = vunpack.c.l.b16 %v1947
    %v5501 = vunpack.c.h.b16 %v1947
    %v5502 = vunpack.c.l.b16 %v1948
    %v5503 = vunpack.c.h.b16 %v1948
    %v5504 = vunpack.c.l.b16 %v1949
    %v5505 = vunpack.c.h.b16 %v1949
    %v5506 = vunpack.c.l.b16 %v1950
    %v5507 = vunpack.c.h.b16 %v1950
    %v5508 = vunpack.c.l.b16 %v1951
    %v5509 = vunpack.c.h.b16 %v1951
    %v5510 = vunpack.c.l.b16 %v1952
    %v5511 = vunpack.c.h.b16 %v1952
    %v5512 = vunpack.c.l.b16 %v1953
    %v5513 = vunpack.c.h.b16 %v1953
    %v5514 = vunpack.c.l.b16 %v1954
    %v5515 = vunpack.c.h.b16 %v1954
    %v5516 = vunpack.c.l.b16 %v1955
    %v5517 = vunpack.c.h.b16 %v1955
    %v5518 = vunpack.c.l.b16 %v1956
    %v5519 = vunpack.c.h.b16 %v1956
    %v5520 = vunpack.c.l.b16 %v1957
    %v5521 = vunpack.c.h.b16 %v1957
    %v5522 = vunpack.c.l.b16 %v1958
    %v5523 = vunpack.c.h.b16 %v1958
    %v5524 = vunpack.c.l.b16 %v1959
    %v5525 = vunpack.c.h.b16 %v1959
    %v5526 = vunpack.c.l.b16 %v1960
    %v5527 = vunpack.c.h.b16 %v1960
    %v5528 = vunpack.c.l.b16 %v1961
    %v5529 = vunpack.c.h.b16 %v1961
    %v5530 = vunpack.c.l.b16 %v1962
    %v5531 = vunpack.c.h.b16 %v1962
    %v5532 = vunpack.c.l.b16 %v1963
    %v5533 = vunpack.c.h.b16 %v1963
    %v5534 = vunpack.c.l.b16 %v1964
    %v5535 = vunpack.c.h.b16 %v1964
    %v5536 = vunpack.c.l.b16 %v1965
    %v5537 = vunpack.c.h.b16 %v1965
    %v5538 = vunpack.c.l.b16 %v1966
    %v5539 = vunpack.c.h.b16 %v1966
    %v5540 = vunpack.c.l.b16 %v1967
    %v5541 = vunpack.c.h.b16 %v1967
    %v5542 = vunpack.c.l.b16 %v1968
    %v5543 = vunpack.c.h.b16 %v1968
    %v5544 = vunpack.c.l.b16 %v1969
    %v5545 = vunpack.c.h.b16 %v1969
    %v5546 = vunpack.c.l.b16 %v1970
    %v5547 = vunpack.c.h.b16 %v1970
    %v5548 = vunpack.c.l.b16 %v1971
    %v5549 = vunpack.c.h.b16 %v1971
    %v5550 = vunpack.c.l.b16 %v1972
    %v5551 = vunpack.c.h.b16 %v1972
    %v5552 = vunpack.c.l.b16 %v1973
    %v5553 = vunpack.c.h.b16 %v1973
    %v5554 = vunpack.c.l.b16 %v1974
    %v5555 = vunpack.c.h.b16 %v1974
    %v5556 = vunpack.c.l.b16 %v1975
    %v5557 = vunpack.c.h.b16 %v1975
    %v5558 = vunpack.c.l.b16 %v1976
    %v5559 = vunpack.c.h.b16 %v1976
    %v5560 = vunpack.c.l.b16 %v1977
    %v5561 = vunpack.c.h.b16 %v1977
    %v5562 = vunpack.c.l.b16 %v1978
    %v5563 = vunpack.c.h.b16 %v1978
    %v5564 = vunpack.c.l.b16 %v1979
    %v5565 = vunpack.c.h.b16 %v1979
    %v5566 = vunpack.c.l.b16 %v1980
    %v5567 = vunpack.c.h.b16 %v1980
    %v5568 = vunpack.c.l.b16 %v1981
    %v5569 = vunpack.c.h.b16 %v1981
    %v5570 = vunpack.c.l.b16 %v1982
    %v5571 = vunpack.c.h.b16 %v1982
    %v5572 = vunpack.c.l.b16 %v1983
    %v5573 = vunpack.c.h.b16 %v1983
    %v5574 = vunpack.c.l.b16 %v1984
    %v5575 = vunpack.c.h.b16 %v1984
    %v5576 = vunpack.c.l.b16 %v1985
    %v5577 = vunpack.c.h.b16 %v1985
    %v5578 = vunpack.c.l.b16 %v1986
    %v5579 = vunpack.c.h.b16 %v1986
    %v5580 = vunpack.c.l.b16 %v1987
    %v5581 = vunpack.c.h.b16 %v1987
    %v5582 = vunpack.c.l.b16 %v1988
    %v5583 = vunpack.c.h.b16 %v1988
    %v5584 = vunpack.c.l.b16 %v1989
    %v5585 = vunpack.c.h.b16 %v1989
    %v5586 = vunpack.c.l.b16 %v1990
    %v5587 = vunpack.c.h.b16 %v1990
    %v5588 = vunpack.c.l.b16 %v1991
    %v5589 = vunpack.c.h.b16 %v1991
    %v5590 = vunpack.c.l.b16 %v1992
    %v5591 = vunpack.c.h.b16 %v1992
    %v5592 = vunpack.c.l.b16 %v1993
    %v5593 = vunpack.c.h.b16 %v1993
    %v5594 = vunpack.c.l.b16 %v1994
    %v5595 = vunpack.c.h.b16 %v1994
    %v5596 = vunpack.c.l.b16 %v1995
    %v5597 = vunpack.c.h.b16 %v1995
    %v5598 = vunpack.c.l.b16 %v1996
    %v5599 = vunpack.c.h.b16 %v1996
    %v5600 = vunpack.c.l.b16 %v1997
    %v5601 = vunpack.c.h.b16 %v1997
    %v5602 = vunpack.c.l.b16 %v1998
    %v5603 = vunpack.c.h.b16 %v1998
    %v5604 = vunpack.c.l.b16 %v1999
    %v5605 = vunpack.c.h.b16 %v1999
    %v5606 = vunpack.c.l.b16 %v2000
    %v5607 = vunpack.c.h.b16 %v2000
    %v5608 = vunpack.c.l.b16 %v2001
    %v5609 = vunpack.c.h.b16 %v2001
    %v5610 = vunpack.c.l.b16 %v2002
    %v5611 = vunpack.c.h.b16 %v2002
    %v5612 = vunpack.c.l.b16 %v2003
    %v5613 = vunpack.c.h.b16 %v2003
    %v5614 = vunpack.c.l.b16 %v2004
    %v5615 = vunpack.c.h.b16 %v2004
    %v5616 = vunpack.c.l.b16 %v2005
    %v5617 = vunpack.c.h.b16 %v2005
    %v5618 = vunpack.c.l.b16 %v2006
    %v5619 = vunpack.c.h.b16 %v2006
    %v5620 = vunpack.c.l.b16 %v2007
    %v5621 = vunpack.c.h.b16 %v2007
    %v5622 = vunpack.c.l.b16 %v2008
    %v5623 = vunpack.c.h.b16 %v2008
    %v5624 = vunpack.c.l.b16 %v2009
    %v5625 = vunpack.c.h.b16 %v2009
    %v5626 = vunpack.c.l.b16 %v2010
    %v5627 = vunpack.c.h.b16 %v2010
    %v5628 = vunpack.c.l.b16 %v2011
    %v5629 = vunpack.c.h.b16 %v2011
    %v5630 = vunpack.c.l.b16 %v2012
    %v5631 = vunpack.c.h.b16 %v2012
    %v5632 = vunpack.c.l.b16 %v2013
    %v5633 = vunpack.c.h.b16 %v2013
    %v5634 = vunpack.c.l.b16 %v2014
    %v5635 = vunpack.c.h.b16 %v2014
    %v5636 = vunpack.c.l.b16 %v2015
    %v5637 = vunpack.c.h.b16 %v2015
    %v5638 = vunpack.c.l.b16 %v2016
    %v5639 = vunpack.c.h.b16 %v2016
    %v5640 = vunpack.c.l.b16 %v2017
    %v5641 = vunpack.c.h.b16 %v2017
    %v5642 = vunpack.c.l.b16 %v2018
    %v5643 = vunpack.c.h.b16 %v2018
    %v5644 = vunpack.c.l.b16 %v2019
    %v5645 = vunpack.c.h.b16 %v2019
    %v5646 = vunpack.c.l.b16 %v2020
    %v5647 = vunpack.c.h.b16 %v2020
    %v5648 = vunpack.c.l.b16 %v2021
    %v5649 = vunpack.c.h.b16 %v2021
    %v5650 = vunpack.c.l.b16 %v2022
    %v5651 = vunpack.c.h.b16 %v2022
    %v5652 = vunpack.c.l.b16 %v2023
    %v5653 = vunpack.c.h.b16 %v2023
    %v5654 = vunpack.c.l.b16 %v2024
    %v5655 = vunpack.c.h.b16 %v2024
    %v5656 = vunpack.c.l.b16 %v2025
    %v5657 = vunpack.c.h.b16 %v2025
    %v5658 = vunpack.c.l.b16 %v2026
    %v5659 = vunpack.c.h.b16 %v2026
    %v5660 = vunpack.c.l.b16 %v2027
    %v5661 = vunpack.c.h.b16 %v2027
    %v5662 = vunpack.c.l.b16 %v2028
    %v5663 = vunpack.c.h.b16 %v2028
    %v5664 = vunpack.c.l.b16 %v2029
    %v5665 = vunpack.c.h.b16 %v2029
    %v5666 = vunpack.c.l.b16 %v2030
    %v5667 = vunpack.c.h.b16 %v2030
    %v5668 = vunpack.c.l.b16 %v2031
    %v5669 = vunpack.c.h.b16 %v2031
    %v5670 = vunpack.c.l.b16 %v2032
    %v5671 = vunpack.c.h.b16 %v2032
    %v5672 = vunpack.c.l.b16 %v2033
    %v5673 = vunpack.c.h.b16 %v2033
    %v5674 = vunpack.c.l.b16 %v2034
    %v5675 = vunpack.c.h.b16 %v2034
    %v5676 = vunpack.c.l.b16 %v2035
    %v5677 = vunpack.c.h.b16 %v2035
    %v5678 = vunpack.c.l.b16 %v2036
    %v5679 = vunpack.c.h.b16 %v2036
    %v5680 = vunpack.c.l.b16 %v2037
    %v5681 = vunpack.c.h.b16 %v2037
    %v5682 = vunpack.c.l.b16 %v2038
    %v5683 = vunpack.c.h.b16 %v2038
    %v5684 = vunpack.c.l.b16 %v2039
    %v5685 = vunpack.c.h.b16 %v2039
    %v5686 = vunpack.c.l.b16 %v2040
    %v5687 = vunpack.c.h.b16 %v2040
    %v5688 = vunpack.c.l.b16 %v2041
    %v5689 = vunpack.c.h.b16 %v2041
    %v5690 = vunpack.c.l.b16 %v2042
    %v5691 = vunpack.c.h.b16 %v2042
    %v5692 = vunpack.c.l.b16 %v2043
    %v5693 = vunpack.c.h.b16 %v2043
    %v5694 = vunpack.c.l.b16 %v2044
    %v5695 = vunpack.c.h.b16 %v2044
    %v5696 = vunpack.c.l.b16 %v2045
    %v5697 = vunpack.c.h.b16 %v2045
    %v5698 = vunpack.c.l.b16 %v2046
    %v5699 = vunpack.c.h.b16 %v2046
    %v5700 = vunpack.c.l.b16 %v2047
    %v5701 = vunpack.c.h.b16 %v2047
    %v5702 = vunpack.c.l.b16 %v2048
    %v5703 = vunpack.c.h.b16 %v2048
    %v5704 = vunpack.c.l.b16 %v2049
    %v5705 = vunpack.c.h.b16 %v2049
    %v5706 = vunpack.c.l.b16 %v2050
    %v5707 = vunpack.c.h.b16 %v2050
    %v5708 = vunpack.c.l.b16 %v2051
    %v5709 = vunpack.c.h.b16 %v2051
    %v5710 = vunpack.c.l.b16 %v2052
    %v5711 = vunpack.c.h.b16 %v2052
    %v5712 = vunpack.c.l.b16 %v2053
    %v5713 = vunpack.c.h.b16 %v2053
    %v5714 = vunpack.c.l.b16 %v2054
    %v5715 = vunpack.c.h.b16 %v2054
    %v5716 = vunpack.c.l.b16 %v2055
    %v5717 = vunpack.c.h.b16 %v2055
    %v5718 = vunpack.c.l.b16 %v2056
    %v5719 = vunpack.c.h.b16 %v2056
    %v5720 = vunpack.c.l.b16 %v2057
    %v5721 = vunpack.c.h.b16 %v2057
    %v5722 = vunpack.c.l.b16 %v2058
    %v5723 = vunpack.c.h.b16 %v2058
    %v5724 = vunpack.c.l.b16 %v2059
    %v5725 = vunpack.c.h.b16 %v2059
    %v5726 = vunpack.c.l.b16 %v2060
    %v5727 = vunpack.c.h.b16 %v2060
    %v5728 = vunpack.c.l.b16 %v2061
    %v5729 = vunpack.c.h.b16 %v2061
    %v5730 = vunpack.c.l.b16 %v2062
    %v5731 = vunpack.c.h.b16 %v2062
    %v5732 = vunpack.c.l.b16 %v2063
    %v5733 = vunpack.c.h.b16 %v2063
    %v5734 = vunpack.c.l.b16 %v2064
    %v5735 = vunpack.c.h.b16 %v2064
    %v5736 = vunpack.c.l.b16 %v2065
    %v5737 = vunpack.c.h.b16 %v2065
    %v5738 = vunpack.c.l.b16 %v2066
    %v5739 = vunpack.c.h.b16 %v2066
    %v5740 = vunpack.c.l.b16 %v2067
    %v5741 = vunpack.c.h.b16 %v2067
    %v5742 = vunpack.c.l.b16 %v2068
    %v5743 = vunpack.c.h.b16 %v2068
    %v5744 = vunpack.c.l.b16 %v2069
    %v5745 = vunpack.c.h.b16 %v2069
    %v5746 = vunpack.c.l.b16 %v2070
    %v5747 = vunpack.c.h.b16 %v2070
    %v5748 = vunpack.c.l.b16 %v2071
    %v5749 = vunpack.c.h.b16 %v2071
    %v5750 = vunpack.c.l.b16 %v2072
    %v5751 = vunpack.c.h.b16 %v2072
    %v5752 = vunpack.c.l.b16 %v2073
    %v5753 = vunpack.c.h.b16 %v2073
    %v5754 = vunpack.c.l.b16 %v2074
    %v5755 = vunpack.c.h.b16 %v2074
    %v5756 = vunpack.c.l.b16 %v2075
    %v5757 = vunpack.c.h.b16 %v2075
    %v5758 = vunpack.c.l.b16 %v2076
    %v5759 = vunpack.c.h.b16 %v2076
    %v5760 = vunpack.c.l.b16 %v2077
    %v5761 = vunpack.c.h.b16 %v2077
    %v5762 = vunpack.c.l.b16 %v2078
    %v5763 = vunpack.c.h.b16 %v2078
    %v5764 = vunpack.c.l.b16 %v2079
    %v5765 = vunpack.c.h.b16 %v2079
    %v5766 = vunpack.c.l.b16 %v2080
    %v5767 = vunpack.c.h.b16 %v2080
    %v5768 = vunpack.c.l.b16 %v2081
    %v5769 = vunpack.c.h.b16 %v2081
    %v5770 = vunpack.c.l.b16 %v2082
    %v5771 = vunpack.c.h.b16 %v2082
    %v5772 = vunpack.c.l.b16 %v2083
    %v5773 = vunpack.c.h.b16 %v2083
    %v5774 = vunpack.c.l.b16 %v2084
    %v5775 = vunpack.c.h.b16 %v2084
    %v5776 = vunpack.c.l.b16 %v2085
    %v5777 = vunpack.c.h.b16 %v2085
    %v5778 = vunpack.c.l.b16 %v2086
    %v5779 = vunpack.c.h.b16 %v2086
    %v5780 = vunpack.c.l.b16 %v2087
    %v5781 = vunpack.c.h.b16 %v2087
    %v5782 = vunpack.c.l.b16 %v2088
    %v5783 = vunpack.c.h.b16 %v2088
    %v5784 = vunpack.c.l.b16 %v2089
    %v5785 = vunpack.c.h.b16 %v2089
    %v5786 = vunpack.c.l.b16 %v2090
    %v5787 = vunpack.c.h.b16 %v2090
    %v5788 = vunpack.c.l.b16 %v2091
    %v5789 = vunpack.c.h.b16 %v2091
    %v5790 = vunpack.c.l.b16 %v2092
    %v5791 = vunpack.c.h.b16 %v2092
    %v5792 = vunpack.c.l.b16 %v2093
    %v5793 = vunpack.c.h.b16 %v2093
    %v5794 = vunpack.c.l.b16 %v2094
    %v5795 = vunpack.c.h.b16 %v2094
    %v5796 = vunpack.c.l.b16 %v2095
    %v5797 = vunpack.c.h.b16 %v2095
    %v5798 = vunpack.c.l.b16 %v2096
    %v5799 = vunpack.c.h.b16 %v2096
    %v5800 = vunpack.c.l.b16 %v2097
    %v5801 = vunpack.c.h.b16 %v2097
    %v5802 = vunpack.c.l.b16 %v2098
    %v5803 = vunpack.c.h.b16 %v2098
    %v5804 = vunpack.c.l.b16 %v2099
    %v5805 = vunpack.c.h.b16 %v2099
    %v5806 = vunpack.c.l.b16 %v2100
    %v5807 = vunpack.c.h.b16 %v2100
    %v5808 = vunpack.c.l.b16 %v2101
    %v5809 = vunpack.c.h.b16 %v2101
    %v5810 = vunpack.c.l.b16 %v2102
    %v5811 = vunpack.c.h.b16 %v2102
    %v5812 = vunpack.c.l.b16 %v2103
    %v5813 = vunpack.c.h.b16 %v2103
    %v5814 = vunpack.c.l.b16 %v2104
    %v5815 = vunpack.c.h.b16 %v2104
    %v5816 = vunpack.c.l.b16 %v2105
    %v5817 = vunpack.c.h.b16 %v2105
    %v5818 = vunpack.c.l.b16 %v2106
    %v5819 = vunpack.c.h.b16 %v2106
    %v5820 = vunpack.c.l.b16 %v2107
    %v5821 = vunpack.c.h.b16 %v2107
    %v5822 = vunpack.c.l.b16 %v2108
    %v5823 = vunpack.c.h.b16 %v2108
    %v5824 = vunpack.c.l.b16 %v2109
    %v5825 = vunpack.c.h.b16 %v2109
    %v5826 = vunpack.c.l.b16 %v2110
    %v5827 = vunpack.c.h.b16 %v2110
    %v5828 = vunpack.c.l.b16 %v2111
    %v5829 = vunpack.c.h.b16 %v2111
    %v5830 = vunpack.c.l.b16 %v2112
    %v5831 = vunpack.c.h.b16 %v2112
    %v5832 = vunpack.c.l.b16 %v2113
    %v5833 = vunpack.c.h.b16 %v2113
    %v5834 = vunpack.c.l.b16 %v2114
    %v5835 = vunpack.c.h.b16 %v2114
    %v5836 = vunpack.c.l.b16 %v2115
    %v5837 = vunpack.c.h.b16 %v2115
    %v5838 = vunpack.c.l.b16 %v2116
    %v5839 = vunpack.c.h.b16 %v2116
    %v5840 = vunpack.c.l.b16 %v2117
    %v5841 = vunpack.c.h.b16 %v2117
    %v5842 = vunpack.c.l.b16 %v2118
    %v5843 = vunpack.c.h.b16 %v2118
    %v5844 = vunpack.c.l.b16 %v2119
    %v5845 = vunpack.c.h.b16 %v2119
    %v5846 = vunpack.c.l.b16 %v2120
    %v5847 = vunpack.c.h.b16 %v2120
    %v5848 = vunpack.c.l.b16 %v2121
    %v5849 = vunpack.c.h.b16 %v2121
    %v5850 = vunpack.c.l.b16 %v2122
    %v5851 = vunpack.c.h.b16 %v2122
    %v5852 = vunpack.c.l.b16 %v2123
    %v5853 = vunpack.c.h.b16 %v2123
    %v5854 = vunpack.c.l.b16 %v2124
    %v5855 = vunpack.c.h.b16 %v2124
    %v5856 = vunpack.c.l.b16 %v2125
    %v5857 = vunpack.c.h.b16 %v2125
    %v5858 = vunpack.c.l.b16 %v2126
    %v5859 = vunpack.c.h.b16 %v2126
    %v5860 = vunpack.c.l.b16 %v2127
    %v5861 = vunpack.c.h.b16 %v2127
    %v5862 = vunpack.c.l.b16 %v2128
    %v5863 = vunpack.c.h.b16 %v2128
    %v5864 = vunpack.c.l.b16 %v2129
    %v5865 = vunpack.c.h.b16 %v2129
    %v5866 = vunpack.c.l.b16 %v2130
    %v5867 = vunpack.c.h.b16 %v2130
    %v5868 = vunpack.c.l.b16 %v2131
    %v5869 = vunpack.c.h.b16 %v2131
    %v5870 = vunpack.c.l.b16 %v2132
    %v5871 = vunpack.c.h.b16 %v2132
    %v5872 = vunpack.c.l.b16 %v2133
    %v5873 = vunpack.c.h.b16 %v2133
    %v5874 = vunpack.c.l.b16 %v2134
    %v5875 = vunpack.c.h.b16 %v2134
    %v5876 = vunpack.c.l.b16 %v2135
    %v5877 = vunpack.c.h.b16 %v2135
    %v5878 = vunpack.c.l.b16 %v2136
    %v5879 = vunpack.c.h.b16 %v2136
    %v5880 = vunpack.c.l.b16 %v2137
    %v5881 = vunpack.c.h.b16 %v2137
    %v5882 = vunpack.c.l.b16 %v2138
    %v5883 = vunpack.c.h.b16 %v2138
    %v5884 = vunpack.c.l.b16 %v2139
    %v5885 = vunpack.c.h.b16 %v2139
    %v5886 = vunpack.c.l.b16 %v2140
    %v5887 = vunpack.c.h.b16 %v2140
    %v5888 = vunpack.c.l.b16 %v2141
    %v5889 = vunpack.c.h.b16 %v2141
    %v5890 = vunpack.c.l.b16 %v2142
    %v5891 = vunpack.c.h.b16 %v2142
    %v5892 = vunpack.c.l.b16 %v2143
    %v5893 = vunpack.c.h.b16 %v2143
    %v5894 = vunpack.c.l.b16 %v2144
    %v5895 = vunpack.c.h.b16 %v2144
    %v5896 = vunpack.c.l.b16 %v2145
    %v5897 = vunpack.c.h.b16 %v2145
    %v5898 = vunpack.c.l.b16 %v2146
    %v5899 = vunpack.c.h.b16 %v2146
    %v5900 = vunpack.c.l.b16 %v2147
    %v5901 = vunpack.c.h.b16 %v2147
    %v5902 = vunpack.c.l.b16 %v2148
    %v5903 = vunpack.c.h.b16 %v2148
    %v5904 = vunpack.c.l.b16 %v2149
    %v5905 = vunpack.c.h.b16 %v2149
    %v5906 = vunpack.c.l.b16 %v2150
    %v5907 = vunpack.c.h.b16 %v2150
    %v5908 = vunpack.c.l.b16 %v2151
    %v5909 = vunpack.c.h.b16 %v2151
    %v5910 = vunpack.c.l.b16 %v2152
    %v5911 = vunpack.c.h.b16 %v2152
    %v5912 = vunpack.c.l.b16 %v2153
    %v5913 = vunpack.c.h.b16 %v2153
    %v5914 = vunpack.c.l.b16 %v2154
    %v5915 = vunpack.c.h.b16 %v2154
    %v5916 = vunpack.c.l.b16 %v2155
    %v5917 = vunpack.c.h.b16 %v2155
    %v5918 = vunpack.c.l.b16 %v2156
    %v5919 = vunpack.c.h.b16 %v2156
    %v5920 = vunpack.c.l.b16 %v2157
    %v5921 = vunpack.c.h.b16 %v2157
    %v5922 = vunpack.c.l.b16 %v2158
    %v5923 = vunpack.c.h.b16 %v2158
    %v5924 = vunpack.c.l.b16 %v2159
    %v5925 = vunpack.c.h.b16 %v2159
    %v5926 = vunpack.c.l.b16 %v2160
    %v5927 = vunpack.c.h.b16 %v2160
    %v5928 = vunpack.c.l.b16 %v2161
    %v5929 = vunpack.c.h.b16 %v2161
    %v5930 = vunpack.c.l.b16 %v2162
    %v5931 = vunpack.c.h.b16 %v2162
    %v5932 = vunpack.c.l.b16 %v2163
    %v5933 = vunpack.c.h.b16 %v2163
    %v5934 = vunpack.c.l.b16 %v2164
    %v5935 = vunpack.c.h.b16 %v2164
    %v5936 = vunpack.c.l.b16 %v2165
    %v5937 = vunpack.c.h.b16 %v2165
    %v5938 = vunpack.c.l.b16 %v2166
    %v5939 = vunpack.c.h.b16 %v2166
    %v5940 = vunpack.c.l.b16 %v2167
    %v5941 = vunpack.c.h.b16 %v2167
    %v5942 = vunpack.c.l.b16 %v2168
    %v5943 = vunpack.c.h.b16 %v2168
    %v5944 = vunpack.c.l.b16 %v2169
    %v5945 = vunpack.c.h.b16 %v2169
    %v5946 = vunpack.c.l.b16 %v2170
    %v5947 = vunpack.c.h.b16 %v2170
    %v5948 = vunpack.c.l.b16 %v2171
    %v5949 = vunpack.c.h.b16 %v2171
    %v5950 = vunpack.c.l.b16 %v2172
    %v5951 = vunpack.c.h.b16 %v2172
    %v5952 = vunpack.c.l.b16 %v2173
    %v5953 = vunpack.c.h.b16 %v2173
    %v5954 = vunpack.c.l.b16 %v2174
    %v5955 = vunpack.c.h.b16 %v2174
    %v5956 = vunpack.c.l.b16 %v2175
    %v5957 = vunpack.c.h.b16 %v2175
    %v5958 = vunpack.c.l.b16 %v2176
    %v5959 = vunpack.c.h.b16 %v2176
    %v5960 = vunpack.c.l.b16 %v2177
    %v5961 = vunpack.c.h.b16 %v2177
    %v5962 = vunpack.c.l.b16 %v2178
    %v5963 = vunpack.c.h.b16 %v2178
    %v5964 = vunpack.c.l.b16 %v2179
    %v5965 = vunpack.c.h.b16 %v2179
    %v5966 = vunpack.c.l.b16 %v2180
    %v5967 = vunpack.c.h.b16 %v2180
    %v5968 = vunpack.c.l.b16 %v2181
    %v5969 = vunpack.c.h.b16 %v2181
    %v5970 = vunpack.c.l.b16 %v2182
    %v5971 = vunpack.c.h.b16 %v2182
    %v5972 = vunpack.c.l.b16 %v2183
    %v5973 = vunpack.c.h.b16 %v2183
    %v5974 = vunpack.c.l.b16 %v2184
    %v5975 = vunpack.c.h.b16 %v2184
    %v5976 = vunpack.c.l.b16 %v2185
    %v5977 = vunpack.c.h.b16 %v2185
    %v5978 = vunpack.c.l.b16 %v2186
    %v5979 = vunpack.c.h.b16 %v2186
    %v5980 = vunpack.c.l.b16 %v2187
    %v5981 = vunpack.c.h.b16 %v2187
    %v5982 = vunpack.c.l.b16 %v2188
    %v5983 = vunpack.c.h.b16 %v2188
    %v5984 = vunpack.c.l.b16 %v2189
    %v5985 = vunpack.c.h.b16 %v2189
    %v5986 = vunpack.c.l.b16 %v2190
    %v5987 = vunpack.c.h.b16 %v2190
    %v5988 = vunpack.c.l.b16 %v2191
    %v5989 = vunpack.c.h.b16 %v2191
    %v5990 = vunpack.c.l.b16 %v2192
    %v5991 = vunpack.c.h.b16 %v2192
    %v5992 = vunpack.c.l.b16 %v2193
    %v5993 = vunpack.c.h.b16 %v2193
    %v5994 = vunpack.c.l.b16 %v2194
    %v5995 = vunpack.c.h.b16 %v2194
    %v5996 = vunpack.c.l.b16 %v2195
    %v5997 = vunpack.c.h.b16 %v2195
    %v5998 = vunpack.c.l.b16 %v2196
    %v5999 = vunpack.c.h.b16 %v2196
    %v6000 = vunpack.c.l.b16 %v2197
    %v6001 = vunpack.c.h.b16 %v2197
    %v6002 = vunpack.c.l.b16 %v2198
    %v6003 = vunpack.c.h.b16 %v2198
    %v6004 = vunpack.c.l.b16 %v2199
    %v6005 = vunpack.c.h.b16 %v2199
    %v6006 = vunpack.c.l.b16 %v2200
    %v6007 = vunpack.c.h.b16 %v2200
    %v6008 = vunpack.c.l.b16 %v2201
    %v6009 = vunpack.c.h.b16 %v2201
    %v6010 = vunpack.c.l.b16 %v2202
    %v6011 = vunpack.c.h.b16 %v2202
    %v6012 = vunpack.c.l.b16 %v2203
    %v6013 = vunpack.c.h.b16 %v2203
    %v6014 = vunpack.c.l.b16 %v2204
    %v6015 = vunpack.c.h.b16 %v2204
    %v6016 = vunpack.c.l.b16 %v2205
    %v6017 = vunpack.c.h.b16 %v2205
    %v6018 = vunpack.c.l.b16 %v2206
    %v6019 = vunpack.c.h.b16 %v2206
    %v6020 = vunpack.c.l.b16 %v2207
    %v6021 = vunpack.c.h.b16 %v2207
    %v6022 = vunpack.c.l.b16 %v2208
    %v6023 = vunpack.c.h.b16 %v2208
    %v6024 = vunpack.c.l.b16 %v2209
    %v6025 = vunpack.c.h.b16 %v2209
    %v6026 = vunpack.c.l.b16 %v2210
    %v6027 = vunpack.c.h.b16 %v2210
    %v6028 = vunpack.c.l.b16 %v2211
    %v6029 = vunpack.c.h.b16 %v2211
    %v6030 = vunpack.c.l.b16 %v2212
    %v6031 = vunpack.c.h.b16 %v2212
    %v6032 = vunpack.c.l.b16 %v2213
    %v6033 = vunpack.c.h.b16 %v2213
    %v6034 = vunpack.c.l.b16 %v2214
    %v6035 = vunpack.c.h.b16 %v2214
    %v6036 = vunpack.c.l.b16 %v2215
    %v6037 = vunpack.c.h.b16 %v2215
    %v6038 = vunpack.c.l.b16 %v2216
    %v6039 = vunpack.c.h.b16 %v2216
    %v6040 = vunpack.c.l.b16 %v2217
    %v6041 = vunpack.c.h.b16 %v2217
    %v6042 = vunpack.c.l.b16 %v2218
    %v6043 = vunpack.c.h.b16 %v2218
    %v6044 = vunpack.c.l.b16 %v2219
    %v6045 = vunpack.c.h.b16 %v2219
    %v6046 = vunpack.c.l.b16 %v2220
    %v6047 = vunpack.c.h.b16 %v2220
    %v6048 = vunpack.c.l.b16 %v2221
    %v6049 = vunpack.c.h.b16 %v2221
    %v6050 = vunpack.c.l.b16 %v2222
    %v6051 = vunpack.c.h.b16 %v2222
    %v6052 = vunpack.c.l.b16 %v2223
    %v6053 = vunpack.c.h.b16 %v2223
    %v6054 = vunpack.c.l.b16 %v2224
    %v6055 = vunpack.c.h.b16 %v2224
    %v6056 = vunpack.c.l.b16 %v2225
    %v6057 = vunpack.c.h.b16 %v2225
    %v6058 = vunpack.c.l.b16 %v2226
    %v6059 = vunpack.c.h.b16 %v2226
    %v6060 = vunpack.c.l.b16 %v2227
    %v6061 = vunpack.c.h.b16 %v2227
    %v6062 = vunpack.c.l.b16 %v2228
    %v6063 = vunpack.c.h.b16 %v2228
    %v6064 = vunpack.c.l.b16 %v2229
    %v6065 = vunpack.c.h.b16 %v2229
    %v6066 = vunpack.c.l.b16 %v2230
    %v6067 = vunpack.c.h.b16 %v2230
    %v6068 = vunpack.c.l.b16 %v2231
    %v6069 = vunpack.c.h.b16 %v2231
    %v6070 = vunpack.c.l.b16 %v2232
    %v6071 = vunpack.c.h.b16 %v2232
    %v6072 = vunpack.c.l.b16 %v2233
    %v6073 = vunpack.c.h.b16 %v2233
    %v6074 = vunpack.c.l.b16 %v2234
    %v6075 = vunpack.c.h.b16 %v2234
    %v6076 = vunpack.c.l.b16 %v2235
    %v6077 = vunpack.c.h.b16 %v2235
    %v6078 = vunpack.c.l.b16 %v2236
    %v6079 = vunpack.c.h.b16 %v2236
    %v6080 = vunpack.c.l.b16 %v2237
    %v6081 = vunpack.c.h.b16 %v2237
    %v6082 = vunpack.c.l.b16 %v2238
    %v6083 = vunpack.c.h.b16 %v2238
    %v6084 = vunpack.c.l.b16 %v2239
    %v6085 = vunpack.c.h.b16 %v2239
    %v6086 = vunpack.c.l.b16 %v2240
    %v6087 = vunpack.c.h.b16 %v2240
    %v6088 = vunpack.c.l.b16 %v2241
    %v6089 = vunpack.c.h.b16 %v2241
    %v6090 = vunpack.c.l.b16 %v2242
    %v6091 = vunpack.c.h.b16 %v2242
    %v6092 = vunpack.c.l.b16 %v2243
    %v6093 = vunpack.c.h.b16 %v2243
    %v6094 = vunpack.c.l.b16 %v2244
    %v6095 = vunpack.c.h.b16 %v2244
    %v6096 = vunpack.c.l.b16 %v2245
    %v6097 = vunpack.c.h.b16 %v2245
    %v6098 = vunpack.c.l.b16 %v2246
    %v6099 = vunpack.c.h.b16 %v2246
    %v6100 = vunpack.c.l.b16 %v2247
    %v6101 = vunpack.c.h.b16 %v2247
    %v6102 = vunpack.c.l.b16 %v2248
    %v6103 = vunpack.c.h.b16 %v2248
    %v6104 = vunpack.c.l.b16 %v2249
    %v6105 = vunpack.c.h.b16 %v2249
    %v6106 = vunpack.c.l.b16 %v2250
    %v6107 = vunpack.c.h.b16 %v2250
    %v6108 = vunpack.c.l.b16 %v2251
    %v6109 = vunpack.c.h.b16 %v2251
    %v6110 = vunpack.c.l.b16 %v2252
    %v6111 = vunpack.c.h.b16 %v2252
    %v6112 = vunpack.c.l.b16 %v2253
    %v6113 = vunpack.c.h.b16 %v2253
    %v6114 = vunpack.c.l.b16 %v2254
    %v6115 = vunpack.c.h.b16 %v2254
    %v6116 = vunpack.c.l.b16 %v2255
    %v6117 = vunpack.c.h.b16 %v2255
    %v6118 = vunpack.c.l.b16 %v2256
    %v6119 = vunpack.c.h.b16 %v2256
    %v6120 = vunpack.c.l.b16 %v2257
    %v6121 = vunpack.c.h.b16 %v2257
    %v6122 = vunpack.c.l.b16 %v2258
    %v6123 = vunpack.c.h.b16 %v2258
    %v6124 = vunpack.c.l.b16 %v2259
    %v6125 = vunpack.c.h.b16 %v2259
    %v6126 = vunpack.c.l.b16 %v2260
    %v6127 = vunpack.c.h.b16 %v2260
    %v6128 = vunpack.c.l.b16 %v2261
    %v6129 = vunpack.c.h.b16 %v2261
    %v6130 = vunpack.c.l.b16 %v2262
    %v6131 = vunpack.c.h.b16 %v2262
    %v6132 = vunpack.c.l.b16 %v2263
    %v6133 = vunpack.c.h.b16 %v2263
    %v6134 = vunpack.c.l.b16 %v2264
    %v6135 = vunpack.c.h.b16 %v2264
    %v6136 = vunpack.c.l.b16 %v2265
    %v6137 = vunpack.c.h.b16 %v2265
    %v6138 = vunpack.c.l.b16 %v2266
    %v6139 = vunpack.c.h.b16 %v2266
    %v6140 = vunpack.c.l.b16 %v2267
    %v6141 = vunpack.c.h.b16 %v2267
    %v6142 = vunpack.c.l.b16 %v2268
    %v6143 = vunpack.c.h.b16 %v2268
    %v6144 = vunpack.c.l.b16 %v2269
    %v6145 = vunpack.c.h.b16 %v2269
    %v6146 = vunpack.c.l.b16 %v2270
    %v6147 = vunpack.c.h.b16 %v2270
    %v6148 = vunpack.c.l.b16 %v2271
    %v6149 = vunpack.c.h.b16 %v2271
    %v6150 = vunpack.c.l.b16 %v2272
    %v6151 = vunpack.c.h.b16 %v2272
    %v6152 = vunpack.c.l.b16 %v2273
    %v6153 = vunpack.c.h.b16 %v2273
    %v6154 = vunpack.c.l.b16 %v2274
    %v6155 = vunpack.c.h.b16 %v2274
    %v6156 = vunpack.c.l.b16 %v2275
    %v6157 = vunpack.c.h.b16 %v2275
    %v6158 = vunpack.c.l.b16 %v2276
    %v6159 = vunpack.c.h.b16 %v2276
    %v6160 = vunpack.c.l.b16 %v2277
    %v6161 = vunpack.c.h.b16 %v2277
    %v6162 = vunpack.c.l.b16 %v2278
    %v6163 = vunpack.c.h.b16 %v2278
    %v6164 = vunpack.c.l.b16 %v2279
    %v6165 = vunpack.c.h.b16 %v2279
    %v6166 = vunpack.c.l.b16 %v2280
    %v6167 = vunpack.c.h.b16 %v2280
    %v6168 = vunpack.c.l.b16 %v2281
    %v6169 = vunpack.c.h.b16 %v2281
    %v6170 = vunpack.c.l.b16 %v2282
    %v6171 = vunpack.c.h.b16 %v2282
    %v6172 = vunpack.c.l.b16 %v2283
    %v6173 = vunpack.c.h.b16 %v2283
    %v6174 = vunpack.c.l.b16 %v2284
    %v6175 = vunpack.c.h.b16 %v2284
    %v6176 = vunpack.c.l.b16 %v2285
    %v6177 = vunpack.c.h.b16 %v2285
    %v6178 = vunpack.c.l.b16 %v2286
    %v6179 = vunpack.c.h.b16 %v2286
    %v6180 = vunpack.c.l.b16 %v2287
    %v6181 = vunpack.c.h.b16 %v2287
    %v6182 = vunpack.c.l.b16 %v2288
    %v6183 = vunpack.c.h.b16 %v2288
    %v6184 = vunpack.c.l.b16 %v2289
    %v6185 = vunpack.c.h.b16 %v2289
    %v6186 = vunpack.c.l.b16 %v2290
    %v6187 = vunpack.c.h.b16 %v2290
    %v6188 = vunpack.c.l.b16 %v2291
    %v6189 = vunpack.c.h.b16 %v2291
    %v6190 = vunpack.c.l.b16 %v2292
    %v6191 = vunpack.c.h.b16 %v2292
    %v6192 = vunpack.c.l.b16 %v2293
    %v6193 = vunpack.c.h.b16 %v2293
    %v6194 = vunpack.c.l.b16 %v2294
    %v6195 = vunpack.c.h.b16 %v2294
    %v6196 = vunpack.c.l.b16 %v2295
    %v6197 = vunpack.c.h.b16 %v2295
    %v6198 = vunpack.c.l.b16 %v2296
    %v6199 = vunpack.c.h.b16 %v2296
    %v6200 = vunpack.c.l.b16 %v2297
    %v6201 = vunpack.c.h.b16 %v2297
    %v6202 = vunpack.c.l.b16 %v2298
    %v6203 = vunpack.c.h.b16 %v2298
    %v6204 = vunpack.c.l.b16 %v2299
    %v6205 = vunpack.c.h.b16 %v2299
    %v6206 = vunpack.c.l.b16 %v2300
    %v6207 = vunpack.c.h.b16 %v2300
    %v6208 = vunpack.c.l.b16 %v2301
    %v6209 = vunpack.c.h.b16 %v2301
    %v6210 = vunpack.c.l.b16 %v2302
    %v6211 = vunpack.c.h.b16 %v2302
    %v6212 = vunpack.c.l.b16 %v2303
    %v6213 = vunpack.c.h.b16 %v2303
    %v6214 = vunpack.c.l.b16 %v2304
    %v6215 = vunpack.c.h.b16 %v2304
    %v6216 = vunpack.c.l.b16 %v2305
    %v6217 = vunpack.c.h.b16 %v2305
    %v6218 = vunpack.c.l.b16 %v2306
    %v6219 = vunpack.c.h.b16 %v2306
    %v6220 = vunpack.c.l.b16 %v2307
    %v6221 = vunpack.c.h.b16 %v2307
    %v6222 = vunpack.c.l.b16 %v2308
    %v6223 = vunpack.c.h.b16 %v2308
    %v6224 = vunpack.c.l.b16 %v2309
    %v6225 = vunpack.c.h.b16 %v2309
    %v6226 = vunpack.c.l.b16 %v2310
    %v6227 = vunpack.c.h.b16 %v2310
    %v6228 = vunpack.c.l.b16 %v2311
    %v6229 = vunpack.c.h.b16 %v2311
    %v6230 = vunpack.c.l.b16 %v2312
    %v6231 = vunpack.c.h.b16 %v2312
    %v6232 = vunpack.c.l.b16 %v2313
    %v6233 = vunpack.c.h.b16 %v2313
    %v6234 = vunpack.c.l.b16 %v2314
    %v6235 = vunpack.c.h.b16 %v2314
    %v6236 = vunpack.c.l.b16 %v2315
    %v6237 = vunpack.c.h.b16 %v2315
    %v6238 = vunpack.c.l.b16 %v2316
    %v6239 = vunpack.c.h.b16 %v2316
    %v6240 = vunpack.c.l.b16 %v2317
    %v6241 = vunpack.c.h.b16 %v2317
    %v6242 = vunpack.c.l.b16 %v2318
    %v6243 = vunpack.c.h.b16 %v2318
    %v6244 = vunpack.c.l.b16 %v2319
    %v6245 = vunpack.c.h.b16 %v2319
    %v6246 = vunpack.c.l.b16 %v2320
    %v6247 = vunpack.c.h.b16 %v2320
    %v6248 = vunpack.c.l.b16 %v2321
    %v6249 = vunpack.c.h.b16 %v2321
    %v6250 = vunpack.c.l.b16 %v2322
    %v6251 = vunpack.c.h.b16 %v2322
    %v6252 = vunpack.c.l.b16 %v2323
    %v6253 = vunpack.c.h.b16 %v2323
    %v6254 = vunpack.c.l.b16 %v2324
    %v6255 = vunpack.c.h.b16 %v2324
    %v6256 = vunpack.c.l.b16 %v2325
    %v6257 = vunpack.c.h.b16 %v2325
    %v6258 = vunpack.c.l.b16 %v2326
    %v6259 = vunpack.c.h.b16 %v2326
    %v6260 = vunpack.c.l.b16 %v2327
    %v6261 = vunpack.c.h.b16 %v2327
    %v6262 = vunpack.c.l.b16 %v2328
    %v6263 = vunpack.c.h.b16 %v2328
    %v6264 = vunpack.c.l.b16 %v2329
    %v6265 = vunpack.c.h.b16 %v2329
    %v6266 = vunpack.c.l.b16 %v2330
    %v6267 = vunpack.c.h.b16 %v2330
    %v6268 = vunpack.c.l.b16 %v2331
    %v6269 = vunpack.c.h.b16 %v2331
    %v6270 = vunpack.c.l.b16 %v2332
    %v6271 = vunpack.c.h.b16 %v2332
    %v6272 = vunpack.c.l.b16 %v2333
    %v6273 = vunpack.c.h.b16 %v2333
    %v6274 = vunpack.c.l.b16 %v2334
    %v6275 = vunpack.c.h.b16 %v2334
    %v6276 = vunpack.c.l.b16 %v2335
    %v6277 = vunpack.c.h.b16 %v2335
    %v6278 = vunpack.c.l.b16 %v2336
    %v6279 = vunpack.c.h.b16 %v2336
    %v6280 = vunpack.c.l.b16 %v2337
    %v6281 = vunpack.c.h.b16 %v2337
    %v6282 = vunpack.c.l.b16 %v2338
    %v6283 = vunpack.c.h.b16 %v2338
    %v6284 = vunpack.c.l.b16 %v2339
    %v6285 = vunpack.c.h.b16 %v2339
    %v6286 = vunpack.c.l.b16 %v2340
    %v6287 = vunpack.c.h.b16 %v2340
    %v6288 = vunpack.c.l.b16 %v2341
    %v6289 = vunpack.c.h.b16 %v2341
    %v6290 = vunpack.c.l.b16 %v2342
    %v6291 = vunpack.c.h.b16 %v2342
    %v6292 = vunpack.c.l.b16 %v2343
    %v6293 = vunpack.c.h.b16 %v2343
    %v6294 = vunpack.c.l.b16 %v2344
    %v6295 = vunpack.c.h.b16 %v2344
    %v6296 = vunpack.c.l.b16 %v2345
    %v6297 = vunpack.c.h.b16 %v2345
    %v6298 = vunpack.c.l.b16 %v2346
    %v6299 = vunpack.c.h.b16 %v2346
    %v6300 = vunpack.c.l.b16 %v2347
    %v6301 = vunpack.c.h.b16 %v2347
    %v6302 = vunpack.c.l.b16 %v2348
    %v6303 = vunpack.c.h.b16 %v2348
    %v6304 = vunpack.c.l.b16 %v2349
    %v6305 = vunpack.c.h.b16 %v2349
    %v6306 = vunpack.c.l.b16 %v2350
    %v6307 = vunpack.c.h.b16 %v2350
    %v6308 = vunpack.c.l.b16 %v2351
    %v6309 = vunpack.c.h.b16 %v2351
    %v6310 = vunpack.c.l.b16 %v2352
    %v6311 = vunpack.c.h.b16 %v2352
    %v6312 = vunpack.c.l.b16 %v2353
    %v6313 = vunpack.c.h.b16 %v2353
    %v6314 = vunpack.c.l.b16 %v2354
    %v6315 = vunpack.c.h.b16 %v2354
    %v6316 = vunpack.c.l.b16 %v2355
    %v6317 = vunpack.c.h.b16 %v2355
    %v6318 = vunpack.c.l.b16 %v2356
    %v6319 = vunpack.c.h.b16 %v2356
    %v6320 = vunpack.c.l.b16 %v2357
    %v6321 = vunpack.c.h.b16 %v2357
    %v6322 = vunpack.c.l.b16 %v2358
    %v6323 = vunpack.c.h.b16 %v2358
    %v6324 = vunpack.c.l.b16 %v2359
    %v6325 = vunpack.c.h.b16 %v2359
    %v6326 = vunpack.c.l.b16 %v2360
    %v6327 = vunpack.c.h.b16 %v2360
    %v6328 = vunpack.c.l.b16 %v2361
    %v6329 = vunpack.c.h.b16 %v2361
    %v6330 = vunpack.c.l.b16 %v2362
    %v6331 = vunpack.c.h.b16 %v2362
    %v6332 = vunpack.c.l.b16 %v2363
    %v6333 = vunpack.c.h.b16 %v2363
    %v6334 = vunpack.c.l.b16 %v2364
    %v6335 = vunpack.c.h.b16 %v2364
    %v6336 = vunpack.c.l.b16 %v2365
    %v6337 = vunpack.c.h.b16 %v2365
    %v6338 = vunpack.c.l.b16 %v2366
    %v6339 = vunpack.c.h.b16 %v2366
    %v6340 = vunpack.c.l.b16 %v2367
    %v6341 = vunpack.c.h.b16 %v2367
    %v6342 = vunpack.c.l.b16 %v2368
    %v6343 = vunpack.c.h.b16 %v2368
    %v6344 = vunpack.c.l.b16 %v2369
    %v6345 = vunpack.c.h.b16 %v2369
    %v6346 = vunpack.c.l.b16 %v2370
    %v6347 = vunpack.c.h.b16 %v2370
    %v6348 = vunpack.c.l.b16 %v2371
    %v6349 = vunpack.c.h.b16 %v2371
    %v6350 = vunpack.c.l.b16 %v2372
    %v6351 = vunpack.c.h.b16 %v2372
    %v6352 = vunpack.c.l.b16 %v2373
    %v6353 = vunpack.c.h.b16 %v2373
    %v6354 = vunpack.c.l.b16 %v2374
    %v6355 = vunpack.c.h.b16 %v2374
    %v6356 = vunpack.c.l.b16 %v2375
    %v6357 = vunpack.c.h.b16 %v2375
    %v6358 = vunpack.c.l.b16 %v2376
    %v6359 = vunpack.c.h.b16 %v2376
    %v6360 = vunpack.c.l.b16 %v2377
    %v6361 = vunpack.c.h.b16 %v2377
    %v6362 = vunpack.c.l.b16 %v2378
    %v6363 = vunpack.c.h.b16 %v2378
    %v6364 = vunpack.c.l.b16 %v2379
    %v6365 = vunpack.c.h.b16 %v2379
    %v6366 = vunpack.c.l.b16 %v2380
    %v6367 = vunpack.c.h.b16 %v2380
    %v6368 = vunpack.c.l.b16 %v2381
    %v6369 = vunpack.c.h.b16 %v2381
    %v6370 = vunpack.c.l.b16 %v2382
    %v6371 = vunpack.c.h.b16 %v2382
    %v6372 = vunpack.c.l.b16 %v2383
    %v6373 = vunpack.c.h.b16 %v2383
    %v6374 = vunpack.c.l.b16 %v2384
    %v6375 = vunpack.c.h.b16 %v2384
    %v6376 = vunpack.c.l.b16 %v2385
    %v6377 = vunpack.c.h.b16 %v2385
    %v6378 = vunpack.c.l.b16 %v2386
    %v6379 = vunpack.c.h.b16 %v2386
    %v6380 = vunpack.c.l.b16 %v2387
    %v6381 = vunpack.c.h.b16 %v2387
    %v6382 = vunpack.c.l.b16 %v2388
    %v6383 = vunpack.c.h.b16 %v2388
    %v6384 = vunpack.c.l.b16 %v2389
    %v6385 = vunpack.c.h.b16 %v2389
    %v6386 = vunpack.c.l.b16 %v2390
    %v6387 = vunpack.c.h.b16 %v2390
    %v6388 = vunpack.c.l.b16 %v2391
    %v6389 = vunpack.c.h.b16 %v2391
    %v6390 = vunpack.c.l.b16 %v2392
    %v6391 = vunpack.c.h.b16 %v2392
    %v6392 = vunpack.c.l.b16 %v2393
    %v6393 = vunpack.c.h.b16 %v2393
    %v6394 = vunpack.c.l.b16 %v2394
    %v6395 = vunpack.c.h.b16 %v2394
    %v6396 = vunpack.c.l.b16 %v2395
    %v6397 = vunpack.c.h.b16 %v2395
    %v6398 = vunpack.c.l.b16 %v2396
    %v6399 = vunpack.c.h.b16 %v2396
    %v6400 = vunpack.c.l.b16 %v2397
    %v6401 = vunpack.c.h.b16 %v2397
    %v6402 = vunpack.c.l.b16 %v2398
    %v6403 = vunpack.c.h.b16 %v2398
    %v6404 = vunpack.c.l.b16 %v2399
    %v6405 = vunpack.c.h.b16 %v2399
    %v6406 = vunpack.c.l.b16 %v2400
    %v6407 = vunpack.c.h.b16 %v2400
    %v6408 = vunpack.c.l.b16 %v2401
    %v6409 = vunpack.c.h.b16 %v2401
    %v6410 = vunpack.c.l.b16 %v2402
    %v6411 = vunpack.c.h.b16 %v2402
    %v6412 = vunpack.c.l.b16 %v2403
    %v6413 = vunpack.c.h.b16 %v2403
    %v6414 = vunpack.c.l.b16 %v2404
    %v6415 = vunpack.c.h.b16 %v2404
    %v6416 = vunpack.c.l.b16 %v2405
    %v6417 = vunpack.c.h.b16 %v2405
    %v6418 = vunpack.c.l.b16 %v2406
    %v6419 = vunpack.c.h.b16 %v2406
    %v6420 = vunpack.c.l.b16 %v2407
    %v6421 = vunpack.c.h.b16 %v2407
    %v6422 = vunpack.c.l.b16 %v2408
    %v6423 = vunpack.c.h.b16 %v2408
    %v6424 = vunpack.c.l.b16 %v2409
    %v6425 = vunpack.c.h.b16 %v2409
    %v6426 = vunpack.c.l.b16 %v2410
    %v6427 = vunpack.c.h.b16 %v2410
    %v6428 = vunpack.c.l.b16 %v2411
    %v6429 = vunpack.c.h.b16 %v2411
    %v6430 = vunpack.c.l.b16 %v2412
    %v6431 = vunpack.c.h.b16 %v2412
    %v6432 = vunpack.c.l.b16 %v2413
    %v6433 = vunpack.c.h.b16 %v2413
    %v6434 = vunpack.c.l.b16 %v2414
    %v6435 = vunpack.c.h.b16 %v2414
    %v6436 = vunpack.c.l.b16 %v2415
    %v6437 = vunpack.c.h.b16 %v2415
    %v6438 = vunpack.c.l.b16 %v2416
    %v6439 = vunpack.c.h.b16 %v2416
    %v6440 = vunpack.c.l.b16 %v2417
    %v6441 = vunpack.c.h.b16 %v2417
    %v6442 = vunpack.c.l.b16 %v2418
    %v6443 = vunpack.c.h.b16 %v2418
    %v6444 = vunpack.c.l.b16 %v2419
    %v6445 = vunpack.c.h.b16 %v2419
    %v6446 = vunpack.c.l.b16 %v2420
    %v6447 = vunpack.c.h.b16 %v2420
    %v6448 = vunpack.c.l.b16 %v2421
    %v6449 = vunpack.c.h.b16 %v2421
    %v6450 = vunpack.c.l.b16 %v2422
    %v6451 = vunpack.c.h.b16 %v2422
    %v6452 = vunpack.c.l.b16 %v2423
    %v6453 = vunpack.c.h.b16 %v2423
    %v6454 = vunpack.c.l.b16 %v2424
    %v6455 = vunpack.c.h.b16 %v2424
    %v6456 = vunpack.c.l.b16 %v2425
    %v6457 = vunpack.c.h.b16 %v2425
    %v6458 = vunpack.c.l.b16 %v2426
    %v6459 = vunpack.c.h.b16 %v2426
    %v6460 = vunpack.c.l.b16 %v2427
    %v6461 = vunpack.c.h.b16 %v2427
    %v6462 = vunpack.c.l.b16 %v2428
    %v6463 = vunpack.c.h.b16 %v2428
    %v6464 = vunpack.c.l.b16 %v2429
    %v6465 = vunpack.c.h.b16 %v2429
    %v6466 = vunpack.c.l.b16 %v2430
    %v6467 = vunpack.c.h.b16 %v2430
    %v6468 = vunpack.c.l.b16 %v2431
    %v6469 = vunpack.c.h.b16 %v2431
    %v6470 = vunpack.c.l.b16 %v2432
    %v6471 = vunpack.c.h.b16 %v2432
    %v6472 = vunpack.c.l.b16 %v2433
    %v6473 = vunpack.c.h.b16 %v2433
    %v6474 = vunpack.c.l.b16 %v2434
    %v6475 = vunpack.c.h.b16 %v2434
    %v6476 = vunpack.c.l.b16 %v2435
    %v6477 = vunpack.c.h.b16 %v2435
    %v6478 = vunpack.c.l.b16 %v2436
    %v6479 = vunpack.c.h.b16 %v2436
    %v6480 = vunpack.c.l.b16 %v2437
    %v6481 = vunpack.c.h.b16 %v2437
    %v6482 = vunpack.c.l.b16 %v2438
    %v6483 = vunpack.c.h.b16 %v2438
    %v6484 = vunpack.c.l.b16 %v2439
    %v6485 = vunpack.c.h.b16 %v2439
    %v6486 = vunpack.c.l.b16 %v2440
    %v6487 = vunpack.c.h.b16 %v2440
    %v6488 = vunpack.c.l.b16 %v2441
    %v6489 = vunpack.c.h.b16 %v2441
    %v6490 = vunpack.c.l.b16 %v2442
    %v6491 = vunpack.c.h.b16 %v2442
    %v6492 = vunpack.c.l.b16 %v2443
    %v6493 = vunpack.c.h.b16 %v2443
    %v6494 = vunpack.c.l.b16 %v2444
    %v6495 = vunpack.c.h.b16 %v2444
    %v6496 = vunpack.c.l.b16 %v2445
    %v6497 = vunpack.c.h.b16 %v2445
    %v6498 = vunpack.c.l.b16 %v2446
    %v6499 = vunpack.c.h.b16 %v2446
    %v6500 = vunpack.c.l.b16 %v2447
    %v6501 = vunpack.c.h.b16 %v2447
    %v6502 = vunpack.c.l.b16 %v2448
    %v6503 = vunpack.c.h.b16 %v2448
    %v6504 = vunpack.c.l.b16 %v2449
    %v6505 = vunpack.c.h.b16 %v2449
    %v6506 = vunpack.c.l.b16 %v2450
    %v6507 = vunpack.c.h.b16 %v2450
    %v6508 = vunpack.c.l.b16 %v2451
    %v6509 = vunpack.c.h.b16 %v2451
    %v6510 = vunpack.c.l.b16 %v2452
    %v6511 = vunpack.c.h.b16 %v2452
    %v6512 = vunpack.c.l.b16 %v2453
    %v6513 = vunpack.c.h.b16 %v2453
    %v6514 = vunpack.c.l.b16 %v2454
    %v6515 = vunpack.c.h.b16 %v2454
    %v6516 = vunpack.c.l.b16 %v2455
    %v6517 = vunpack.c.h.b16 %v2455
    %v6518 = vunpack.c.l.b16 %v2456
    %v6519 = vunpack.c.h.b16 %v2456
    %v6520 = vunpack.c.l.b16 %v2457
    %v6521 = vunpack.c.h.b16 %v2457
    %v6522 = vunpack.c.l.b16 %v2458
    %v6523 = vunpack.c.h.b16 %v2458
    %v6524 = vunpack.c.l.b16 %v2459
    %v6525 = vunpack.c.h.b16 %v2459
    %v6526 = vunpack.c.l.b16 %v2460
    %v6527 = vunpack.c.h.b16 %v2460
    %v6528 = vunpack.c.l.b16 %v2461
    %v6529 = vunpack.c.h.b16 %v2461
    %v6530 = vunpack.c.l.b16 %v2462
    %v6531 = vunpack.c.h.b16 %v2462
    %v6532 = vunpack.c.l.b16 %v2463
    %v6533 = vunpack.c.h.b16 %v2463
    %v6534 = vunpack.c.l.b16 %v2464
    %v6535 = vunpack.c.h.b16 %v2464
    %v6536 = vunpack.c.l.b16 %v2465
    %v6537 = vunpack.c.h.b16 %v2465
    %v6538 = vunpack.c.l.b16 %v2466
    %v6539 = vunpack.c.h.b16 %v2466
    %v6540 = vunpack.c.l.b16 %v2467
    %v6541 = vunpack.c.h.b16 %v2467
    %v6542 = vunpack.c.l.b16 %v2468
    %v6543 = vunpack.c.h.b16 %v2468
    %v6544 = vunpack.c.l.b16 %v2469
    %v6545 = vunpack.c.h.b16 %v2469
    %v6546 = vunpack.c.l.b16 %v2470
    %v6547 = vunpack.c.h.b16 %v2470
    %v6548 = vunpack.c.l.b16 %v2471
    %v6549 = vunpack.c.h.b16 %v2471
    %v6550 = vunpack.c.l.b16 %v2472
    %v6551 = vunpack.c.h.b16 %v2472
    %v6552 = vunpack.c.l.b16 %v2473
    %v6553 = vunpack.c.h.b16 %v2473
    %v6554 = vunpack.c.l.b16 %v2474
    %v6555 = vunpack.c.h.b16 %v2474
    %v6556 = vunpack.c.l.b16 %v2475
    %v6557 = vunpack.c.h.b16 %v2475
    %v6558 = vunpack.c.l.b16 %v2476
    %v6559 = vunpack.c.h.b16 %v2476
    %v6560 = vunpack.c.l.b16 %v2477
    %v6561 = vunpack.c.h.b16 %v2477
    %v6562 = vunpack.c.l.b16 %v2478
    %v6563 = vunpack.c.h.b16 %v2478
    %v6564 = vunpack.c.l.b16 %v2479
    %v6565 = vunpack.c.h.b16 %v2479
    %v6566 = vunpack.c.l.b16 %v2480
    %v6567 = vunpack.c.h.b16 %v2480
    %v6568 = vunpack.c.l.b16 %v2481
    %v6569 = vunpack.c.h.b16 %v2481
    %v6570 = vunpack.c.l.b16 %v2482
    %v6571 = vunpack.c.h.b16 %v2482
    %v6572 = vunpack.c.l.b16 %v2483
    %v6573 = vunpack.c.h.b16 %v2483
    %v6574 = vunpack.c.l.b16 %v2484
    %v6575 = vunpack.c.h.b16 %v2484
    %v6576 = vunpack.c.l.b16 %v2485
    %v6577 = vunpack.c.h.b16 %v2485
    %v6578 = vunpack.c.l.b16 %v2486
    %v6579 = vunpack.c.h.b16 %v2486
    %v6580 = vunpack.c.l.b16 %v2487
    %v6581 = vunpack.c.h.b16 %v2487
    %v6582 = vunpack.c.l.b16 %v2488
    %v6583 = vunpack.c.h.b16 %v2488
    %v6584 = vunpack.c.l.b16 %v2489
    %v6585 = vunpack.c.h.b16 %v2489
    %v6586 = vunpack.c.l.b16 %v2490
    %v6587 = vunpack.c.h.b16 %v2490
    %v6588 = vunpack.c.l.b16 %v2491
    %v6589 = vunpack.c.h.b16 %v2491
    %v6590 = vunpack.c.l.b16 %v2492
    %v6591 = vunpack.c.h.b16 %v2492
    %v6592 = vunpack.c.l.b16 %v2493
    %v6593 = vunpack.c.h.b16 %v2493
    %v6594 = vunpack.c.l.b16 %v2494
    %v6595 = vunpack.c.h.b16 %v2494
    %v6596 = vunpack.c.l.b16 %v2495
    %v6597 = vunpack.c.h.b16 %v2495
    %v6598 = vunpack.c.l.b16 %v2496
    %v6599 = vunpack.c.h.b16 %v2496
    %v6600 = vunpack.c.l.b16 %v2497
    %v6601 = vunpack.c.h.b16 %v2497
    %v6602 = vunpack.c.l.b16 %v2498
    %v6603 = vunpack.c.h.b16 %v2498
    %v6604 = vunpack.c.l.b16 %v2499
    %v6605 = vunpack.c.h.b16 %v2499
    %v6606 = vunpack.c.l.b16 %v2500
    %v6607 = vunpack.c.h.b16 %v2500
    %v6608 = vunpack.c.l.b16 %v2501
    %v6609 = vunpack.c.h.b16 %v2501
    %v6610 = vunpack.c.l.b16 %v2502
    %v6611 = vunpack.c.h.b16 %v2502
    %v6612 = vunpack.c.l.b16 %v2503
    %v6613 = vunpack.c.h.b16 %v2503
    %v6614 = vunpack.c.l.b16 %v2504
    %v6615 = vunpack.c.h.b16 %v2504
    %v6616 = vunpack.c.l.b16 %v2505
    %v6617 = vunpack.c.h.b16 %v2505
    %v6618 = vunpack.c.l.b16 %v2506
    %v6619 = vunpack.c.h.b16 %v2506
    %v6620 = vunpack.c.l.b16 %v2507
    %v6621 = vunpack.c.h.b16 %v2507
    %v6622 = vunpack.c.l.b16 %v2508
    %v6623 = vunpack.c.h.b16 %v2508
    %v6624 = vunpack.c.l.b16 %v2509
    %v6625 = vunpack.c.h.b16 %v2509
    %v6626 = vunpack.c.l.b16 %v2510
    %v6627 = vunpack.c.h.b16 %v2510
    %v6628 = vunpack.c.l.b16 %v2511
    %v6629 = vunpack.c.h.b16 %v2511
    %v6630 = vunpack.c.l.b16 %v2512
    %v6631 = vunpack.c.h.b16 %v2512
    %v6632 = vunpack.c.l.b16 %v2513
    %v6633 = vunpack.c.h.b16 %v2513
    %v6634 = vunpack.c.l.b16 %v2514
    %v6635 = vunpack.c.h.b16 %v2514
    %v6636 = vunpack.c.l.b16 %v2515
    %v6637 = vunpack.c.h.b16 %v2515
    %v6638 = vunpack.c.l.b16 %v2516
    %v6639 = vunpack.c.h.b16 %v2516
    %v6640 = vunpack.c.l.b16 %v2517
    %v6641 = vunpack.c.h.b16 %v2517
    %v6642 = vunpack.c.l.b16 %v2518
    %v6643 = vunpack.c.h.b16 %v2518
    %v6644 = vunpack.c.l.b16 %v2519
    %v6645 = vunpack.c.h.b16 %v2519
    %v6646 = vunpack.c.l.b16 %v2520
    %v6647 = vunpack.c.h.b16 %v2520
    %v6648 = vunpack.c.l.b16 %v2521
    %v6649 = vunpack.c.h.b16 %v2521
    %v6650 = vunpack.c.l.b16 %v2522
    %v6651 = vunpack.c.h.b16 %v2522
    %v6652 = vunpack.c.l.b16 %v2523
    %v6653 = vunpack.c.h.b16 %v2523
    %v6654 = vunpack.c.l.b16 %v2524
    %v6655 = vunpack.c.h.b16 %v2524
    %v6656 = vunpack.c.l.b16 %v2525
    %v6657 = vunpack.c.h.b16 %v2525
    %v6658 = vunpack.c.l.b16 %v2526
    %v6659 = vunpack.c.h.b16 %v2526
    %v6660 = vunpack.c.l.b16 %v2527
    %v6661 = vunpack.c.h.b16 %v2527
    %v6662 = vunpack.c.l.b16 %v2528
    %v6663 = vunpack.c.h.b16 %v2528
    %v6664 = vunpack.c.l.b16 %v2529
    %v6665 = vunpack.c.h.b16 %v2529
    %v6666 = vunpack.c.l.b16 %v2530
    %v6667 = vunpack.c.h.b16 %v2530
    %v6668 = vunpack.c.l.b16 %v2531
    %v6669 = vunpack.c.h.b16 %v2531
    %v6670 = vunpack.c.l.b16 %v2532
    %v6671 = vunpack.c.h.b16 %v2532
    %v6672 = vunpack.c.l.b16 %v2533
    %v6673 = vunpack.c.h.b16 %v2533
    %v6674 = vunpack.c.l.b16 %v2534
    %v6675 = vunpack.c.h.b16 %v2534
    %v6676 = vunpack.c.l.b16 %v2535
    %v6677 = vunpack.c.h.b16 %v2535
    %v6678 = vunpack.c.l.b16 %v2536
    %v6679 = vunpack.c.h.b16 %v2536
    %v6680 = vunpack.c.l.b16 %v2537
    %v6681 = vunpack.c.h.b16 %v2537
    %v6682 = vunpack.c.l.b16 %v2538
    %v6683 = vunpack.c.h.b16 %v2538
    %v6684 = vunpack.c.l.b16 %v2539
    %v6685 = vunpack.c.h.b16 %v2539
    %v6686 = vunpack.c.l.b16 %v2540
    %v6687 = vunpack.c.h.b16 %v2540
    %v6688 = vunpack.c.l.b16 %v2541
    %v6689 = vunpack.c.h.b16 %v2541
    %v6690 = vunpack.c.l.b16 %v2542
    %v6691 = vunpack.c.h.b16 %v2542
    %v6692 = vunpack.c.l.b16 %v2543
    %v6693 = vunpack.c.h.b16 %v2543
    %v6694 = vunpack.c.l.b16 %v2544
    %v6695 = vunpack.c.h.b16 %v2544
    %v6696 = vunpack.c.l.b16 %v2545
    %v6697 = vunpack.c.h.b16 %v2545
    %v6698 = vunpack.c.l.b16 %v2546
    %v6699 = vunpack.c.h.b16 %v2546
    %v6700 = vunpack.c.l.b16 %v2547
    %v6701 = vunpack.c.h.b16 %v2547
    %v6702 = vunpack.c.l.b16 %v2548
    %v6703 = vunpack.c.h.b16 %v2548
    %v6704 = vunpack.c.l.b16 %v2549
    %v6705 = vunpack.c.h.b16 %v2549
    %v6706 = vunpack.c.l.b16 %v2550
    %v6707 = vunpack.c.h.b16 %v2550
    %v6708 = vunpack.c.l.b16 %v2551
    %v6709 = vunpack.c.h.b16 %v2551
    %v6710 = vunpack.c.l.b16 %v2552
    %v6711 = vunpack.c.h.b16 %v2552
    %v6712 = vunpack.c.l.b16 %v2553
    %v6713 = vunpack.c.h.b16 %v2553
    %v6714 = vunpack.c.l.b16 %v2554
    %v6715 = vunpack.c.h.b16 %v2554
    %v6716 = vunpack.c.l.b16 %v2555
    %v6717 = vunpack.c.h.b16 %v2555
    %v6718 = vunpack.c.l.b16 %v2556
    %v6719 = vunpack.c.h.b16 %v2556
    %v6720 = vunpack.c.l.b16 %v2557
    %v6721 = vunpack.c.h.b16 %v2557
    %v6722 = vunpack.c.l.b16 %v2558
    %v6723 = vunpack.c.h.b16 %v2558
    %v6724 = vunpack.c.l.b16 %v2559
    %v6725 = vunpack.c.h.b16 %v2559
    %v6726 = vunpack.c.l.b16 %v2560
    %v6727 = vunpack.c.h.b16 %v2560
    %v6728 = vunpack.c.l.b16 %v2561
    %v6729 = vunpack.c.h.b16 %v2561
    %v6730 = vunpack.c.l.b16 %v2562
    %v6731 = vunpack.c.h.b16 %v2562
    %v6732 = vunpack.c.l.b16 %v2563
    %v6733 = vunpack.c.h.b16 %v2563
    %v6734 = vunpack.c.l.b16 %v2564
    %v6735 = vunpack.c.h.b16 %v2564
    %v6736 = vunpack.c.l.b16 %v2565
    %v6737 = vunpack.c.h.b16 %v2565
    %v6738 = vunpack.c.l.b16 %v2566
    %v6739 = vunpack.c.h.b16 %v2566
    %v6740 = vunpack.c.l.b16 %v2567
    %v6741 = vunpack.c.h.b16 %v2567
    %v6742 = vunpack.c.l.b16 %v2568
    %v6743 = vunpack.c.h.b16 %v2568
    %v6744 = vunpack.c.l.b16 %v2569
    %v6745 = vunpack.c.h.b16 %v2569
    %v6746 = vunpack.c.l.b16 %v2570
    %v6747 = vunpack.c.h.b16 %v2570
    %v6748 = vunpack.c.l.b16 %v2571
    %v6749 = vunpack.c.h.b16 %v2571
    %v6750 = vunpack.c.l.b16 %v2572
    %v6751 = vunpack.c.h.b16 %v2572
    %v6752 = vunpack.c.l.b16 %v2573
    %v6753 = vunpack.c.h.b16 %v2573
    %v6754 = vunpack.c.l.b16 %v2574
    %v6755 = vunpack.c.h.b16 %v2574
    %v6756 = vunpack.c.l.b16 %v2575
    %v6757 = vunpack.c.h.b16 %v2575
    %v6758 = vunpack.c.l.b16 %v2576
    %v6759 = vunpack.c.h.b16 %v2576
    %v6760 = vunpack.c.l.b16 %v2577
    %v6761 = vunpack.c.h.b16 %v2577
    %v6762 = vunpack.c.l.b16 %v2578
    %v6763 = vunpack.c.h.b16 %v2578
    %v6764 = vunpack.c.l.b16 %v2579
    %v6765 = vunpack.c.h.b16 %v2579
    %v6766 = vunpack.c.l.b16 %v2580
    %v6767 = vunpack.c.h.b16 %v2580
    %v6768 = vunpack.c.l.b16 %v2581
    %v6769 = vunpack.c.h.b16 %v2581
    %v6770 = vunpack.c.l.b16 %v2582
    %v6771 = vunpack.c.h.b16 %v2582
    %v6772 = vunpack.c.l.b16 %v2583
    %v6773 = vunpack.c.h.b16 %v2583
    %v6774 = vunpack.c.l.b16 %v2584
    %v6775 = vunpack.c.h.b16 %v2584
    %v6776 = vunpack.c.l.b16 %v2585
    %v6777 = vunpack.c.h.b16 %v2585
    %v6778 = vunpack.c.l.b16 %v2586
    %v6779 = vunpack.c.h.b16 %v2586
    %v6780 = vunpack.c.l.b16 %v2587
    %v6781 = vunpack.c.h.b16 %v2587
    %v6782 = vunpack.c.l.b16 %v2588
    %v6783 = vunpack.c.h.b16 %v2588
    %v6784 = vunpack.c.l.b16 %v2589
    %v6785 = vunpack.c.h.b16 %v2589
    %v6786 = vunpack.c.l.b16 %v2590
    %v6787 = vunpack.c.h.b16 %v2590
    %v6788 = vunpack.c.l.b16 %v2591
    %v6789 = vunpack.c.h.b16 %v2591
    %v6790 = vunpack.c.l.b16 %v2592
    %v6791 = vunpack.c.h.b16 %v2592
    %v6792 = vunpack.c.l.b16 %v2593
    %v6793 = vunpack.c.h.b16 %v2593
    %v6794 = vunpack.c.l.b16 %v2594
    %v6795 = vunpack.c.h.b16 %v2594
    %v6796 = vunpack.c.l.b16 %v2595
    %v6797 = vunpack.c.h.b16 %v2595
    %v6798 = vunpack.c.l.b16 %v2596
    %v6799 = vunpack.c.h.b16 %v2596
    %v6800 = vunpack.c.l.b16 %v2597
    %v6801 = vunpack.c.h.b16 %v2597
    %v6802 = vunpack.c.l.b16 %v2598
    %v6803 = vunpack.c.h.b16 %v2598
    %v6804 = vunpack.c.l.b16 %v2599
    %v6805 = vunpack.c.h.b16 %v2599
    %v6806 = vunpack.c.l.b16 %v2600
    %v6807 = vunpack.c.h.b16 %v2600
    %v6808 = vunpack.c.l.b16 %v2601
    %v6809 = vunpack.c.h.b16 %v2601
    %v6810 = vunpack.c.l.b16 %v2602
    %v6811 = vunpack.c.h.b16 %v2602
    %v6812 = vunpack.c.l.b16 %v2603
    %v6813 = vunpack.c.h.b16 %v2603
    %v6814 = vunpack.c.l.b16 %v2604
    %v6815 = vunpack.c.h.b16 %v2604
    %v6816 = vunpack.c.l.b16 %v2605
    %v6817 = vunpack.c.h.b16 %v2605
    %v6818 = vunpack.c.l.b16 %v2606
    %v6819 = vunpack.c.h.b16 %v2606
    %v6820 = vunpack.c.l.b16 %v2607
    %v6821 = vunpack.c.h.b16 %v2607
    %v6822 = vunpack.c.l.b16 %v2608
    %v6823 = vunpack.c.h.b16 %v2608
    %v6824 = vunpack.c.l.b16 %v2609
    %v6825 = vunpack.c.h.b16 %v2609
    %v6826 = vunpack.c.l.b16 %v2610
    %v6827 = vunpack.c.h.b16 %v2610
    %v6828 = vunpack.c.l.b16 %v2611
    %v6829 = vunpack.c.h.b16 %v2611
    %v6830 = vunpack.c.l.b16 %v2612
    %v6831 = vunpack.c.h.b16 %v2612
    %v6832 = vunpack.c.l.b16 %v2613
    %v6833 = vunpack.c.h.b16 %v2613
    %v6834 = vunpack.c.l.b16 %v2614
    %v6835 = vunpack.c.h.b16 %v2614
    %v6836 = vunpack.c.l.b16 %v2615
    %v6837 = vunpack.c.h.b16 %v2615
    %v6838 = vunpack.c.l.b16 %v2616
    %v6839 = vunpack.c.h.b16 %v2616
    %v6840 = vunpack.c.l.b16 %v2617
    %v6841 = vunpack.c.h.b16 %v2617
    %v6842 = vunpack.c.l.b16 %v2618
    %v6843 = vunpack.c.h.b16 %v2618
    %v6844 = vunpack.c.l.b16 %v2619
    %v6845 = vunpack.c.h.b16 %v2619
    %v6846 = vunpack.c.l.b16 %v2620
    %v6847 = vunpack.c.h.b16 %v2620
    %v6848 = vunpack.c.l.b16 %v2621
    %v6849 = vunpack.c.h.b16 %v2621
    %v6850 = vunpack.c.l.b16 %v2622
    %v6851 = vunpack.c.h.b16 %v2622
    %v6852 = vunpack.c.l.b16 %v2623
    %v6853 = vunpack.c.h.b16 %v2623
    %v6854 = vunpack.c.l.b16 %v2624
    %v6855 = vunpack.c.h.b16 %v2624
    %v6856 = vunpack.c.l.b16 %v2625
    %v6857 = vunpack.c.h.b16 %v2625
    %v6858 = vunpack.c.l.b16 %v2626
    %v6859 = vunpack.c.h.b16 %v2626
    %v6860 = vunpack.c.l.b16 %v2627
    %v6861 = vunpack.c.h.b16 %v2627
    %v6862 = vunpack.c.l.b16 %v2628
    %v6863 = vunpack.c.h.b16 %v2628
    %v6864 = vunpack.c.l.b16 %v2629
    %v6865 = vunpack.c.h.b16 %v2629
    %v6866 = vunpack.c.l.b16 %v2630
    %v6867 = vunpack.c.h.b16 %v2630
    %v6868 = vunpack.c.l.b16 %v2631
    %v6869 = vunpack.c.h.b16 %v2631
    %v6870 = vunpack.c.l.b16 %v2632
    %v6871 = vunpack.c.h.b16 %v2632
    %v6872 = vunpack.c.l.b16 %v2633
    %v6873 = vunpack.c.h.b16 %v2633
    %v6874 = vunpack.c.l.b16 %v2634
    %v6875 = vunpack.c.h.b16 %v2634
    %v6876 = vunpack.c.l.b16 %v2635
    %v6877 = vunpack.c.h.b16 %v2635
    %v6878 = vunpack.c.l.b16 %v2636
    %v6879 = vunpack.c.h.b16 %v2636
    %v6880 = vunpack.c.l.b16 %v2637
    %v6881 = vunpack.c.h.b16 %v2637
    %v6882 = vunpack.c.l.b16 %v2638
    %v6883 = vunpack.c.h.b16 %v2638
    %v6884 = vunpack.c.l.b16 %v2639
    %v6885 = vunpack.c.h.b16 %v2639
    %v6886 = vunpack.c.l.b16 %v2640
    %v6887 = vunpack.c.h.b16 %v2640
    %v6888 = vunpack.c.l.b16 %v2641
    %v6889 = vunpack.c.h.b16 %v2641
    %v6890 = vunpack.c.l.b16 %v2642
    %v6891 = vunpack.c.h.b16 %v2642
    %v6892 = vunpack.c.l.b16 %v2643
    %v6893 = vunpack.c.h.b16 %v2643
    %v6894 = vunpack.c.l.b16 %v2644
    %v6895 = vunpack.c.h.b16 %v2644
    %v6896 = vunpack.c.l.b16 %v2645
    %v6897 = vunpack.c.h.b16 %v2645
    %v6898 = vunpack.c.l.b16 %v2646
    %v6899 = vunpack.c.h.b16 %v2646
    %v6900 = vunpack.c.l.b16 %v2647
    %v6901 = vunpack.c.h.b16 %v2647
    %v6902 = vunpack.c.l.b16 %v2648
    %v6903 = vunpack.c.h.b16 %v2648
    %v6904 = vunpack.c.l.b16 %v2649
    %v6905 = vunpack.c.h.b16 %v2649
    %v6906 = vunpack.c.l.b16 %v2650
    %v6907 = vunpack.c.h.b16 %v2650
    %v6908 = vunpack.c.l.b16 %v2651
    %v6909 = vunpack.c.h.b16 %v2651
    %v6910 = vunpack.c.l.b16 %v2652
    %v6911 = vunpack.c.h.b16 %v2652
    %v6912 = vunpack.c.l.b16 %v2653
    %v6913 = vunpack.c.h.b16 %v2653
    %v6914 = vunpack.c.l.b16 %v2654
    %v6915 = vunpack.c.h.b16 %v2654
    %v6916 = vunpack.c.l.b16 %v2655
    %v6917 = vunpack.c.h.b16 %v2655
    %v6918 = vunpack.c.l.b16 %v2656
    %v6919 = vunpack.c.h.b16 %v2656
    %v6920 = vunpack.c.l.b16 %v2657
    %v6921 = vunpack.c.h.b16 %v2657
    %v6922 = vunpack.c.l.b16 %v2658
    %v6923 = vunpack.c.h.b16 %v2658
    %v6924 = vunpack.c.l.b16 %v2659
    %v6925 = vunpack.c.h.b16 %v2659
    %v6926 = vunpack.c.l.b16 %v2660
    %v6927 = vunpack.c.h.b16 %v2660
    %v6928 = vunpack.c.l.b16 %v2661
    %v6929 = vunpack.c.h.b16 %v2661
    %v6930 = vunpack.c.l.b16 %v2662
    %v6931 = vunpack.c.h.b16 %v2662
    %v6932 = vunpack.c.l.b16 %v2663
    %v6933 = vunpack.c.h.b16 %v2663
    %v6934 = vunpack.c.l.b16 %v2664
    %v6935 = vunpack.c.h.b16 %v2664
    %v6936 = vunpack.c.l.b16 %v2665
    %v6937 = vunpack.c.h.b16 %v2665
    %v6938 = vunpack.c.l.b16 %v2666
    %v6939 = vunpack.c.h.b16 %v2666
    %v6940 = vunpack.c.l.b16 %v2667
    %v6941 = vunpack.c.h.b16 %v2667
    %v6942 = vunpack.c.l.b16 %v2668
    %v6943 = vunpack.c.h.b16 %v2668
    %v6944 = vunpack.c.l.b16 %v2669
    %v6945 = vunpack.c.h.b16 %v2669
    %v6946 = vunpack.c.l.b16 %v2670
    %v6947 = vunpack.c.h.b16 %v2670
    %v6948 = vunpack.c.l.b16 %v2671
    %v6949 = vunpack.c.h.b16 %v2671
    %v6950 = vunpack.c.l.b16 %v2672
    %v6951 = vunpack.c.h.b16 %v2672
    %v6952 = vunpack.c.l.b16 %v2673
    %v6953 = vunpack.c.h.b16 %v2673
    %v6954 = vunpack.c.l.b16 %v2674
    %v6955 = vunpack.c.h.b16 %v2674
    %v6956 = vunpack.c.l.b16 %v2675
    %v6957 = vunpack.c.h.b16 %v2675
    %v6958 = vunpack.c.l.b16 %v2676
    %v6959 = vunpack.c.h.b16 %v2676
    %v6960 = vunpack.c.l.b16 %v2677
    %v6961 = vunpack.c.h.b16 %v2677
    %v6962 = vunpack.c.l.b16 %v2678
    %v6963 = vunpack.c.h.b16 %v2678
    %v6964 = vunpack.c.l.b16 %v2679
    %v6965 = vunpack.c.h.b16 %v2679
    %v6966 = vunpack.c.l.b16 %v2680
    %v6967 = vunpack.c.h.b16 %v2680
    %v6968 = vunpack.c.l.b16 %v2681
    %v6969 = vunpack.c.h.b16 %v2681
    %v6970 = vunpack.c.l.b16 %v2682
    %v6971 = vunpack.c.h.b16 %v2682
    %v6972 = vunpack.c.l.b16 %v2683
    %v6973 = vunpack.c.h.b16 %v2683
    %v6974 = vunpack.c.l.b16 %v2684
    %v6975 = vunpack.c.h.b16 %v2684
    %v6976 = vunpack.c.l.b16 %v2685
    %v6977 = vunpack.c.h.b16 %v2685
    %v6978 = vunpack.c.l.b16 %v2686
    %v6979 = vunpack.c.h.b16 %v2686
    %v6980 = vunpack.c.l.b16 %v2687
    %v6981 = vunpack.c.h.b16 %v2687
    %v6982 = vunpack.c.l.b16 %v2688
    %v6983 = vunpack.c.h.b16 %v2688
    %v6984 = vunpack.c.l.b16 %v2689
    %v6985 = vunpack.c.h.b16 %v2689
    %v6986 = vunpack.c.l.b16 %v2690
    %v6987 = vunpack.c.h.b16 %v2690
    %v6988 = vunpack.c.l.b16 %v2691
    %v6989 = vunpack.c.h.b16 %v2691
    %v6990 = vunpack.c.l.b16 %v2692
    %v6991 = vunpack.c.h.b16 %v2692
    %v6992 = vunpack.c.l.b16 %v2693
    %v6993 = vunpack.c.h.b16 %v2693
    %v6994 = vunpack.c.l.b16 %v2694
    %v6995 = vunpack.c.h.b16 %v2694
    %v6996 = vunpack.c.l.b16 %v2695
    %v6997 = vunpack.c.h.b16 %v2695
    %v6998 = vunpack.c.l.b16 %v2696
    %v6999 = vunpack.c.h.b16 %v2696
    %v7000 = vunpack.c.l.b16 %v2697
    %v7001 = vunpack.c.h.b16 %v2697
    %v7002 = vunpack.c.l.b16 %v2698
    %v7003 = vunpack.c.h.b16 %v2698
    %v7004 = vunpack.c.l.b16 %v2699
    %v7005 = vunpack.c.h.b16 %v2699
    %v7006 = vunpack.c.l.b16 %v2700
    %v7007 = vunpack.c.h.b16 %v2700
    %v7008 = vunpack.c.l.b16 %v2701
    %v7009 = vunpack.c.h.b16 %v2701
    %v7010 = vunpack.c.l.b16 %v2702
    %v7011 = vunpack.c.h.b16 %v2702
    %v7012 = vunpack.c.l.b16 %v2703
    %v7013 = vunpack.c.h.b16 %v2703
    %v7014 = vunpack.c.l.b16 %v2704
    %v7015 = vunpack.c.h.b16 %v2704
    %v7016 = vunpack.c.l.b16 %v2705
    %v7017 = vunpack.c.h.b16 %v2705
    %v7018 = vunpack.c.l.b16 %v2706
    %v7019 = vunpack.c.h.b16 %v2706
    %v7020 = vunpack.c.l.b16 %v2707
    %v7021 = vunpack.c.h.b16 %v2707
    %v7022 = vunpack.c.l.b16 %v2708
    %v7023 = vunpack.c.h.b16 %v2708
    %v7024 = vunpack.c.l.b16 %v2709
    %v7025 = vunpack.c.h.b16 %v2709
    %v7026 = vunpack.c.l.b16 %v2710
    %v7027 = vunpack.c.h.b16 %v2710
    %v7028 = vunpack.c.l.b16 %v2711
    %v7029 = vunpack.c.h.b16 %v2711
    %v7030 = vunpack.c.l.b16 %v2712
    %v7031 = vunpack.c.h.b16 %v2712
    %v7032 = vunpack.c.l.b16 %v2713
    %v7033 = vunpack.c.h.b16 %v2713
    %v7034 = vunpack.c.l.b16 %v2714
    %v7035 = vunpack.c.h.b16 %v2714
    %v7036 = vunpack.c.l.b16 %v2715
    %v7037 = vunpack.c.h.b16 %v2715
    %v7038 = vunpack.c.l.b16 %v2716
    %v7039 = vunpack.c.h.b16 %v2716
    %v7040 = vunpack.c.l.b16 %v2717
    %v7041 = vunpack.c.h.b16 %v2717
    %v7042 = vunpack.c.l.b16 %v2718
    %v7043 = vunpack.c.h.b16 %v2718
    %v7044 = vunpack.c.l.b16 %v2719
    %v7045 = vunpack.c.h.b16 %v2719
    %v7046 = vunpack.c.l.b16 %v2720
    %v7047 = vunpack.c.h.b16 %v2720
    %v7048 = vunpack.c.l.b16 %v2721
    %v7049 = vunpack.c.h.b16 %v2721
    %v7050 = vunpack.c.l.b16 %v2722
    %v7051 = vunpack.c.h.b16 %v2722
    %v7052 = vunpack.c.l.b16 %v2723
    %v7053 = vunpack.c.h.b16 %v2723
    %v7054 = vunpack.c.l.b16 %v2724
    %v7055 = vunpack.c.h.b16 %v2724
    %v7056 = vunpack.c.l.b16 %v2725
    %v7057 = vunpack.c.h.b16 %v2725
    %v7058 = vunpack.c.l.b16 %v2726
    %v7059 = vunpack.c.h.b16 %v2726
    %v7060 = vunpack.c.l.b16 %v2727
    %v7061 = vunpack.c.h.b16 %v2727
    %v7062 = vunpack.c.l.b16 %v2728
    %v7063 = vunpack.c.h.b16 %v2728
    %v7064 = vunpack.c.l.b16 %v2729
    %v7065 = vunpack.c.h.b16 %v2729
    %v7066 = vunpack.c.l.b16 %v2730
    %v7067 = vunpack.c.h.b16 %v2730
    %v7068 = vunpack.c.l.b16 %v2731
    %v7069 = vunpack.c.h.b16 %v2731
    %v7070 = vunpack.c.l.b16 %v2732
    %v7071 = vunpack.c.h.b16 %v2732
    %v7072 = vunpack.c.l.b16 %v2733
    %v7073 = vunpack.c.h.b16 %v2733
    %v7074 = vunpack.c.l.b16 %v2734
    %v7075 = vunpack.c.h.b16 %v2734
    %v7076 = vunpack.c.l.b16 %v2735
    %v7077 = vunpack.c.h.b16 %v2735
    %v7078 = vunpack.c.l.b16 %v2736
    %v7079 = vunpack.c.h.b16 %v2736
    %v7080 = vunpack.c.l.b16 %v2737
    %v7081 = vunpack.c.h.b16 %v2737
    %v7082 = vunpack.c.l.b16 %v2738
    %v7083 = vunpack.c.h.b16 %v2738
    %v7084 = vunpack.c.l.b16 %v2739
    %v7085 = vunpack.c.h.b16 %v2739
    %v7086 = vunpack.c.l.b16 %v2740
    %v7087 = vunpack.c.h.b16 %v2740
    %v7088 = vunpack.c.l.b16 %v2741
    %v7089 = vunpack.c.h.b16 %v2741
    %v7090 = vunpack.c.l.b16 %v2742
    %v7091 = vunpack.c.h.b16 %v2742
    %v7092 = vunpack.c.l.b16 %v2743
    %v7093 = vunpack.c.h.b16 %v2743
    %v7094 = vunpack.c.l.b16 %v2744
    %v7095 = vunpack.c.h.b16 %v2744
    %v7096 = vunpack.c.l.b16 %v2745
    %v7097 = vunpack.c.h.b16 %v2745
    %v7098 = vunpack.c.l.b16 %v2746
    %v7099 = vunpack.c.h.b16 %v2746
    %v7100 = vunpack.c.l.b16 %v2747
    %v7101 = vunpack.c.h.b16 %v2747
    %v7102 = vunpack.c.l.b16 %v2748
    %v7103 = vunpack.c.h.b16 %v2748
    %v7104 = vunpack.c.l.b16 %v2749
    %v7105 = vunpack.c.h.b16 %v2749
    %v7106 = vunpack.c.l.b16 %v2750
    %v7107 = vunpack.c.h.b16 %v2750
    %v7108 = vunpack.c.l.b16 %v2751
    %v7109 = vunpack.c.h.b16 %v2751
    %v7110 = vunpack.c.l.b16 %v2752
    %v7111 = vunpack.c.h.b16 %v2752
    %v7112 = vunpack.c.l.b16 %v2753
    %v7113 = vunpack.c.h.b16 %v2753
    %v7114 = vunpack.c.l.b16 %v2754
    %v7115 = vunpack.c.h.b16 %v2754
    %v7116 = vunpack.c.l.b16 %v2755
    %v7117 = vunpack.c.h.b16 %v2755
    %v7118 = vunpack.c.l.b16 %v2756
    %v7119 = vunpack.c.h.b16 %v2756
    %v7120 = vunpack.c.l.b16 %v2757
    %v7121 = vunpack.c.h.b16 %v2757
    %v7122 = vunpack.c.l.b16 %v2758
    %v7123 = vunpack.c.h.b16 %v2758
    %v7124 = vunpack.c.l.b16 %v2759
    %v7125 = vunpack.c.h.b16 %v2759
    %v7126 = vunpack.c.l.b16 %v2760
    %v7127 = vunpack.c.h.b16 %v2760
    %v7128 = vunpack.c.l.b16 %v2761
    %v7129 = vunpack.c.h.b16 %v2761
    %v7130 = vunpack.c.l.b16 %v2762
    %v7131 = vunpack.c.h.b16 %v2762
    %v7132 = vunpack.c.l.b16 %v2763
    %v7133 = vunpack.c.h.b16 %v2763
    %v7134 = vunpack.c.l.b16 %v2764
    %v7135 = vunpack.c.h.b16 %v2764
    %v7136 = vunpack.c.l.b16 %v2765
    %v7137 = vunpack.c.h.b16 %v2765
    %v7138 = vunpack.c.l.b16 %v2766
    %v7139 = vunpack.c.h.b16 %v2766
    %v7140 = vunpack.c.l.b16 %v2767
    %v7141 = vunpack.c.h.b16 %v2767
    %v7142 = vunpack.c.l.b16 %v2768
    %v7143 = vunpack.c.h.b16 %v2768
    %v7144 = vunpack.c.l.b16 %v2769
    %v7145 = vunpack.c.h.b16 %v2769
    %v7146 = vunpack.c.l.b16 %v2770
    %v7147 = vunpack.c.h.b16 %v2770
    %v7148 = vunpack.c.l.b16 %v2771
    %v7149 = vunpack.c.h.b16 %v2771
    %v7150 = vunpack.c.l.b16 %v2772
    %v7151 = vunpack.c.h.b16 %v2772
    %v7152 = vunpack.c.l.b16 %v2773
    %v7153 = vunpack.c.h.b16 %v2773
    %v7154 = vunpack.c.l.b16 %v2774
    %v7155 = vunpack.c.h.b16 %v2774
    %v7156 = vunpack.c.l.b16 %v2775
    %v7157 = vunpack.c.h.b16 %v2775
    %v7158 = vunpack.c.l.b16 %v2776
    %v7159 = vunpack.c.h.b16 %v2776
    %v7160 = vunpack.c.l.b16 %v2777
    %v7161 = vunpack.c.h.b16 %v2777
    %v7162 = vunpack.c.l.b16 %v2778
    %v7163 = vunpack.c.h.b16 %v2778
    %v7164 = vunpack.c.l.b16 %v2779
    %v7165 = vunpack.c.h.b16 %v2779
    %v7166 = vunpack.c.l.b16 %v2780
    %v7167 = vunpack.c.h.b16 %v2780
    %v7168 = vunpack.c.l.b16 %v2781
    %v7169 = vunpack.c.h.b16 %v2781
    %v7170 = vunpack.c.l.b16 %v2782
    %v7171 = vunpack.c.h.b16 %v2782
    %v7172 = vunpack.c.l.b16 %v2783
    %v7173 = vunpack.c.h.b16 %v2783
    %v7174 = vunpack.c.l.b16 %v2784
    %v7175 = vunpack.c.h.b16 %v2784
    %v7176 = vunpack.c.l.b16 %v2785
    %v7177 = vunpack.c.h.b16 %v2785
    %v7178 = vunpack.c.l.b16 %v2786
    %v7179 = vunpack.c.h.b16 %v2786
    %v7180 = vunpack.c.l.b16 %v2787
    %v7181 = vunpack.c.h.b16 %v2787
    %v7182 = vunpack.c.l.b16 %v2788
    %v7183 = vunpack.c.h.b16 %v2788
    %v7184 = vunpack.c.l.b16 %v2789
    %v7185 = vunpack.c.h.b16 %v2789
    %v7186 = vunpack.c.l.b16 %v2790
    %v7187 = vunpack.c.h.b16 %v2790
    %v7188 = vunpack.c.l.b16 %v2791
    %v7189 = vunpack.c.h.b16 %v2791
    %v7190 = vunpack.c.l.b16 %v2792
    %v7191 = vunpack.c.h.b16 %v2792
    %v7192 = vunpack.c.l.b16 %v2793
    %v7193 = vunpack.c.h.b16 %v2793
    %v7194 = vunpack.c.l.b16 %v2794
    %v7195 = vunpack.c.h.b16 %v2794
    %v7196 = vunpack.c.l.b16 %v2795
    %v7197 = vunpack.c.h.b16 %v2795
    %v7198 = vunpack.c.l.b16 %v2796
    %v7199 = vunpack.c.h.b16 %v2796
    %v7200 = vunpack.c.l.b16 %v2797
    %v7201 = vunpack.c.h.b16 %v2797
    %v7202 = vunpack.c.l.b16 %v2798
    %v7203 = vunpack.c.h.b16 %v2798
    %v7204 = vunpack.c.l.b16 %v2799
    %v7205 = vunpack.c.h.b16 %v2799
    %v7206 = vunpack.c.l.b16 %v2800
    %v7207 = vunpack.c.h.b16 %v2800
    %v7208 = vunpack.c.l.b16 %v2801
    %v7209 = vunpack.c.h.b16 %v2801
    %v7210 = vunpack.c.l.b16 %v2802
    %v7211 = vunpack.c.h.b16 %v2802
    %v7212 = vunpack.c.l.b16 %v2803
    %v7213 = vunpack.c.h.b16 %v2803
    %v7214 = vunpack.c.l.b16 %v2804
    %v7215 = vunpack.c.h.b16 %v2804
    %v7216 = vunpack.c.l.b16 %v2805
    %v7217 = vunpack.c.h.b16 %v2805
    %v7218 = vunpack.c.l.b16 %v2806
    %v7219 = vunpack.c.h.b16 %v2806
    %v7220 = vunpack.c.l.b16 %v2807
    %v7221 = vunpack.c.h.b16 %v2807
    %v7222 = vunpack.c.l.b16 %v2808
    %v7223 = vunpack.c.h.b16 %v2808
    %v7224 = vunpack.c.l.b16 %v2809
    %v7225 = vunpack.c.h.b16 %v2809
    %v7226 = vunpack.c.l.b16 %v2810
    %v7227 = vunpack.c.h.b16 %v2810
    %v7228 = vunpack.c.l.b16 %v2811
    %v7229 = vunpack.c.h.b16 %v2811
    %v7230 = vunpack.c.l.b16 %v2812
    %v7231 = vunpack.c.h.b16 %v2812
    %v7232 = vunpack.c.l.b16 %v2813
    %v7233 = vunpack.c.h.b16 %v2813
    %v7234 = vunpack.c.l.b16 %v2814
    %v7235 = vunpack.c.h.b16 %v2814
    %v7236 = vunpack.c.l.b16 %v2815
    %v7237 = vunpack.c.h.b16 %v2815
    %v7238 = vunpack.c.l.b16 %v2816
    %v7239 = vunpack.c.h.b16 %v2816
    %v7240 = vunpack.c.l.b16 %v2817
    %v7241 = vunpack.c.h.b16 %v2817
    %v7242 = vunpack.c.l.b16 %v2818
    %v7243 = vunpack.c.h.b16 %v2818
    %v7244 = vunpack.c.l.b16 %v2819
    %v7245 = vunpack.c.h.b16 %v2819
    %v7246 = vunpack.c.l.b16 %v2820
    %v7247 = vunpack.c.h.b16 %v2820
    %v7248 = vunpack.c.l.b16 %v2821
    %v7249 = vunpack.c.h.b16 %v2821
    %v7250 = vunpack.c.l.b16 %v2822
    %v7251 = vunpack.c.h.b16 %v2822
    %v7252 = vunpack.c.l.b16 %v2823
    %v7253 = vunpack.c.h.b16 %v2823
    %v7254 = vunpack.c.l.b16 %v2824
    %v7255 = vunpack.c.h.b16 %v2824
    %v7256 = vunpack.c.l.b16 %v2825
    %v7257 = vunpack.c.h.b16 %v2825
    %v7258 = vunpack.c.l.b16 %v2826
    %v7259 = vunpack.c.h.b16 %v2826
    %v7260 = vunpack.c.l.b16 %v2827
    %v7261 = vunpack.c.h.b16 %v2827
    %v7262 = vunpack.c.l.b16 %v2828
    %v7263 = vunpack.c.h.b16 %v2828
    %v7264 = vunpack.c.l.b16 %v2829
    %v7265 = vunpack.c.h.b16 %v2829
    %v7266 = vunpack.c.l.b16 %v2830
    %v7267 = vunpack.c.h.b16 %v2830
    %v7268 = vunpack.c.l.b16 %v2831
    %v7269 = vunpack.c.h.b16 %v2831
    %v7270 = vunpack.c.l.b16 %v2832
    %v7271 = vunpack.c.h.b16 %v2832
    %v7272 = vunpack.c.l.b16 %v2833
    %v7273 = vunpack.c.h.b16 %v2833
    %v7274 = vunpack.c.l.b16 %v2834
    %v7275 = vunpack.c.h.b16 %v2834
    %v7276 = vunpack.c.l.b16 %v2835
    %v7277 = vunpack.c.h.b16 %v2835
    %v7278 = vunpack.c.l.b16 %v2836
    %v7279 = vunpack.c.h.b16 %v2836
    %v7280 = vunpack.c.l.b16 %v2837
    %v7281 = vunpack.c.h.b16 %v2837
    %v7282 = vunpack.c.l.b16 %v2838
    %v7283 = vunpack.c.h.b16 %v2838
    %v7284 = vunpack.c.l.b16 %v2839
    %v7285 = vunpack.c.h.b16 %v2839
    %v7286 = vunpack.c.l.b16 %v2840
    %v7287 = vunpack.c.h.b16 %v2840
    %v7288 = vunpack.c.l.b16 %v2841
    %v7289 = vunpack.c.h.b16 %v2841
    %v7290 = vunpack.c.l.b16 %v2842
    %v7291 = vunpack.c.h.b16 %v2842
    %v7292 = vunpack.c.l.b16 %v2843
    %v7293 = vunpack.c.h.b16 %v2843
    %v7294 = vunpack.c.l.b16 %v2844
    %v7295 = vunpack.c.h.b16 %v2844
    %v7296 = vunpack.c.l.b16 %v2845
    %v7297 = vunpack.c.h.b16 %v2845
    %v7298 = vunpack.c.l.b16 %v2846
    %v7299 = vunpack.c.h.b16 %v2846
    %v7300 = vunpack.c.l.b16 %v2847
    %v7301 = vunpack.c.h.b16 %v2847
    %v7302 = vunpack.c.l.b16 %v2848
    %v7303 = vunpack.c.h.b16 %v2848
    %v7304 = vunpack.c.l.b16 %v2849
    %v7305 = vunpack.c.h.b16 %v2849
    %v7306 = vunpack.c.l.b16 %v2850
    %v7307 = vunpack.c.h.b16 %v2850
    %v7308 = vunpack.c.l.b16 %v2851
    %v7309 = vunpack.c.h.b16 %v2851
    %v7310 = vunpack.c.l.b16 %v2852
    %v7311 = vunpack.c.h.b16 %v2852
    %v7312 = vunpack.c.l.b16 %v2853
    %v7313 = vunpack.c.h.b16 %v2853
    %v7314 = vunpack.c.l.b16 %v2854
    %v7315 = vunpack.c.h.b16 %v2854
    %v7316 = vunpack.c.l.b16 %v2855
    %v7317 = vunpack.c.h.b16 %v2855
    %v7318 = vunpack.c.l.b16 %v2856
    %v7319 = vunpack.c.h.b16 %v2856
    %v7320 = vunpack.c.l.b16 %v2857
    %v7321 = vunpack.c.h.b16 %v2857
    %v7322 = vunpack.c.l.b16 %v2858
    %v7323 = vunpack.c.h.b16 %v2858
    %v7324 = vunpack.c.l.b16 %v2859
    %v7325 = vunpack.c.h.b16 %v2859
    %v7326 = vunpack.c.l.b16 %v2860
    %v7327 = vunpack.c.h.b16 %v2860
    %v7328 = vunpack.c.l.b16 %v2861
    %v7329 = vunpack.c.h.b16 %v2861
    %v7330 = vunpack.c.l.b16 %v2862
    %v7331 = vunpack.c.h.b16 %v2862
    %v7332 = vunpack.c.l.b16 %v2863
    %v7333 = vunpack.c.h.b16 %v2863
    %v7334 = vunpack.c.l.b16 %v2864
    %v7335 = vunpack.c.h.b16 %v2864
    %v7336 = vunpack.c.l.b16 %v2865
    %v7337 = vunpack.c.h.b16 %v2865
    %v7338 = vunpack.c.l.b16 %v2866
    %v7339 = vunpack.c.h.b16 %v2866
    %v7340 = vunpack.c.l.b16 %v2867
    %v7341 = vunpack.c.h.b16 %v2867
    %v7342 = vunpack.c.l.b16 %v2868
    %v7343 = vunpack.c.h.b16 %v2868
    %v7344 = vunpack.c.l.b16 %v2869
    %v7345 = vunpack.c.h.b16 %v2869
    %v7346 = vunpack.c.l.b16 %v2870
    %v7347 = vunpack.c.h.b16 %v2870
    %v7348 = vunpack.c.l.b16 %v2871
    %v7349 = vunpack.c.h.b16 %v2871
    %v7350 = vunpack.c.l.b16 %v2872
    %v7351 = vunpack.c.h.b16 %v2872
    %v7352 = vunpack.c.l.b16 %v2873
    %v7353 = vunpack.c.h.b16 %v2873
    %v7354 = vunpack.c.l.b16 %v2874
    %v7355 = vunpack.c.h.b16 %v2874
    %v7356 = vunpack.c.l.b16 %v2875
    %v7357 = vunpack.c.h.b16 %v2875
    %v7358 = vunpack.c.l.b16 %v2876
    %v7359 = vunpack.c.h.b16 %v2876
    %v7360 = vunpack.c.l.b16 %v2877
    %v7361 = vunpack.c.h.b16 %v2877
    %v7362 = vunpack.c.l.b16 %v2878
    %v7363 = vunpack.c.h.b16 %v2878
    %v7364 = vunpack.c.l.b16 %v2879
    %v7365 = vunpack.c.h.b16 %v2879
    %v7366 = vunpack.c.l.b16 %v2880
    %v7367 = vunpack.c.h.b16 %v2880
    %v7368 = vunpack.c.l.b16 %v2881
    %v7369 = vunpack.c.h.b16 %v2881
    %v7370 = vunpack.c.l.b16 %v2882
    %v7371 = vunpack.c.h.b16 %v2882
    %v7372 = vunpack.c.l.b16 %v2883
    %v7373 = vunpack.c.h.b16 %v2883
    %v7374 = vunpack.c.l.b16 %v2884
    %v7375 = vunpack.c.h.b16 %v2884
    %v7376 = vunpack.c.l.b16 %v2885
    %v7377 = vunpack.c.h.b16 %v2885
    %v7378 = vunpack.c.l.b16 %v2886
    %v7379 = vunpack.c.h.b16 %v2886
    %v7380 = vunpack.c.l.b16 %v2887
    %v7381 = vunpack.c.h.b16 %v2887
    %v7382 = vunpack.c.l.b16 %v2888
    %v7383 = vunpack.c.h.b16 %v2888
    %v7384 = vunpack.c.l.b16 %v2889
    %v7385 = vunpack.c.h.b16 %v2889
    %v7386 = vunpack.c.l.b16 %v2890
    %v7387 = vunpack.c.h.b16 %v2890
    %v7388 = vunpack.c.l.b16 %v2891
    %v7389 = vunpack.c.h.b16 %v2891
    %v7390 = vunpack.c.l.b16 %v2892
    %v7391 = vunpack.c.h.b16 %v2892
    %v7392 = vunpack.c.l.b16 %v2893
    %v7393 = vunpack.c.h.b16 %v2893
    %v7394 = vunpack.c.l.b16 %v2894
    %v7395 = vunpack.c.h.b16 %v2894
    %v7396 = vunpack.c.l.b16 %v2895
    %v7397 = vunpack.c.h.b16 %v2895
    %v7398 = vunpack.c.l.b16 %v2896
    %v7399 = vunpack.c.h.b16 %v2896
    %v7400 = vunpack.c.l.b16 %v2897
    %v7401 = vunpack.c.h.b16 %v2897
    %v7402 = vunpack.c.l.b16 %v2898
    %v7403 = vunpack.c.h.b16 %v2898
    %v7404 = vunpack.c.l.b16 %v2899
    %v7405 = vunpack.c.h.b16 %v2899
    %v7406 = vunpack.c.l.b16 %v2900
    %v7407 = vunpack.c.h.b16 %v2900
    %v7408 = vunpack.c.l.b16 %v2901
    %v7409 = vunpack.c.h.b16 %v2901
    %v7410 = vunpack.c.l.b16 %v2902
    %v7411 = vunpack.c.h.b16 %v2902
    %v7412 = vunpack.c.l.b16 %v2903
    %v7413 = vunpack.c.h.b16 %v2903
    %v7414 = vunpack.c.l.b16 %v2904
    %v7415 = vunpack.c.h.b16 %v2904
    %v7416 = vunpack.c.l.b16 %v2905
    %v7417 = vunpack.c.h.b16 %v2905
    %v7418 = vunpack.c.l.b16 %v2906
    %v7419 = vunpack.c.h.b16 %v2906
    %v7420 = vunpack.c.l.b16 %v2907
    %v7421 = vunpack.c.h.b16 %v2907
    %v7422 = vunpack.c.l.b16 %v2908
    %v7423 = vunpack.c.h.b16 %v2908
    %v7424 = vunpack.c.l.b16 %v2909
    %v7425 = vunpack.c.h.b16 %v2909
    %v7426 = vunpack.c.l.b16 %v2910
    %v7427 = vunpack.c.h.b16 %v2910
    %v7428 = vunpack.c.l.b16 %v2911
    %v7429 = vunpack.c.h.b16 %v2911
    %v7430 = vunpack.c.l.b16 %v2912
    %v7431 = vunpack.c.h.b16 %v2912
    %v7432 = vunpack.c.l.b16 %v2913
    %v7433 = vunpack.c.h.b16 %v2913
    %v7434 = vunpack.c.l.b16 %v2914
    %v7435 = vunpack.c.h.b16 %v2914
    %v7436 = vunpack.c.l.b16 %v2915
    %v7437 = vunpack.c.h.b16 %v2915
    %v7438 = vunpack.c.l.b16 %v2916
    %v7439 = vunpack.c.h.b16 %v2916
    %v7440 = vunpack.c.l.b16 %v2917
    %v7441 = vunpack.c.h.b16 %v2917
    %v7442 = vunpack.c.l.b16 %v2918
    %v7443 = vunpack.c.h.b16 %v2918
    %v7444 = vunpack.c.l.b16 %v2919
    %v7445 = vunpack.c.h.b16 %v2919
    %v7446 = vunpack.c.l.b16 %v2920
    %v7447 = vunpack.c.h.b16 %v2920
    %v7448 = vunpack.c.l.b16 %v2921
    %v7449 = vunpack.c.h.b16 %v2921
    %v7450 = vunpack.c.l.b16 %v2922
    %v7451 = vunpack.c.h.b16 %v2922
    %v7452 = vunpack.c.l.b16 %v2923
    %v7453 = vunpack.c.h.b16 %v2923
    %v7454 = vunpack.c.l.b16 %v2924
    %v7455 = vunpack.c.h.b16 %v2924
    %v7456 = vunpack.c.l.b16 %v2925
    %v7457 = vunpack.c.h.b16 %v2925
    %v7458 = vunpack.c.l.b16 %v2926
    %v7459 = vunpack.c.h.b16 %v2926
    %v7460 = vunpack.c.l.b16 %v2927
    %v7461 = vunpack.c.h.b16 %v2927
    %v7462 = vunpack.c.l.b16 %v2928
    %v7463 = vunpack.c.h.b16 %v2928
    %v7464 = vunpack.c.l.b16 %v2929
    %v7465 = vunpack.c.h.b16 %v2929
    %v7466 = vunpack.c.l.b16 %v2930
    %v7467 = vunpack.c.h.b16 %v2930
    %v7468 = vunpack.c.l.b16 %v2931
    %v7469 = vunpack.c.h.b16 %v2931
    %v7470 = vunpack.c.l.b16 %v2932
    %v7471 = vunpack.c.h.b16 %v2932
    %v7472 = vunpack.c.l.b16 %v2933
    %v7473 = vunpack.c.h.b16 %v2933
    %v7474 = vunpack.c.l.b16 %v2934
    %v7475 = vunpack.c.h.b16 %v2934
    %v7476 = vunpack.c.l.b16 %v2935
    %v7477 = vunpack.c.h.b16 %v2935
    %v7478 = vunpack.c.l.b16 %v2936
    %v7479 = vunpack.c.h.b16 %v2936
    %v7480 = vunpack.c.l.b16 %v2937
    %v7481 = vunpack.c.h.b16 %v2937
    %v7482 = vunpack.c.l.b16 %v2938
    %v7483 = vunpack.c.h.b16 %v2938
    %v7484 = vunpack.c.l.b16 %v2939
    %v7485 = vunpack.c.h.b16 %v2939
    %v7486 = vunpack.c.l.b16 %v2940
    %v7487 = vunpack.c.h.b16 %v2940
    %v7488 = vunpack.c.l.b16 %v2941
    %v7489 = vunpack.c.h.b16 %v2941
    %v7490 = vunpack.c.l.b16 %v2942
    %v7491 = vunpack.c.h.b16 %v2942
    %v7492 = vunpack.c.l.b16 %v2943
    %v7493 = vunpack.c.h.b16 %v2943
    %v7494 = vunpack.c.l.b16 %v2944
    %v7495 = vunpack.c.h.b16 %v2944
    %v7496 = vunpack.c.l.b16 %v2945
    %v7497 = vunpack.c.h.b16 %v2945
    %v7498 = vunpack.c.l.b16 %v2946
    %v7499 = vunpack.c.h.b16 %v2946
    %v7500 = vunpack.c.l.b16 %v2947
    %v7501 = vunpack.c.h.b16 %v2947
    %v7502 = vunpack.c.l.b16 %v2948
    %v7503 = vunpack.c.h.b16 %v2948
    %v7504 = vunpack.c.l.b16 %v2949
    %v7505 = vunpack.c.h.b16 %v2949
    %v7506 = vunpack.c.l.b16 %v2950
    %v7507 = vunpack.c.h.b16 %v2950
    %v7508 = vunpack.c.l.b16 %v2951
    %v7509 = vunpack.c.h.b16 %v2951
    %v7510 = vunpack.c.l.b16 %v2952
    %v7511 = vunpack.c.h.b16 %v2952
    %v7512 = vunpack.c.l.b16 %v2953
    %v7513 = vunpack.c.h.b16 %v2953
    %v7514 = vunpack.c.l.b16 %v2954
    %v7515 = vunpack.c.h.b16 %v2954
    %v7516 = vunpack.c.l.b16 %v2955
    %v7517 = vunpack.c.h.b16 %v2955
    %v7518 = vunpack.c.l.b16 %v2956
    %v7519 = vunpack.c.h.b16 %v2956
    %v7520 = vunpack.c.l.b16 %v2957
    %v7521 = vunpack.c.h.b16 %v2957
    %v7522 = vunpack.c.l.b16 %v2958
    %v7523 = vunpack.c.h.b16 %v2958
    %v7524 = vunpack.c.l.b16 %v2959
    %v7525 = vunpack.c.h.b16 %v2959
    %v7526 = vunpack.c.l.b16 %v2960
    %v7527 = vunpack.c.h.b16 %v2960
    %v7528 = vunpack.c.l.b16 %v2961
    %v7529 = vunpack.c.h.b16 %v2961
    %v7530 = vunpack.c.l.b16 %v2962
    %v7531 = vunpack.c.h.b16 %v2962
    %v7532 = vunpack.c.l.b16 %v2963
    %v7533 = vunpack.c.h.b16 %v2963
    %v7534 = vunpack.c.l.b16 %v2964
    %v7535 = vunpack.c.h.b16 %v2964
    %v7536 = vunpack.c.l.b16 %v2965
    %v7537 = vunpack.c.h.b16 %v2965
    %v7538 = vunpack.c.l.b16 %v2966
    %v7539 = vunpack.c.h.b16 %v2966
    %v7540 = vunpack.c.l.b16 %v2967
    %v7541 = vunpack.c.h.b16 %v2967
    %v7542 = vunpack.c.l.b16 %v2968
    %v7543 = vunpack.c.h.b16 %v2968
    %v7544 = vunpack.c.l.b16 %v2969
    %v7545 = vunpack.c.h.b16 %v2969
    %v7546 = vunpack.c.l.b16 %v2970
    %v7547 = vunpack.c.h.b16 %v2970
    %v7548 = vunpack.c.l.b16 %v2971
    %v7549 = vunpack.c.h.b16 %v2971
    %v7550 = vunpack.c.l.b16 %v2972
    %v7551 = vunpack.c.h.b16 %v2972
    %v7552 = vunpack.c.l.b16 %v2973
    %v7553 = vunpack.c.h.b16 %v2973
    %v7554 = vunpack.c.l.b16 %v2974
    %v7555 = vunpack.c.h.b16 %v2974
    %v7556 = vunpack.c.l.b16 %v2975
    %v7557 = vunpack.c.h.b16 %v2975
    %v7558 = vunpack.c.l.b16 %v2976
    %v7559 = vunpack.c.h.b16 %v2976
    %v7560 = vunpack.c.l.b16 %v2977
    %v7561 = vunpack.c.h.b16 %v2977
    %v7562 = vunpack.c.l.b16 %v2978
    %v7563 = vunpack.c.h.b16 %v2978
    %v7564 = vunpack.c.l.b16 %v2979
    %v7565 = vunpack.c.h.b16 %v2979
    %v7566 = vunpack.c.l.b16 %v2980
    %v7567 = vunpack.c.h.b16 %v2980
    %v7568 = vunpack.c.l.b16 %v2981
    %v7569 = vunpack.c.h.b16 %v2981
    %v7570 = vunpack.c.l.b16 %v2982
    %v7571 = vunpack.c.h.b16 %v2982
    %v7572 = vunpack.c.l.b16 %v2983
    %v7573 = vunpack.c.h.b16 %v2983
    %v7574 = vunpack.c.l.b16 %v2984
    %v7575 = vunpack.c.h.b16 %v2984
    %v7576 = vunpack.c.l.b16 %v2985
    %v7577 = vunpack.c.h.b16 %v2985
    %v7578 = vunpack.c.l.b16 %v2986
    %v7579 = vunpack.c.h.b16 %v2986
    %v7580 = vunpack.c.l.b16 %v2987
    %v7581 = vunpack.c.h.b16 %v2987
    %v7582 = vunpack.c.l.b16 %v2988
    %v7583 = vunpack.c.h.b16 %v2988
    %v7584 = vunpack.c.l.b16 %v2989
    %v7585 = vunpack.c.h.b16 %v2989
    %v7586 = vunpack.c.l.b16 %v2990
    %v7587 = vunpack.c.h.b16 %v2990
    %v7588 = vunpack.c.l.b16 %v2991
    %v7589 = vunpack.c.h.b16 %v2991
    %v7590 = vunpack.c.l.b16 %v2992
    %v7591 = vunpack.c.h.b16 %v2992
    %v7592 = vunpack.c.l.b16 %v2993
    %v7593 = vunpack.c.h.b16 %v2993
    %v7594 = vunpack.c.l.b16 %v2994
    %v7595 = vunpack.c.h.b16 %v2994
    %v7596 = vunpack.c.l.b16 %v2995
    %v7597 = vunpack.c.h.b16 %v2995
    %v7598 = vunpack.c.l.b16 %v2996
    %v7599 = vunpack.c.h.b16 %v2996
    %v7600 = vunpack.c.l.b16 %v2997
    %v7601 = vunpack.c.h.b16 %v2997
    %v7602 = vunpack.c.l.b16 %v2998
    %v7603 = vunpack.c.h.b16 %v2998
    %v7604 = vunpack.c.l.b16 %v2999
    %v7605 = vunpack.c.h.b16 %v2999
    %v7606 = vunpack.c.l.b16 %v3000
    %v7607 = vunpack.c.h.b16 %v3000
    %v7608 = vunpack.c.l.b16 %v3001
    %v7609 = vunpack.c.h.b16 %v3001
    %v7610 = vunpack.c.l.b16 %v3002
    %v7611 = vunpack.c.h.b16 %v3002
    %v7612 = vunpack.c.l.b16 %v3003
    %v7613 = vunpack.c.h.b16 %v3003
    %v7614 = vunpack.c.l.b16 %v3004
    %v7615 = vunpack.c.h.b16 %v3004
    %v7616 = vunpack.c.l.b16 %v3005
    %v7617 = vunpack.c.h.b16 %v3005
    %v7618 = vunpack.c.l.b16 %v3006
    %v7619 = vunpack.c.h.b16 %v3006
    %v7620 = vunpack.c.l.b16 %v3007
    %v7621 = vunpack.c.h.b16 %v3007
    %v7622 = vunpack.c.l.b16 %v3008
    %v7623 = vunpack.c.h.b16 %v3008
    %v7624 = vunpack.c.l.b16 %v3009
    %v7625 = vunpack.c.h.b16 %v3009
    %v7626 = vunpack.c.l.b16 %v3010
    %v7627 = vunpack.c.h.b16 %v3010
    %v7628 = vunpack.c.l.b16 %v3011
    %v7629 = vunpack.c.h.b16 %v3011
    %v7630 = vunpack.c.l.b16 %v3012
    %v7631 = vunpack.c.h.b16 %v3012
    %v7632 = vunpack.c.l.b16 %v3013
    %v7633 = vunpack.c.h.b16 %v3013
    %v7634 = vunpack.c.l.b16 %v3014
    %v7635 = vunpack.c.h.b16 %v3014
    %v7636 = vunpack.c.l.b16 %v3015
    %v7637 = vunpack.c.h.b16 %v3015
    %v7638 = vunpack.c.l.b16 %v3016
    %v7639 = vunpack.c.h.b16 %v3016
    %v7640 = vunpack.c.l.b16 %v3017
    %v7641 = vunpack.c.h.b16 %v3017
    %v7642 = vunpack.c.l.b16 %v3018
    %v7643 = vunpack.c.h.b16 %v3018
    %v7644 = vunpack.c.l.b16 %v3019
    %v7645 = vunpack.c.h.b16 %v3019
    %v7646 = vunpack.c.l.b16 %v3020
    %v7647 = vunpack.c.h.b16 %v3020
    %v7648 = vunpack.c.l.b16 %v3021
    %v7649 = vunpack.c.h.b16 %v3021
    %v7650 = vunpack.c.l.b16 %v3022
    %v7651 = vunpack.c.h.b16 %v3022
    %v7652 = vunpack.c.l.b16 %v3023
    %v7653 = vunpack.c.h.b16 %v3023
    %v7654 = vunpack.c.l.b16 %v3024
    %v7655 = vunpack.c.h.b16 %v3024
    %v7656 = vunpack.c.l.b16 %v3025
    %v7657 = vunpack.c.h.b16 %v3025
    %v7658 = vunpack.c.l.b16 %v3026
    %v7659 = vunpack.c.h.b16 %v3026
    %v7660 = vunpack.c.l.b16 %v3027
    %v7661 = vunpack.c.h.b16 %v3027
    %v7662 = vunpack.c.l.b16 %v3028
    %v7663 = vunpack.c.h.b16 %v3028
    %v7664 = vunpack.c.l.b16 %v3029
    %v7665 = vunpack.c.h.b16 %v3029
    %v7666 = vunpack.c.l.b16 %v3030
    %v7667 = vunpack.c.h.b16 %v3030
    %v7668 = vunpack.c.l.b16 %v3031
    %v7669 = vunpack.c.h.b16 %v3031
    %v7670 = vunpack.c.l.b16 %v3032
    %v7671 = vunpack.c.h.b16 %v3032
    %v7672 = vunpack.c.l.b16 %v3033
    %v7673 = vunpack.c.h.b16 %v3033
    %v7674 = vunpack.c.l.b16 %v3034
    %v7675 = vunpack.c.h.b16 %v3034
    %v7676 = vunpack.c.l.b16 %v3035
    %v7677 = vunpack.c.h.b16 %v3035
    %v7678 = vunpack.c.l.b16 %v3036
    %v7679 = vunpack.c.h.b16 %v3036
    %v7680 = vunpack.c.l.b16 %v3037
    %v7681 = vunpack.c.h.b16 %v3037
    %v7682 = vpack.c.b16 %v4626, %v4610
    %v7683 = vpack.c.b16 %v4627, %v4611
    %v7684 = vpack.c.b16 %v4628, %v4612
    %v7685 = vpack.c.b16 %v4629, %v4613
    %v7686 = vpack.c.b16 %v4630, %v4614
    %v7687 = vpack.c.b16 %v4631, %v4615
    %v7688 = vpack.c.b16 %v4632, %v4616
    %v7689 = vpack.c.b16 %v4633, %v4617
    %v7690 = vpack.c.b16 %v4634, %v4618
    %v7691 = vpack.c.b16 %v4635, %v4619
    %v7692 = vpack.c.b16 %v4636, %v4620
    %v7693 = vpack.c.b16 %v4637, %v4621
    %v7694 = vpack.c.b16 %v4638, %v4622
    %v7695 = vpack.c.b16 %v4639, %v4623
    %v7696 = vpack.c.b16 %v4640, %v4624
    %v7697 = vpack.c.b16 %v4641, %v4625
    %v7698 = vpack.c.b16 %v4658, %v4642
    %v7699 = vpack.c.b16 %v4659, %v4643
    %v7700 = vpack.c.b16 %v4660, %v4644
    %v7701 = vpack.c.b16 %v4661, %v4645
    %v7702 = vpack.c.b16 %v4662, %v4646
    %v7703 = vpack.c.b16 %v4663, %v4647
    %v7704 = vpack.c.b16 %v4664, %v4648
    %v7705 = vpack.c.b16 %v4665, %v4649
    %v7706 = vpack.c.b16 %v4666, %v4650
    %v7707 = vpack.c.b16 %v4667, %v4651
    %v7708 = vpack.c.b16 %v4668, %v4652
    %v7709 = vpack.c.b16 %v4669, %v4653
    %v7710 = vpack.c.b16 %v4670, %v4654
    %v7711 = vpack.c.b16 %v4671, %v4655
    %v7712 = vpack.c.b16 %v4672, %v4656
    %v7713 = vpack.c.b16 %v4673, %v4657
    %v7714 = vpack.c.b16 %v4690, %v4674
    %v7715 = vpack.c.b16 %v4691, %v4675
    %v7716 = vpack.c.b16 %v4692, %v4676
    %v7717 = vpack.c.b16 %v4693, %v4677
    %v7718 = vpack.c.b16 %v4694, %v4678
    %v7719 = vpack.c.b16 %v4695, %v4679
    %v7720 = vpack.c.b16 %v4696, %v4680
    %v7721 = vpack.c.b16 %v4697, %v4681
    %v7722 = vpack.c.b16 %v4698, %v4682
    %v7723 = vpack.c.b16 %v4699, %v4683
    %v7724 = vpack.c.b16 %v4700, %v4684
    %v7725 = vpack.c.b16 %v4701, %v4685
    %v7726 = vpack.c.b16 %v4702, %v4686
    %v7727 = vpack.c.b16 %v4703, %v4687
    %v7728 = vpack.c.b16 %v4704, %v4688
    %v7729 = vpack.c.b16 %v4705, %v4689
    %v7730 = vpack.c.b16 %v4722, %v4706
    %v7731 = vpack.c.b16 %v4723, %v4707
    %v7732 = vpack.c.b16 %v4724, %v4708
    %v7733 = vpack.c.b16 %v4725, %v4709
    %v7734 = vpack.c.b16 %v4726, %v4710
    %v7735 = vpack.c.b16 %v4727, %v4711
    %v7736 = vpack.c.b16 %v4728, %v4712
    %v7737 = vpack.c.b16 %v4729, %v4713
    %v7738 = vpack.c.b16 %v4730, %v4714
    %v7739 = vpack.c.b16 %v4731, %v4715
    %v7740 = vpack.c.b16 %v4732, %v4716
    %v7741 = vpack.c.b16 %v4733, %v4717
    %v7742 = vpack.c.b16 %v4734, %v4718
    %v7743 = vpack.c.b16 %v4735, %v4719
    %v7744 = vpack.c.b16 %v4736, %v4720
    %v7745 = vpack.c.b16 %v4737, %v4721
    %v7746 = vpack.c.b16 %v4754, %v4738
    %v7747 = vpack.c.b16 %v4755, %v4739
    %v7748 = vpack.c.b16 %v4756, %v4740
    %v7749 = vpack.c.b16 %v4757, %v4741
    %v7750 = vpack.c.b16 %v4758, %v4742
    %v7751 = vpack.c.b16 %v4759, %v4743
    %v7752 = vpack.c.b16 %v4760, %v4744
    %v7753 = vpack.c.b16 %v4761, %v4745
    %v7754 = vpack.c.b16 %v4762, %v4746
    %v7755 = vpack.c.b16 %v4763, %v4747
    %v7756 = vpack.c.b16 %v4764, %v4748
    %v7757 = vpack.c.b16 %v4765, %v4749
    %v7758 = vpack.c.b16 %v4766, %v4750
    %v7759 = vpack.c.b16 %v4767, %v4751
    %v7760 = vpack.c.b16 %v4768, %v4752
    %v7761 = vpack.c.b16 %v4769, %v4753
    %v7762 = vpack.c.b16 %v4786, %v4770
    %v7763 = vpack.c.b16 %v4787, %v4771
    %v7764 = vpack.c.b16 %v4788, %v4772
    %v7765 = vpack.c.b16 %v4789, %v4773
    %v7766 = vpack.c.b16 %v4790, %v4774
    %v7767 = vpack.c.b16 %v4791, %v4775
    %v7768 = vpack.c.b16 %v4792, %v4776
    %v7769 = vpack.c.b16 %v4793, %v4777
    %v7770 = vpack.c.b16 %v4794, %v4778
    %v7771 = vpack.c.b16 %v4795, %v4779
    %v7772 = vpack.c.b16 %v4796, %v4780
    %v7773 = vpack.c.b16 %v4797, %v4781
    %v7774 = vpack.c.b16 %v4798, %v4782
    %v7775 = vpack.c.b16 %v4799, %v4783
    %v7776 = vpack.c.b16 %v4800, %v4784
    %v7777 = vpack.c.b16 %v4801, %v4785
    %v7778 = vpack.c.b16 %v4818, %v4802
    %v7779 = vpack.c.b16 %v4819, %v4803
    %v7780 = vpack.c.b16 %v4820, %v4804
    %v7781 = vpack.c.b16 %v4821, %v4805
    %v7782 = vpack.c.b16 %v4822, %v4806
    %v7783 = vpack.c.b16 %v4823, %v4807
    %v7784 = vpack.c.b16 %v4824, %v4808
    %v7785 = vpack.c.b16 %v4825, %v4809
    %v7786 = vpack.c.b16 %v4826, %v4810
    %v7787 = vpack.c.b16 %v4827, %v4811
    %v7788 = vpack.c.b16 %v4828, %v4812
    %v7789 = vpack.c.b16 %v4829, %v4813
    %v7790 = vpack.c.b16 %v4830, %v4814
    %v7791 = vpack.c.b16 %v4831, %v4815
    %v7792 = vpack.c.b16 %v4832, %v4816
    %v7793 = vpack.c.b16 %v4833, %v4817
    %v7794 = vpack.c.b16 %v4850, %v4834
    %v7795 = vpack.c.b16 %v4851, %v4835
    %v7796 = vpack.c.b16 %v4852, %v4836
    %v7797 = vpack.c.b16 %v4853, %v4837
    %v7798 = vpack.c.b16 %v4854, %v4838
    %v7799 = vpack.c.b16 %v4855, %v4839
    %v7800 = vpack.c.b16 %v4856, %v4840
    %v7801 = vpack.c.b16 %v4857, %v4841
    %v7802 = vpack.c.b16 %v4858, %v4842
    %v7803 = vpack.c.b16 %v4859, %v4843
    %v7804 = vpack.c.b16 %v4860, %v4844
    %v7805 = vpack.c.b16 %v4861, %v4845
    %v7806 = vpack.c.b16 %v4862, %v4846
    %v7807 = vpack.c.b16 %v4863, %v4847
    %v7808 = vpack.c.b16 %v4864, %v4848
    %v7809 = vpack.c.b16 %v4865, %v4849
    %v7810 = vpack.c.b16 %v4882, %v4866
    %v7811 = vpack.c.b16 %v4883, %v4867
    %v7812 = vpack.c.b16 %v4884, %v4868
    %v7813 = vpack.c.b16 %v4885, %v4869
    %v7814 = vpack.c.b16 %v4886, %v4870
    %v7815 = vpack.c.b16 %v4887, %v4871
    %v7816 = vpack.c.b16 %v4888, %v4872
    %v7817 = vpack.c.b16 %v4889, %v4873
    %v7818 = vpack.c.b16 %v4890, %v4874
    %v7819 = vpack.c.b16 %v4891, %v4875
    %v7820 = vpack.c.b16 %v4892, %v4876
    %v7821 = vpack.c.b16 %v4893, %v4877
    %v7822 = vpack.c.b16 %v4894, %v4878
    %v7823 = vpack.c.b16 %v4895, %v4879
    %v7824 = vpack.c.b16 %v4896, %v4880
    %v7825 = vpack.c.b16 %v4897, %v4881
    %v7826 = vpack.c.b16 %v4914, %v4898
    %v7827 = vpack.c.b16 %v4915, %v4899
    %v7828 = vpack.c.b16 %v4916, %v4900
    %v7829 = vpack.c.b16 %v4917, %v4901
    %v7830 = vpack.c.b16 %v4918, %v4902
    %v7831 = vpack.c.b16 %v4919, %v4903
    %v7832 = vpack.c.b16 %v4920, %v4904
    %v7833 = vpack.c.b16 %v4921, %v4905
    %v7834 = vpack.c.b16 %v4922, %v4906
    %v7835 = vpack.c.b16 %v4923, %v4907
    %v7836 = vpack.c.b16 %v4924, %v4908
    %v7837 = vpack.c.b16 %v4925, %v4909
    %v7838 = vpack.c.b16 %v4926, %v4910
    %v7839 = vpack.c.b16 %v4927, %v4911
    %v7840 = vpack.c.b16 %v4928, %v4912
    %v7841 = vpack.c.b16 %v4929, %v4913
    %v7842 = vpack.c.b16 %v4946, %v4930
    %v7843 = vpack.c.b16 %v4947, %v4931
    %v7844 = vpack.c.b16 %v4948, %v4932
    %v7845 = vpack.c.b16 %v4949, %v4933
    %v7846 = vpack.c.b16 %v4950, %v4934
    %v7847 = vpack.c.b16 %v4951, %v4935
    %v7848 = vpack.c.b16 %v4952, %v4936
    %v7849 = vpack.c.b16 %v4953, %v4937
    %v7850 = vpack.c.b16 %v4954, %v4938
    %v7851 = vpack.c.b16 %v4955, %v4939
    %v7852 = vpack.c.b16 %v4956, %v4940
    %v7853 = vpack.c.b16 %v4957, %v4941
    %v7854 = vpack.c.b16 %v4958, %v4942
    %v7855 = vpack.c.b16 %v4959, %v4943
    %v7856 = vpack.c.b16 %v4960, %v4944
    %v7857 = vpack.c.b16 %v4961, %v4945
    %v7858 = vpack.c.b16 %v4978, %v4962
    %v7859 = vpack.c.b16 %v4979, %v4963
    %v7860 = vpack.c.b16 %v4980, %v4964
    %v7861 = vpack.c.b16 %v4981, %v4965
    %v7862 = vpack.c.b16 %v4982, %v4966
    %v7863 = vpack.c.b16 %v4983, %v4967
    %v7864 = vpack.c.b16 %v4984, %v4968
    %v7865 = vpack.c.b16 %v4985, %v4969
    %v7866 = vpack.c.b16 %v4986, %v4970
    %v7867 = vpack.c.b16 %v4987, %v4971
    %v7868 = vpack.c.b16 %v4988, %v4972
    %v7869 = vpack.c.b16 %v4989, %v4973
    %v7870 = vpack.c.b16 %v4990, %v4974
    %v7871 = vpack.c.b16 %v4991, %v4975
    %v7872 = vpack.c.b16 %v4992, %v4976
    %v7873 = vpack.c.b16 %v4993, %v4977
    %v7874 = vpack.c.b16 %v5010, %v4994
    %v7875 = vpack.c.b16 %v5011, %v4995
    %v7876 = vpack.c.b16 %v5012, %v4996
    %v7877 = vpack.c.b16 %v5013, %v4997
    %v7878 = vpack.c.b16 %v5014, %v4998
    %v7879 = vpack.c.b16 %v5015, %v4999
    %v7880 = vpack.c.b16 %v5016, %v5000
    %v7881 = vpack.c.b16 %v5017, %v5001
    %v7882 = vpack.c.b16 %v5018, %v5002
    %v7883 = vpack.c.b16 %v5019, %v5003
    %v7884 = vpack.c.b16 %v5020, %v5004
    %v7885 = vpack.c.b16 %v5021, %v5005
    %v7886 = vpack.c.b16 %v5022, %v5006
    %v7887 = vpack.c.b16 %v5023, %v5007
    %v7888 = vpack.c.b16 %v5024, %v5008
    %v7889 = vpack.c.b16 %v5025, %v5009
    %v7890 = vpack.c.b16 %v5042, %v5026
    %v7891 = vpack.c.b16 %v5043, %v5027
    %v7892 = vpack.c.b16 %v5044, %v5028
    %v7893 = vpack.c.b16 %v5045, %v5029
    %v7894 = vpack.c.b16 %v5046, %v5030
    %v7895 = vpack.c.b16 %v5047, %v5031
    %v7896 = vpack.c.b16 %v5048, %v5032
    %v7897 = vpack.c.b16 %v5049, %v5033
    %v7898 = vpack.c.b16 %v5050, %v5034
    %v7899 = vpack.c.b16 %v5051, %v5035
    %v7900 = vpack.c.b16 %v5052, %v5036
    %v7901 = vpack.c.b16 %v5053, %v5037
    %v7902 = vpack.c.b16 %v5054, %v5038
    %v7903 = vpack.c.b16 %v5055, %v5039
    %v7904 = vpack.c.b16 %v5056, %v5040
    %v7905 = vpack.c.b16 %v5057, %v5041
    %v7906 = vpack.c.b16 %v5074, %v5058
    %v7907 = vpack.c.b16 %v5075, %v5059
    %v7908 = vpack.c.b16 %v5076, %v5060
    %v7909 = vpack.c.b16 %v5077, %v5061
    %v7910 = vpack.c.b16 %v5078, %v5062
    %v7911 = vpack.c.b16 %v5079, %v5063
    %v7912 = vpack.c.b16 %v5080, %v5064
    %v7913 = vpack.c.b16 %v5081, %v5065
    %v7914 = vpack.c.b16 %v5082, %v5066
    %v7915 = vpack.c.b16 %v5083, %v5067
    %v7916 = vpack.c.b16 %v5084, %v5068
    %v7917 = vpack.c.b16 %v5085, %v5069
    %v7918 = vpack.c.b16 %v5086, %v5070
    %v7919 = vpack.c.b16 %v5087, %v5071
    %v7920 = vpack.c.b16 %v5088, %v5072
    %v7921 = vpack.c.b16 %v5089, %v5073
    %v7922 = vpack.c.b16 %v5106, %v5090
    %v7923 = vpack.c.b16 %v5107, %v5091
    %v7924 = vpack.c.b16 %v5108, %v5092
    %v7925 = vpack.c.b16 %v5109, %v5093
    %v7926 = vpack.c.b16 %v5110, %v5094
    %v7927 = vpack.c.b16 %v5111, %v5095
    %v7928 = vpack.c.b16 %v5112, %v5096
    %v7929 = vpack.c.b16 %v5113, %v5097
    %v7930 = vpack.c.b16 %v5114, %v5098
    %v7931 = vpack.c.b16 %v5115, %v5099
    %v7932 = vpack.c.b16 %v5116, %v5100
    %v7933 = vpack.c.b16 %v5117, %v5101
    %v7934 = vpack.c.b16 %v5118, %v5102
    %v7935 = vpack.c.b16 %v5119, %v5103
    %v7936 = vpack.c.b16 %v5120, %v5104
    %v7937 = vpack.c.b16 %v5121, %v5105
    %v7938 = vpack.c.b16 %v5138, %v5122
    %v7939 = vpack.c.b16 %v5139, %v5123
    %v7940 = vpack.c.b16 %v5140, %v5124
    %v7941 = vpack.c.b16 %v5141, %v5125
    %v7942 = vpack.c.b16 %v5142, %v5126
    %v7943 = vpack.c.b16 %v5143, %v5127
    %v7944 = vpack.c.b16 %v5144, %v5128
    %v7945 = vpack.c.b16 %v5145, %v5129
    %v7946 = vpack.c.b16 %v5146, %v5130
    %v7947 = vpack.c.b16 %v5147, %v5131
    %v7948 = vpack.c.b16 %v5148, %v5132
    %v7949 = vpack.c.b16 %v5149, %v5133
    %v7950 = vpack.c.b16 %v5150, %v5134
    %v7951 = vpack.c.b16 %v5151, %v5135
    %v7952 = vpack.c.b16 %v5152, %v5136
    %v7953 = vpack.c.b16 %v5153, %v5137
    %v7954 = vpack.c.b16 %v5170, %v5154
    %v7955 = vpack.c.b16 %v5171, %v5155
    %v7956 = vpack.c.b16 %v5172, %v5156
    %v7957 = vpack.c.b16 %v5173, %v5157
    %v7958 = vpack.c.b16 %v5174, %v5158
    %v7959 = vpack.c.b16 %v5175, %v5159
    %v7960 = vpack.c.b16 %v5176, %v5160
    %v7961 = vpack.c.b16 %v5177, %v5161
    %v7962 = vpack.c.b16 %v5178, %v5162
    %v7963 = vpack.c.b16 %v5179, %v5163
    %v7964 = vpack.c.b16 %v5180, %v5164
    %v7965 = vpack.c.b16 %v5181, %v5165
    %v7966 = vpack.c.b16 %v5182, %v5166
    %v7967 = vpack.c.b16 %v5183, %v5167
    %v7968 = vpack.c.b16 %v5184, %v5168
    %v7969 = vpack.c.b16 %v5185, %v5169
    %v7970 = vpack.c.b16 %v5202, %v5186
    %v7971 = vpack.c.b16 %v5203, %v5187
    %v7972 = vpack.c.b16 %v5204, %v5188
    %v7973 = vpack.c.b16 %v5205, %v5189
    %v7974 = vpack.c.b16 %v5206, %v5190
    %v7975 = vpack.c.b16 %v5207, %v5191
    %v7976 = vpack.c.b16 %v5208, %v5192
    %v7977 = vpack.c.b16 %v5209, %v5193
    %v7978 = vpack.c.b16 %v5210, %v5194
    %v7979 = vpack.c.b16 %v5211, %v5195
    %v7980 = vpack.c.b16 %v5212, %v5196
    %v7981 = vpack.c.b16 %v5213, %v5197
    %v7982 = vpack.c.b16 %v5214, %v5198
    %v7983 = vpack.c.b16 %v5215, %v5199
    %v7984 = vpack.c.b16 %v5216, %v5200
    %v7985 = vpack.c.b16 %v5217, %v5201
    %v7986 = vpack.c.b16 %v5234, %v5218
    %v7987 = vpack.c.b16 %v5235, %v5219
    %v7988 = vpack.c.b16 %v5236, %v5220
    %v7989 = vpack.c.b16 %v5237, %v5221
    %v7990 = vpack.c.b16 %v5238, %v5222
    %v7991 = vpack.c.b16 %v5239, %v5223
    %v7992 = vpack.c.b16 %v5240, %v5224
    %v7993 = vpack.c.b16 %v5241, %v5225
    %v7994 = vpack.c.b16 %v5242, %v5226
    %v7995 = vpack.c.b16 %v5243, %v5227
    %v7996 = vpack.c.b16 %v5244, %v5228
    %v7997 = vpack.c.b16 %v5245, %v5229
    %v7998 = vpack.c.b16 %v5246, %v5230
    %v7999 = vpack.c.b16 %v5247, %v5231
    %v8000 = vpack.c.b16 %v5248, %v5232
    %v8001 = vpack.c.b16 %v5249, %v5233
    %v8002 = vpack.c.b16 %v5266, %v5250
    %v8003 = vpack.c.b16 %v5267, %v5251
    %v8004 = vpack.c.b16 %v5268, %v5252
    %v8005 = vpack.c.b16 %v5269, %v5253
    %v8006 = vpack.c.b16 %v5270, %v5254
    %v8007 = vpack.c.b16 %v5271, %v5255
    %v8008 = vpack.c.b16 %v5272, %v5256
    %v8009 = vpack.c.b16 %v5273, %v5257
    %v8010 = vpack.c.b16 %v5274, %v5258
    %v8011 = vpack.c.b16 %v5275, %v5259
    %v8012 = vpack.c.b16 %v5276, %v5260
    %v8013 = vpack.c.b16 %v5277, %v5261
    %v8014 = vpack.c.b16 %v5278, %v5262
    %v8015 = vpack.c.b16 %v5279, %v5263
    %v8016 = vpack.c.b16 %v5280, %v5264
    %v8017 = vpack.c.b16 %v5281, %v5265
    %v8018 = vpack.c.b16 %v5298, %v5282
    %v8019 = vpack.c.b16 %v5299, %v5283
    %v8020 = vpack.c.b16 %v5300, %v5284
    %v8021 = vpack.c.b16 %v5301, %v5285
    %v8022 = vpack.c.b16 %v5302, %v5286
    %v8023 = vpack.c.b16 %v5303, %v5287
    %v8024 = vpack.c.b16 %v5304, %v5288
    %v8025 = vpack.c.b16 %v5305, %v5289
    %v8026 = vpack.c.b16 %v5306, %v5290
    %v8027 = vpack.c.b16 %v5307, %v5291
    %v8028 = vpack.c.b16 %v5308, %v5292
    %v8029 = vpack.c.b16 %v5309, %v5293
    %v8030 = vpack.c.b16 %v5310, %v5294
    %v8031 = vpack.c.b16 %v5311, %v5295
    %v8032 = vpack.c.b16 %v5312, %v5296
    %v8033 = vpack.c.b16 %v5313, %v5297
    %v8034 = vpack.c.b16 %v5330, %v5314
    %v8035 = vpack.c.b16 %v5331, %v5315
    %v8036 = vpack.c.b16 %v5332, %v5316
    %v8037 = vpack.c.b16 %v5333, %v5317
    %v8038 = vpack.c.b16 %v5334, %v5318
    %v8039 = vpack.c.b16 %v5335, %v5319
    %v8040 = vpack.c.b16 %v5336, %v5320
    %v8041 = vpack.c.b16 %v5337, %v5321
    %v8042 = vpack.c.b16 %v5338, %v5322
    %v8043 = vpack.c.b16 %v5339, %v5323
    %v8044 = vpack.c.b16 %v5340, %v5324
    %v8045 = vpack.c.b16 %v5341, %v5325
    %v8046 = vpack.c.b16 %v5342, %v5326
    %v8047 = vpack.c.b16 %v5343, %v5327
    %v8048 = vpack.c.b16 %v5344, %v5328
    %v8049 = vpack.c.b16 %v5345, %v5329
    %v8050 = vpack.c.b16 %v5362, %v5346
    %v8051 = vpack.c.b16 %v5363, %v5347
    %v8052 = vpack.c.b16 %v5364, %v5348
    %v8053 = vpack.c.b16 %v5365, %v5349
    %v8054 = vpack.c.b16 %v5366, %v5350
    %v8055 = vpack.c.b16 %v5367, %v5351
    %v8056 = vpack.c.b16 %v5368, %v5352
    %v8057 = vpack.c.b16 %v5369, %v5353
    %v8058 = vpack.c.b16 %v5370, %v5354
    %v8059 = vpack.c.b16 %v5371, %v5355
    %v8060 = vpack.c.b16 %v5372, %v5356
    %v8061 = vpack.c.b16 %v5373, %v5357
    %v8062 = vpack.c.b16 %v5374, %v5358
    %v8063 = vpack.c.b16 %v5375, %v5359
    %v8064 = vpack.c.b16 %v5376, %v5360
    %v8065 = vpack.c.b16 %v5377, %v5361
    %v8066 = vpack.c.b16 %v5394, %v5378
    %v8067 = vpack.c.b16 %v5395, %v5379
    %v8068 = vpack.c.b16 %v5396, %v5380
    %v8069 = vpack.c.b16 %v5397, %v5381
    %v8070 = vpack.c.b16 %v5398, %v5382
    %v8071 = vpack.c.b16 %v5399, %v5383
    %v8072 = vpack.c.b16 %v5400, %v5384
    %v8073 = vpack.c.b16 %v5401, %v5385
    %v8074 = vpack.c.b16 %v5402, %v5386
    %v8075 = vpack.c.b16 %v5403, %v5387
    %v8076 = vpack.c.b16 %v5404, %v5388
    %v8077 = vpack.c.b16 %v5405, %v5389
    %v8078 = vpack.c.b16 %v5406, %v5390
    %v8079 = vpack.c.b16 %v5407, %v5391
    %v8080 = vpack.c.b16 %v5408, %v5392
    %v8081 = vpack.c.b16 %v5409, %v5393
    %v8082 = vpack.c.b16 %v5426, %v5410
    %v8083 = vpack.c.b16 %v5427, %v5411
    %v8084 = vpack.c.b16 %v5428, %v5412
    %v8085 = vpack.c.b16 %v5429, %v5413
    %v8086 = vpack.c.b16 %v5430, %v5414
    %v8087 = vpack.c.b16 %v5431, %v5415
    %v8088 = vpack.c.b16 %v5432, %v5416
    %v8089 = vpack.c.b16 %v5433, %v5417
    %v8090 = vpack.c.b16 %v5434, %v5418
    %v8091 = vpack.c.b16 %v5435, %v5419
    %v8092 = vpack.c.b16 %v5436, %v5420
    %v8093 = vpack.c.b16 %v5437, %v5421
    %v8094 = vpack.c.b16 %v5438, %v5422
    %v8095 = vpack.c.b16 %v5439, %v5423
    %v8096 = vpack.c.b16 %v5440, %v5424
    %v8097 = vpack.c.b16 %v5441, %v5425
    %v8098 = vpack.c.b16 %v5458, %v5442
    %v8099 = vpack.c.b16 %v5459, %v5443
    %v8100 = vpack.c.b16 %v5460, %v5444
    %v8101 = vpack.c.b16 %v5461, %v5445
    %v8102 = vpack.c.b16 %v5462, %v5446
    %v8103 = vpack.c.b16 %v5463, %v5447
    %v8104 = vpack.c.b16 %v5464, %v5448
    %v8105 = vpack.c.b16 %v5465, %v5449
    %v8106 = vpack.c.b16 %v5466, %v5450
    %v8107 = vpack.c.b16 %v5467, %v5451
    %v8108 = vpack.c.b16 %v5468, %v5452
    %v8109 = vpack.c.b16 %v5469, %v5453
    %v8110 = vpack.c.b16 %v5470, %v5454
    %v8111 = vpack.c.b16 %v5471, %v5455
    %v8112 = vpack.c.b16 %v5472, %v5456
    %v8113 = vpack.c.b16 %v5473, %v5457
    %v8114 = vpack.c.b16 %v5490, %v5474
    %v8115 = vpack.c.b16 %v5491, %v5475
    %v8116 = vpack.c.b16 %v5492, %v5476
    %v8117 = vpack.c.b16 %v5493, %v5477
    %v8118 = vpack.c.b16 %v5494, %v5478
    %v8119 = vpack.c.b16 %v5495, %v5479
    %v8120 = vpack.c.b16 %v5496, %v5480
    %v8121 = vpack.c.b16 %v5497, %v5481
    %v8122 = vpack.c.b16 %v5498, %v5482
    %v8123 = vpack.c.b16 %v5499, %v5483
    %v8124 = vpack.c.b16 %v5500, %v5484
    %v8125 = vpack.c.b16 %v5501, %v5485
    %v8126 = vpack.c.b16 %v5502, %v5486
    %v8127 = vpack.c.b16 %v5503, %v5487
    %v8128 = vpack.c.b16 %v5504, %v5488
    %v8129 = vpack.c.b16 %v5505, %v5489
    %v8130 = vpack.c.b16 %v5522, %v5506
    %v8131 = vpack.c.b16 %v5523, %v5507
    %v8132 = vpack.c.b16 %v5524, %v5508
    %v8133 = vpack.c.b16 %v5525, %v5509
    %v8134 = vpack.c.b16 %v5526, %v5510
    %v8135 = vpack.c.b16 %v5527, %v5511
    %v8136 = vpack.c.b16 %v5528, %v5512
    %v8137 = vpack.c.b16 %v5529, %v5513
    %v8138 = vpack.c.b16 %v5530, %v5514
    %v8139 = vpack.c.b16 %v5531, %v5515
    %v8140 = vpack.c.b16 %v5532, %v5516
    %v8141 = vpack.c.b16 %v5533, %v5517
    %v8142 = vpack.c.b16 %v5534, %v5518
    %v8143 = vpack.c.b16 %v5535, %v5519
    %v8144 = vpack.c.b16 %v5536, %v5520
    %v8145 = vpack.c.b16 %v5537, %v5521
    %v8146 = vpack.c.b16 %v5554, %v5538
    %v8147 = vpack.c.b16 %v5555, %v5539
    %v8148 = vpack.c.b16 %v5556, %v5540
    %v8149 = vpack.c.b16 %v5557, %v5541
    %v8150 = vpack.c.b16 %v5558, %v5542
    %v8151 = vpack.c.b16 %v5559, %v5543
    %v8152 = vpack.c.b16 %v5560, %v5544
    %v8153 = vpack.c.b16 %v5561, %v5545
    %v8154 = vpack.c.b16 %v5562, %v5546
    %v8155 = vpack.c.b16 %v5563, %v5547
    %v8156 = vpack.c.b16 %v5564, %v5548
    %v8157 = vpack.c.b16 %v5565, %v5549
    %v8158 = vpack.c.b16 %v5566, %v5550
    %v8159 = vpack.c.b16 %v5567, %v5551
    %v8160 = vpack.c.b16 %v5568, %v5552
    %v8161 = vpack.c.b16 %v5569, %v5553
    %v8162 = vpack.c.b16 %v5586, %v5570
    %v8163 = vpack.c.b16 %v5587, %v5571
    %v8164 = vpack.c.b16 %v5588, %v5572
    %v8165 = vpack.c.b16 %v5589, %v5573
    %v8166 = vpack.c.b16 %v5590, %v5574
    %v8167 = vpack.c.b16 %v5591, %v5575
    %v8168 = vpack.c.b16 %v5592, %v5576
    %v8169 = vpack.c.b16 %v5593, %v5577
    %v8170 = vpack.c.b16 %v5594, %v5578
    %v8171 = vpack.c.b16 %v5595, %v5579
    %v8172 = vpack.c.b16 %v5596, %v5580
    %v8173 = vpack.c.b16 %v5597, %v5581
    %v8174 = vpack.c.b16 %v5598, %v5582
    %v8175 = vpack.c.b16 %v5599, %v5583
    %v8176 = vpack.c.b16 %v5600, %v5584
    %v8177 = vpack.c.b16 %v5601, %v5585
    %v8178 = vpack.c.b16 %v5618, %v5602
    %v8179 = vpack.c.b16 %v5619, %v5603
    %v8180 = vpack.c.b16 %v5620, %v5604
    %v8181 = vpack.c.b16 %v5621, %v5605
    %v8182 = vpack.c.b16 %v5622, %v5606
    %v8183 = vpack.c.b16 %v5623, %v5607
    %v8184 = vpack.c.b16 %v5624, %v5608
    %v8185 = vpack.c.b16 %v5625, %v5609
    %v8186 = vpack.c.b16 %v5626, %v5610
    %v8187 = vpack.c.b16 %v5627, %v5611
    %v8188 = vpack.c.b16 %v5628, %v5612
    %v8189 = vpack.c.b16 %v5629, %v5613
    %v8190 = vpack.c.b16 %v5630, %v5614
    %v8191 = vpack.c.b16 %v5631, %v5615
    %v8192 = vpack.c.b16 %v5632, %v5616
    %v8193 = vpack.c.b16 %v5633, %v5617
    %v8194 = vpack.c.b16 %v5650, %v5634
    %v8195 = vpack.c.b16 %v5651, %v5635
    %v8196 = vpack.c.b16 %v5652, %v5636
    %v8197 = vpack.c.b16 %v5653, %v5637
    %v8198 = vpack.c.b16 %v5654, %v5638
    %v8199 = vpack.c.b16 %v5655, %v5639
    %v8200 = vpack.c.b16 %v5656, %v5640
    %v8201 = vpack.c.b16 %v5657, %v5641
    %v8202 = vpack.c.b16 %v5658, %v5642
    %v8203 = vpack.c.b16 %v5659, %v5643
    %v8204 = vpack.c.b16 %v5660, %v5644
    %v8205 = vpack.c.b16 %v5661, %v5645
    %v8206 = vpack.c.b16 %v5662, %v5646
    %v8207 = vpack.c.b16 %v5663, %v5647
    %v8208 = vpack.c.b16 %v5664, %v5648
    %v8209 = vpack.c.b16 %v5665, %v5649
    %v8210 = vpack.c.b16 %v5682, %v5666
    %v8211 = vpack.c.b16 %v5683, %v5667
    %v8212 = vpack.c.b16 %v5684, %v5668
    %v8213 = vpack.c.b16 %v5685, %v5669
    %v8214 = vpack.c.b16 %v5686, %v5670
    %v8215 = vpack.c.b16 %v5687, %v5671
    %v8216 = vpack.c.b16 %v5688, %v5672
    %v8217 = vpack.c.b16 %v5689, %v5673
    %v8218 = vpack.c.b16 %v5690, %v5674
    %v8219 = vpack.c.b16 %v5691, %v5675
    %v8220 = vpack.c.b16 %v5692, %v5676
    %v8221 = vpack.c.b16 %v5693, %v5677
    %v8222 = vpack.c.b16 %v5694, %v5678
    %v8223 = vpack.c.b16 %v5695, %v5679
    %v8224 = vpack.c.b16 %v5696, %v5680
    %v8225 = vpack.c.b16 %v5697, %v5681
    %v8226 = vpack.c.b16 %v5714, %v5698
    %v8227 = vpack.c.b16 %v5715, %v5699
    %v8228 = vpack.c.b16 %v5716, %v5700
    %v8229 = vpack.c.b16 %v5717, %v5701
    %v8230 = vpack.c.b16 %v5718, %v5702
    %v8231 = vpack.c.b16 %v5719, %v5703
    %v8232 = vpack.c.b16 %v5720, %v5704
    %v8233 = vpack.c.b16 %v5721, %v5705
    %v8234 = vpack.c.b16 %v5722, %v5706
    %v8235 = vpack.c.b16 %v5723, %v5707
    %v8236 = vpack.c.b16 %v5724, %v5708
    %v8237 = vpack.c.b16 %v5725, %v5709
    %v8238 = vpack.c.b16 %v5726, %v5710
    %v8239 = vpack.c.b16 %v5727, %v5711
    %v8240 = vpack.c.b16 %v5728, %v5712
    %v8241 = vpack.c.b16 %v5729, %v5713
    %v8242 = vpack.c.b16 %v5746, %v5730
    %v8243 = vpack.c.b16 %v5747, %v5731
    %v8244 = vpack.c.b16 %v5748, %v5732
    %v8245 = vpack.c.b16 %v5749, %v5733
    %v8246 = vpack.c.b16 %v5750, %v5734
    %v8247 = vpack.c.b16 %v5751, %v5735
    %v8248 = vpack.c.b16 %v5752, %v5736
    %v8249 = vpack.c.b16 %v5753, %v5737
    %v8250 = vpack.c.b16 %v5754, %v5738
    %v8251 = vpack.c.b16 %v5755, %v5739
    %v8252 = vpack.c.b16 %v5756, %v5740
    %v8253 = vpack.c.b16 %v5757, %v5741
    %v8254 = vpack.c.b16 %v5758, %v5742
    %v8255 = vpack.c.b16 %v5759, %v5743
    %v8256 = vpack.c.b16 %v5760, %v5744
    %v8257 = vpack.c.b16 %v5761, %v5745
    %v8258 = vpack.c.b16 %v5778, %v5762
    %v8259 = vpack.c.b16 %v5779, %v5763
    %v8260 = vpack.c.b16 %v5780, %v5764
    %v8261 = vpack.c.b16 %v5781, %v5765
    %v8262 = vpack.c.b16 %v5782, %v5766
    %v8263 = vpack.c.b16 %v5783, %v5767
    %v8264 = vpack.c.b16 %v5784, %v5768
    %v8265 = vpack.c.b16 %v5785, %v5769
    %v8266 = vpack.c.b16 %v5786, %v5770
    %v8267 = vpack.c.b16 %v5787, %v5771
    %v8268 = vpack.c.b16 %v5788, %v5772
    %v8269 = vpack.c.b16 %v5789, %v5773
    %v8270 = vpack.c.b16 %v5790, %v5774
    %v8271 = vpack.c.b16 %v5791, %v5775
    %v8272 = vpack.c.b16 %v5792, %v5776
    %v8273 = vpack.c.b16 %v5793, %v5777
    %v8274 = vpack.c.b16 %v5810, %v5794
    %v8275 = vpack.c.b16 %v5811, %v5795
    %v8276 = vpack.c.b16 %v5812, %v5796
    %v8277 = vpack.c.b16 %v5813, %v5797
    %v8278 = vpack.c.b16 %v5814, %v5798
    %v8279 = vpack.c.b16 %v5815, %v5799
    %v8280 = vpack.c.b16 %v5816, %v5800
    %v8281 = vpack.c.b16 %v5817, %v5801
    %v8282 = vpack.c.b16 %v5818, %v5802
    %v8283 = vpack.c.b16 %v5819, %v5803
    %v8284 = vpack.c.b16 %v5820, %v5804
    %v8285 = vpack.c.b16 %v5821, %v5805
    %v8286 = vpack.c.b16 %v5822, %v5806
    %v8287 = vpack.c.b16 %v5823, %v5807
    %v8288 = vpack.c.b16 %v5824, %v5808
    %v8289 = vpack.c.b16 %v5825, %v5809
    %v8290 = vpack.c.b16 %v5842, %v5826
    %v8291 = vpack.c.b16 %v5843, %v5827
    %v8292 = vpack.c.b16 %v5844, %v5828
    %v8293 = vpack.c.b16 %v5845, %v5829
    %v8294 = vpack.c.b16 %v5846, %v5830
    %v8295 = vpack.c.b16 %v5847, %v5831
    %v8296 = vpack.c.b16 %v5848, %v5832
    %v8297 = vpack.c.b16 %v5849, %v5833
    %v8298 = vpack.c.b16 %v5850, %v5834
    %v8299 = vpack.c.b16 %v5851, %v5835
    %v8300 = vpack.c.b16 %v5852, %v5836
    %v8301 = vpack.c.b16 %v5853, %v5837
    %v8302 = vpack.c.b16 %v5854, %v5838
    %v8303 = vpack.c.b16 %v5855, %v5839
    %v8304 = vpack.c.b16 %v5856, %v5840
    %v8305 = vpack.c.b16 %v5857, %v5841
    %v8306 = vpack.c.b16 %v5874, %v5858
    %v8307 = vpack.c.b16 %v5875, %v5859
    %v8308 = vpack.c.b16 %v5876, %v5860
    %v8309 = vpack.c.b16 %v5877, %v5861
    %v8310 = vpack.c.b16 %v5878, %v5862
    %v8311 = vpack.c.b16 %v5879, %v5863
    %v8312 = vpack.c.b16 %v5880, %v5864
    %v8313 = vpack.c.b16 %v5881, %v5865
    %v8314 = vpack.c.b16 %v5882, %v5866
    %v8315 = vpack.c.b16 %v5883, %v5867
    %v8316 = vpack.c.b16 %v5884, %v5868
    %v8317 = vpack.c.b16 %v5885, %v5869
    %v8318 = vpack.c.b16 %v5886, %v5870
    %v8319 = vpack.c.b16 %v5887, %v5871
    %v8320 = vpack.c.b16 %v5888, %v5872
    %v8321 = vpack.c.b16 %v5889, %v5873
    %v8322 = vpack.c.b16 %v5906, %v5890
    %v8323 = vpack.c.b16 %v5907, %v5891
    %v8324 = vpack.c.b16 %v5908, %v5892
    %v8325 = vpack.c.b16 %v5909, %v5893
    %v8326 = vpack.c.b16 %v5910, %v5894
    %v8327 = vpack.c.b16 %v5911, %v5895
    %v8328 = vpack.c.b16 %v5912, %v5896
    %v8329 = vpack.c.b16 %v5913, %v5897
    %v8330 = vpack.c.b16 %v5914, %v5898
    %v8331 = vpack.c.b16 %v5915, %v5899
    %v8332 = vpack.c.b16 %v5916, %v5900
    %v8333 = vpack.c.b16 %v5917, %v5901
    %v8334 = vpack.c.b16 %v5918, %v5902
    %v8335 = vpack.c.b16 %v5919, %v5903
    %v8336 = vpack.c.b16 %v5920, %v5904
    %v8337 = vpack.c.b16 %v5921, %v5905
    %v8338 = vpack.c.b16 %v5938, %v5922
    %v8339 = vpack.c.b16 %v5939, %v5923
    %v8340 = vpack.c.b16 %v5940, %v5924
    %v8341 = vpack.c.b16 %v5941, %v5925
    %v8342 = vpack.c.b16 %v5942, %v5926
    %v8343 = vpack.c.b16 %v5943, %v5927
    %v8344 = vpack.c.b16 %v5944, %v5928
    %v8345 = vpack.c.b16 %v5945, %v5929
    %v8346 = vpack.c.b16 %v5946, %v5930
    %v8347 = vpack.c.b16 %v5947, %v5931
    %v8348 = vpack.c.b16 %v5948, %v5932
    %v8349 = vpack.c.b16 %v5949, %v5933
    %v8350 = vpack.c.b16 %v5950, %v5934
    %v8351 = vpack.c.b16 %v5951, %v5935
    %v8352 = vpack.c.b16 %v5952, %v5936
    %v8353 = vpack.c.b16 %v5953, %v5937
    %v8354 = vpack.c.b16 %v5970, %v5954
    %v8355 = vpack.c.b16 %v5971, %v5955
    %v8356 = vpack.c.b16 %v5972, %v5956
    %v8357 = vpack.c.b16 %v5973, %v5957
    %v8358 = vpack.c.b16 %v5974, %v5958
    %v8359 = vpack.c.b16 %v5975, %v5959
    %v8360 = vpack.c.b16 %v5976, %v5960
    %v8361 = vpack.c.b16 %v5977, %v5961
    %v8362 = vpack.c.b16 %v5978, %v5962
    %v8363 = vpack.c.b16 %v5979, %v5963
    %v8364 = vpack.c.b16 %v5980, %v5964
    %v8365 = vpack.c.b16 %v5981, %v5965
    %v8366 = vpack.c.b16 %v5982, %v5966
    %v8367 = vpack.c.b16 %v5983, %v5967
    %v8368 = vpack.c.b16 %v5984, %v5968
    %v8369 = vpack.c.b16 %v5985, %v5969
    %v8370 = vpack.c.b16 %v6002, %v5986
    %v8371 = vpack.c.b16 %v6003, %v5987
    %v8372 = vpack.c.b16 %v6004, %v5988
    %v8373 = vpack.c.b16 %v6005, %v5989
    %v8374 = vpack.c.b16 %v6006, %v5990
    %v8375 = vpack.c.b16 %v6007, %v5991
    %v8376 = vpack.c.b16 %v6008, %v5992
    %v8377 = vpack.c.b16 %v6009, %v5993
    %v8378 = vpack.c.b16 %v6010, %v5994
    %v8379 = vpack.c.b16 %v6011, %v5995
    %v8380 = vpack.c.b16 %v6012, %v5996
    %v8381 = vpack.c.b16 %v6013, %v5997
    %v8382 = vpack.c.b16 %v6014, %v5998
    %v8383 = vpack.c.b16 %v6015, %v5999
    %v8384 = vpack.c.b16 %v6016, %v6000
    %v8385 = vpack.c.b16 %v6017, %v6001
    %v8386 = vpack.c.b16 %v6034, %v6018
    %v8387 = vpack.c.b16 %v6035, %v6019
    %v8388 = vpack.c.b16 %v6036, %v6020
    %v8389 = vpack.c.b16 %v6037, %v6021
    %v8390 = vpack.c.b16 %v6038, %v6022
    %v8391 = vpack.c.b16 %v6039, %v6023
    %v8392 = vpack.c.b16 %v6040, %v6024
    %v8393 = vpack.c.b16 %v6041, %v6025
    %v8394 = vpack.c.b16 %v6042, %v6026
    %v8395 = vpack.c.b16 %v6043, %v6027
    %v8396 = vpack.c.b16 %v6044, %v6028
    %v8397 = vpack.c.b16 %v6045, %v6029
    %v8398 = vpack.c.b16 %v6046, %v6030
    %v8399 = vpack.c.b16 %v6047, %v6031
    %v8400 = vpack.c.b16 %v6048, %v6032
    %v8401 = vpack.c.b16 %v6049, %v6033
    %v8402 = vpack.c.b16 %v6066, %v6050
    %v8403 = vpack.c.b16 %v6067, %v6051
    %v8404 = vpack.c.b16 %v6068, %v6052
    %v8405 = vpack.c.b16 %v6069, %v6053
    %v8406 = vpack.c.b16 %v6070, %v6054
    %v8407 = vpack.c.b16 %v6071, %v6055
    %v8408 = vpack.c.b16 %v6072, %v6056
    %v8409 = vpack.c.b16 %v6073, %v6057
    %v8410 = vpack.c.b16 %v6074, %v6058
    %v8411 = vpack.c.b16 %v6075, %v6059
    %v8412 = vpack.c.b16 %v6076, %v6060
    %v8413 = vpack.c.b16 %v6077, %v6061
    %v8414 = vpack.c.b16 %v6078, %v6062
    %v8415 = vpack.c.b16 %v6079, %v6063
    %v8416 = vpack.c.b16 %v6080, %v6064
    %v8417 = vpack.c.b16 %v6081, %v6065
    %v8418 = vpack.c.b16 %v6098, %v6082
    %v8419 = vpack.c.b16 %v6099, %v6083
    %v8420 = vpack.c.b16 %v6100, %v6084
    %v8421 = vpack.c.b16 %v6101, %v6085
    %v8422 = vpack.c.b16 %v6102, %v6086
    %v8423 = vpack.c.b16 %v6103, %v6087
    %v8424 = vpack.c.b16 %v6104, %v6088
    %v8425 = vpack.c.b16 %v6105, %v6089
    %v8426 = vpack.c.b16 %v6106, %v6090
    %v8427 = vpack.c.b16 %v6107, %v6091
    %v8428 = vpack.c.b16 %v6108, %v6092
    %v8429 = vpack.c.b16 %v6109, %v6093
    %v8430 = vpack.c.b16 %v6110, %v6094
    %v8431 = vpack.c.b16 %v6111, %v6095
    %v8432 = vpack.c.b16 %v6112, %v6096
    %v8433 = vpack.c.b16 %v6113, %v6097
    %v8434 = vpack.c.b16 %v6130, %v6114
    %v8435 = vpack.c.b16 %v6131, %v6115
    %v8436 = vpack.c.b16 %v6132, %v6116
    %v8437 = vpack.c.b16 %v6133, %v6117
    %v8438 = vpack.c.b16 %v6134, %v6118
    %v8439 = vpack.c.b16 %v6135, %v6119
    %v8440 = vpack.c.b16 %v6136, %v6120
    %v8441 = vpack.c.b16 %v6137, %v6121
    %v8442 = vpack.c.b16 %v6138, %v6122
    %v8443 = vpack.c.b16 %v6139, %v6123
    %v8444 = vpack.c.b16 %v6140, %v6124
    %v8445 = vpack.c.b16 %v6141, %v6125
    %v8446 = vpack.c.b16 %v6142, %v6126
    %v8447 = vpack.c.b16 %v6143, %v6127
    %v8448 = vpack.c.b16 %v6144, %v6128
    %v8449 = vpack.c.b16 %v6145, %v6129
    %v8450 = vpack.c.b16 %v6162, %v6146
    %v8451 = vpack.c.b16 %v6163, %v6147
    %v8452 = vpack.c.b16 %v6164, %v6148
    %v8453 = vpack.c.b16 %v6165, %v6149
    %v8454 = vpack.c.b16 %v6166, %v6150
    %v8455 = vpack.c.b16 %v6167, %v6151
    %v8456 = vpack.c.b16 %v6168, %v6152
    %v8457 = vpack.c.b16 %v6169, %v6153
    %v8458 = vpack.c.b16 %v6170, %v6154
    %v8459 = vpack.c.b16 %v6171, %v6155
    %v8460 = vpack.c.b16 %v6172, %v6156
    %v8461 = vpack.c.b16 %v6173, %v6157
    %v8462 = vpack.c.b16 %v6174, %v6158
    %v8463 = vpack.c.b16 %v6175, %v6159
    %v8464 = vpack.c.b16 %v6176, %v6160
    %v8465 = vpack.c.b16 %v6177, %v6161
    %v8466 = vpack.c.b16 %v6194, %v6178
    %v8467 = vpack.c.b16 %v6195, %v6179
    %v8468 = vpack.c.b16 %v6196, %v6180
    %v8469 = vpack.c.b16 %v6197, %v6181
    %v8470 = vpack.c.b16 %v6198, %v6182
    %v8471 = vpack.c.b16 %v6199, %v6183
    %v8472 = vpack.c.b16 %v6200, %v6184
    %v8473 = vpack.c.b16 %v6201, %v6185
    %v8474 = vpack.c.b16 %v6202, %v6186
    %v8475 = vpack.c.b16 %v6203, %v6187
    %v8476 = vpack.c.b16 %v6204, %v6188
    %v8477 = vpack.c.b16 %v6205, %v6189
    %v8478 = vpack.c.b16 %v6206, %v6190
    %v8479 = vpack.c.b16 %v6207, %v6191
    %v8480 = vpack.c.b16 %v6208, %v6192
    %v8481 = vpack.c.b16 %v6209, %v6193
    %v8482 = vpack.c.b16 %v6226, %v6210
    %v8483 = vpack.c.b16 %v6227, %v6211
    %v8484 = vpack.c.b16 %v6228, %v6212
    %v8485 = vpack.c.b16 %v6229, %v6213
    %v8486 = vpack.c.b16 %v6230, %v6214
    %v8487 = vpack.c.b16 %v6231, %v6215
    %v8488 = vpack.c.b16 %v6232, %v6216
    %v8489 = vpack.c.b16 %v6233, %v6217
    %v8490 = vpack.c.b16 %v6234, %v6218
    %v8491 = vpack.c.b16 %v6235, %v6219
    %v8492 = vpack.c.b16 %v6236, %v6220
    %v8493 = vpack.c.b16 %v6237, %v6221
    %v8494 = vpack.c.b16 %v6238, %v6222
    %v8495 = vpack.c.b16 %v6239, %v6223
    %v8496 = vpack.c.b16 %v6240, %v6224
    %v8497 = vpack.c.b16 %v6241, %v6225
    %v8498 = vpack.c.b16 %v6258, %v6242
    %v8499 = vpack.c.b16 %v6259, %v6243
    %v8500 = vpack.c.b16 %v6260, %v6244
    %v8501 = vpack.c.b16 %v6261, %v6245
    %v8502 = vpack.c.b16 %v6262, %v6246
    %v8503 = vpack.c.b16 %v6263, %v6247
    %v8504 = vpack.c.b16 %v6264, %v6248
    %v8505 = vpack.c.b16 %v6265, %v6249
    %v8506 = vpack.c.b16 %v6266, %v6250
    %v8507 = vpack.c.b16 %v6267, %v6251
    %v8508 = vpack.c.b16 %v6268, %v6252
    %v8509 = vpack.c.b16 %v6269, %v6253
    %v8510 = vpack.c.b16 %v6270, %v6254
    %v8511 = vpack.c.b16 %v6271, %v6255
    %v8512 = vpack.c.b16 %v6272, %v6256
    %v8513 = vpack.c.b16 %v6273, %v6257
    %v8514 = vpack.c.b16 %v6290, %v6274
    %v8515 = vpack.c.b16 %v6291, %v6275
    %v8516 = vpack.c.b16 %v6292, %v6276
    %v8517 = vpack.c.b16 %v6293, %v6277
    %v8518 = vpack.c.b16 %v6294, %v6278
    %v8519 = vpack.c.b16 %v6295, %v6279
    %v8520 = vpack.c.b16 %v6296, %v6280
    %v8521 = vpack.c.b16 %v6297, %v6281
    %v8522 = vpack.c.b16 %v6298, %v6282
    %v8523 = vpack.c.b16 %v6299, %v6283
    %v8524 = vpack.c.b16 %v6300, %v6284
    %v8525 = vpack.c.b16 %v6301, %v6285
    %v8526 = vpack.c.b16 %v6302, %v6286
    %v8527 = vpack.c.b16 %v6303, %v6287
    %v8528 = vpack.c.b16 %v6304, %v6288
    %v8529 = vpack.c.b16 %v6305, %v6289
    %v8530 = vpack.c.b16 %v6322, %v6306
    %v8531 = vpack.c.b16 %v6323, %v6307
    %v8532 = vpack.c.b16 %v6324, %v6308
    %v8533 = vpack.c.b16 %v6325, %v6309
    %v8534 = vpack.c.b16 %v6326, %v6310
    %v8535 = vpack.c.b16 %v6327, %v6311
    %v8536 = vpack.c.b16 %v6328, %v6312
    %v8537 = vpack.c.b16 %v6329, %v6313
    %v8538 = vpack.c.b16 %v6330, %v6314
    %v8539 = vpack.c.b16 %v6331, %v6315
    %v8540 = vpack.c.b16 %v6332, %v6316
    %v8541 = vpack.c.b16 %v6333, %v6317
    %v8542 = vpack.c.b16 %v6334, %v6318
    %v8543 = vpack.c.b16 %v6335, %v6319
    %v8544 = vpack.c.b16 %v6336, %v6320
    %v8545 = vpack.c.b16 %v6337, %v6321
    %v8546 = vpack.c.b16 %v6354, %v6338
    %v8547 = vpack.c.b16 %v6355, %v6339
    %v8548 = vpack.c.b16 %v6356, %v6340
    %v8549 = vpack.c.b16 %v6357, %v6341
    %v8550 = vpack.c.b16 %v6358, %v6342
    %v8551 = vpack.c.b16 %v6359, %v6343
    %v8552 = vpack.c.b16 %v6360, %v6344
    %v8553 = vpack.c.b16 %v6361, %v6345
    %v8554 = vpack.c.b16 %v6362, %v6346
    %v8555 = vpack.c.b16 %v6363, %v6347
    %v8556 = vpack.c.b16 %v6364, %v6348
    %v8557 = vpack.c.b16 %v6365, %v6349
    %v8558 = vpack.c.b16 %v6366, %v6350
    %v8559 = vpack.c.b16 %v6367, %v6351
    %v8560 = vpack.c.b16 %v6368, %v6352
    %v8561 = vpack.c.b16 %v6369, %v6353
    %v8562 = vpack.c.b16 %v6386, %v6370
    %v8563 = vpack.c.b16 %v6387, %v6371
    %v8564 = vpack.c.b16 %v6388, %v6372
    %v8565 = vpack.c.b16 %v6389, %v6373
    %v8566 = vpack.c.b16 %v6390, %v6374
    %v8567 = vpack.c.b16 %v6391, %v6375
    %v8568 = vpack.c.b16 %v6392, %v6376
    %v8569 = vpack.c.b16 %v6393, %v6377
    %v8570 = vpack.c.b16 %v6394, %v6378
    %v8571 = vpack.c.b16 %v6395, %v6379
    %v8572 = vpack.c.b16 %v6396, %v6380
    %v8573 = vpack.c.b16 %v6397, %v6381
    %v8574 = vpack.c.b16 %v6398, %v6382
    %v8575 = vpack.c.b16 %v6399, %v6383
    %v8576 = vpack.c.b16 %v6400, %v6384
    %v8577 = vpack.c.b16 %v6401, %v6385
    %v8578 = vpack.c.b16 %v6418, %v6402
    %v8579 = vpack.c.b16 %v6419, %v6403
    %v8580 = vpack.c.b16 %v6420, %v6404
    %v8581 = vpack.c.b16 %v6421, %v6405
    %v8582 = vpack.c.b16 %v6422, %v6406
    %v8583 = vpack.c.b16 %v6423, %v6407
    %v8584 = vpack.c.b16 %v6424, %v6408
    %v8585 = vpack.c.b16 %v6425, %v6409
    %v8586 = vpack.c.b16 %v6426, %v6410
    %v8587 = vpack.c.b16 %v6427, %v6411
    %v8588 = vpack.c.b16 %v6428, %v6412
    %v8589 = vpack.c.b16 %v6429, %v6413
    %v8590 = vpack.c.b16 %v6430, %v6414
    %v8591 = vpack.c.b16 %v6431, %v6415
    %v8592 = vpack.c.b16 %v6432, %v6416
    %v8593 = vpack.c.b16 %v6433, %v6417
    %v8594 = vpack.c.b16 %v6450, %v6434
    %v8595 = vpack.c.b16 %v6451, %v6435
    %v8596 = vpack.c.b16 %v6452, %v6436
    %v8597 = vpack.c.b16 %v6453, %v6437
    %v8598 = vpack.c.b16 %v6454, %v6438
    %v8599 = vpack.c.b16 %v6455, %v6439
    %v8600 = vpack.c.b16 %v6456, %v6440
    %v8601 = vpack.c.b16 %v6457, %v6441
    %v8602 = vpack.c.b16 %v6458, %v6442
    %v8603 = vpack.c.b16 %v6459, %v6443
    %v8604 = vpack.c.b16 %v6460, %v6444
    %v8605 = vpack.c.b16 %v6461, %v6445
    %v8606 = vpack.c.b16 %v6462, %v6446
    %v8607 = vpack.c.b16 %v6463, %v6447
    %v8608 = vpack.c.b16 %v6464, %v6448
    %v8609 = vpack.c.b16 %v6465, %v6449
    %v8610 = vpack.c.b16 %v6482, %v6466
    %v8611 = vpack.c.b16 %v6483, %v6467
    %v8612 = vpack.c.b16 %v6484, %v6468
    %v8613 = vpack.c.b16 %v6485, %v6469
    %v8614 = vpack.c.b16 %v6486, %v6470
    %v8615 = vpack.c.b16 %v6487, %v6471
    %v8616 = vpack.c.b16 %v6488, %v6472
    %v8617 = vpack.c.b16 %v6489, %v6473
    %v8618 = vpack.c.b16 %v6490, %v6474
    %v8619 = vpack.c.b16 %v6491, %v6475
    %v8620 = vpack.c.b16 %v6492, %v6476
    %v8621 = vpack.c.b16 %v6493, %v6477
    %v8622 = vpack.c.b16 %v6494, %v6478
    %v8623 = vpack.c.b16 %v6495, %v6479
    %v8624 = vpack.c.b16 %v6496, %v6480
    %v8625 = vpack.c.b16 %v6497, %v6481
    %v8626 = vpack.c.b16 %v6514, %v6498
    %v8627 = vpack.c.b16 %v6515, %v6499
    %v8628 = vpack.c.b16 %v6516, %v6500
    %v8629 = vpack.c.b16 %v6517, %v6501
    %v8630 = vpack.c.b16 %v6518, %v6502
    %v8631 = vpack.c.b16 %v6519, %v6503
    %v8632 = vpack.c.b16 %v6520, %v6504
    %v8633 = vpack.c.b16 %v6521, %v6505
    %v8634 = vpack.c.b16 %v6522, %v6506
    %v8635 = vpack.c.b16 %v6523, %v6507
    %v8636 = vpack.c.b16 %v6524, %v6508
    %v8637 = vpack.c.b16 %v6525, %v6509
    %v8638 = vpack.c.b16 %v6526, %v6510
    %v8639 = vpack.c.b16 %v6527, %v6511
    %v8640 = vpack.c.b16 %v6528, %v6512
    %v8641 = vpack.c.b16 %v6529, %v6513
    %v8642 = vpack.c.b16 %v6546, %v6530
    %v8643 = vpack.c.b16 %v6547, %v6531
    %v8644 = vpack.c.b16 %v6548, %v6532
    %v8645 = vpack.c.b16 %v6549, %v6533
    %v8646 = vpack.c.b16 %v6550, %v6534
    %v8647 = vpack.c.b16 %v6551, %v6535
    %v8648 = vpack.c.b16 %v6552, %v6536
    %v8649 = vpack.c.b16 %v6553, %v6537
    %v8650 = vpack.c.b16 %v6554, %v6538
    %v8651 = vpack.c.b16 %v6555, %v6539
    %v8652 = vpack.c.b16 %v6556, %v6540
    %v8653 = vpack.c.b16 %v6557, %v6541
    %v8654 = vpack.c.b16 %v6558, %v6542
    %v8655 = vpack.c.b16 %v6559, %v6543
    %v8656 = vpack.c.b16 %v6560, %v6544
    %v8657 = vpack.c.b16 %v6561, %v6545
    %v8658 = vpack.c.b16 %v6578, %v6562
    %v8659 = vpack.c.b16 %v6579, %v6563
    %v8660 = vpack.c.b16 %v6580, %v6564
    %v8661 = vpack.c.b16 %v6581, %v6565
    %v8662 = vpack.c.b16 %v6582, %v6566
    %v8663 = vpack.c.b16 %v6583, %v6567
    %v8664 = vpack.c.b16 %v6584, %v6568
    %v8665 = vpack.c.b16 %v6585, %v6569
    %v8666 = vpack.c.b16 %v6586, %v6570
    %v8667 = vpack.c.b16 %v6587, %v6571
    %v8668 = vpack.c.b16 %v6588, %v6572
    %v8669 = vpack.c.b16 %v6589, %v6573
    %v8670 = vpack.c.b16 %v6590, %v6574
    %v8671 = vpack.c.b16 %v6591, %v6575
    %v8672 = vpack.c.b16 %v6592, %v6576
    %v8673 = vpack.c.b16 %v6593, %v6577
    %v8674 = vpack.c.b16 %v6610, %v6594
    %v8675 = vpack.c.b16 %v6611, %v6595
    %v8676 = vpack.c.b16 %v6612, %v6596
    %v8677 = vpack.c.b16 %v6613, %v6597
    %v8678 = vpack.c.b16 %v6614, %v6598
    %v8679 = vpack.c.b16 %v6615, %v6599
    %v8680 = vpack.c.b16 %v6616, %v6600
    %v8681 = vpack.c.b16 %v6617, %v6601
    %v8682 = vpack.c.b16 %v6618, %v6602
    %v8683 = vpack.c.b16 %v6619, %v6603
    %v8684 = vpack.c.b16 %v6620, %v6604
    %v8685 = vpack.c.b16 %v6621, %v6605
    %v8686 = vpack.c.b16 %v6622, %v6606
    %v8687 = vpack.c.b16 %v6623, %v6607
    %v8688 = vpack.c.b16 %v6624, %v6608
    %v8689 = vpack.c.b16 %v6625, %v6609
    %v8690 = vpack.c.b16 %v6642, %v6626
    %v8691 = vpack.c.b16 %v6643, %v6627
    %v8692 = vpack.c.b16 %v6644, %v6628
    %v8693 = vpack.c.b16 %v6645, %v6629
    %v8694 = vpack.c.b16 %v6646, %v6630
    %v8695 = vpack.c.b16 %v6647, %v6631
    %v8696 = vpack.c.b16 %v6648, %v6632
    %v8697 = vpack.c.b16 %v6649, %v6633
    %v8698 = vpack.c.b16 %v6650, %v6634
    %v8699 = vpack.c.b16 %v6651, %v6635
    %v8700 = vpack.c.b16 %v6652, %v6636
    %v8701 = vpack.c.b16 %v6653, %v6637
    %v8702 = vpack.c.b16 %v6654, %v6638
    %v8703 = vpack.c.b16 %v6655, %v6639
    %v8704 = vpack.c.b16 %v6656, %v6640
    %v8705 = vpack.c.b16 %v6657, %v6641
    %v8706 = vpack.c.b16 %v6674, %v6658
    %v8707 = vpack.c.b16 %v6675, %v6659
    %v8708 = vpack.c.b16 %v6676, %v6660
    %v8709 = vpack.c.b16 %v6677, %v6661
    %v8710 = vpack.c.b16 %v6678, %v6662
    %v8711 = vpack.c.b16 %v6679, %v6663
    %v8712 = vpack.c.b16 %v6680, %v6664
    %v8713 = vpack.c.b16 %v6681, %v6665
    %v8714 = vpack.c.b16 %v6682, %v6666
    %v8715 = vpack.c.b16 %v6683, %v6667
    %v8716 = vpack.c.b16 %v6684, %v6668
    %v8717 = vpack.c.b16 %v6685, %v6669
    %v8718 = vpack.c.b16 %v6686, %v6670
    %v8719 = vpack.c.b16 %v6687, %v6671
    %v8720 = vpack.c.b16 %v6688, %v6672
    %v8721 = vpack.c.b16 %v6689, %v6673
    %v8722 = vpack.c.b16 %v6706, %v6690
    %v8723 = vpack.c.b16 %v6707, %v6691
    %v8724 = vpack.c.b16 %v6708, %v6692
    %v8725 = vpack.c.b16 %v6709, %v6693
    %v8726 = vpack.c.b16 %v6710, %v6694
    %v8727 = vpack.c.b16 %v6711, %v6695
    %v8728 = vpack.c.b16 %v6712, %v6696
    %v8729 = vpack.c.b16 %v6713, %v6697
    %v8730 = vpack.c.b16 %v6714, %v6698
    %v8731 = vpack.c.b16 %v6715, %v6699
    %v8732 = vpack.c.b16 %v6716, %v6700
    %v8733 = vpack.c.b16 %v6717, %v6701
    %v8734 = vpack.c.b16 %v6718, %v6702
    %v8735 = vpack.c.b16 %v6719, %v6703
    %v8736 = vpack.c.b16 %v6720, %v6704
    %v8737 = vpack.c.b16 %v6721, %v6705
    %v8738 = vpack.c.b16 %v6738, %v6722
    %v8739 = vpack.c.b16 %v6739, %v6723
    %v8740 = vpack.c.b16 %v6740, %v6724
    %v8741 = vpack.c.b16 %v6741, %v6725
    %v8742 = vpack.c.b16 %v6742, %v6726
    %v8743 = vpack.c.b16 %v6743, %v6727
    %v8744 = vpack.c.b16 %v6744, %v6728
    %v8745 = vpack.c.b16 %v6745, %v6729
    %v8746 = vpack.c.b16 %v6746, %v6730
    %v8747 = vpack.c.b16 %v6747, %v6731
    %v8748 = vpack.c.b16 %v6748, %v6732
    %v8749 = vpack.c.b16 %v6749, %v6733
    %v8750 = vpack.c.b16 %v6750, %v6734
    %v8751 = vpack.c.b16 %v6751, %v6735
    %v8752 = vpack.c.b16 %v6752, %v6736
    %v8753 = vpack.c.b16 %v6753, %v6737
    %v8754 = vpack.c.b16 %v6770, %v6754
    %v8755 = vpack.c.b16 %v6771, %v6755
    %v8756 = vpack.c.b16 %v6772, %v6756
    %v8757 = vpack.c.b16 %v6773, %v6757
    %v8758 = vpack.c.b16 %v6774, %v6758
    %v8759 = vpack.c.b16 %v6775, %v6759
    %v8760 = vpack.c.b16 %v6776, %v6760
    %v8761 = vpack.c.b16 %v6777, %v6761
    %v8762 = vpack.c.b16 %v6778, %v6762
    %v8763 = vpack.c.b16 %v6779, %v6763
    %v8764 = vpack.c.b16 %v6780, %v6764
    %v8765 = vpack.c.b16 %v6781, %v6765
    %v8766 = vpack.c.b16 %v6782, %v6766
    %v8767 = vpack.c.b16 %v6783, %v6767
    %v8768 = vpack.c.b16 %v6784, %v6768
    %v8769 = vpack.c.b16 %v6785, %v6769
    %v8770 = vpack.c.b16 %v6802, %v6786
    %v8771 = vpack.c.b16 %v6803, %v6787
    %v8772 = vpack.c.b16 %v6804, %v6788
    %v8773 = vpack.c.b16 %v6805, %v6789
    %v8774 = vpack.c.b16 %v6806, %v6790
    %v8775 = vpack.c.b16 %v6807, %v6791
    %v8776 = vpack.c.b16 %v6808, %v6792
    %v8777 = vpack.c.b16 %v6809, %v6793
    %v8778 = vpack.c.b16 %v6810, %v6794
    %v8779 = vpack.c.b16 %v6811, %v6795
    %v8780 = vpack.c.b16 %v6812, %v6796
    %v8781 = vpack.c.b16 %v6813, %v6797
    %v8782 = vpack.c.b16 %v6814, %v6798
    %v8783 = vpack.c.b16 %v6815, %v6799
    %v8784 = vpack.c.b16 %v6816, %v6800
    %v8785 = vpack.c.b16 %v6817, %v6801
    %v8786 = vpack.c.b16 %v6834, %v6818
    %v8787 = vpack.c.b16 %v6835, %v6819
    %v8788 = vpack.c.b16 %v6836, %v6820
    %v8789 = vpack.c.b16 %v6837, %v6821
    %v8790 = vpack.c.b16 %v6838, %v6822
    %v8791 = vpack.c.b16 %v6839, %v6823
    %v8792 = vpack.c.b16 %v6840, %v6824
    %v8793 = vpack.c.b16 %v6841, %v6825
    %v8794 = vpack.c.b16 %v6842, %v6826
    %v8795 = vpack.c.b16 %v6843, %v6827
    %v8796 = vpack.c.b16 %v6844, %v6828
    %v8797 = vpack.c.b16 %v6845, %v6829
    %v8798 = vpack.c.b16 %v6846, %v6830
    %v8799 = vpack.c.b16 %v6847, %v6831
    %v8800 = vpack.c.b16 %v6848, %v6832
    %v8801 = vpack.c.b16 %v6849, %v6833
    %v8802 = vpack.c.b16 %v6866, %v6850
    %v8803 = vpack.c.b16 %v6867, %v6851
    %v8804 = vpack.c.b16 %v6868, %v6852
    %v8805 = vpack.c.b16 %v6869, %v6853
    %v8806 = vpack.c.b16 %v6870, %v6854
    %v8807 = vpack.c.b16 %v6871, %v6855
    %v8808 = vpack.c.b16 %v6872, %v6856
    %v8809 = vpack.c.b16 %v6873, %v6857
    %v8810 = vpack.c.b16 %v6874, %v6858
    %v8811 = vpack.c.b16 %v6875, %v6859
    %v8812 = vpack.c.b16 %v6876, %v6860
    %v8813 = vpack.c.b16 %v6877, %v6861
    %v8814 = vpack.c.b16 %v6878, %v6862
    %v8815 = vpack.c.b16 %v6879, %v6863
    %v8816 = vpack.c.b16 %v6880, %v6864
    %v8817 = vpack.c.b16 %v6881, %v6865
    %v8818 = vpack.c.b16 %v6898, %v6882
    %v8819 = vpack.c.b16 %v6899, %v6883
    %v8820 = vpack.c.b16 %v6900, %v6884
    %v8821 = vpack.c.b16 %v6901, %v6885
    %v8822 = vpack.c.b16 %v6902, %v6886
    %v8823 = vpack.c.b16 %v6903, %v6887
    %v8824 = vpack.c.b16 %v6904, %v6888
    %v8825 = vpack.c.b16 %v6905, %v6889
    %v8826 = vpack.c.b16 %v6906, %v6890
    %v8827 = vpack.c.b16 %v6907, %v6891
    %v8828 = vpack.c.b16 %v6908, %v6892
    %v8829 = vpack.c.b16 %v6909, %v6893
    %v8830 = vpack.c.b16 %v6910, %v6894
    %v8831 = vpack.c.b16 %v6911, %v6895
    %v8832 = vpack.c.b16 %v6912, %v6896
    %v8833 = vpack.c.b16 %v6913, %v6897
    %v8834 = vpack.c.b16 %v6930, %v6914
    %v8835 = vpack.c.b16 %v6931, %v6915
    %v8836 = vpack.c.b16 %v6932, %v6916
    %v8837 = vpack.c.b16 %v6933, %v6917
    %v8838 = vpack.c.b16 %v6934, %v6918
    %v8839 = vpack.c.b16 %v6935, %v6919
    %v8840 = vpack.c.b16 %v6936, %v6920
    %v8841 = vpack.c.b16 %v6937, %v6921
    %v8842 = vpack.c.b16 %v6938, %v6922
    %v8843 = vpack.c.b16 %v6939, %v6923
    %v8844 = vpack.c.b16 %v6940, %v6924
    %v8845 = vpack.c.b16 %v6941, %v6925
    %v8846 = vpack.c.b16 %v6942, %v6926
    %v8847 = vpack.c.b16 %v6943, %v6927
    %v8848 = vpack.c.b16 %v6944, %v6928
    %v8849 = vpack.c.b16 %v6945, %v6929
    %v8850 = vpack.c.b16 %v6962, %v6946
    %v8851 = vpack.c.b16 %v6963, %v6947
    %v8852 = vpack.c.b16 %v6964, %v6948
    %v8853 = vpack.c.b16 %v6965, %v6949
    %v8854 = vpack.c.b16 %v6966, %v6950
    %v8855 = vpack.c.b16 %v6967, %v6951
    %v8856 = vpack.c.b16 %v6968, %v6952
    %v8857 = vpack.c.b16 %v6969, %v6953
    %v8858 = vpack.c.b16 %v6970, %v6954
    %v8859 = vpack.c.b16 %v6971, %v6955
    %v8860 = vpack.c.b16 %v6972, %v6956
    %v8861 = vpack.c.b16 %v6973, %v6957
    %v8862 = vpack.c.b16 %v6974, %v6958
    %v8863 = vpack.c.b16 %v6975, %v6959
    %v8864 = vpack.c.b16 %v6976, %v6960
    %v8865 = vpack.c.b16 %v6977, %v6961
    %v8866 = vpack.c.b16 %v6994, %v6978
    %v8867 = vpack.c.b16 %v6995, %v6979
    %v8868 = vpack.c.b16 %v6996, %v6980
    %v8869 = vpack.c.b16 %v6997, %v6981
    %v8870 = vpack.c.b16 %v6998, %v6982
    %v8871 = vpack.c.b16 %v6999, %v6983
    %v8872 = vpack.c.b16 %v7000, %v6984
    %v8873 = vpack.c.b16 %v7001, %v6985
    %v8874 = vpack.c.b16 %v7002, %v6986
    %v8875 = vpack.c.b16 %v7003, %v6987
    %v8876 = vpack.c.b16 %v7004, %v6988
    %v8877 = vpack.c.b16 %v7005, %v6989
    %v8878 = vpack.c.b16 %v7006, %v6990
    %v8879 = vpack.c.b16 %v7007, %v6991
    %v8880 = vpack.c.b16 %v7008, %v6992
    %v8881 = vpack.c.b16 %v7009, %v6993
    %v8882 = vpack.c.b16 %v7026, %v7010
    %v8883 = vpack.c.b16 %v7027, %v7011
    %v8884 = vpack.c.b16 %v7028, %v7012
    %v8885 = vpack.c.b16 %v7029, %v7013
    %v8886 = vpack.c.b16 %v7030, %v7014
    %v8887 = vpack.c.b16 %v7031, %v7015
    %v8888 = vpack.c.b16 %v7032, %v7016
    %v8889 = vpack.c.b16 %v7033, %v7017
    %v8890 = vpack.c.b16 %v7034, %v7018
    %v8891 = vpack.c.b16 %v7035, %v7019
    %v8892 = vpack.c.b16 %v7036, %v7020
    %v8893 = vpack.c.b16 %v7037, %v7021
    %v8894 = vpack.c.b16 %v7038, %v7022
    %v8895 = vpack.c.b16 %v7039, %v7023
    %v8896 = vpack.c.b16 %v7040, %v7024
    %v8897 = vpack.c.b16 %v7041, %v7025
    %v8898 = vpack.c.b16 %v7058, %v7042
    %v8899 = vpack.c.b16 %v7059, %v7043
    %v8900 = vpack.c.b16 %v7060, %v7044
    %v8901 = vpack.c.b16 %v7061, %v7045
    %v8902 = vpack.c.b16 %v7062, %v7046
    %v8903 = vpack.c.b16 %v7063, %v7047
    %v8904 = vpack.c.b16 %v7064, %v7048
    %v8905 = vpack.c.b16 %v7065, %v7049
    %v8906 = vpack.c.b16 %v7066, %v7050
    %v8907 = vpack.c.b16 %v7067, %v7051
    %v8908 = vpack.c.b16 %v7068, %v7052
    %v8909 = vpack.c.b16 %v7069, %v7053
    %v8910 = vpack.c.b16 %v7070, %v7054
    %v8911 = vpack.c.b16 %v7071, %v7055
    %v8912 = vpack.c.b16 %v7072, %v7056
    %v8913 = vpack.c.b16 %v7073, %v7057
    %v8914 = vpack.c.b16 %v7090, %v7074
    %v8915 = vpack.c.b16 %v7091, %v7075
    %v8916 = vpack.c.b16 %v7092, %v7076
    %v8917 = vpack.c.b16 %v7093, %v7077
    %v8918 = vpack.c.b16 %v7094, %v7078
    %v8919 = vpack.c.b16 %v7095, %v7079
    %v8920 = vpack.c.b16 %v7096, %v7080
    %v8921 = vpack.c.b16 %v7097, %v7081
    %v8922 = vpack.c.b16 %v7098, %v7082
    %v8923 = vpack.c.b16 %v7099, %v7083
    %v8924 = vpack.c.b16 %v7100, %v7084
    %v8925 = vpack.c.b16 %v7101, %v7085
    %v8926 = vpack.c.b16 %v7102, %v7086
    %v8927 = vpack.c.b16 %v7103, %v7087
    %v8928 = vpack.c.b16 %v7104, %v7088
    %v8929 = vpack.c.b16 %v7105, %v7089
    %v8930 = vpack.c.b16 %v7122, %v7106
    %v8931 = vpack.c.b16 %v7123, %v7107
    %v8932 = vpack.c.b16 %v7124, %v7108
    %v8933 = vpack.c.b16 %v7125, %v7109
    %v8934 = vpack.c.b16 %v7126, %v7110
    %v8935 = vpack.c.b16 %v7127, %v7111
    %v8936 = vpack.c.b16 %v7128, %v7112
    %v8937 = vpack.c.b16 %v7129, %v7113
    %v8938 = vpack.c.b16 %v7130, %v7114
    %v8939 = vpack.c.b16 %v7131, %v7115
    %v8940 = vpack.c.b16 %v7132, %v7116
    %v8941 = vpack.c.b16 %v7133, %v7117
    %v8942 = vpack.c.b16 %v7134, %v7118
    %v8943 = vpack.c.b16 %v7135, %v7119
    %v8944 = vpack.c.b16 %v7136, %v7120
    %v8945 = vpack.c.b16 %v7137, %v7121
    %v8946 = vpack.c.b16 %v7154, %v7138
    %v8947 = vpack.c.b16 %v7155, %v7139
    %v8948 = vpack.c.b16 %v7156, %v7140
    %v8949 = vpack.c.b16 %v7157, %v7141
    %v8950 = vpack.c.b16 %v7158, %v7142
    %v8951 = vpack.c.b16 %v7159, %v7143
    %v8952 = vpack.c.b16 %v7160, %v7144
    %v8953 = vpack.c.b16 %v7161, %v7145
    %v8954 = vpack.c.b16 %v7162, %v7146
    %v8955 = vpack.c.b16 %v7163, %v7147
    %v8956 = vpack.c.b16 %v7164, %v7148
    %v8957 = vpack.c.b16 %v7165, %v7149
    %v8958 = vpack.c.b16 %v7166, %v7150
    %v8959 = vpack.c.b16 %v7167, %v7151
    %v8960 = vpack.c.b16 %v7168, %v7152
    %v8961 = vpack.c.b16 %v7169, %v7153
    %v8962 = vpack.c.b16 %v7186, %v7170
    %v8963 = vpack.c.b16 %v7187, %v7171
    %v8964 = vpack.c.b16 %v7188, %v7172
    %v8965 = vpack.c.b16 %v7189, %v7173
    %v8966 = vpack.c.b16 %v7190, %v7174
    %v8967 = vpack.c.b16 %v7191, %v7175
    %v8968 = vpack.c.b16 %v7192, %v7176
    %v8969 = vpack.c.b16 %v7193, %v7177
    %v8970 = vpack.c.b16 %v7194, %v7178
    %v8971 = vpack.c.b16 %v7195, %v7179
    %v8972 = vpack.c.b16 %v7196, %v7180
    %v8973 = vpack.c.b16 %v7197, %v7181
    %v8974 = vpack.c.b16 %v7198, %v7182
    %v8975 = vpack.c.b16 %v7199, %v7183
    %v8976 = vpack.c.b16 %v7200, %v7184
    %v8977 = vpack.c.b16 %v7201, %v7185
    %v8978 = vpack.c.b16 %v7218, %v7202
    %v8979 = vpack.c.b16 %v7219, %v7203
    %v8980 = vpack.c.b16 %v7220, %v7204
    %v8981 = vpack.c.b16 %v7221, %v7205
    %v8982 = vpack.c.b16 %v7222, %v7206
    %v8983 = vpack.c.b16 %v7223, %v7207
    %v8984 = vpack.c.b16 %v7224, %v7208
    %v8985 = vpack.c.b16 %v7225, %v7209
    %v8986 = vpack.c.b16 %v7226, %v7210
    %v8987 = vpack.c.b16 %v7227, %v7211
    %v8988 = vpack.c.b16 %v7228, %v7212
    %v8989 = vpack.c.b16 %v7229, %v7213
    %v8990 = vpack.c.b16 %v7230, %v7214
    %v8991 = vpack.c.b16 %v7231, %v7215
    %v8992 = vpack.c.b16 %v7232, %v7216
    %v8993 = vpack.c.b16 %v7233, %v7217
    %v8994 = vpack.c.b16 %v7250, %v7234
    %v8995 = vpack.c.b16 %v7251, %v7235
    %v8996 = vpack.c.b16 %v7252, %v7236
    %v8997 = vpack.c.b16 %v7253, %v7237
    %v8998 = vpack.c.b16 %v7254, %v7238
    %v8999 = vpack.c.b16 %v7255, %v7239
    %v9000 = vpack.c.b16 %v7256, %v7240
    %v9001 = vpack.c.b16 %v7257, %v7241
    %v9002 = vpack.c.b16 %v7258, %v7242
    %v9003 = vpack.c.b16 %v7259, %v7243
    %v9004 = vpack.c.b16 %v7260, %v7244
    %v9005 = vpack.c.b16 %v7261, %v7245
    %v9006 = vpack.c.b16 %v7262, %v7246
    %v9007 = vpack.c.b16 %v7263, %v7247
    %v9008 = vpack.c.b16 %v7264, %v7248
    %v9009 = vpack.c.b16 %v7265, %v7249
    %v9010 = vpack.c.b16 %v7282, %v7266
    %v9011 = vpack.c.b16 %v7283, %v7267
    %v9012 = vpack.c.b16 %v7284, %v7268
    %v9013 = vpack.c.b16 %v7285, %v7269
    %v9014 = vpack.c.b16 %v7286, %v7270
    %v9015 = vpack.c.b16 %v7287, %v7271
    %v9016 = vpack.c.b16 %v7288, %v7272
    %v9017 = vpack.c.b16 %v7289, %v7273
    %v9018 = vpack.c.b16 %v7290, %v7274
    %v9019 = vpack.c.b16 %v7291, %v7275
    %v9020 = vpack.c.b16 %v7292, %v7276
    %v9021 = vpack.c.b16 %v7293, %v7277
    %v9022 = vpack.c.b16 %v7294, %v7278
    %v9023 = vpack.c.b16 %v7295, %v7279
    %v9024 = vpack.c.b16 %v7296, %v7280
    %v9025 = vpack.c.b16 %v7297, %v7281
    %v9026 = vpack.c.b16 %v7314, %v7298
    %v9027 = vpack.c.b16 %v7315, %v7299
    %v9028 = vpack.c.b16 %v7316, %v7300
    %v9029 = vpack.c.b16 %v7317, %v7301
    %v9030 = vpack.c.b16 %v7318, %v7302
    %v9031 = vpack.c.b16 %v7319, %v7303
    %v9032 = vpack.c.b16 %v7320, %v7304
    %v9033 = vpack.c.b16 %v7321, %v7305
    %v9034 = vpack.c.b16 %v7322, %v7306
    %v9035 = vpack.c.b16 %v7323, %v7307
    %v9036 = vpack.c.b16 %v7324, %v7308
    %v9037 = vpack.c.b16 %v7325, %v7309
    %v9038 = vpack.c.b16 %v7326, %v7310
    %v9039 = vpack.c.b16 %v7327, %v7311
    %v9040 = vpack.c.b16 %v7328, %v7312
    %v9041 = vpack.c.b16 %v7329, %v7313
    %v9042 = vpack.c.b16 %v7346, %v7330
    %v9043 = vpack.c.b16 %v7347, %v7331
    %v9044 = vpack.c.b16 %v7348, %v7332
    %v9045 = vpack.c.b16 %v7349, %v7333
    %v9046 = vpack.c.b16 %v7350, %v7334
    %v9047 = vpack.c.b16 %v7351, %v7335
    %v9048 = vpack.c.b16 %v7352, %v7336
    %v9049 = vpack.c.b16 %v7353, %v7337
    %v9050 = vpack.c.b16 %v7354, %v7338
    %v9051 = vpack.c.b16 %v7355, %v7339
    %v9052 = vpack.c.b16 %v7356, %v7340
    %v9053 = vpack.c.b16 %v7357, %v7341
    %v9054 = vpack.c.b16 %v7358, %v7342
    %v9055 = vpack.c.b16 %v7359, %v7343
    %v9056 = vpack.c.b16 %v7360, %v7344
    %v9057 = vpack.c.b16 %v7361, %v7345
    %v9058 = vpack.c.b16 %v7378, %v7362
    %v9059 = vpack.c.b16 %v7379, %v7363
    %v9060 = vpack.c.b16 %v7380, %v7364
    %v9061 = vpack.c.b16 %v7381, %v7365
    %v9062 = vpack.c.b16 %v7382, %v7366
    %v9063 = vpack.c.b16 %v7383, %v7367
    %v9064 = vpack.c.b16 %v7384, %v7368
    %v9065 = vpack.c.b16 %v7385, %v7369
    %v9066 = vpack.c.b16 %v7386, %v7370
    %v9067 = vpack.c.b16 %v7387, %v7371
    %v9068 = vpack.c.b16 %v7388, %v7372
    %v9069 = vpack.c.b16 %v7389, %v7373
    %v9070 = vpack.c.b16 %v7390, %v7374
    %v9071 = vpack.c.b16 %v7391, %v7375
    %v9072 = vpack.c.b16 %v7392, %v7376
    %v9073 = vpack.c.b16 %v7393, %v7377
    %v9074 = vpack.c.b16 %v7410, %v7394
    %v9075 = vpack.c.b16 %v7411, %v7395
    %v9076 = vpack.c.b16 %v7412, %v7396
    %v9077 = vpack.c.b16 %v7413, %v7397
    %v9078 = vpack.c.b16 %v7414, %v7398
    %v9079 = vpack.c.b16 %v7415, %v7399
    %v9080 = vpack.c.b16 %v7416, %v7400
    %v9081 = vpack.c.b16 %v7417, %v7401
    %v9082 = vpack.c.b16 %v7418, %v7402
    %v9083 = vpack.c.b16 %v7419, %v7403
    %v9084 = vpack.c.b16 %v7420, %v7404
    %v9085 = vpack.c.b16 %v7421, %v7405
    %v9086 = vpack.c.b16 %v7422, %v7406
    %v9087 = vpack.c.b16 %v7423, %v7407
    %v9088 = vpack.c.b16 %v7424, %v7408
    %v9089 = vpack.c.b16 %v7425, %v7409
    %v9090 = vpack.c.b16 %v7442, %v7426
    %v9091 = vpack.c.b16 %v7443, %v7427
    %v9092 = vpack.c.b16 %v7444, %v7428
    %v9093 = vpack.c.b16 %v7445, %v7429
    %v9094 = vpack.c.b16 %v7446, %v7430
    %v9095 = vpack.c.b16 %v7447, %v7431
    %v9096 = vpack.c.b16 %v7448, %v7432
    %v9097 = vpack.c.b16 %v7449, %v7433
    %v9098 = vpack.c.b16 %v7450, %v7434
    %v9099 = vpack.c.b16 %v7451, %v7435
    %v9100 = vpack.c.b16 %v7452, %v7436
    %v9101 = vpack.c.b16 %v7453, %v7437
    %v9102 = vpack.c.b16 %v7454, %v7438
    %v9103 = vpack.c.b16 %v7455, %v7439
    %v9104 = vpack.c.b16 %v7456, %v7440
    %v9105 = vpack.c.b16 %v7457, %v7441
    %v9106 = vpack.c.b16 %v7474, %v7458
    %v9107 = vpack.c.b16 %v7475, %v7459
    %v9108 = vpack.c.b16 %v7476, %v7460
    %v9109 = vpack.c.b16 %v7477, %v7461
    %v9110 = vpack.c.b16 %v7478, %v7462
    %v9111 = vpack.c.b16 %v7479, %v7463
    %v9112 = vpack.c.b16 %v7480, %v7464
    %v9113 = vpack.c.b16 %v7481, %v7465
    %v9114 = vpack.c.b16 %v7482, %v7466
    %v9115 = vpack.c.b16 %v7483, %v7467
    %v9116 = vpack.c.b16 %v7484, %v7468
    %v9117 = vpack.c.b16 %v7485, %v7469
    %v9118 = vpack.c.b16 %v7486, %v7470
    %v9119 = vpack.c.b16 %v7487, %v7471
    %v9120 = vpack.c.b16 %v7488, %v7472
    %v9121 = vpack.c.b16 %v7489, %v7473
    %v9122 = vpack.c.b16 %v7506, %v7490
    %v9123 = vpack.c.b16 %v7507, %v7491
    %v9124 = vpack.c.b16 %v7508, %v7492
    %v9125 = vpack.c.b16 %v7509, %v7493
    %v9126 = vpack.c.b16 %v7510, %v7494
    %v9127 = vpack.c.b16 %v7511, %v7495
    %v9128 = vpack.c.b16 %v7512, %v7496
    %v9129 = vpack.c.b16 %v7513, %v7497
    %v9130 = vpack.c.b16 %v7514, %v7498
    %v9131 = vpack.c.b16 %v7515, %v7499
    %v9132 = vpack.c.b16 %v7516, %v7500
    %v9133 = vpack.c.b16 %v7517, %v7501
    %v9134 = vpack.c.b16 %v7518, %v7502
    %v9135 = vpack.c.b16 %v7519, %v7503
    %v9136 = vpack.c.b16 %v7520, %v7504
    %v9137 = vpack.c.b16 %v7521, %v7505
    %v9138 = vpack.c.b16 %v7538, %v7522
    %v9139 = vpack.c.b16 %v7539, %v7523
    %v9140 = vpack.c.b16 %v7540, %v7524
    %v9141 = vpack.c.b16 %v7541, %v7525
    %v9142 = vpack.c.b16 %v7542, %v7526
    %v9143 = vpack.c.b16 %v7543, %v7527
    %v9144 = vpack.c.b16 %v7544, %v7528
    %v9145 = vpack.c.b16 %v7545, %v7529
    %v9146 = vpack.c.b16 %v7546, %v7530
    %v9147 = vpack.c.b16 %v7547, %v7531
    %v9148 = vpack.c.b16 %v7548, %v7532
    %v9149 = vpack.c.b16 %v7549, %v7533
    %v9150 = vpack.c.b16 %v7550, %v7534
    %v9151 = vpack.c.b16 %v7551, %v7535
    %v9152 = vpack.c.b16 %v7552, %v7536
    %v9153 = vpack.c.b16 %v7553, %v7537
    %v9154 = vpack.c.b16 %v7570, %v7554
    %v9155 = vpack.c.b16 %v7571, %v7555
    %v9156 = vpack.c.b16 %v7572, %v7556
    %v9157 = vpack.c.b16 %v7573, %v7557
    %v9158 = vpack.c.b16 %v7574, %v7558
    %v9159 = vpack.c.b16 %v7575, %v7559
    %v9160 = vpack.c.b16 %v7576, %v7560
    %v9161 = vpack.c.b16 %v7577, %v7561
    %v9162 = vpack.c.b16 %v7578, %v7562
    %v9163 = vpack.c.b16 %v7579, %v7563
    %v9164 = vpack.c.b16 %v7580, %v7564
    %v9165 = vpack.c.b16 %v7581, %v7565
    %v9166 = vpack.c.b16 %v7582, %v7566
    %v9167 = vpack.c.b16 %v7583, %v7567
    %v9168 = vpack.c.b16 %v7584, %v7568
    %v9169 = vpack.c.b16 %v7585, %v7569
    %v9170 = vpack.c.b16 %v7602, %v7586
    %v9171 = vpack.c.b16 %v7603, %v7587
    %v9172 = vpack.c.b16 %v7604, %v7588
    %v9173 = vpack.c.b16 %v7605, %v7589
    %v9174 = vpack.c.b16 %v7606, %v7590
    %v9175 = vpack.c.b16 %v7607, %v7591
    %v9176 = vpack.c.b16 %v7608, %v7592
    %v9177 = vpack.c.b16 %v7609, %v7593
    %v9178 = vpack.c.b16 %v7610, %v7594
    %v9179 = vpack.c.b16 %v7611, %v7595
    %v9180 = vpack.c.b16 %v7612, %v7596
    %v9181 = vpack.c.b16 %v7613, %v7597
    %v9182 = vpack.c.b16 %v7614, %v7598
    %v9183 = vpack.c.b16 %v7615, %v7599
    %v9184 = vpack.c.b16 %v7616, %v7600
    %v9185 = vpack.c.b16 %v7617, %v7601
    %v9186 = vpack.c.b16 %v7634, %v7618
    %v9187 = vpack.c.b16 %v7635, %v7619
    %v9188 = vpack.c.b16 %v7636, %v7620
    %v9189 = vpack.c.b16 %v7637, %v7621
    %v9190 = vpack.c.b16 %v7638, %v7622
    %v9191 = vpack.c.b16 %v7639, %v7623
    %v9192 = vpack.c.b16 %v7640, %v7624
    %v9193 = vpack.c.b16 %v7641, %v7625
    %v9194 = vpack.c.b16 %v7642, %v7626
    %v9195 = vpack.c.b16 %v7643, %v7627
    %v9196 = vpack.c.b16 %v7644, %v7628
    %v9197 = vpack.c.b16 %v7645, %v7629
    %v9198 = vpack.c.b16 %v7646, %v7630
    %v9199 = vpack.c.b16 %v7647, %v7631
    %v9200 = vpack.c.b16 %v7648, %v7632
    %v9201 = vpack.c.b16 %v7649, %v7633
    %v9202 = vpack.c.b16 %v7666, %v7650
    %v9203 = vpack.c.b16 %v7667, %v7651
    %v9204 = vpack.c.b16 %v7668, %v7652
    %v9205 = vpack.c.b16 %v7669, %v7653
    %v9206 = vpack.c.b16 %v7670, %v7654
    %v9207 = vpack.c.b16 %v7671, %v7655
    %v9208 = vpack.c.b16 %v7672, %v7656
    %v9209 = vpack.c.b16 %v7673, %v7657
    %v9210 = vpack.c.b16 %v7674, %v7658
    %v9211 = vpack.c.b16 %v7675, %v7659
    %v9212 = vpack.c.b16 %v7676, %v7660
    %v9213 = vpack.c.b16 %v7677, %v7661
    %v9214 = vpack.c.b16 %v7678, %v7662
    %v9215 = vpack.c.b16 %v7679, %v7663
    %v9216 = vpack.c.b16 %v7680, %v7664
    %v9217 = vpack.c.b16 %v7681, %v7665
    %10754 = vmatpush.bf16.msra.mxu0 %v7794
    %10755 = vmatpush.bf16.msra.mxu0 %v7778
    %10756 = vmatpush.bf16.msra.mxu0 %v7762
    %10757 = vmatpush.bf16.msra.mxu0 %v7746
    %10758 = vmatpush.bf16.msra.mxu0 %v7730
    %10759 = vmatpush.bf16.msra.mxu0 %v7714
    %10760 = vmatpush.bf16.msra.mxu0 %v7698
    %10761 = vmatpush.bf16.msra.mxu0 %v7682
    %10762 = vmatmul.bf16.gmra.mxu0 %v1466
    %v10763 = vpop.f32.mrf.mxu0
    %v10764 = vadd.f32 %v3042, %v10763
    %v10765 = vpop.f32.mrf.mxu0
    %10766 = vdwg.mxu0
    %10767 = vmatpush.bf16.msra.mxu0 %v7922
    %10768 = vmatpush.bf16.msra.mxu0 %v7906
    %10769 = vmatpush.bf16.msra.mxu0 %v7890
    %10770 = vmatpush.bf16.msra.mxu0 %v7874
    %10771 = vmatpush.bf16.msra.mxu0 %v7858
    %10772 = vmatpush.bf16.msra.mxu0 %v7842
    %10773 = vmatpush.bf16.msra.mxu0 %v7826
    %10774 = vmatpush.bf16.msra.mxu0 %v7810
    %10775 = vmatmul.bf16.gmra.mxu0 %v1467
    %v10776 = vpop.f32.mrf.mxu0
    %v10777 = vadd.f32 %v10764, %v10776
    %v10778 = vpop.f32.mrf.mxu0
    %10779 = vdwg.mxu0
    %10780 = vmatpush.bf16.msra.mxu0 %v8050
    %10781 = vmatpush.bf16.msra.mxu0 %v8034
    %10782 = vmatpush.bf16.msra.mxu0 %v8018
    %10783 = vmatpush.bf16.msra.mxu0 %v8002
    %10784 = vmatpush.bf16.msra.mxu0 %v7986
    %10785 = vmatpush.bf16.msra.mxu0 %v7970
    %10786 = vmatpush.bf16.msra.mxu0 %v7954
    %10787 = vmatpush.bf16.msra.mxu0 %v7938
    %10788 = vmatmul.bf16.gmra.mxu0 %v1468
    %v10789 = vpop.f32.mrf.mxu0
    %v10790 = vadd.f32 %v10777, %v10789
    %v10791 = vpop.f32.mrf.mxu0
    %10792 = vdwg.mxu0
    %10793 = vmatpush.bf16.msra.mxu0 %v8178
    %10794 = vmatpush.bf16.msra.mxu0 %v8162
    %10795 = vmatpush.bf16.msra.mxu0 %v8146
    %10796 = vmatpush.bf16.msra.mxu0 %v8130
    %10797 = vmatpush.bf16.msra.mxu0 %v8114
    %10798 = vmatpush.bf16.msra.mxu0 %v8098
    %10799 = vmatpush.bf16.msra.mxu0 %v8082
    %10800 = vmatpush.bf16.msra.mxu0 %v8066
    %10801 = vmatmul.bf16.gmra.mxu0 %v1469
    %v10802 = vpop.f32.mrf.mxu0
    %v10803 = vadd.f32 %v10790, %v10802
    %v10804 = vpop.f32.mrf.mxu0
    %10805 = vdwg.mxu0
    %10806 = vmatpush.bf16.msra.mxu0 %v8306
    %10807 = vmatpush.bf16.msra.mxu0 %v8290
    %10808 = vmatpush.bf16.msra.mxu0 %v8274
    %10809 = vmatpush.bf16.msra.mxu0 %v8258
    %10810 = vmatpush.bf16.msra.mxu0 %v8242
    %10811 = vmatpush.bf16.msra.mxu0 %v8226
    %10812 = vmatpush.bf16.msra.mxu0 %v8210
    %10813 = vmatpush.bf16.msra.mxu0 %v8194
    %10814 = vmatmul.bf16.gmra.mxu0 %v1480
    %v10815 = vpop.f32.mrf.mxu0
    %v10816 = vadd.f32 %v10803, %v10815
    %v10817 = vpop.f32.mrf.mxu0
    %10818 = vdwg.mxu0
    %10819 = vmatpush.bf16.msra.mxu0 %v8434
    %10820 = vmatpush.bf16.msra.mxu0 %v8418
    %10821 = vmatpush.bf16.msra.mxu0 %v8402
    %10822 = vmatpush.bf16.msra.mxu0 %v8386
    %10823 = vmatpush.bf16.msra.mxu0 %v8370
    %10824 = vmatpush.bf16.msra.mxu0 %v8354
    %10825 = vmatpush.bf16.msra.mxu0 %v8338
    %10826 = vmatpush.bf16.msra.mxu0 %v8322
    %10827 = vmatmul.bf16.gmra.mxu0 %v1481
    %v10828 = vpop.f32.mrf.mxu0
    %v10829 = vadd.f32 %v10816, %v10828
    %v10830 = vpop.f32.mrf.mxu0
    %10831 = vdwg.mxu0
    %10832 = vmatpush.bf16.msra.mxu0 %v8562
    %10833 = vmatpush.bf16.msra.mxu0 %v8546
    %10834 = vmatpush.bf16.msra.mxu0 %v8530
    %10835 = vmatpush.bf16.msra.mxu0 %v8514
    %10836 = vmatpush.bf16.msra.mxu0 %v8498
    %10837 = vmatpush.bf16.msra.mxu0 %v8482
    %10838 = vmatpush.bf16.msra.mxu0 %v8466
    %10839 = vmatpush.bf16.msra.mxu0 %v8450
    %10840 = vmatmul.bf16.gmra.mxu0 %v1482
    %v10841 = vpop.f32.mrf.mxu0
    %v10842 = vadd.f32 %v10829, %v10841
    %v10843 = vpop.f32.mrf.mxu0
    %10844 = vdwg.mxu0
    %10845 = vmatpush.bf16.msra.mxu0 %v8690
    %10846 = vmatpush.bf16.msra.mxu0 %v8674
    %10847 = vmatpush.bf16.msra.mxu0 %v8658
    %10848 = vmatpush.bf16.msra.mxu0 %v8642
    %10849 = vmatpush.bf16.msra.mxu0 %v8626
    %10850 = vmatpush.bf16.msra.mxu0 %v8610
    %10851 = vmatpush.bf16.msra.mxu0 %v8594
    %10852 = vmatpush.bf16.msra.mxu0 %v8578
    %10853 = vmatmul.bf16.gmra.mxu0 %v1483
    %v10854 = vpop.f32.mrf.mxu0
    %v10855 = vadd.f32 %v10842, %v10854
    %v10856 = vpop.f32.mrf.mxu0
    %10857 = vdwg.mxu0
    %10858 = vmatpush.bf16.msra.mxu0 %v8818
    %10859 = vmatpush.bf16.msra.mxu0 %v8802
    %10860 = vmatpush.bf16.msra.mxu0 %v8786
    %10861 = vmatpush.bf16.msra.mxu0 %v8770
    %10862 = vmatpush.bf16.msra.mxu0 %v8754
    %10863 = vmatpush.bf16.msra.mxu0 %v8738
    %10864 = vmatpush.bf16.msra.mxu0 %v8722
    %10865 = vmatpush.bf16.msra.mxu0 %v8706
    %10866 = vmatmul.bf16.gmra.mxu0 %v1494
    %v10867 = vpop.f32.mrf.mxu0
    %v10868 = vadd.f32 %v10855, %v10867
    %v10869 = vpop.f32.mrf.mxu0
    %10870 = vdwg.mxu0
    %10871 = vmatpush.bf16.msra.mxu0 %v8946
    %10872 = vmatpush.bf16.msra.mxu0 %v8930
    %10873 = vmatpush.bf16.msra.mxu0 %v8914
    %10874 = vmatpush.bf16.msra.mxu0 %v8898
    %10875 = vmatpush.bf16.msra.mxu0 %v8882
    %10876 = vmatpush.bf16.msra.mxu0 %v8866
    %10877 = vmatpush.bf16.msra.mxu0 %v8850
    %10878 = vmatpush.bf16.msra.mxu0 %v8834
    %10879 = vmatmul.bf16.gmra.mxu0 %v1495
    %v10880 = vpop.f32.mrf.mxu0
    %v10881 = vadd.f32 %v10868, %v10880
    %v10882 = vpop.f32.mrf.mxu0
    %10883 = vdwg.mxu0
    %10884 = vmatpush.bf16.msra.mxu0 %v9074
    %10885 = vmatpush.bf16.msra.mxu0 %v9058
    %10886 = vmatpush.bf16.msra.mxu0 %v9042
    %10887 = vmatpush.bf16.msra.mxu0 %v9026
    %10888 = vmatpush.bf16.msra.mxu0 %v9010
    %10889 = vmatpush.bf16.msra.mxu0 %v8994
    %10890 = vmatpush.bf16.msra.mxu0 %v8978
    %10891 = vmatpush.bf16.msra.mxu0 %v8962
    %10892 = vmatmul.bf16.gmra.mxu0 %v1496
    %v10893 = vpop.f32.mrf.mxu0
    %v10894 = vadd.f32 %v10881, %v10893
    %v10895 = vpop.f32.mrf.mxu0
    %10896 = vdwg.mxu0
    %10897 = vmatpush.bf16.msra.mxu0 %v9202
    %10898 = vmatpush.bf16.msra.mxu0 %v9186
    %10899 = vmatpush.bf16.msra.mxu0 %v9170
    %10900 = vmatpush.bf16.msra.mxu0 %v9154
    %10901 = vmatpush.bf16.msra.mxu0 %v9138
    %10902 = vmatpush.bf16.msra.mxu0 %v9122
    %10903 = vmatpush.bf16.msra.mxu0 %v9106
    %10904 = vmatpush.bf16.msra.mxu0 %v9090
    %10905 = vmatmul.bf16.gmra.mxu0 %v1497
    %v10906 = vpop.f32.mrf.mxu0
    %v10907 = vadd.f32 %v10894, %v10906
    %v10908 = vpop.f32.mrf.mxu0
    %10909 = vdwg.mxu0
    %10910 = vmatpush.bf16.msra.mxu0 %v7795
    %10911 = vmatpush.bf16.msra.mxu0 %v7779
    %10912 = vmatpush.bf16.msra.mxu0 %v7763
    %10913 = vmatpush.bf16.msra.mxu0 %v7747
    %10914 = vmatpush.bf16.msra.mxu0 %v7731
    %10915 = vmatpush.bf16.msra.mxu0 %v7715
    %10916 = vmatpush.bf16.msra.mxu0 %v7699
    %10917 = vmatpush.bf16.msra.mxu0 %v7683
    %10918 = vmatmul.bf16.gmra.mxu0 %v1466
    %v10919 = vpop.f32.mrf.mxu0
    %v10920 = vadd.f32 %v3043, %v10919
    %v10921 = vpop.f32.mrf.mxu0
    %10922 = vdwg.mxu0
    %10923 = vmatpush.bf16.msra.mxu0 %v7923
    %10924 = vmatpush.bf16.msra.mxu0 %v7907
    %10925 = vmatpush.bf16.msra.mxu0 %v7891
    %10926 = vmatpush.bf16.msra.mxu0 %v7875
    %10927 = vmatpush.bf16.msra.mxu0 %v7859
    %10928 = vmatpush.bf16.msra.mxu0 %v7843
    %10929 = vmatpush.bf16.msra.mxu0 %v7827
    %10930 = vmatpush.bf16.msra.mxu0 %v7811
    %10931 = vmatmul.bf16.gmra.mxu0 %v1467
    %v10932 = vpop.f32.mrf.mxu0
    %v10933 = vadd.f32 %v10920, %v10932
    %v10934 = vpop.f32.mrf.mxu0
    %10935 = vdwg.mxu0
    %10936 = vmatpush.bf16.msra.mxu0 %v8051
    %10937 = vmatpush.bf16.msra.mxu0 %v8035
    %10938 = vmatpush.bf16.msra.mxu0 %v8019
    %10939 = vmatpush.bf16.msra.mxu0 %v8003
    %10940 = vmatpush.bf16.msra.mxu0 %v7987
    %10941 = vmatpush.bf16.msra.mxu0 %v7971
    %10942 = vmatpush.bf16.msra.mxu0 %v7955
    %10943 = vmatpush.bf16.msra.mxu0 %v7939
    %10944 = vmatmul.bf16.gmra.mxu0 %v1468
    %v10945 = vpop.f32.mrf.mxu0
    %v10946 = vadd.f32 %v10933, %v10945
    %v10947 = vpop.f32.mrf.mxu0
    %10948 = vdwg.mxu0
    %10949 = vmatpush.bf16.msra.mxu0 %v8179
    %10950 = vmatpush.bf16.msra.mxu0 %v8163
    %10951 = vmatpush.bf16.msra.mxu0 %v8147
    %10952 = vmatpush.bf16.msra.mxu0 %v8131
    %10953 = vmatpush.bf16.msra.mxu0 %v8115
    %10954 = vmatpush.bf16.msra.mxu0 %v8099
    %10955 = vmatpush.bf16.msra.mxu0 %v8083
    %10956 = vmatpush.bf16.msra.mxu0 %v8067
    %10957 = vmatmul.bf16.gmra.mxu0 %v1469
    %v10958 = vpop.f32.mrf.mxu0
    %v10959 = vadd.f32 %v10946, %v10958
    %v10960 = vpop.f32.mrf.mxu0
    %10961 = vdwg.mxu0
    %10962 = vmatpush.bf16.msra.mxu0 %v8307
    %10963 = vmatpush.bf16.msra.mxu0 %v8291
    %10964 = vmatpush.bf16.msra.mxu0 %v8275
    %10965 = vmatpush.bf16.msra.mxu0 %v8259
    %10966 = vmatpush.bf16.msra.mxu0 %v8243
    %10967 = vmatpush.bf16.msra.mxu0 %v8227
    %10968 = vmatpush.bf16.msra.mxu0 %v8211
    %10969 = vmatpush.bf16.msra.mxu0 %v8195
    %10970 = vmatmul.bf16.gmra.mxu0 %v1480
    %v10971 = vpop.f32.mrf.mxu0
    %v10972 = vadd.f32 %v10959, %v10971
    %v10973 = vpop.f32.mrf.mxu0
    %10974 = vdwg.mxu0
    %10975 = vmatpush.bf16.msra.mxu0 %v8435
    %10976 = vmatpush.bf16.msra.mxu0 %v8419
    %10977 = vmatpush.bf16.msra.mxu0 %v8403
    %10978 = vmatpush.bf16.msra.mxu0 %v8387
    %10979 = vmatpush.bf16.msra.mxu0 %v8371
    %10980 = vmatpush.bf16.msra.mxu0 %v8355
    %10981 = vmatpush.bf16.msra.mxu0 %v8339
    %10982 = vmatpush.bf16.msra.mxu0 %v8323
    %10983 = vmatmul.bf16.gmra.mxu0 %v1481
    %v10984 = vpop.f32.mrf.mxu0
    %v10985 = vadd.f32 %v10972, %v10984
    %v10986 = vpop.f32.mrf.mxu0
    %10987 = vdwg.mxu0
    %10988 = vmatpush.bf16.msra.mxu0 %v8563
    %10989 = vmatpush.bf16.msra.mxu0 %v8547
    %10990 = vmatpush.bf16.msra.mxu0 %v8531
    %10991 = vmatpush.bf16.msra.mxu0 %v8515
    %10992 = vmatpush.bf16.msra.mxu0 %v8499
    %10993 = vmatpush.bf16.msra.mxu0 %v8483
    %10994 = vmatpush.bf16.msra.mxu0 %v8467
    %10995 = vmatpush.bf16.msra.mxu0 %v8451
    %10996 = vmatmul.bf16.gmra.mxu0 %v1482
    %v10997 = vpop.f32.mrf.mxu0
    %v10998 = vadd.f32 %v10985, %v10997
    %v10999 = vpop.f32.mrf.mxu0
    %11000 = vdwg.mxu0
    %11001 = vmatpush.bf16.msra.mxu0 %v8691
    %11002 = vmatpush.bf16.msra.mxu0 %v8675
    %11003 = vmatpush.bf16.msra.mxu0 %v8659
    %11004 = vmatpush.bf16.msra.mxu0 %v8643
    %11005 = vmatpush.bf16.msra.mxu0 %v8627
    %11006 = vmatpush.bf16.msra.mxu0 %v8611
    %11007 = vmatpush.bf16.msra.mxu0 %v8595
    %11008 = vmatpush.bf16.msra.mxu0 %v8579
    %11009 = vmatmul.bf16.gmra.mxu0 %v1483
    %v11010 = vpop.f32.mrf.mxu0
    %v11011 = vadd.f32 %v10998, %v11010
    %v11012 = vpop.f32.mrf.mxu0
    %11013 = vdwg.mxu0
    %11014 = vmatpush.bf16.msra.mxu0 %v8819
    %11015 = vmatpush.bf16.msra.mxu0 %v8803
    %11016 = vmatpush.bf16.msra.mxu0 %v8787
    %11017 = vmatpush.bf16.msra.mxu0 %v8771
    %11018 = vmatpush.bf16.msra.mxu0 %v8755
    %11019 = vmatpush.bf16.msra.mxu0 %v8739
    %11020 = vmatpush.bf16.msra.mxu0 %v8723
    %11021 = vmatpush.bf16.msra.mxu0 %v8707
    %11022 = vmatmul.bf16.gmra.mxu0 %v1494
    %v11023 = vpop.f32.mrf.mxu0
    %v11024 = vadd.f32 %v11011, %v11023
    %v11025 = vpop.f32.mrf.mxu0
    %11026 = vdwg.mxu0
    %11027 = vmatpush.bf16.msra.mxu0 %v8947
    %11028 = vmatpush.bf16.msra.mxu0 %v8931
    %11029 = vmatpush.bf16.msra.mxu0 %v8915
    %11030 = vmatpush.bf16.msra.mxu0 %v8899
    %11031 = vmatpush.bf16.msra.mxu0 %v8883
    %11032 = vmatpush.bf16.msra.mxu0 %v8867
    %11033 = vmatpush.bf16.msra.mxu0 %v8851
    %11034 = vmatpush.bf16.msra.mxu0 %v8835
    %11035 = vmatmul.bf16.gmra.mxu0 %v1495
    %v11036 = vpop.f32.mrf.mxu0
    %v11037 = vadd.f32 %v11024, %v11036
    %v11038 = vpop.f32.mrf.mxu0
    %11039 = vdwg.mxu0
    %11040 = vmatpush.bf16.msra.mxu0 %v9075
    %11041 = vmatpush.bf16.msra.mxu0 %v9059
    %11042 = vmatpush.bf16.msra.mxu0 %v9043
    %11043 = vmatpush.bf16.msra.mxu0 %v9027
    %11044 = vmatpush.bf16.msra.mxu0 %v9011
    %11045 = vmatpush.bf16.msra.mxu0 %v8995
    %11046 = vmatpush.bf16.msra.mxu0 %v8979
    %11047 = vmatpush.bf16.msra.mxu0 %v8963
    %11048 = vmatmul.bf16.gmra.mxu0 %v1496
    %v11049 = vpop.f32.mrf.mxu0
    %v11050 = vadd.f32 %v11037, %v11049
    %v11051 = vpop.f32.mrf.mxu0
    %11052 = vdwg.mxu0
    %11053 = vmatpush.bf16.msra.mxu0 %v9203
    %11054 = vmatpush.bf16.msra.mxu0 %v9187
    %11055 = vmatpush.bf16.msra.mxu0 %v9171
    %11056 = vmatpush.bf16.msra.mxu0 %v9155
    %11057 = vmatpush.bf16.msra.mxu0 %v9139
    %11058 = vmatpush.bf16.msra.mxu0 %v9123
    %11059 = vmatpush.bf16.msra.mxu0 %v9107
    %11060 = vmatpush.bf16.msra.mxu0 %v9091
    %11061 = vmatmul.bf16.gmra.mxu0 %v1497
    %v11062 = vpop.f32.mrf.mxu0
    %v11063 = vadd.f32 %v11050, %v11062
    %v11064 = vpop.f32.mrf.mxu0
    %11065 = vdwg.mxu0
    %11066 = vmatpush.bf16.msra.mxu0 %v7796
    %11067 = vmatpush.bf16.msra.mxu0 %v7780
    %11068 = vmatpush.bf16.msra.mxu0 %v7764
    %11069 = vmatpush.bf16.msra.mxu0 %v7748
    %11070 = vmatpush.bf16.msra.mxu0 %v7732
    %11071 = vmatpush.bf16.msra.mxu0 %v7716
    %11072 = vmatpush.bf16.msra.mxu0 %v7700
    %11073 = vmatpush.bf16.msra.mxu0 %v7684
    %11074 = vmatmul.bf16.gmra.mxu0 %v1466
    %v11075 = vpop.f32.mrf.mxu0
    %v11076 = vadd.f32 %v3044, %v11075
    %v11077 = vpop.f32.mrf.mxu0
    %11078 = vdwg.mxu0
    %11079 = vmatpush.bf16.msra.mxu0 %v7924
    %11080 = vmatpush.bf16.msra.mxu0 %v7908
    %11081 = vmatpush.bf16.msra.mxu0 %v7892
    %11082 = vmatpush.bf16.msra.mxu0 %v7876
    %11083 = vmatpush.bf16.msra.mxu0 %v7860
    %11084 = vmatpush.bf16.msra.mxu0 %v7844
    %11085 = vmatpush.bf16.msra.mxu0 %v7828
    %11086 = vmatpush.bf16.msra.mxu0 %v7812
    %11087 = vmatmul.bf16.gmra.mxu0 %v1467
    %v11088 = vpop.f32.mrf.mxu0
    %v11089 = vadd.f32 %v11076, %v11088
    %v11090 = vpop.f32.mrf.mxu0
    %11091 = vdwg.mxu0
    %11092 = vmatpush.bf16.msra.mxu0 %v8052
    %11093 = vmatpush.bf16.msra.mxu0 %v8036
    %11094 = vmatpush.bf16.msra.mxu0 %v8020
    %11095 = vmatpush.bf16.msra.mxu0 %v8004
    %11096 = vmatpush.bf16.msra.mxu0 %v7988
    %11097 = vmatpush.bf16.msra.mxu0 %v7972
    %11098 = vmatpush.bf16.msra.mxu0 %v7956
    %11099 = vmatpush.bf16.msra.mxu0 %v7940
    %11100 = vmatmul.bf16.gmra.mxu0 %v1468
    %v11101 = vpop.f32.mrf.mxu0
    %v11102 = vadd.f32 %v11089, %v11101
    %v11103 = vpop.f32.mrf.mxu0
    %11104 = vdwg.mxu0
    %11105 = vmatpush.bf16.msra.mxu0 %v8180
    %11106 = vmatpush.bf16.msra.mxu0 %v8164
    %11107 = vmatpush.bf16.msra.mxu0 %v8148
    %11108 = vmatpush.bf16.msra.mxu0 %v8132
    %11109 = vmatpush.bf16.msra.mxu0 %v8116
    %11110 = vmatpush.bf16.msra.mxu0 %v8100
    %11111 = vmatpush.bf16.msra.mxu0 %v8084
    %11112 = vmatpush.bf16.msra.mxu0 %v8068
    %11113 = vmatmul.bf16.gmra.mxu0 %v1469
    %v11114 = vpop.f32.mrf.mxu0
    %v11115 = vadd.f32 %v11102, %v11114
    %v11116 = vpop.f32.mrf.mxu0
    %11117 = vdwg.mxu0
    %11118 = vmatpush.bf16.msra.mxu0 %v8308
    %11119 = vmatpush.bf16.msra.mxu0 %v8292
    %11120 = vmatpush.bf16.msra.mxu0 %v8276
    %11121 = vmatpush.bf16.msra.mxu0 %v8260
    %11122 = vmatpush.bf16.msra.mxu0 %v8244
    %11123 = vmatpush.bf16.msra.mxu0 %v8228
    %11124 = vmatpush.bf16.msra.mxu0 %v8212
    %11125 = vmatpush.bf16.msra.mxu0 %v8196
    %11126 = vmatmul.bf16.gmra.mxu0 %v1480
    %v11127 = vpop.f32.mrf.mxu0
    %v11128 = vadd.f32 %v11115, %v11127
    %v11129 = vpop.f32.mrf.mxu0
    %11130 = vdwg.mxu0
    %11131 = vmatpush.bf16.msra.mxu0 %v8436
    %11132 = vmatpush.bf16.msra.mxu0 %v8420
    %11133 = vmatpush.bf16.msra.mxu0 %v8404
    %11134 = vmatpush.bf16.msra.mxu0 %v8388
    %11135 = vmatpush.bf16.msra.mxu0 %v8372
    %11136 = vmatpush.bf16.msra.mxu0 %v8356
    %11137 = vmatpush.bf16.msra.mxu0 %v8340
    %11138 = vmatpush.bf16.msra.mxu0 %v8324
    %11139 = vmatmul.bf16.gmra.mxu0 %v1481
    %v11140 = vpop.f32.mrf.mxu0
    %v11141 = vadd.f32 %v11128, %v11140
    %v11142 = vpop.f32.mrf.mxu0
    %11143 = vdwg.mxu0
    %11144 = vmatpush.bf16.msra.mxu0 %v8564
    %11145 = vmatpush.bf16.msra.mxu0 %v8548
    %11146 = vmatpush.bf16.msra.mxu0 %v8532
    %11147 = vmatpush.bf16.msra.mxu0 %v8516
    %11148 = vmatpush.bf16.msra.mxu0 %v8500
    %11149 = vmatpush.bf16.msra.mxu0 %v8484
    %11150 = vmatpush.bf16.msra.mxu0 %v8468
    %11151 = vmatpush.bf16.msra.mxu0 %v8452
    %11152 = vmatmul.bf16.gmra.mxu0 %v1482
    %v11153 = vpop.f32.mrf.mxu0
    %v11154 = vadd.f32 %v11141, %v11153
    %v11155 = vpop.f32.mrf.mxu0
    %11156 = vdwg.mxu0
    %11157 = vmatpush.bf16.msra.mxu0 %v8692
    %11158 = vmatpush.bf16.msra.mxu0 %v8676
    %11159 = vmatpush.bf16.msra.mxu0 %v8660
    %11160 = vmatpush.bf16.msra.mxu0 %v8644
    %11161 = vmatpush.bf16.msra.mxu0 %v8628
    %11162 = vmatpush.bf16.msra.mxu0 %v8612
    %11163 = vmatpush.bf16.msra.mxu0 %v8596
    %11164 = vmatpush.bf16.msra.mxu0 %v8580
    %11165 = vmatmul.bf16.gmra.mxu0 %v1483
    %v11166 = vpop.f32.mrf.mxu0
    %v11167 = vadd.f32 %v11154, %v11166
    %v11168 = vpop.f32.mrf.mxu0
    %11169 = vdwg.mxu0
    %11170 = vmatpush.bf16.msra.mxu0 %v8820
    %11171 = vmatpush.bf16.msra.mxu0 %v8804
    %11172 = vmatpush.bf16.msra.mxu0 %v8788
    %11173 = vmatpush.bf16.msra.mxu0 %v8772
    %11174 = vmatpush.bf16.msra.mxu0 %v8756
    %11175 = vmatpush.bf16.msra.mxu0 %v8740
    %11176 = vmatpush.bf16.msra.mxu0 %v8724
    %11177 = vmatpush.bf16.msra.mxu0 %v8708
    %11178 = vmatmul.bf16.gmra.mxu0 %v1494
    %v11179 = vpop.f32.mrf.mxu0
    %v11180 = vadd.f32 %v11167, %v11179
    %v11181 = vpop.f32.mrf.mxu0
    %11182 = vdwg.mxu0
    %11183 = vmatpush.bf16.msra.mxu0 %v8948
    %11184 = vmatpush.bf16.msra.mxu0 %v8932
    %11185 = vmatpush.bf16.msra.mxu0 %v8916
    %11186 = vmatpush.bf16.msra.mxu0 %v8900
    %11187 = vmatpush.bf16.msra.mxu0 %v8884
    %11188 = vmatpush.bf16.msra.mxu0 %v8868
    %11189 = vmatpush.bf16.msra.mxu0 %v8852
    %11190 = vmatpush.bf16.msra.mxu0 %v8836
    %11191 = vmatmul.bf16.gmra.mxu0 %v1495
    %v11192 = vpop.f32.mrf.mxu0
    %v11193 = vadd.f32 %v11180, %v11192
    %v11194 = vpop.f32.mrf.mxu0
    %11195 = vdwg.mxu0
    %11196 = vmatpush.bf16.msra.mxu0 %v9076
    %11197 = vmatpush.bf16.msra.mxu0 %v9060
    %11198 = vmatpush.bf16.msra.mxu0 %v9044
    %11199 = vmatpush.bf16.msra.mxu0 %v9028
    %11200 = vmatpush.bf16.msra.mxu0 %v9012
    %11201 = vmatpush.bf16.msra.mxu0 %v8996
    %11202 = vmatpush.bf16.msra.mxu0 %v8980
    %11203 = vmatpush.bf16.msra.mxu0 %v8964
    %11204 = vmatmul.bf16.gmra.mxu0 %v1496
    %v11205 = vpop.f32.mrf.mxu0
    %v11206 = vadd.f32 %v11193, %v11205
    %v11207 = vpop.f32.mrf.mxu0
    %11208 = vdwg.mxu0
    %11209 = vmatpush.bf16.msra.mxu0 %v9204
    %11210 = vmatpush.bf16.msra.mxu0 %v9188
    %11211 = vmatpush.bf16.msra.mxu0 %v9172
    %11212 = vmatpush.bf16.msra.mxu0 %v9156
    %11213 = vmatpush.bf16.msra.mxu0 %v9140
    %11214 = vmatpush.bf16.msra.mxu0 %v9124
    %11215 = vmatpush.bf16.msra.mxu0 %v9108
    %11216 = vmatpush.bf16.msra.mxu0 %v9092
    %11217 = vmatmul.bf16.gmra.mxu0 %v1497
    %v11218 = vpop.f32.mrf.mxu0
    %v11219 = vadd.f32 %v11206, %v11218
    %v11220 = vpop.f32.mrf.mxu0
    %11221 = vdwg.mxu0
    %11222 = vmatpush.bf16.msra.mxu0 %v7797
    %11223 = vmatpush.bf16.msra.mxu0 %v7781
    %11224 = vmatpush.bf16.msra.mxu0 %v7765
    %11225 = vmatpush.bf16.msra.mxu0 %v7749
    %11226 = vmatpush.bf16.msra.mxu0 %v7733
    %11227 = vmatpush.bf16.msra.mxu0 %v7717
    %11228 = vmatpush.bf16.msra.mxu0 %v7701
    %11229 = vmatpush.bf16.msra.mxu0 %v7685
    %11230 = vmatmul.bf16.gmra.mxu0 %v1466
    %v11231 = vpop.f32.mrf.mxu0
    %v11232 = vadd.f32 %v3045, %v11231
    %v11233 = vpop.f32.mrf.mxu0
    %11234 = vdwg.mxu0
    %11235 = vmatpush.bf16.msra.mxu0 %v7925
    %11236 = vmatpush.bf16.msra.mxu0 %v7909
    %11237 = vmatpush.bf16.msra.mxu0 %v7893
    %11238 = vmatpush.bf16.msra.mxu0 %v7877
    %11239 = vmatpush.bf16.msra.mxu0 %v7861
    %11240 = vmatpush.bf16.msra.mxu0 %v7845
    %11241 = vmatpush.bf16.msra.mxu0 %v7829
    %11242 = vmatpush.bf16.msra.mxu0 %v7813
    %11243 = vmatmul.bf16.gmra.mxu0 %v1467
    %v11244 = vpop.f32.mrf.mxu0
    %v11245 = vadd.f32 %v11232, %v11244
    %v11246 = vpop.f32.mrf.mxu0
    %11247 = vdwg.mxu0
    %11248 = vmatpush.bf16.msra.mxu0 %v8053
    %11249 = vmatpush.bf16.msra.mxu0 %v8037
    %11250 = vmatpush.bf16.msra.mxu0 %v8021
    %11251 = vmatpush.bf16.msra.mxu0 %v8005
    %11252 = vmatpush.bf16.msra.mxu0 %v7989
    %11253 = vmatpush.bf16.msra.mxu0 %v7973
    %11254 = vmatpush.bf16.msra.mxu0 %v7957
    %11255 = vmatpush.bf16.msra.mxu0 %v7941
    %11256 = vmatmul.bf16.gmra.mxu0 %v1468
    %v11257 = vpop.f32.mrf.mxu0
    %v11258 = vadd.f32 %v11245, %v11257
    %v11259 = vpop.f32.mrf.mxu0
    %11260 = vdwg.mxu0
    %11261 = vmatpush.bf16.msra.mxu0 %v8181
    %11262 = vmatpush.bf16.msra.mxu0 %v8165
    %11263 = vmatpush.bf16.msra.mxu0 %v8149
    %11264 = vmatpush.bf16.msra.mxu0 %v8133
    %11265 = vmatpush.bf16.msra.mxu0 %v8117
    %11266 = vmatpush.bf16.msra.mxu0 %v8101
    %11267 = vmatpush.bf16.msra.mxu0 %v8085
    %11268 = vmatpush.bf16.msra.mxu0 %v8069
    %11269 = vmatmul.bf16.gmra.mxu0 %v1469
    %v11270 = vpop.f32.mrf.mxu0
    %v11271 = vadd.f32 %v11258, %v11270
    %v11272 = vpop.f32.mrf.mxu0
    %11273 = vdwg.mxu0
    %11274 = vmatpush.bf16.msra.mxu0 %v8309
    %11275 = vmatpush.bf16.msra.mxu0 %v8293
    %11276 = vmatpush.bf16.msra.mxu0 %v8277
    %11277 = vmatpush.bf16.msra.mxu0 %v8261
    %11278 = vmatpush.bf16.msra.mxu0 %v8245
    %11279 = vmatpush.bf16.msra.mxu0 %v8229
    %11280 = vmatpush.bf16.msra.mxu0 %v8213
    %11281 = vmatpush.bf16.msra.mxu0 %v8197
    %11282 = vmatmul.bf16.gmra.mxu0 %v1480
    %v11283 = vpop.f32.mrf.mxu0
    %v11284 = vadd.f32 %v11271, %v11283
    %v11285 = vpop.f32.mrf.mxu0
    %11286 = vdwg.mxu0
    %11287 = vmatpush.bf16.msra.mxu0 %v8437
    %11288 = vmatpush.bf16.msra.mxu0 %v8421
    %11289 = vmatpush.bf16.msra.mxu0 %v8405
    %11290 = vmatpush.bf16.msra.mxu0 %v8389
    %11291 = vmatpush.bf16.msra.mxu0 %v8373
    %11292 = vmatpush.bf16.msra.mxu0 %v8357
    %11293 = vmatpush.bf16.msra.mxu0 %v8341
    %11294 = vmatpush.bf16.msra.mxu0 %v8325
    %11295 = vmatmul.bf16.gmra.mxu0 %v1481
    %v11296 = vpop.f32.mrf.mxu0
    %v11297 = vadd.f32 %v11284, %v11296
    %v11298 = vpop.f32.mrf.mxu0
    %11299 = vdwg.mxu0
    %11300 = vmatpush.bf16.msra.mxu0 %v8565
    %11301 = vmatpush.bf16.msra.mxu0 %v8549
    %11302 = vmatpush.bf16.msra.mxu0 %v8533
    %11303 = vmatpush.bf16.msra.mxu0 %v8517
    %11304 = vmatpush.bf16.msra.mxu0 %v8501
    %11305 = vmatpush.bf16.msra.mxu0 %v8485
    %11306 = vmatpush.bf16.msra.mxu0 %v8469
    %11307 = vmatpush.bf16.msra.mxu0 %v8453
    %11308 = vmatmul.bf16.gmra.mxu0 %v1482
    %v11309 = vpop.f32.mrf.mxu0
    %v11310 = vadd.f32 %v11297, %v11309
    %v11311 = vpop.f32.mrf.mxu0
    %11312 = vdwg.mxu0
    %11313 = vmatpush.bf16.msra.mxu0 %v8693
    %11314 = vmatpush.bf16.msra.mxu0 %v8677
    %11315 = vmatpush.bf16.msra.mxu0 %v8661
    %11316 = vmatpush.bf16.msra.mxu0 %v8645
    %11317 = vmatpush.bf16.msra.mxu0 %v8629
    %11318 = vmatpush.bf16.msra.mxu0 %v8613
    %11319 = vmatpush.bf16.msra.mxu0 %v8597
    %11320 = vmatpush.bf16.msra.mxu0 %v8581
    %11321 = vmatmul.bf16.gmra.mxu0 %v1483
    %v11322 = vpop.f32.mrf.mxu0
    %v11323 = vadd.f32 %v11310, %v11322
    %v11324 = vpop.f32.mrf.mxu0
    %11325 = vdwg.mxu0
    %11326 = vmatpush.bf16.msra.mxu0 %v8821
    %11327 = vmatpush.bf16.msra.mxu0 %v8805
    %11328 = vmatpush.bf16.msra.mxu0 %v8789
    %11329 = vmatpush.bf16.msra.mxu0 %v8773
    %11330 = vmatpush.bf16.msra.mxu0 %v8757
    %11331 = vmatpush.bf16.msra.mxu0 %v8741
    %11332 = vmatpush.bf16.msra.mxu0 %v8725
    %11333 = vmatpush.bf16.msra.mxu0 %v8709
    %11334 = vmatmul.bf16.gmra.mxu0 %v1494
    %v11335 = vpop.f32.mrf.mxu0
    %v11336 = vadd.f32 %v11323, %v11335
    %v11337 = vpop.f32.mrf.mxu0
    %11338 = vdwg.mxu0
    %11339 = vmatpush.bf16.msra.mxu0 %v8949
    %11340 = vmatpush.bf16.msra.mxu0 %v8933
    %11341 = vmatpush.bf16.msra.mxu0 %v8917
    %11342 = vmatpush.bf16.msra.mxu0 %v8901
    %11343 = vmatpush.bf16.msra.mxu0 %v8885
    %11344 = vmatpush.bf16.msra.mxu0 %v8869
    %11345 = vmatpush.bf16.msra.mxu0 %v8853
    %11346 = vmatpush.bf16.msra.mxu0 %v8837
    %11347 = vmatmul.bf16.gmra.mxu0 %v1495
    %v11348 = vpop.f32.mrf.mxu0
    %v11349 = vadd.f32 %v11336, %v11348
    %v11350 = vpop.f32.mrf.mxu0
    %11351 = vdwg.mxu0
    %11352 = vmatpush.bf16.msra.mxu0 %v9077
    %11353 = vmatpush.bf16.msra.mxu0 %v9061
    %11354 = vmatpush.bf16.msra.mxu0 %v9045
    %11355 = vmatpush.bf16.msra.mxu0 %v9029
    %11356 = vmatpush.bf16.msra.mxu0 %v9013
    %11357 = vmatpush.bf16.msra.mxu0 %v8997
    %11358 = vmatpush.bf16.msra.mxu0 %v8981
    %11359 = vmatpush.bf16.msra.mxu0 %v8965
    %11360 = vmatmul.bf16.gmra.mxu0 %v1496
    %v11361 = vpop.f32.mrf.mxu0
    %v11362 = vadd.f32 %v11349, %v11361
    %v11363 = vpop.f32.mrf.mxu0
    %11364 = vdwg.mxu0
    %11365 = vmatpush.bf16.msra.mxu0 %v9205
    %11366 = vmatpush.bf16.msra.mxu0 %v9189
    %11367 = vmatpush.bf16.msra.mxu0 %v9173
    %11368 = vmatpush.bf16.msra.mxu0 %v9157
    %11369 = vmatpush.bf16.msra.mxu0 %v9141
    %11370 = vmatpush.bf16.msra.mxu0 %v9125
    %11371 = vmatpush.bf16.msra.mxu0 %v9109
    %11372 = vmatpush.bf16.msra.mxu0 %v9093
    %11373 = vmatmul.bf16.gmra.mxu0 %v1497
    %v11374 = vpop.f32.mrf.mxu0
    %v11375 = vadd.f32 %v11362, %v11374
    %v11376 = vpop.f32.mrf.mxu0
    %11377 = vdwg.mxu0
    %11378 = vmatpush.bf16.msra.mxu0 %v7798
    %11379 = vmatpush.bf16.msra.mxu0 %v7782
    %11380 = vmatpush.bf16.msra.mxu0 %v7766
    %11381 = vmatpush.bf16.msra.mxu0 %v7750
    %11382 = vmatpush.bf16.msra.mxu0 %v7734
    %11383 = vmatpush.bf16.msra.mxu0 %v7718
    %11384 = vmatpush.bf16.msra.mxu0 %v7702
    %11385 = vmatpush.bf16.msra.mxu0 %v7686
    %11386 = vmatmul.bf16.gmra.mxu0 %v1466
    %v11387 = vpop.f32.mrf.mxu0
    %v11388 = vadd.f32 %v3046, %v11387
    %v11389 = vpop.f32.mrf.mxu0
    %11390 = vdwg.mxu0
    %11391 = vmatpush.bf16.msra.mxu0 %v7926
    %11392 = vmatpush.bf16.msra.mxu0 %v7910
    %11393 = vmatpush.bf16.msra.mxu0 %v7894
    %11394 = vmatpush.bf16.msra.mxu0 %v7878
    %11395 = vmatpush.bf16.msra.mxu0 %v7862
    %11396 = vmatpush.bf16.msra.mxu0 %v7846
    %11397 = vmatpush.bf16.msra.mxu0 %v7830
    %11398 = vmatpush.bf16.msra.mxu0 %v7814
    %11399 = vmatmul.bf16.gmra.mxu0 %v1467
    %v11400 = vpop.f32.mrf.mxu0
    %v11401 = vadd.f32 %v11388, %v11400
    %v11402 = vpop.f32.mrf.mxu0
    %11403 = vdwg.mxu0
    %11404 = vmatpush.bf16.msra.mxu0 %v8054
    %11405 = vmatpush.bf16.msra.mxu0 %v8038
    %11406 = vmatpush.bf16.msra.mxu0 %v8022
    %11407 = vmatpush.bf16.msra.mxu0 %v8006
    %11408 = vmatpush.bf16.msra.mxu0 %v7990
    %11409 = vmatpush.bf16.msra.mxu0 %v7974
    %11410 = vmatpush.bf16.msra.mxu0 %v7958
    %11411 = vmatpush.bf16.msra.mxu0 %v7942
    %11412 = vmatmul.bf16.gmra.mxu0 %v1468
    %v11413 = vpop.f32.mrf.mxu0
    %v11414 = vadd.f32 %v11401, %v11413
    %v11415 = vpop.f32.mrf.mxu0
    %11416 = vdwg.mxu0
    %11417 = vmatpush.bf16.msra.mxu0 %v8182
    %11418 = vmatpush.bf16.msra.mxu0 %v8166
    %11419 = vmatpush.bf16.msra.mxu0 %v8150
    %11420 = vmatpush.bf16.msra.mxu0 %v8134
    %11421 = vmatpush.bf16.msra.mxu0 %v8118
    %11422 = vmatpush.bf16.msra.mxu0 %v8102
    %11423 = vmatpush.bf16.msra.mxu0 %v8086
    %11424 = vmatpush.bf16.msra.mxu0 %v8070
    %11425 = vmatmul.bf16.gmra.mxu0 %v1469
    %v11426 = vpop.f32.mrf.mxu0
    %v11427 = vadd.f32 %v11414, %v11426
    %v11428 = vpop.f32.mrf.mxu0
    %11429 = vdwg.mxu0
    %11430 = vmatpush.bf16.msra.mxu0 %v8310
    %11431 = vmatpush.bf16.msra.mxu0 %v8294
    %11432 = vmatpush.bf16.msra.mxu0 %v8278
    %11433 = vmatpush.bf16.msra.mxu0 %v8262
    %11434 = vmatpush.bf16.msra.mxu0 %v8246
    %11435 = vmatpush.bf16.msra.mxu0 %v8230
    %11436 = vmatpush.bf16.msra.mxu0 %v8214
    %11437 = vmatpush.bf16.msra.mxu0 %v8198
    %11438 = vmatmul.bf16.gmra.mxu0 %v1480
    %v11439 = vpop.f32.mrf.mxu0
    %v11440 = vadd.f32 %v11427, %v11439
    %v11441 = vpop.f32.mrf.mxu0
    %11442 = vdwg.mxu0
    %11443 = vmatpush.bf16.msra.mxu0 %v8438
    %11444 = vmatpush.bf16.msra.mxu0 %v8422
    %11445 = vmatpush.bf16.msra.mxu0 %v8406
    %11446 = vmatpush.bf16.msra.mxu0 %v8390
    %11447 = vmatpush.bf16.msra.mxu0 %v8374
    %11448 = vmatpush.bf16.msra.mxu0 %v8358
    %11449 = vmatpush.bf16.msra.mxu0 %v8342
    %11450 = vmatpush.bf16.msra.mxu0 %v8326
    %11451 = vmatmul.bf16.gmra.mxu0 %v1481
    %v11452 = vpop.f32.mrf.mxu0
    %v11453 = vadd.f32 %v11440, %v11452
    %v11454 = vpop.f32.mrf.mxu0
    %11455 = vdwg.mxu0
    %11456 = vmatpush.bf16.msra.mxu0 %v8566
    %11457 = vmatpush.bf16.msra.mxu0 %v8550
    %11458 = vmatpush.bf16.msra.mxu0 %v8534
    %11459 = vmatpush.bf16.msra.mxu0 %v8518
    %11460 = vmatpush.bf16.msra.mxu0 %v8502
    %11461 = vmatpush.bf16.msra.mxu0 %v8486
    %11462 = vmatpush.bf16.msra.mxu0 %v8470
    %11463 = vmatpush.bf16.msra.mxu0 %v8454
    %11464 = vmatmul.bf16.gmra.mxu0 %v1482
    %v11465 = vpop.f32.mrf.mxu0
    %v11466 = vadd.f32 %v11453, %v11465
    %v11467 = vpop.f32.mrf.mxu0
    %11468 = vdwg.mxu0
    %11469 = vmatpush.bf16.msra.mxu0 %v8694
    %11470 = vmatpush.bf16.msra.mxu0 %v8678
    %11471 = vmatpush.bf16.msra.mxu0 %v8662
    %11472 = vmatpush.bf16.msra.mxu0 %v8646
    %11473 = vmatpush.bf16.msra.mxu0 %v8630
    %11474 = vmatpush.bf16.msra.mxu0 %v8614
    %11475 = vmatpush.bf16.msra.mxu0 %v8598
    %11476 = vmatpush.bf16.msra.mxu0 %v8582
    %11477 = vmatmul.bf16.gmra.mxu0 %v1483
    %v11478 = vpop.f32.mrf.mxu0
    %v11479 = vadd.f32 %v11466, %v11478
    %v11480 = vpop.f32.mrf.mxu0
    %11481 = vdwg.mxu0
    %11482 = vmatpush.bf16.msra.mxu0 %v8822
    %11483 = vmatpush.bf16.msra.mxu0 %v8806
    %11484 = vmatpush.bf16.msra.mxu0 %v8790
    %11485 = vmatpush.bf16.msra.mxu0 %v8774
    %11486 = vmatpush.bf16.msra.mxu0 %v8758
    %11487 = vmatpush.bf16.msra.mxu0 %v8742
    %11488 = vmatpush.bf16.msra.mxu0 %v8726
    %11489 = vmatpush.bf16.msra.mxu0 %v8710
    %11490 = vmatmul.bf16.gmra.mxu0 %v1494
    %v11491 = vpop.f32.mrf.mxu0
    %v11492 = vadd.f32 %v11479, %v11491
    %v11493 = vpop.f32.mrf.mxu0
    %11494 = vdwg.mxu0
    %11495 = vmatpush.bf16.msra.mxu0 %v8950
    %11496 = vmatpush.bf16.msra.mxu0 %v8934
    %11497 = vmatpush.bf16.msra.mxu0 %v8918
    %11498 = vmatpush.bf16.msra.mxu0 %v8902
    %11499 = vmatpush.bf16.msra.mxu0 %v8886
    %11500 = vmatpush.bf16.msra.mxu0 %v8870
    %11501 = vmatpush.bf16.msra.mxu0 %v8854
    %11502 = vmatpush.bf16.msra.mxu0 %v8838
    %11503 = vmatmul.bf16.gmra.mxu0 %v1495
    %v11504 = vpop.f32.mrf.mxu0
    %v11505 = vadd.f32 %v11492, %v11504
    %v11506 = vpop.f32.mrf.mxu0
    %11507 = vdwg.mxu0
    %11508 = vmatpush.bf16.msra.mxu0 %v9078
    %11509 = vmatpush.bf16.msra.mxu0 %v9062
    %11510 = vmatpush.bf16.msra.mxu0 %v9046
    %11511 = vmatpush.bf16.msra.mxu0 %v9030
    %11512 = vmatpush.bf16.msra.mxu0 %v9014
    %11513 = vmatpush.bf16.msra.mxu0 %v8998
    %11514 = vmatpush.bf16.msra.mxu0 %v8982
    %11515 = vmatpush.bf16.msra.mxu0 %v8966
    %11516 = vmatmul.bf16.gmra.mxu0 %v1496
    %v11517 = vpop.f32.mrf.mxu0
    %v11518 = vadd.f32 %v11505, %v11517
    %v11519 = vpop.f32.mrf.mxu0
    %11520 = vdwg.mxu0
    %11521 = vmatpush.bf16.msra.mxu0 %v9206
    %11522 = vmatpush.bf16.msra.mxu0 %v9190
    %11523 = vmatpush.bf16.msra.mxu0 %v9174
    %11524 = vmatpush.bf16.msra.mxu0 %v9158
    %11525 = vmatpush.bf16.msra.mxu0 %v9142
    %11526 = vmatpush.bf16.msra.mxu0 %v9126
    %11527 = vmatpush.bf16.msra.mxu0 %v9110
    %11528 = vmatpush.bf16.msra.mxu0 %v9094
    %11529 = vmatmul.bf16.gmra.mxu0 %v1497
    %v11530 = vpop.f32.mrf.mxu0
    %v11531 = vadd.f32 %v11518, %v11530
    %v11532 = vpop.f32.mrf.mxu0
    %11533 = vdwg.mxu0
    %11534 = vmatpush.bf16.msra.mxu0 %v7799
    %11535 = vmatpush.bf16.msra.mxu0 %v7783
    %11536 = vmatpush.bf16.msra.mxu0 %v7767
    %11537 = vmatpush.bf16.msra.mxu0 %v7751
    %11538 = vmatpush.bf16.msra.mxu0 %v7735
    %11539 = vmatpush.bf16.msra.mxu0 %v7719
    %11540 = vmatpush.bf16.msra.mxu0 %v7703
    %11541 = vmatpush.bf16.msra.mxu0 %v7687
    %11542 = vmatmul.bf16.gmra.mxu0 %v1466
    %v11543 = vpop.f32.mrf.mxu0
    %v11544 = vadd.f32 %v3047, %v11543
    %v11545 = vpop.f32.mrf.mxu0
    %11546 = vdwg.mxu0
    %11547 = vmatpush.bf16.msra.mxu0 %v7927
    %11548 = vmatpush.bf16.msra.mxu0 %v7911
    %11549 = vmatpush.bf16.msra.mxu0 %v7895
    %11550 = vmatpush.bf16.msra.mxu0 %v7879
    %11551 = vmatpush.bf16.msra.mxu0 %v7863
    %11552 = vmatpush.bf16.msra.mxu0 %v7847
    %11553 = vmatpush.bf16.msra.mxu0 %v7831
    %11554 = vmatpush.bf16.msra.mxu0 %v7815
    %11555 = vmatmul.bf16.gmra.mxu0 %v1467
    %v11556 = vpop.f32.mrf.mxu0
    %v11557 = vadd.f32 %v11544, %v11556
    %v11558 = vpop.f32.mrf.mxu0
    %11559 = vdwg.mxu0
    %11560 = vmatpush.bf16.msra.mxu0 %v8055
    %11561 = vmatpush.bf16.msra.mxu0 %v8039
    %11562 = vmatpush.bf16.msra.mxu0 %v8023
    %11563 = vmatpush.bf16.msra.mxu0 %v8007
    %11564 = vmatpush.bf16.msra.mxu0 %v7991
    %11565 = vmatpush.bf16.msra.mxu0 %v7975
    %11566 = vmatpush.bf16.msra.mxu0 %v7959
    %11567 = vmatpush.bf16.msra.mxu0 %v7943
    %11568 = vmatmul.bf16.gmra.mxu0 %v1468
    %v11569 = vpop.f32.mrf.mxu0
    %v11570 = vadd.f32 %v11557, %v11569
    %v11571 = vpop.f32.mrf.mxu0
    %11572 = vdwg.mxu0
    %11573 = vmatpush.bf16.msra.mxu0 %v8183
    %11574 = vmatpush.bf16.msra.mxu0 %v8167
    %11575 = vmatpush.bf16.msra.mxu0 %v8151
    %11576 = vmatpush.bf16.msra.mxu0 %v8135
    %11577 = vmatpush.bf16.msra.mxu0 %v8119
    %11578 = vmatpush.bf16.msra.mxu0 %v8103
    %11579 = vmatpush.bf16.msra.mxu0 %v8087
    %11580 = vmatpush.bf16.msra.mxu0 %v8071
    %11581 = vmatmul.bf16.gmra.mxu0 %v1469
    %v11582 = vpop.f32.mrf.mxu0
    %v11583 = vadd.f32 %v11570, %v11582
    %v11584 = vpop.f32.mrf.mxu0
    %11585 = vdwg.mxu0
    %11586 = vmatpush.bf16.msra.mxu0 %v8311
    %11587 = vmatpush.bf16.msra.mxu0 %v8295
    %11588 = vmatpush.bf16.msra.mxu0 %v8279
    %11589 = vmatpush.bf16.msra.mxu0 %v8263
    %11590 = vmatpush.bf16.msra.mxu0 %v8247
    %11591 = vmatpush.bf16.msra.mxu0 %v8231
    %11592 = vmatpush.bf16.msra.mxu0 %v8215
    %11593 = vmatpush.bf16.msra.mxu0 %v8199
    %11594 = vmatmul.bf16.gmra.mxu0 %v1480
    %v11595 = vpop.f32.mrf.mxu0
    %v11596 = vadd.f32 %v11583, %v11595
    %v11597 = vpop.f32.mrf.mxu0
    %11598 = vdwg.mxu0
    %11599 = vmatpush.bf16.msra.mxu0 %v8439
    %11600 = vmatpush.bf16.msra.mxu0 %v8423
    %11601 = vmatpush.bf16.msra.mxu0 %v8407
    %11602 = vmatpush.bf16.msra.mxu0 %v8391
    %11603 = vmatpush.bf16.msra.mxu0 %v8375
    %11604 = vmatpush.bf16.msra.mxu0 %v8359
    %11605 = vmatpush.bf16.msra.mxu0 %v8343
    %11606 = vmatpush.bf16.msra.mxu0 %v8327
    %11607 = vmatmul.bf16.gmra.mxu0 %v1481
    %v11608 = vpop.f32.mrf.mxu0
    %v11609 = vadd.f32 %v11596, %v11608
    %v11610 = vpop.f32.mrf.mxu0
    %11611 = vdwg.mxu0
    %11612 = vmatpush.bf16.msra.mxu0 %v8567
    %11613 = vmatpush.bf16.msra.mxu0 %v8551
    %11614 = vmatpush.bf16.msra.mxu0 %v8535
    %11615 = vmatpush.bf16.msra.mxu0 %v8519
    %11616 = vmatpush.bf16.msra.mxu0 %v8503
    %11617 = vmatpush.bf16.msra.mxu0 %v8487
    %11618 = vmatpush.bf16.msra.mxu0 %v8471
    %11619 = vmatpush.bf16.msra.mxu0 %v8455
    %11620 = vmatmul.bf16.gmra.mxu0 %v1482
    %v11621 = vpop.f32.mrf.mxu0
    %v11622 = vadd.f32 %v11609, %v11621
    %v11623 = vpop.f32.mrf.mxu0
    %11624 = vdwg.mxu0
    %11625 = vmatpush.bf16.msra.mxu0 %v8695
    %11626 = vmatpush.bf16.msra.mxu0 %v8679
    %11627 = vmatpush.bf16.msra.mxu0 %v8663
    %11628 = vmatpush.bf16.msra.mxu0 %v8647
    %11629 = vmatpush.bf16.msra.mxu0 %v8631
    %11630 = vmatpush.bf16.msra.mxu0 %v8615
    %11631 = vmatpush.bf16.msra.mxu0 %v8599
    %11632 = vmatpush.bf16.msra.mxu0 %v8583
    %11633 = vmatmul.bf16.gmra.mxu0 %v1483
    %v11634 = vpop.f32.mrf.mxu0
    %v11635 = vadd.f32 %v11622, %v11634
    %v11636 = vpop.f32.mrf.mxu0
    %11637 = vdwg.mxu0
    %11638 = vmatpush.bf16.msra.mxu0 %v8823
    %11639 = vmatpush.bf16.msra.mxu0 %v8807
    %11640 = vmatpush.bf16.msra.mxu0 %v8791
    %11641 = vmatpush.bf16.msra.mxu0 %v8775
    %11642 = vmatpush.bf16.msra.mxu0 %v8759
    %11643 = vmatpush.bf16.msra.mxu0 %v8743
    %11644 = vmatpush.bf16.msra.mxu0 %v8727
    %11645 = vmatpush.bf16.msra.mxu0 %v8711
    %11646 = vmatmul.bf16.gmra.mxu0 %v1494
    %v11647 = vpop.f32.mrf.mxu0
    %v11648 = vadd.f32 %v11635, %v11647
    %v11649 = vpop.f32.mrf.mxu0
    %11650 = vdwg.mxu0
    %11651 = vmatpush.bf16.msra.mxu0 %v8951
    %11652 = vmatpush.bf16.msra.mxu0 %v8935
    %11653 = vmatpush.bf16.msra.mxu0 %v8919
    %11654 = vmatpush.bf16.msra.mxu0 %v8903
    %11655 = vmatpush.bf16.msra.mxu0 %v8887
    %11656 = vmatpush.bf16.msra.mxu0 %v8871
    %11657 = vmatpush.bf16.msra.mxu0 %v8855
    %11658 = vmatpush.bf16.msra.mxu0 %v8839
    %11659 = vmatmul.bf16.gmra.mxu0 %v1495
    %v11660 = vpop.f32.mrf.mxu0
    %v11661 = vadd.f32 %v11648, %v11660
    %v11662 = vpop.f32.mrf.mxu0
    %11663 = vdwg.mxu0
    %11664 = vmatpush.bf16.msra.mxu0 %v9079
    %11665 = vmatpush.bf16.msra.mxu0 %v9063
    %11666 = vmatpush.bf16.msra.mxu0 %v9047
    %11667 = vmatpush.bf16.msra.mxu0 %v9031
    %11668 = vmatpush.bf16.msra.mxu0 %v9015
    %11669 = vmatpush.bf16.msra.mxu0 %v8999
    %11670 = vmatpush.bf16.msra.mxu0 %v8983
    %11671 = vmatpush.bf16.msra.mxu0 %v8967
    %11672 = vmatmul.bf16.gmra.mxu0 %v1496
    %v11673 = vpop.f32.mrf.mxu0
    %v11674 = vadd.f32 %v11661, %v11673
    %v11675 = vpop.f32.mrf.mxu0
    %11676 = vdwg.mxu0
    %11677 = vmatpush.bf16.msra.mxu0 %v9207
    %11678 = vmatpush.bf16.msra.mxu0 %v9191
    %11679 = vmatpush.bf16.msra.mxu0 %v9175
    %11680 = vmatpush.bf16.msra.mxu0 %v9159
    %11681 = vmatpush.bf16.msra.mxu0 %v9143
    %11682 = vmatpush.bf16.msra.mxu0 %v9127
    %11683 = vmatpush.bf16.msra.mxu0 %v9111
    %11684 = vmatpush.bf16.msra.mxu0 %v9095
    %11685 = vmatmul.bf16.gmra.mxu0 %v1497
    %v11686 = vpop.f32.mrf.mxu0
    %v11687 = vadd.f32 %v11674, %v11686
    %v11688 = vpop.f32.mrf.mxu0
    %11689 = vdwg.mxu0
    %11690 = vmatpush.bf16.msra.mxu0 %v7800
    %11691 = vmatpush.bf16.msra.mxu0 %v7784
    %11692 = vmatpush.bf16.msra.mxu0 %v7768
    %11693 = vmatpush.bf16.msra.mxu0 %v7752
    %11694 = vmatpush.bf16.msra.mxu0 %v7736
    %11695 = vmatpush.bf16.msra.mxu0 %v7720
    %11696 = vmatpush.bf16.msra.mxu0 %v7704
    %11697 = vmatpush.bf16.msra.mxu0 %v7688
    %11698 = vmatmul.bf16.gmra.mxu0 %v1466
    %v11699 = vpop.f32.mrf.mxu0
    %v11700 = vadd.f32 %v3048, %v11699
    %v11701 = vpop.f32.mrf.mxu0
    %11702 = vdwg.mxu0
    %11703 = vmatpush.bf16.msra.mxu0 %v7928
    %11704 = vmatpush.bf16.msra.mxu0 %v7912
    %11705 = vmatpush.bf16.msra.mxu0 %v7896
    %11706 = vmatpush.bf16.msra.mxu0 %v7880
    %11707 = vmatpush.bf16.msra.mxu0 %v7864
    %11708 = vmatpush.bf16.msra.mxu0 %v7848
    %11709 = vmatpush.bf16.msra.mxu0 %v7832
    %11710 = vmatpush.bf16.msra.mxu0 %v7816
    %11711 = vmatmul.bf16.gmra.mxu0 %v1467
    %v11712 = vpop.f32.mrf.mxu0
    %v11713 = vadd.f32 %v11700, %v11712
    %v11714 = vpop.f32.mrf.mxu0
    %11715 = vdwg.mxu0
    %11716 = vmatpush.bf16.msra.mxu0 %v8056
    %11717 = vmatpush.bf16.msra.mxu0 %v8040
    %11718 = vmatpush.bf16.msra.mxu0 %v8024
    %11719 = vmatpush.bf16.msra.mxu0 %v8008
    %11720 = vmatpush.bf16.msra.mxu0 %v7992
    %11721 = vmatpush.bf16.msra.mxu0 %v7976
    %11722 = vmatpush.bf16.msra.mxu0 %v7960
    %11723 = vmatpush.bf16.msra.mxu0 %v7944
    %11724 = vmatmul.bf16.gmra.mxu0 %v1468
    %v11725 = vpop.f32.mrf.mxu0
    %v11726 = vadd.f32 %v11713, %v11725
    %v11727 = vpop.f32.mrf.mxu0
    %11728 = vdwg.mxu0
    %11729 = vmatpush.bf16.msra.mxu0 %v8184
    %11730 = vmatpush.bf16.msra.mxu0 %v8168
    %11731 = vmatpush.bf16.msra.mxu0 %v8152
    %11732 = vmatpush.bf16.msra.mxu0 %v8136
    %11733 = vmatpush.bf16.msra.mxu0 %v8120
    %11734 = vmatpush.bf16.msra.mxu0 %v8104
    %11735 = vmatpush.bf16.msra.mxu0 %v8088
    %11736 = vmatpush.bf16.msra.mxu0 %v8072
    %11737 = vmatmul.bf16.gmra.mxu0 %v1469
    %v11738 = vpop.f32.mrf.mxu0
    %v11739 = vadd.f32 %v11726, %v11738
    %v11740 = vpop.f32.mrf.mxu0
    %11741 = vdwg.mxu0
    %11742 = vmatpush.bf16.msra.mxu0 %v8312
    %11743 = vmatpush.bf16.msra.mxu0 %v8296
    %11744 = vmatpush.bf16.msra.mxu0 %v8280
    %11745 = vmatpush.bf16.msra.mxu0 %v8264
    %11746 = vmatpush.bf16.msra.mxu0 %v8248
    %11747 = vmatpush.bf16.msra.mxu0 %v8232
    %11748 = vmatpush.bf16.msra.mxu0 %v8216
    %11749 = vmatpush.bf16.msra.mxu0 %v8200
    %11750 = vmatmul.bf16.gmra.mxu0 %v1480
    %v11751 = vpop.f32.mrf.mxu0
    %v11752 = vadd.f32 %v11739, %v11751
    %v11753 = vpop.f32.mrf.mxu0
    %11754 = vdwg.mxu0
    %11755 = vmatpush.bf16.msra.mxu0 %v8440
    %11756 = vmatpush.bf16.msra.mxu0 %v8424
    %11757 = vmatpush.bf16.msra.mxu0 %v8408
    %11758 = vmatpush.bf16.msra.mxu0 %v8392
    %11759 = vmatpush.bf16.msra.mxu0 %v8376
    %11760 = vmatpush.bf16.msra.mxu0 %v8360
    %11761 = vmatpush.bf16.msra.mxu0 %v8344
    %11762 = vmatpush.bf16.msra.mxu0 %v8328
    %11763 = vmatmul.bf16.gmra.mxu0 %v1481
    %v11764 = vpop.f32.mrf.mxu0
    %v11765 = vadd.f32 %v11752, %v11764
    %v11766 = vpop.f32.mrf.mxu0
    %11767 = vdwg.mxu0
    %11768 = vmatpush.bf16.msra.mxu0 %v8568
    %11769 = vmatpush.bf16.msra.mxu0 %v8552
    %11770 = vmatpush.bf16.msra.mxu0 %v8536
    %11771 = vmatpush.bf16.msra.mxu0 %v8520
    %11772 = vmatpush.bf16.msra.mxu0 %v8504
    %11773 = vmatpush.bf16.msra.mxu0 %v8488
    %11774 = vmatpush.bf16.msra.mxu0 %v8472
    %11775 = vmatpush.bf16.msra.mxu0 %v8456
    %11776 = vmatmul.bf16.gmra.mxu0 %v1482
    %v11777 = vpop.f32.mrf.mxu0
    %v11778 = vadd.f32 %v11765, %v11777
    %v11779 = vpop.f32.mrf.mxu0
    %11780 = vdwg.mxu0
    %11781 = vmatpush.bf16.msra.mxu0 %v8696
    %11782 = vmatpush.bf16.msra.mxu0 %v8680
    %11783 = vmatpush.bf16.msra.mxu0 %v8664
    %11784 = vmatpush.bf16.msra.mxu0 %v8648
    %11785 = vmatpush.bf16.msra.mxu0 %v8632
    %11786 = vmatpush.bf16.msra.mxu0 %v8616
    %11787 = vmatpush.bf16.msra.mxu0 %v8600
    %11788 = vmatpush.bf16.msra.mxu0 %v8584
    %11789 = vmatmul.bf16.gmra.mxu0 %v1483
    %v11790 = vpop.f32.mrf.mxu0
    %v11791 = vadd.f32 %v11778, %v11790
    %v11792 = vpop.f32.mrf.mxu0
    %11793 = vdwg.mxu0
    %11794 = vmatpush.bf16.msra.mxu0 %v8824
    %11795 = vmatpush.bf16.msra.mxu0 %v8808
    %11796 = vmatpush.bf16.msra.mxu0 %v8792
    %11797 = vmatpush.bf16.msra.mxu0 %v8776
    %11798 = vmatpush.bf16.msra.mxu0 %v8760
    %11799 = vmatpush.bf16.msra.mxu0 %v8744
    %11800 = vmatpush.bf16.msra.mxu0 %v8728
    %11801 = vmatpush.bf16.msra.mxu0 %v8712
    %11802 = vmatmul.bf16.gmra.mxu0 %v1494
    %v11803 = vpop.f32.mrf.mxu0
    %v11804 = vadd.f32 %v11791, %v11803
    %v11805 = vpop.f32.mrf.mxu0
    %11806 = vdwg.mxu0
    %11807 = vmatpush.bf16.msra.mxu0 %v8952
    %11808 = vmatpush.bf16.msra.mxu0 %v8936
    %11809 = vmatpush.bf16.msra.mxu0 %v8920
    %11810 = vmatpush.bf16.msra.mxu0 %v8904
    %11811 = vmatpush.bf16.msra.mxu0 %v8888
    %11812 = vmatpush.bf16.msra.mxu0 %v8872
    %11813 = vmatpush.bf16.msra.mxu0 %v8856
    %11814 = vmatpush.bf16.msra.mxu0 %v8840
    %11815 = vmatmul.bf16.gmra.mxu0 %v1495
    %v11816 = vpop.f32.mrf.mxu0
    %v11817 = vadd.f32 %v11804, %v11816
    %v11818 = vpop.f32.mrf.mxu0
    %11819 = vdwg.mxu0
    %11820 = vmatpush.bf16.msra.mxu0 %v9080
    %11821 = vmatpush.bf16.msra.mxu0 %v9064
    %11822 = vmatpush.bf16.msra.mxu0 %v9048
    %11823 = vmatpush.bf16.msra.mxu0 %v9032
    %11824 = vmatpush.bf16.msra.mxu0 %v9016
    %11825 = vmatpush.bf16.msra.mxu0 %v9000
    %11826 = vmatpush.bf16.msra.mxu0 %v8984
    %11827 = vmatpush.bf16.msra.mxu0 %v8968
    %11828 = vmatmul.bf16.gmra.mxu0 %v1496
    %v11829 = vpop.f32.mrf.mxu0
    %v11830 = vadd.f32 %v11817, %v11829
    %v11831 = vpop.f32.mrf.mxu0
    %11832 = vdwg.mxu0
    %11833 = vmatpush.bf16.msra.mxu0 %v9208
    %11834 = vmatpush.bf16.msra.mxu0 %v9192
    %11835 = vmatpush.bf16.msra.mxu0 %v9176
    %11836 = vmatpush.bf16.msra.mxu0 %v9160
    %11837 = vmatpush.bf16.msra.mxu0 %v9144
    %11838 = vmatpush.bf16.msra.mxu0 %v9128
    %11839 = vmatpush.bf16.msra.mxu0 %v9112
    %11840 = vmatpush.bf16.msra.mxu0 %v9096
    %11841 = vmatmul.bf16.gmra.mxu0 %v1497
    %v11842 = vpop.f32.mrf.mxu0
    %v11843 = vadd.f32 %v11830, %v11842
    %v11844 = vpop.f32.mrf.mxu0
    %11845 = vdwg.mxu0
    %11846 = vmatpush.bf16.msra.mxu0 %v7801
    %11847 = vmatpush.bf16.msra.mxu0 %v7785
    %11848 = vmatpush.bf16.msra.mxu0 %v7769
    %11849 = vmatpush.bf16.msra.mxu0 %v7753
    %11850 = vmatpush.bf16.msra.mxu0 %v7737
    %11851 = vmatpush.bf16.msra.mxu0 %v7721
    %11852 = vmatpush.bf16.msra.mxu0 %v7705
    %11853 = vmatpush.bf16.msra.mxu0 %v7689
    %11854 = vmatmul.bf16.gmra.mxu0 %v1466
    %v11855 = vpop.f32.mrf.mxu0
    %v11856 = vadd.f32 %v3049, %v11855
    %v11857 = vpop.f32.mrf.mxu0
    %11858 = vdwg.mxu0
    %11859 = vmatpush.bf16.msra.mxu0 %v7929
    %11860 = vmatpush.bf16.msra.mxu0 %v7913
    %11861 = vmatpush.bf16.msra.mxu0 %v7897
    %11862 = vmatpush.bf16.msra.mxu0 %v7881
    %11863 = vmatpush.bf16.msra.mxu0 %v7865
    %11864 = vmatpush.bf16.msra.mxu0 %v7849
    %11865 = vmatpush.bf16.msra.mxu0 %v7833
    %11866 = vmatpush.bf16.msra.mxu0 %v7817
    %11867 = vmatmul.bf16.gmra.mxu0 %v1467
    %v11868 = vpop.f32.mrf.mxu0
    %v11869 = vadd.f32 %v11856, %v11868
    %v11870 = vpop.f32.mrf.mxu0
    %11871 = vdwg.mxu0
    %11872 = vmatpush.bf16.msra.mxu0 %v8057
    %11873 = vmatpush.bf16.msra.mxu0 %v8041
    %11874 = vmatpush.bf16.msra.mxu0 %v8025
    %11875 = vmatpush.bf16.msra.mxu0 %v8009
    %11876 = vmatpush.bf16.msra.mxu0 %v7993
    %11877 = vmatpush.bf16.msra.mxu0 %v7977
    %11878 = vmatpush.bf16.msra.mxu0 %v7961
    %11879 = vmatpush.bf16.msra.mxu0 %v7945
    %11880 = vmatmul.bf16.gmra.mxu0 %v1468
    %v11881 = vpop.f32.mrf.mxu0
    %v11882 = vadd.f32 %v11869, %v11881
    %v11883 = vpop.f32.mrf.mxu0
    %11884 = vdwg.mxu0
    %11885 = vmatpush.bf16.msra.mxu0 %v8185
    %11886 = vmatpush.bf16.msra.mxu0 %v8169
    %11887 = vmatpush.bf16.msra.mxu0 %v8153
    %11888 = vmatpush.bf16.msra.mxu0 %v8137
    %11889 = vmatpush.bf16.msra.mxu0 %v8121
    %11890 = vmatpush.bf16.msra.mxu0 %v8105
    %11891 = vmatpush.bf16.msra.mxu0 %v8089
    %11892 = vmatpush.bf16.msra.mxu0 %v8073
    %11893 = vmatmul.bf16.gmra.mxu0 %v1469
    %v11894 = vpop.f32.mrf.mxu0
    %v11895 = vadd.f32 %v11882, %v11894
    %v11896 = vpop.f32.mrf.mxu0
    %11897 = vdwg.mxu0
    %11898 = vmatpush.bf16.msra.mxu0 %v8313
    %11899 = vmatpush.bf16.msra.mxu0 %v8297
    %11900 = vmatpush.bf16.msra.mxu0 %v8281
    %11901 = vmatpush.bf16.msra.mxu0 %v8265
    %11902 = vmatpush.bf16.msra.mxu0 %v8249
    %11903 = vmatpush.bf16.msra.mxu0 %v8233
    %11904 = vmatpush.bf16.msra.mxu0 %v8217
    %11905 = vmatpush.bf16.msra.mxu0 %v8201
    %11906 = vmatmul.bf16.gmra.mxu0 %v1480
    %v11907 = vpop.f32.mrf.mxu0
    %v11908 = vadd.f32 %v11895, %v11907
    %v11909 = vpop.f32.mrf.mxu0
    %11910 = vdwg.mxu0
    %11911 = vmatpush.bf16.msra.mxu0 %v8441
    %11912 = vmatpush.bf16.msra.mxu0 %v8425
    %11913 = vmatpush.bf16.msra.mxu0 %v8409
    %11914 = vmatpush.bf16.msra.mxu0 %v8393
    %11915 = vmatpush.bf16.msra.mxu0 %v8377
    %11916 = vmatpush.bf16.msra.mxu0 %v8361
    %11917 = vmatpush.bf16.msra.mxu0 %v8345
    %11918 = vmatpush.bf16.msra.mxu0 %v8329
    %11919 = vmatmul.bf16.gmra.mxu0 %v1481
    %v11920 = vpop.f32.mrf.mxu0
    %v11921 = vadd.f32 %v11908, %v11920
    %v11922 = vpop.f32.mrf.mxu0
    %11923 = vdwg.mxu0
    %11924 = vmatpush.bf16.msra.mxu0 %v8569
    %11925 = vmatpush.bf16.msra.mxu0 %v8553
    %11926 = vmatpush.bf16.msra.mxu0 %v8537
    %11927 = vmatpush.bf16.msra.mxu0 %v8521
    %11928 = vmatpush.bf16.msra.mxu0 %v8505
    %11929 = vmatpush.bf16.msra.mxu0 %v8489
    %11930 = vmatpush.bf16.msra.mxu0 %v8473
    %11931 = vmatpush.bf16.msra.mxu0 %v8457
    %11932 = vmatmul.bf16.gmra.mxu0 %v1482
    %v11933 = vpop.f32.mrf.mxu0
    %v11934 = vadd.f32 %v11921, %v11933
    %v11935 = vpop.f32.mrf.mxu0
    %11936 = vdwg.mxu0
    %11937 = vmatpush.bf16.msra.mxu0 %v8697
    %11938 = vmatpush.bf16.msra.mxu0 %v8681
    %11939 = vmatpush.bf16.msra.mxu0 %v8665
    %11940 = vmatpush.bf16.msra.mxu0 %v8649
    %11941 = vmatpush.bf16.msra.mxu0 %v8633
    %11942 = vmatpush.bf16.msra.mxu0 %v8617
    %11943 = vmatpush.bf16.msra.mxu0 %v8601
    %11944 = vmatpush.bf16.msra.mxu0 %v8585
    %11945 = vmatmul.bf16.gmra.mxu0 %v1483
    %v11946 = vpop.f32.mrf.mxu0
    %v11947 = vadd.f32 %v11934, %v11946
    %v11948 = vpop.f32.mrf.mxu0
    %11949 = vdwg.mxu0
    %11950 = vmatpush.bf16.msra.mxu0 %v8825
    %11951 = vmatpush.bf16.msra.mxu0 %v8809
    %11952 = vmatpush.bf16.msra.mxu0 %v8793
    %11953 = vmatpush.bf16.msra.mxu0 %v8777
    %11954 = vmatpush.bf16.msra.mxu0 %v8761
    %11955 = vmatpush.bf16.msra.mxu0 %v8745
    %11956 = vmatpush.bf16.msra.mxu0 %v8729
    %11957 = vmatpush.bf16.msra.mxu0 %v8713
    %11958 = vmatmul.bf16.gmra.mxu0 %v1494
    %v11959 = vpop.f32.mrf.mxu0
    %v11960 = vadd.f32 %v11947, %v11959
    %v11961 = vpop.f32.mrf.mxu0
    %11962 = vdwg.mxu0
    %11963 = vmatpush.bf16.msra.mxu0 %v8953
    %11964 = vmatpush.bf16.msra.mxu0 %v8937
    %11965 = vmatpush.bf16.msra.mxu0 %v8921
    %11966 = vmatpush.bf16.msra.mxu0 %v8905
    %11967 = vmatpush.bf16.msra.mxu0 %v8889
    %11968 = vmatpush.bf16.msra.mxu0 %v8873
    %11969 = vmatpush.bf16.msra.mxu0 %v8857
    %11970 = vmatpush.bf16.msra.mxu0 %v8841
    %11971 = vmatmul.bf16.gmra.mxu0 %v1495
    %v11972 = vpop.f32.mrf.mxu0
    %v11973 = vadd.f32 %v11960, %v11972
    %v11974 = vpop.f32.mrf.mxu0
    %11975 = vdwg.mxu0
    %11976 = vmatpush.bf16.msra.mxu0 %v9081
    %11977 = vmatpush.bf16.msra.mxu0 %v9065
    %11978 = vmatpush.bf16.msra.mxu0 %v9049
    %11979 = vmatpush.bf16.msra.mxu0 %v9033
    %11980 = vmatpush.bf16.msra.mxu0 %v9017
    %11981 = vmatpush.bf16.msra.mxu0 %v9001
    %11982 = vmatpush.bf16.msra.mxu0 %v8985
    %11983 = vmatpush.bf16.msra.mxu0 %v8969
    %11984 = vmatmul.bf16.gmra.mxu0 %v1496
    %v11985 = vpop.f32.mrf.mxu0
    %v11986 = vadd.f32 %v11973, %v11985
    %v11987 = vpop.f32.mrf.mxu0
    %11988 = vdwg.mxu0
    %11989 = vmatpush.bf16.msra.mxu0 %v9209
    %11990 = vmatpush.bf16.msra.mxu0 %v9193
    %11991 = vmatpush.bf16.msra.mxu0 %v9177
    %11992 = vmatpush.bf16.msra.mxu0 %v9161
    %11993 = vmatpush.bf16.msra.mxu0 %v9145
    %11994 = vmatpush.bf16.msra.mxu0 %v9129
    %11995 = vmatpush.bf16.msra.mxu0 %v9113
    %11996 = vmatpush.bf16.msra.mxu0 %v9097
    %11997 = vmatmul.bf16.gmra.mxu0 %v1497
    %v11998 = vpop.f32.mrf.mxu0
    %v11999 = vadd.f32 %v11986, %v11998
    %v12000 = vpop.f32.mrf.mxu0
    %12001 = vdwg.mxu0
    %12002 = vmatpush.bf16.msra.mxu0 %v7802
    %12003 = vmatpush.bf16.msra.mxu0 %v7786
    %12004 = vmatpush.bf16.msra.mxu0 %v7770
    %12005 = vmatpush.bf16.msra.mxu0 %v7754
    %12006 = vmatpush.bf16.msra.mxu0 %v7738
    %12007 = vmatpush.bf16.msra.mxu0 %v7722
    %12008 = vmatpush.bf16.msra.mxu0 %v7706
    %12009 = vmatpush.bf16.msra.mxu0 %v7690
    %12010 = vmatmul.bf16.gmra.mxu0 %v1466
    %v12011 = vpop.f32.mrf.mxu0
    %v12012 = vadd.f32 %v3050, %v12011
    %v12013 = vpop.f32.mrf.mxu0
    %12014 = vdwg.mxu0
    %12015 = vmatpush.bf16.msra.mxu0 %v7930
    %12016 = vmatpush.bf16.msra.mxu0 %v7914
    %12017 = vmatpush.bf16.msra.mxu0 %v7898
    %12018 = vmatpush.bf16.msra.mxu0 %v7882
    %12019 = vmatpush.bf16.msra.mxu0 %v7866
    %12020 = vmatpush.bf16.msra.mxu0 %v7850
    %12021 = vmatpush.bf16.msra.mxu0 %v7834
    %12022 = vmatpush.bf16.msra.mxu0 %v7818
    %12023 = vmatmul.bf16.gmra.mxu0 %v1467
    %v12024 = vpop.f32.mrf.mxu0
    %v12025 = vadd.f32 %v12012, %v12024
    %v12026 = vpop.f32.mrf.mxu0
    %12027 = vdwg.mxu0
    %12028 = vmatpush.bf16.msra.mxu0 %v8058
    %12029 = vmatpush.bf16.msra.mxu0 %v8042
    %12030 = vmatpush.bf16.msra.mxu0 %v8026
    %12031 = vmatpush.bf16.msra.mxu0 %v8010
    %12032 = vmatpush.bf16.msra.mxu0 %v7994
    %12033 = vmatpush.bf16.msra.mxu0 %v7978
    %12034 = vmatpush.bf16.msra.mxu0 %v7962
    %12035 = vmatpush.bf16.msra.mxu0 %v7946
    %12036 = vmatmul.bf16.gmra.mxu0 %v1468
    %v12037 = vpop.f32.mrf.mxu0
    %v12038 = vadd.f32 %v12025, %v12037
    %v12039 = vpop.f32.mrf.mxu0
    %12040 = vdwg.mxu0
    %12041 = vmatpush.bf16.msra.mxu0 %v8186
    %12042 = vmatpush.bf16.msra.mxu0 %v8170
    %12043 = vmatpush.bf16.msra.mxu0 %v8154
    %12044 = vmatpush.bf16.msra.mxu0 %v8138
    %12045 = vmatpush.bf16.msra.mxu0 %v8122
    %12046 = vmatpush.bf16.msra.mxu0 %v8106
    %12047 = vmatpush.bf16.msra.mxu0 %v8090
    %12048 = vmatpush.bf16.msra.mxu0 %v8074
    %12049 = vmatmul.bf16.gmra.mxu0 %v1469
    %v12050 = vpop.f32.mrf.mxu0
    %v12051 = vadd.f32 %v12038, %v12050
    %v12052 = vpop.f32.mrf.mxu0
    %12053 = vdwg.mxu0
    %12054 = vmatpush.bf16.msra.mxu0 %v8314
    %12055 = vmatpush.bf16.msra.mxu0 %v8298
    %12056 = vmatpush.bf16.msra.mxu0 %v8282
    %12057 = vmatpush.bf16.msra.mxu0 %v8266
    %12058 = vmatpush.bf16.msra.mxu0 %v8250
    %12059 = vmatpush.bf16.msra.mxu0 %v8234
    %12060 = vmatpush.bf16.msra.mxu0 %v8218
    %12061 = vmatpush.bf16.msra.mxu0 %v8202
    %12062 = vmatmul.bf16.gmra.mxu0 %v1480
    %v12063 = vpop.f32.mrf.mxu0
    %v12064 = vadd.f32 %v12051, %v12063
    %v12065 = vpop.f32.mrf.mxu0
    %12066 = vdwg.mxu0
    %12067 = vmatpush.bf16.msra.mxu0 %v8442
    %12068 = vmatpush.bf16.msra.mxu0 %v8426
    %12069 = vmatpush.bf16.msra.mxu0 %v8410
    %12070 = vmatpush.bf16.msra.mxu0 %v8394
    %12071 = vmatpush.bf16.msra.mxu0 %v8378
    %12072 = vmatpush.bf16.msra.mxu0 %v8362
    %12073 = vmatpush.bf16.msra.mxu0 %v8346
    %12074 = vmatpush.bf16.msra.mxu0 %v8330
    %12075 = vmatmul.bf16.gmra.mxu0 %v1481
    %v12076 = vpop.f32.mrf.mxu0
    %v12077 = vadd.f32 %v12064, %v12076
    %v12078 = vpop.f32.mrf.mxu0
    %12079 = vdwg.mxu0
    %12080 = vmatpush.bf16.msra.mxu0 %v8570
    %12081 = vmatpush.bf16.msra.mxu0 %v8554
    %12082 = vmatpush.bf16.msra.mxu0 %v8538
    %12083 = vmatpush.bf16.msra.mxu0 %v8522
    %12084 = vmatpush.bf16.msra.mxu0 %v8506
    %12085 = vmatpush.bf16.msra.mxu0 %v8490
    %12086 = vmatpush.bf16.msra.mxu0 %v8474
    %12087 = vmatpush.bf16.msra.mxu0 %v8458
    %12088 = vmatmul.bf16.gmra.mxu0 %v1482
    %v12089 = vpop.f32.mrf.mxu0
    %v12090 = vadd.f32 %v12077, %v12089
    %v12091 = vpop.f32.mrf.mxu0
    %12092 = vdwg.mxu0
    %12093 = vmatpush.bf16.msra.mxu0 %v8698
    %12094 = vmatpush.bf16.msra.mxu0 %v8682
    %12095 = vmatpush.bf16.msra.mxu0 %v8666
    %12096 = vmatpush.bf16.msra.mxu0 %v8650
    %12097 = vmatpush.bf16.msra.mxu0 %v8634
    %12098 = vmatpush.bf16.msra.mxu0 %v8618
    %12099 = vmatpush.bf16.msra.mxu0 %v8602
    %12100 = vmatpush.bf16.msra.mxu0 %v8586
    %12101 = vmatmul.bf16.gmra.mxu0 %v1483
    %v12102 = vpop.f32.mrf.mxu0
    %v12103 = vadd.f32 %v12090, %v12102
    %v12104 = vpop.f32.mrf.mxu0
    %12105 = vdwg.mxu0
    %12106 = vmatpush.bf16.msra.mxu0 %v8826
    %12107 = vmatpush.bf16.msra.mxu0 %v8810
    %12108 = vmatpush.bf16.msra.mxu0 %v8794
    %12109 = vmatpush.bf16.msra.mxu0 %v8778
    %12110 = vmatpush.bf16.msra.mxu0 %v8762
    %12111 = vmatpush.bf16.msra.mxu0 %v8746
    %12112 = vmatpush.bf16.msra.mxu0 %v8730
    %12113 = vmatpush.bf16.msra.mxu0 %v8714
    %12114 = vmatmul.bf16.gmra.mxu0 %v1494
    %v12115 = vpop.f32.mrf.mxu0
    %v12116 = vadd.f32 %v12103, %v12115
    %v12117 = vpop.f32.mrf.mxu0
    %12118 = vdwg.mxu0
    %12119 = vmatpush.bf16.msra.mxu0 %v8954
    %12120 = vmatpush.bf16.msra.mxu0 %v8938
    %12121 = vmatpush.bf16.msra.mxu0 %v8922
    %12122 = vmatpush.bf16.msra.mxu0 %v8906
    %12123 = vmatpush.bf16.msra.mxu0 %v8890
    %12124 = vmatpush.bf16.msra.mxu0 %v8874
    %12125 = vmatpush.bf16.msra.mxu0 %v8858
    %12126 = vmatpush.bf16.msra.mxu0 %v8842
    %12127 = vmatmul.bf16.gmra.mxu0 %v1495
    %v12128 = vpop.f32.mrf.mxu0
    %v12129 = vadd.f32 %v12116, %v12128
    %v12130 = vpop.f32.mrf.mxu0
    %12131 = vdwg.mxu0
    %12132 = vmatpush.bf16.msra.mxu0 %v9082
    %12133 = vmatpush.bf16.msra.mxu0 %v9066
    %12134 = vmatpush.bf16.msra.mxu0 %v9050
    %12135 = vmatpush.bf16.msra.mxu0 %v9034
    %12136 = vmatpush.bf16.msra.mxu0 %v9018
    %12137 = vmatpush.bf16.msra.mxu0 %v9002
    %12138 = vmatpush.bf16.msra.mxu0 %v8986
    %12139 = vmatpush.bf16.msra.mxu0 %v8970
    %12140 = vmatmul.bf16.gmra.mxu0 %v1496
    %v12141 = vpop.f32.mrf.mxu0
    %v12142 = vadd.f32 %v12129, %v12141
    %v12143 = vpop.f32.mrf.mxu0
    %12144 = vdwg.mxu0
    %12145 = vmatpush.bf16.msra.mxu0 %v9210
    %12146 = vmatpush.bf16.msra.mxu0 %v9194
    %12147 = vmatpush.bf16.msra.mxu0 %v9178
    %12148 = vmatpush.bf16.msra.mxu0 %v9162
    %12149 = vmatpush.bf16.msra.mxu0 %v9146
    %12150 = vmatpush.bf16.msra.mxu0 %v9130
    %12151 = vmatpush.bf16.msra.mxu0 %v9114
    %12152 = vmatpush.bf16.msra.mxu0 %v9098
    %12153 = vmatmul.bf16.gmra.mxu0 %v1497
    %v12154 = vpop.f32.mrf.mxu0
    %v12155 = vadd.f32 %v12142, %v12154
    %v12156 = vpop.f32.mrf.mxu0
    %12157 = vdwg.mxu0
    %12158 = vmatpush.bf16.msra.mxu0 %v7803
    %12159 = vmatpush.bf16.msra.mxu0 %v7787
    %12160 = vmatpush.bf16.msra.mxu0 %v7771
    %12161 = vmatpush.bf16.msra.mxu0 %v7755
    %12162 = vmatpush.bf16.msra.mxu0 %v7739
    %12163 = vmatpush.bf16.msra.mxu0 %v7723
    %12164 = vmatpush.bf16.msra.mxu0 %v7707
    %12165 = vmatpush.bf16.msra.mxu0 %v7691
    %12166 = vmatmul.bf16.gmra.mxu0 %v1466
    %v12167 = vpop.f32.mrf.mxu0
    %v12168 = vadd.f32 %v3051, %v12167
    %v12169 = vpop.f32.mrf.mxu0
    %12170 = vdwg.mxu0
    %12171 = vmatpush.bf16.msra.mxu0 %v7931
    %12172 = vmatpush.bf16.msra.mxu0 %v7915
    %12173 = vmatpush.bf16.msra.mxu0 %v7899
    %12174 = vmatpush.bf16.msra.mxu0 %v7883
    %12175 = vmatpush.bf16.msra.mxu0 %v7867
    %12176 = vmatpush.bf16.msra.mxu0 %v7851
    %12177 = vmatpush.bf16.msra.mxu0 %v7835
    %12178 = vmatpush.bf16.msra.mxu0 %v7819
    %12179 = vmatmul.bf16.gmra.mxu0 %v1467
    %v12180 = vpop.f32.mrf.mxu0
    %v12181 = vadd.f32 %v12168, %v12180
    %v12182 = vpop.f32.mrf.mxu0
    %12183 = vdwg.mxu0
    %12184 = vmatpush.bf16.msra.mxu0 %v8059
    %12185 = vmatpush.bf16.msra.mxu0 %v8043
    %12186 = vmatpush.bf16.msra.mxu0 %v8027
    %12187 = vmatpush.bf16.msra.mxu0 %v8011
    %12188 = vmatpush.bf16.msra.mxu0 %v7995
    %12189 = vmatpush.bf16.msra.mxu0 %v7979
    %12190 = vmatpush.bf16.msra.mxu0 %v7963
    %12191 = vmatpush.bf16.msra.mxu0 %v7947
    %12192 = vmatmul.bf16.gmra.mxu0 %v1468
    %v12193 = vpop.f32.mrf.mxu0
    %v12194 = vadd.f32 %v12181, %v12193
    %v12195 = vpop.f32.mrf.mxu0
    %12196 = vdwg.mxu0
    %12197 = vmatpush.bf16.msra.mxu0 %v8187
    %12198 = vmatpush.bf16.msra.mxu0 %v8171
    %12199 = vmatpush.bf16.msra.mxu0 %v8155
    %12200 = vmatpush.bf16.msra.mxu0 %v8139
    %12201 = vmatpush.bf16.msra.mxu0 %v8123
    %12202 = vmatpush.bf16.msra.mxu0 %v8107
    %12203 = vmatpush.bf16.msra.mxu0 %v8091
    %12204 = vmatpush.bf16.msra.mxu0 %v8075
    %12205 = vmatmul.bf16.gmra.mxu0 %v1469
    %v12206 = vpop.f32.mrf.mxu0
    %v12207 = vadd.f32 %v12194, %v12206
    %v12208 = vpop.f32.mrf.mxu0
    %12209 = vdwg.mxu0
    %12210 = vmatpush.bf16.msra.mxu0 %v8315
    %12211 = vmatpush.bf16.msra.mxu0 %v8299
    %12212 = vmatpush.bf16.msra.mxu0 %v8283
    %12213 = vmatpush.bf16.msra.mxu0 %v8267
    %12214 = vmatpush.bf16.msra.mxu0 %v8251
    %12215 = vmatpush.bf16.msra.mxu0 %v8235
    %12216 = vmatpush.bf16.msra.mxu0 %v8219
    %12217 = vmatpush.bf16.msra.mxu0 %v8203
    %12218 = vmatmul.bf16.gmra.mxu0 %v1480
    %v12219 = vpop.f32.mrf.mxu0
    %v12220 = vadd.f32 %v12207, %v12219
    %v12221 = vpop.f32.mrf.mxu0
    %12222 = vdwg.mxu0
    %12223 = vmatpush.bf16.msra.mxu0 %v8443
    %12224 = vmatpush.bf16.msra.mxu0 %v8427
    %12225 = vmatpush.bf16.msra.mxu0 %v8411
    %12226 = vmatpush.bf16.msra.mxu0 %v8395
    %12227 = vmatpush.bf16.msra.mxu0 %v8379
    %12228 = vmatpush.bf16.msra.mxu0 %v8363
    %12229 = vmatpush.bf16.msra.mxu0 %v8347
    %12230 = vmatpush.bf16.msra.mxu0 %v8331
    %12231 = vmatmul.bf16.gmra.mxu0 %v1481
    %v12232 = vpop.f32.mrf.mxu0
    %v12233 = vadd.f32 %v12220, %v12232
    %v12234 = vpop.f32.mrf.mxu0
    %12235 = vdwg.mxu0
    %12236 = vmatpush.bf16.msra.mxu0 %v8571
    %12237 = vmatpush.bf16.msra.mxu0 %v8555
    %12238 = vmatpush.bf16.msra.mxu0 %v8539
    %12239 = vmatpush.bf16.msra.mxu0 %v8523
    %12240 = vmatpush.bf16.msra.mxu0 %v8507
    %12241 = vmatpush.bf16.msra.mxu0 %v8491
    %12242 = vmatpush.bf16.msra.mxu0 %v8475
    %12243 = vmatpush.bf16.msra.mxu0 %v8459
    %12244 = vmatmul.bf16.gmra.mxu0 %v1482
    %v12245 = vpop.f32.mrf.mxu0
    %v12246 = vadd.f32 %v12233, %v12245
    %v12247 = vpop.f32.mrf.mxu0
    %12248 = vdwg.mxu0
    %12249 = vmatpush.bf16.msra.mxu0 %v8699
    %12250 = vmatpush.bf16.msra.mxu0 %v8683
    %12251 = vmatpush.bf16.msra.mxu0 %v8667
    %12252 = vmatpush.bf16.msra.mxu0 %v8651
    %12253 = vmatpush.bf16.msra.mxu0 %v8635
    %12254 = vmatpush.bf16.msra.mxu0 %v8619
    %12255 = vmatpush.bf16.msra.mxu0 %v8603
    %12256 = vmatpush.bf16.msra.mxu0 %v8587
    %12257 = vmatmul.bf16.gmra.mxu0 %v1483
    %v12258 = vpop.f32.mrf.mxu0
    %v12259 = vadd.f32 %v12246, %v12258
    %v12260 = vpop.f32.mrf.mxu0
    %12261 = vdwg.mxu0
    %12262 = vmatpush.bf16.msra.mxu0 %v8827
    %12263 = vmatpush.bf16.msra.mxu0 %v8811
    %12264 = vmatpush.bf16.msra.mxu0 %v8795
    %12265 = vmatpush.bf16.msra.mxu0 %v8779
    %12266 = vmatpush.bf16.msra.mxu0 %v8763
    %12267 = vmatpush.bf16.msra.mxu0 %v8747
    %12268 = vmatpush.bf16.msra.mxu0 %v8731
    %12269 = vmatpush.bf16.msra.mxu0 %v8715
    %12270 = vmatmul.bf16.gmra.mxu0 %v1494
    %v12271 = vpop.f32.mrf.mxu0
    %v12272 = vadd.f32 %v12259, %v12271
    %v12273 = vpop.f32.mrf.mxu0
    %12274 = vdwg.mxu0
    %12275 = vmatpush.bf16.msra.mxu0 %v8955
    %12276 = vmatpush.bf16.msra.mxu0 %v8939
    %12277 = vmatpush.bf16.msra.mxu0 %v8923
    %12278 = vmatpush.bf16.msra.mxu0 %v8907
    %12279 = vmatpush.bf16.msra.mxu0 %v8891
    %12280 = vmatpush.bf16.msra.mxu0 %v8875
    %12281 = vmatpush.bf16.msra.mxu0 %v8859
    %12282 = vmatpush.bf16.msra.mxu0 %v8843
    %12283 = vmatmul.bf16.gmra.mxu0 %v1495
    %v12284 = vpop.f32.mrf.mxu0
    %v12285 = vadd.f32 %v12272, %v12284
    %v12286 = vpop.f32.mrf.mxu0
    %12287 = vdwg.mxu0
    %12288 = vmatpush.bf16.msra.mxu0 %v9083
    %12289 = vmatpush.bf16.msra.mxu0 %v9067
    %12290 = vmatpush.bf16.msra.mxu0 %v9051
    %12291 = vmatpush.bf16.msra.mxu0 %v9035
    %12292 = vmatpush.bf16.msra.mxu0 %v9019
    %12293 = vmatpush.bf16.msra.mxu0 %v9003
    %12294 = vmatpush.bf16.msra.mxu0 %v8987
    %12295 = vmatpush.bf16.msra.mxu0 %v8971
    %12296 = vmatmul.bf16.gmra.mxu0 %v1496
    %v12297 = vpop.f32.mrf.mxu0
    %v12298 = vadd.f32 %v12285, %v12297
    %v12299 = vpop.f32.mrf.mxu0
    %12300 = vdwg.mxu0
    %12301 = vmatpush.bf16.msra.mxu0 %v9211
    %12302 = vmatpush.bf16.msra.mxu0 %v9195
    %12303 = vmatpush.bf16.msra.mxu0 %v9179
    %12304 = vmatpush.bf16.msra.mxu0 %v9163
    %12305 = vmatpush.bf16.msra.mxu0 %v9147
    %12306 = vmatpush.bf16.msra.mxu0 %v9131
    %12307 = vmatpush.bf16.msra.mxu0 %v9115
    %12308 = vmatpush.bf16.msra.mxu0 %v9099
    %12309 = vmatmul.bf16.gmra.mxu0 %v1497
    %v12310 = vpop.f32.mrf.mxu0
    %v12311 = vadd.f32 %v12298, %v12310
    %v12312 = vpop.f32.mrf.mxu0
    %12313 = vdwg.mxu0
    %12314 = vmatpush.bf16.msra.mxu0 %v7804
    %12315 = vmatpush.bf16.msra.mxu0 %v7788
    %12316 = vmatpush.bf16.msra.mxu0 %v7772
    %12317 = vmatpush.bf16.msra.mxu0 %v7756
    %12318 = vmatpush.bf16.msra.mxu0 %v7740
    %12319 = vmatpush.bf16.msra.mxu0 %v7724
    %12320 = vmatpush.bf16.msra.mxu0 %v7708
    %12321 = vmatpush.bf16.msra.mxu0 %v7692
    %12322 = vmatmul.bf16.gmra.mxu0 %v1466
    %v12323 = vpop.f32.mrf.mxu0
    %v12324 = vadd.f32 %v3052, %v12323
    %v12325 = vpop.f32.mrf.mxu0
    %12326 = vdwg.mxu0
    %12327 = vmatpush.bf16.msra.mxu0 %v7932
    %12328 = vmatpush.bf16.msra.mxu0 %v7916
    %12329 = vmatpush.bf16.msra.mxu0 %v7900
    %12330 = vmatpush.bf16.msra.mxu0 %v7884
    %12331 = vmatpush.bf16.msra.mxu0 %v7868
    %12332 = vmatpush.bf16.msra.mxu0 %v7852
    %12333 = vmatpush.bf16.msra.mxu0 %v7836
    %12334 = vmatpush.bf16.msra.mxu0 %v7820
    %12335 = vmatmul.bf16.gmra.mxu0 %v1467
    %v12336 = vpop.f32.mrf.mxu0
    %v12337 = vadd.f32 %v12324, %v12336
    %v12338 = vpop.f32.mrf.mxu0
    %12339 = vdwg.mxu0
    %12340 = vmatpush.bf16.msra.mxu0 %v8060
    %12341 = vmatpush.bf16.msra.mxu0 %v8044
    %12342 = vmatpush.bf16.msra.mxu0 %v8028
    %12343 = vmatpush.bf16.msra.mxu0 %v8012
    %12344 = vmatpush.bf16.msra.mxu0 %v7996
    %12345 = vmatpush.bf16.msra.mxu0 %v7980
    %12346 = vmatpush.bf16.msra.mxu0 %v7964
    %12347 = vmatpush.bf16.msra.mxu0 %v7948
    %12348 = vmatmul.bf16.gmra.mxu0 %v1468
    %v12349 = vpop.f32.mrf.mxu0
    %v12350 = vadd.f32 %v12337, %v12349
    %v12351 = vpop.f32.mrf.mxu0
    %12352 = vdwg.mxu0
    %12353 = vmatpush.bf16.msra.mxu0 %v8188
    %12354 = vmatpush.bf16.msra.mxu0 %v8172
    %12355 = vmatpush.bf16.msra.mxu0 %v8156
    %12356 = vmatpush.bf16.msra.mxu0 %v8140
    %12357 = vmatpush.bf16.msra.mxu0 %v8124
    %12358 = vmatpush.bf16.msra.mxu0 %v8108
    %12359 = vmatpush.bf16.msra.mxu0 %v8092
    %12360 = vmatpush.bf16.msra.mxu0 %v8076
    %12361 = vmatmul.bf16.gmra.mxu0 %v1469
    %v12362 = vpop.f32.mrf.mxu0
    %v12363 = vadd.f32 %v12350, %v12362
    %v12364 = vpop.f32.mrf.mxu0
    %12365 = vdwg.mxu0
    %12366 = vmatpush.bf16.msra.mxu0 %v8316
    %12367 = vmatpush.bf16.msra.mxu0 %v8300
    %12368 = vmatpush.bf16.msra.mxu0 %v8284
    %12369 = vmatpush.bf16.msra.mxu0 %v8268
    %12370 = vmatpush.bf16.msra.mxu0 %v8252
    %12371 = vmatpush.bf16.msra.mxu0 %v8236
    %12372 = vmatpush.bf16.msra.mxu0 %v8220
    %12373 = vmatpush.bf16.msra.mxu0 %v8204
    %12374 = vmatmul.bf16.gmra.mxu0 %v1480
    %v12375 = vpop.f32.mrf.mxu0
    %v12376 = vadd.f32 %v12363, %v12375
    %v12377 = vpop.f32.mrf.mxu0
    %12378 = vdwg.mxu0
    %12379 = vmatpush.bf16.msra.mxu0 %v8444
    %12380 = vmatpush.bf16.msra.mxu0 %v8428
    %12381 = vmatpush.bf16.msra.mxu0 %v8412
    %12382 = vmatpush.bf16.msra.mxu0 %v8396
    %12383 = vmatpush.bf16.msra.mxu0 %v8380
    %12384 = vmatpush.bf16.msra.mxu0 %v8364
    %12385 = vmatpush.bf16.msra.mxu0 %v8348
    %12386 = vmatpush.bf16.msra.mxu0 %v8332
    %12387 = vmatmul.bf16.gmra.mxu0 %v1481
    %v12388 = vpop.f32.mrf.mxu0
    %v12389 = vadd.f32 %v12376, %v12388
    %v12390 = vpop.f32.mrf.mxu0
    %12391 = vdwg.mxu0
    %12392 = vmatpush.bf16.msra.mxu0 %v8572
    %12393 = vmatpush.bf16.msra.mxu0 %v8556
    %12394 = vmatpush.bf16.msra.mxu0 %v8540
    %12395 = vmatpush.bf16.msra.mxu0 %v8524
    %12396 = vmatpush.bf16.msra.mxu0 %v8508
    %12397 = vmatpush.bf16.msra.mxu0 %v8492
    %12398 = vmatpush.bf16.msra.mxu0 %v8476
    %12399 = vmatpush.bf16.msra.mxu0 %v8460
    %12400 = vmatmul.bf16.gmra.mxu0 %v1482
    %v12401 = vpop.f32.mrf.mxu0
    %v12402 = vadd.f32 %v12389, %v12401
    %v12403 = vpop.f32.mrf.mxu0
    %12404 = vdwg.mxu0
    %12405 = vmatpush.bf16.msra.mxu0 %v8700
    %12406 = vmatpush.bf16.msra.mxu0 %v8684
    %12407 = vmatpush.bf16.msra.mxu0 %v8668
    %12408 = vmatpush.bf16.msra.mxu0 %v8652
    %12409 = vmatpush.bf16.msra.mxu0 %v8636
    %12410 = vmatpush.bf16.msra.mxu0 %v8620
    %12411 = vmatpush.bf16.msra.mxu0 %v8604
    %12412 = vmatpush.bf16.msra.mxu0 %v8588
    %12413 = vmatmul.bf16.gmra.mxu0 %v1483
    %v12414 = vpop.f32.mrf.mxu0
    %v12415 = vadd.f32 %v12402, %v12414
    %v12416 = vpop.f32.mrf.mxu0
    %12417 = vdwg.mxu0
    %12418 = vmatpush.bf16.msra.mxu0 %v8828
    %12419 = vmatpush.bf16.msra.mxu0 %v8812
    %12420 = vmatpush.bf16.msra.mxu0 %v8796
    %12421 = vmatpush.bf16.msra.mxu0 %v8780
    %12422 = vmatpush.bf16.msra.mxu0 %v8764
    %12423 = vmatpush.bf16.msra.mxu0 %v8748
    %12424 = vmatpush.bf16.msra.mxu0 %v8732
    %12425 = vmatpush.bf16.msra.mxu0 %v8716
    %12426 = vmatmul.bf16.gmra.mxu0 %v1494
    %v12427 = vpop.f32.mrf.mxu0
    %v12428 = vadd.f32 %v12415, %v12427
    %v12429 = vpop.f32.mrf.mxu0
    %12430 = vdwg.mxu0
    %12431 = vmatpush.bf16.msra.mxu0 %v8956
    %12432 = vmatpush.bf16.msra.mxu0 %v8940
    %12433 = vmatpush.bf16.msra.mxu0 %v8924
    %12434 = vmatpush.bf16.msra.mxu0 %v8908
    %12435 = vmatpush.bf16.msra.mxu0 %v8892
    %12436 = vmatpush.bf16.msra.mxu0 %v8876
    %12437 = vmatpush.bf16.msra.mxu0 %v8860
    %12438 = vmatpush.bf16.msra.mxu0 %v8844
    %12439 = vmatmul.bf16.gmra.mxu0 %v1495
    %v12440 = vpop.f32.mrf.mxu0
    %v12441 = vadd.f32 %v12428, %v12440
    %v12442 = vpop.f32.mrf.mxu0
    %12443 = vdwg.mxu0
    %12444 = vmatpush.bf16.msra.mxu0 %v9084
    %12445 = vmatpush.bf16.msra.mxu0 %v9068
    %12446 = vmatpush.bf16.msra.mxu0 %v9052
    %12447 = vmatpush.bf16.msra.mxu0 %v9036
    %12448 = vmatpush.bf16.msra.mxu0 %v9020
    %12449 = vmatpush.bf16.msra.mxu0 %v9004
    %12450 = vmatpush.bf16.msra.mxu0 %v8988
    %12451 = vmatpush.bf16.msra.mxu0 %v8972
    %12452 = vmatmul.bf16.gmra.mxu0 %v1496
    %v12453 = vpop.f32.mrf.mxu0
    %v12454 = vadd.f32 %v12441, %v12453
    %v12455 = vpop.f32.mrf.mxu0
    %12456 = vdwg.mxu0
    %12457 = vmatpush.bf16.msra.mxu0 %v9212
    %12458 = vmatpush.bf16.msra.mxu0 %v9196
    %12459 = vmatpush.bf16.msra.mxu0 %v9180
    %12460 = vmatpush.bf16.msra.mxu0 %v9164
    %12461 = vmatpush.bf16.msra.mxu0 %v9148
    %12462 = vmatpush.bf16.msra.mxu0 %v9132
    %12463 = vmatpush.bf16.msra.mxu0 %v9116
    %12464 = vmatpush.bf16.msra.mxu0 %v9100
    %12465 = vmatmul.bf16.gmra.mxu0 %v1497
    %v12466 = vpop.f32.mrf.mxu0
    %v12467 = vadd.f32 %v12454, %v12466
    %v12468 = vpop.f32.mrf.mxu0
    %12469 = vdwg.mxu0
    %12470 = vmatpush.bf16.msra.mxu0 %v7805
    %12471 = vmatpush.bf16.msra.mxu0 %v7789
    %12472 = vmatpush.bf16.msra.mxu0 %v7773
    %12473 = vmatpush.bf16.msra.mxu0 %v7757
    %12474 = vmatpush.bf16.msra.mxu0 %v7741
    %12475 = vmatpush.bf16.msra.mxu0 %v7725
    %12476 = vmatpush.bf16.msra.mxu0 %v7709
    %12477 = vmatpush.bf16.msra.mxu0 %v7693
    %12478 = vmatmul.bf16.gmra.mxu0 %v1466
    %v12479 = vpop.f32.mrf.mxu0
    %v12480 = vadd.f32 %v3053, %v12479
    %v12481 = vpop.f32.mrf.mxu0
    %12482 = vdwg.mxu0
    %12483 = vmatpush.bf16.msra.mxu0 %v7933
    %12484 = vmatpush.bf16.msra.mxu0 %v7917
    %12485 = vmatpush.bf16.msra.mxu0 %v7901
    %12486 = vmatpush.bf16.msra.mxu0 %v7885
    %12487 = vmatpush.bf16.msra.mxu0 %v7869
    %12488 = vmatpush.bf16.msra.mxu0 %v7853
    %12489 = vmatpush.bf16.msra.mxu0 %v7837
    %12490 = vmatpush.bf16.msra.mxu0 %v7821
    %12491 = vmatmul.bf16.gmra.mxu0 %v1467
    %v12492 = vpop.f32.mrf.mxu0
    %v12493 = vadd.f32 %v12480, %v12492
    %v12494 = vpop.f32.mrf.mxu0
    %12495 = vdwg.mxu0
    %12496 = vmatpush.bf16.msra.mxu0 %v8061
    %12497 = vmatpush.bf16.msra.mxu0 %v8045
    %12498 = vmatpush.bf16.msra.mxu0 %v8029
    %12499 = vmatpush.bf16.msra.mxu0 %v8013
    %12500 = vmatpush.bf16.msra.mxu0 %v7997
    %12501 = vmatpush.bf16.msra.mxu0 %v7981
    %12502 = vmatpush.bf16.msra.mxu0 %v7965
    %12503 = vmatpush.bf16.msra.mxu0 %v7949
    %12504 = vmatmul.bf16.gmra.mxu0 %v1468
    %v12505 = vpop.f32.mrf.mxu0
    %v12506 = vadd.f32 %v12493, %v12505
    %v12507 = vpop.f32.mrf.mxu0
    %12508 = vdwg.mxu0
    %12509 = vmatpush.bf16.msra.mxu0 %v8189
    %12510 = vmatpush.bf16.msra.mxu0 %v8173
    %12511 = vmatpush.bf16.msra.mxu0 %v8157
    %12512 = vmatpush.bf16.msra.mxu0 %v8141
    %12513 = vmatpush.bf16.msra.mxu0 %v8125
    %12514 = vmatpush.bf16.msra.mxu0 %v8109
    %12515 = vmatpush.bf16.msra.mxu0 %v8093
    %12516 = vmatpush.bf16.msra.mxu0 %v8077
    %12517 = vmatmul.bf16.gmra.mxu0 %v1469
    %v12518 = vpop.f32.mrf.mxu0
    %v12519 = vadd.f32 %v12506, %v12518
    %v12520 = vpop.f32.mrf.mxu0
    %12521 = vdwg.mxu0
    %12522 = vmatpush.bf16.msra.mxu0 %v8317
    %12523 = vmatpush.bf16.msra.mxu0 %v8301
    %12524 = vmatpush.bf16.msra.mxu0 %v8285
    %12525 = vmatpush.bf16.msra.mxu0 %v8269
    %12526 = vmatpush.bf16.msra.mxu0 %v8253
    %12527 = vmatpush.bf16.msra.mxu0 %v8237
    %12528 = vmatpush.bf16.msra.mxu0 %v8221
    %12529 = vmatpush.bf16.msra.mxu0 %v8205
    %12530 = vmatmul.bf16.gmra.mxu0 %v1480
    %v12531 = vpop.f32.mrf.mxu0
    %v12532 = vadd.f32 %v12519, %v12531
    %v12533 = vpop.f32.mrf.mxu0
    %12534 = vdwg.mxu0
    %12535 = vmatpush.bf16.msra.mxu0 %v8445
    %12536 = vmatpush.bf16.msra.mxu0 %v8429
    %12537 = vmatpush.bf16.msra.mxu0 %v8413
    %12538 = vmatpush.bf16.msra.mxu0 %v8397
    %12539 = vmatpush.bf16.msra.mxu0 %v8381
    %12540 = vmatpush.bf16.msra.mxu0 %v8365
    %12541 = vmatpush.bf16.msra.mxu0 %v8349
    %12542 = vmatpush.bf16.msra.mxu0 %v8333
    %12543 = vmatmul.bf16.gmra.mxu0 %v1481
    %v12544 = vpop.f32.mrf.mxu0
    %v12545 = vadd.f32 %v12532, %v12544
    %v12546 = vpop.f32.mrf.mxu0
    %12547 = vdwg.mxu0
    %12548 = vmatpush.bf16.msra.mxu0 %v8573
    %12549 = vmatpush.bf16.msra.mxu0 %v8557
    %12550 = vmatpush.bf16.msra.mxu0 %v8541
    %12551 = vmatpush.bf16.msra.mxu0 %v8525
    %12552 = vmatpush.bf16.msra.mxu0 %v8509
    %12553 = vmatpush.bf16.msra.mxu0 %v8493
    %12554 = vmatpush.bf16.msra.mxu0 %v8477
    %12555 = vmatpush.bf16.msra.mxu0 %v8461
    %12556 = vmatmul.bf16.gmra.mxu0 %v1482
    %v12557 = vpop.f32.mrf.mxu0
    %v12558 = vadd.f32 %v12545, %v12557
    %v12559 = vpop.f32.mrf.mxu0
    %12560 = vdwg.mxu0
    %12561 = vmatpush.bf16.msra.mxu0 %v8701
    %12562 = vmatpush.bf16.msra.mxu0 %v8685
    %12563 = vmatpush.bf16.msra.mxu0 %v8669
    %12564 = vmatpush.bf16.msra.mxu0 %v8653
    %12565 = vmatpush.bf16.msra.mxu0 %v8637
    %12566 = vmatpush.bf16.msra.mxu0 %v8621
    %12567 = vmatpush.bf16.msra.mxu0 %v8605
    %12568 = vmatpush.bf16.msra.mxu0 %v8589
    %12569 = vmatmul.bf16.gmra.mxu0 %v1483
    %v12570 = vpop.f32.mrf.mxu0
    %v12571 = vadd.f32 %v12558, %v12570
    %v12572 = vpop.f32.mrf.mxu0
    %12573 = vdwg.mxu0
    %12574 = vmatpush.bf16.msra.mxu0 %v8829
    %12575 = vmatpush.bf16.msra.mxu0 %v8813
    %12576 = vmatpush.bf16.msra.mxu0 %v8797
    %12577 = vmatpush.bf16.msra.mxu0 %v8781
    %12578 = vmatpush.bf16.msra.mxu0 %v8765
    %12579 = vmatpush.bf16.msra.mxu0 %v8749
    %12580 = vmatpush.bf16.msra.mxu0 %v8733
    %12581 = vmatpush.bf16.msra.mxu0 %v8717
    %12582 = vmatmul.bf16.gmra.mxu0 %v1494
    %v12583 = vpop.f32.mrf.mxu0
    %v12584 = vadd.f32 %v12571, %v12583
    %v12585 = vpop.f32.mrf.mxu0
    %12586 = vdwg.mxu0
    %12587 = vmatpush.bf16.msra.mxu0 %v8957
    %12588 = vmatpush.bf16.msra.mxu0 %v8941
    %12589 = vmatpush.bf16.msra.mxu0 %v8925
    %12590 = vmatpush.bf16.msra.mxu0 %v8909
    %12591 = vmatpush.bf16.msra.mxu0 %v8893
    %12592 = vmatpush.bf16.msra.mxu0 %v8877
    %12593 = vmatpush.bf16.msra.mxu0 %v8861
    %12594 = vmatpush.bf16.msra.mxu0 %v8845
    %12595 = vmatmul.bf16.gmra.mxu0 %v1495
    %v12596 = vpop.f32.mrf.mxu0
    %v12597 = vadd.f32 %v12584, %v12596
    %v12598 = vpop.f32.mrf.mxu0
    %12599 = vdwg.mxu0
    %12600 = vmatpush.bf16.msra.mxu0 %v9085
    %12601 = vmatpush.bf16.msra.mxu0 %v9069
    %12602 = vmatpush.bf16.msra.mxu0 %v9053
    %12603 = vmatpush.bf16.msra.mxu0 %v9037
    %12604 = vmatpush.bf16.msra.mxu0 %v9021
    %12605 = vmatpush.bf16.msra.mxu0 %v9005
    %12606 = vmatpush.bf16.msra.mxu0 %v8989
    %12607 = vmatpush.bf16.msra.mxu0 %v8973
    %12608 = vmatmul.bf16.gmra.mxu0 %v1496
    %v12609 = vpop.f32.mrf.mxu0
    %v12610 = vadd.f32 %v12597, %v12609
    %v12611 = vpop.f32.mrf.mxu0
    %12612 = vdwg.mxu0
    %12613 = vmatpush.bf16.msra.mxu0 %v9213
    %12614 = vmatpush.bf16.msra.mxu0 %v9197
    %12615 = vmatpush.bf16.msra.mxu0 %v9181
    %12616 = vmatpush.bf16.msra.mxu0 %v9165
    %12617 = vmatpush.bf16.msra.mxu0 %v9149
    %12618 = vmatpush.bf16.msra.mxu0 %v9133
    %12619 = vmatpush.bf16.msra.mxu0 %v9117
    %12620 = vmatpush.bf16.msra.mxu0 %v9101
    %12621 = vmatmul.bf16.gmra.mxu0 %v1497
    %v12622 = vpop.f32.mrf.mxu0
    %v12623 = vadd.f32 %v12610, %v12622
    %v12624 = vpop.f32.mrf.mxu0
    %12625 = vdwg.mxu0
    %12626 = vmatpush.bf16.msra.mxu0 %v7806
    %12627 = vmatpush.bf16.msra.mxu0 %v7790
    %12628 = vmatpush.bf16.msra.mxu0 %v7774
    %12629 = vmatpush.bf16.msra.mxu0 %v7758
    %12630 = vmatpush.bf16.msra.mxu0 %v7742
    %12631 = vmatpush.bf16.msra.mxu0 %v7726
    %12632 = vmatpush.bf16.msra.mxu0 %v7710
    %12633 = vmatpush.bf16.msra.mxu0 %v7694
    %12634 = vmatmul.bf16.gmra.mxu0 %v1466
    %v12635 = vpop.f32.mrf.mxu0
    %v12636 = vadd.f32 %v3054, %v12635
    %v12637 = vpop.f32.mrf.mxu0
    %12638 = vdwg.mxu0
    %12639 = vmatpush.bf16.msra.mxu0 %v7934
    %12640 = vmatpush.bf16.msra.mxu0 %v7918
    %12641 = vmatpush.bf16.msra.mxu0 %v7902
    %12642 = vmatpush.bf16.msra.mxu0 %v7886
    %12643 = vmatpush.bf16.msra.mxu0 %v7870
    %12644 = vmatpush.bf16.msra.mxu0 %v7854
    %12645 = vmatpush.bf16.msra.mxu0 %v7838
    %12646 = vmatpush.bf16.msra.mxu0 %v7822
    %12647 = vmatmul.bf16.gmra.mxu0 %v1467
    %v12648 = vpop.f32.mrf.mxu0
    %v12649 = vadd.f32 %v12636, %v12648
    %v12650 = vpop.f32.mrf.mxu0
    %12651 = vdwg.mxu0
    %12652 = vmatpush.bf16.msra.mxu0 %v8062
    %12653 = vmatpush.bf16.msra.mxu0 %v8046
    %12654 = vmatpush.bf16.msra.mxu0 %v8030
    %12655 = vmatpush.bf16.msra.mxu0 %v8014
    %12656 = vmatpush.bf16.msra.mxu0 %v7998
    %12657 = vmatpush.bf16.msra.mxu0 %v7982
    %12658 = vmatpush.bf16.msra.mxu0 %v7966
    %12659 = vmatpush.bf16.msra.mxu0 %v7950
    %12660 = vmatmul.bf16.gmra.mxu0 %v1468
    %v12661 = vpop.f32.mrf.mxu0
    %v12662 = vadd.f32 %v12649, %v12661
    %v12663 = vpop.f32.mrf.mxu0
    %12664 = vdwg.mxu0
    %12665 = vmatpush.bf16.msra.mxu0 %v8190
    %12666 = vmatpush.bf16.msra.mxu0 %v8174
    %12667 = vmatpush.bf16.msra.mxu0 %v8158
    %12668 = vmatpush.bf16.msra.mxu0 %v8142
    %12669 = vmatpush.bf16.msra.mxu0 %v8126
    %12670 = vmatpush.bf16.msra.mxu0 %v8110
    %12671 = vmatpush.bf16.msra.mxu0 %v8094
    %12672 = vmatpush.bf16.msra.mxu0 %v8078
    %12673 = vmatmul.bf16.gmra.mxu0 %v1469
    %v12674 = vpop.f32.mrf.mxu0
    %v12675 = vadd.f32 %v12662, %v12674
    %v12676 = vpop.f32.mrf.mxu0
    %12677 = vdwg.mxu0
    %12678 = vmatpush.bf16.msra.mxu0 %v8318
    %12679 = vmatpush.bf16.msra.mxu0 %v8302
    %12680 = vmatpush.bf16.msra.mxu0 %v8286
    %12681 = vmatpush.bf16.msra.mxu0 %v8270
    %12682 = vmatpush.bf16.msra.mxu0 %v8254
    %12683 = vmatpush.bf16.msra.mxu0 %v8238
    %12684 = vmatpush.bf16.msra.mxu0 %v8222
    %12685 = vmatpush.bf16.msra.mxu0 %v8206
    %12686 = vmatmul.bf16.gmra.mxu0 %v1480
    %v12687 = vpop.f32.mrf.mxu0
    %v12688 = vadd.f32 %v12675, %v12687
    %v12689 = vpop.f32.mrf.mxu0
    %12690 = vdwg.mxu0
    %12691 = vmatpush.bf16.msra.mxu0 %v8446
    %12692 = vmatpush.bf16.msra.mxu0 %v8430
    %12693 = vmatpush.bf16.msra.mxu0 %v8414
    %12694 = vmatpush.bf16.msra.mxu0 %v8398
    %12695 = vmatpush.bf16.msra.mxu0 %v8382
    %12696 = vmatpush.bf16.msra.mxu0 %v8366
    %12697 = vmatpush.bf16.msra.mxu0 %v8350
    %12698 = vmatpush.bf16.msra.mxu0 %v8334
    %12699 = vmatmul.bf16.gmra.mxu0 %v1481
    %v12700 = vpop.f32.mrf.mxu0
    %v12701 = vadd.f32 %v12688, %v12700
    %v12702 = vpop.f32.mrf.mxu0
    %12703 = vdwg.mxu0
    %12704 = vmatpush.bf16.msra.mxu0 %v8574
    %12705 = vmatpush.bf16.msra.mxu0 %v8558
    %12706 = vmatpush.bf16.msra.mxu0 %v8542
    %12707 = vmatpush.bf16.msra.mxu0 %v8526
    %12708 = vmatpush.bf16.msra.mxu0 %v8510
    %12709 = vmatpush.bf16.msra.mxu0 %v8494
    %12710 = vmatpush.bf16.msra.mxu0 %v8478
    %12711 = vmatpush.bf16.msra.mxu0 %v8462
    %12712 = vmatmul.bf16.gmra.mxu0 %v1482
    %v12713 = vpop.f32.mrf.mxu0
    %v12714 = vadd.f32 %v12701, %v12713
    %v12715 = vpop.f32.mrf.mxu0
    %12716 = vdwg.mxu0
    %12717 = vmatpush.bf16.msra.mxu0 %v8702
    %12718 = vmatpush.bf16.msra.mxu0 %v8686
    %12719 = vmatpush.bf16.msra.mxu0 %v8670
    %12720 = vmatpush.bf16.msra.mxu0 %v8654
    %12721 = vmatpush.bf16.msra.mxu0 %v8638
    %12722 = vmatpush.bf16.msra.mxu0 %v8622
    %12723 = vmatpush.bf16.msra.mxu0 %v8606
    %12724 = vmatpush.bf16.msra.mxu0 %v8590
    %12725 = vmatmul.bf16.gmra.mxu0 %v1483
    %v12726 = vpop.f32.mrf.mxu0
    %v12727 = vadd.f32 %v12714, %v12726
    %v12728 = vpop.f32.mrf.mxu0
    %12729 = vdwg.mxu0
    %12730 = vmatpush.bf16.msra.mxu0 %v8830
    %12731 = vmatpush.bf16.msra.mxu0 %v8814
    %12732 = vmatpush.bf16.msra.mxu0 %v8798
    %12733 = vmatpush.bf16.msra.mxu0 %v8782
    %12734 = vmatpush.bf16.msra.mxu0 %v8766
    %12735 = vmatpush.bf16.msra.mxu0 %v8750
    %12736 = vmatpush.bf16.msra.mxu0 %v8734
    %12737 = vmatpush.bf16.msra.mxu0 %v8718
    %12738 = vmatmul.bf16.gmra.mxu0 %v1494
    %v12739 = vpop.f32.mrf.mxu0
    %v12740 = vadd.f32 %v12727, %v12739
    %v12741 = vpop.f32.mrf.mxu0
    %12742 = vdwg.mxu0
    %12743 = vmatpush.bf16.msra.mxu0 %v8958
    %12744 = vmatpush.bf16.msra.mxu0 %v8942
    %12745 = vmatpush.bf16.msra.mxu0 %v8926
    %12746 = vmatpush.bf16.msra.mxu0 %v8910
    %12747 = vmatpush.bf16.msra.mxu0 %v8894
    %12748 = vmatpush.bf16.msra.mxu0 %v8878
    %12749 = vmatpush.bf16.msra.mxu0 %v8862
    %12750 = vmatpush.bf16.msra.mxu0 %v8846
    %12751 = vmatmul.bf16.gmra.mxu0 %v1495
    %v12752 = vpop.f32.mrf.mxu0
    %v12753 = vadd.f32 %v12740, %v12752
    %v12754 = vpop.f32.mrf.mxu0
    %12755 = vdwg.mxu0
    %12756 = vmatpush.bf16.msra.mxu0 %v9086
    %12757 = vmatpush.bf16.msra.mxu0 %v9070
    %12758 = vmatpush.bf16.msra.mxu0 %v9054
    %12759 = vmatpush.bf16.msra.mxu0 %v9038
    %12760 = vmatpush.bf16.msra.mxu0 %v9022
    %12761 = vmatpush.bf16.msra.mxu0 %v9006
    %12762 = vmatpush.bf16.msra.mxu0 %v8990
    %12763 = vmatpush.bf16.msra.mxu0 %v8974
    %12764 = vmatmul.bf16.gmra.mxu0 %v1496
    %v12765 = vpop.f32.mrf.mxu0
    %v12766 = vadd.f32 %v12753, %v12765
    %v12767 = vpop.f32.mrf.mxu0
    %12768 = vdwg.mxu0
    %12769 = vmatpush.bf16.msra.mxu0 %v9214
    %12770 = vmatpush.bf16.msra.mxu0 %v9198
    %12771 = vmatpush.bf16.msra.mxu0 %v9182
    %12772 = vmatpush.bf16.msra.mxu0 %v9166
    %12773 = vmatpush.bf16.msra.mxu0 %v9150
    %12774 = vmatpush.bf16.msra.mxu0 %v9134
    %12775 = vmatpush.bf16.msra.mxu0 %v9118
    %12776 = vmatpush.bf16.msra.mxu0 %v9102
    %12777 = vmatmul.bf16.gmra.mxu0 %v1497
    %v12778 = vpop.f32.mrf.mxu0
    %v12779 = vadd.f32 %v12766, %v12778
    %v12780 = vpop.f32.mrf.mxu0
    %12781 = vdwg.mxu0
    %12782 = vmatpush.bf16.msra.mxu0 %v7807
    %12783 = vmatpush.bf16.msra.mxu0 %v7791
    %12784 = vmatpush.bf16.msra.mxu0 %v7775
    %12785 = vmatpush.bf16.msra.mxu0 %v7759
    %12786 = vmatpush.bf16.msra.mxu0 %v7743
    %12787 = vmatpush.bf16.msra.mxu0 %v7727
    %12788 = vmatpush.bf16.msra.mxu0 %v7711
    %12789 = vmatpush.bf16.msra.mxu0 %v7695
    %12790 = vmatmul.bf16.gmra.mxu0 %v1466
    %v12791 = vpop.f32.mrf.mxu0
    %v12792 = vadd.f32 %v3055, %v12791
    %v12793 = vpop.f32.mrf.mxu0
    %12794 = vdwg.mxu0
    %12795 = vmatpush.bf16.msra.mxu0 %v7935
    %12796 = vmatpush.bf16.msra.mxu0 %v7919
    %12797 = vmatpush.bf16.msra.mxu0 %v7903
    %12798 = vmatpush.bf16.msra.mxu0 %v7887
    %12799 = vmatpush.bf16.msra.mxu0 %v7871
    %12800 = vmatpush.bf16.msra.mxu0 %v7855
    %12801 = vmatpush.bf16.msra.mxu0 %v7839
    %12802 = vmatpush.bf16.msra.mxu0 %v7823
    %12803 = vmatmul.bf16.gmra.mxu0 %v1467
    %v12804 = vpop.f32.mrf.mxu0
    %v12805 = vadd.f32 %v12792, %v12804
    %v12806 = vpop.f32.mrf.mxu0
    %12807 = vdwg.mxu0
    %12808 = vmatpush.bf16.msra.mxu0 %v8063
    %12809 = vmatpush.bf16.msra.mxu0 %v8047
    %12810 = vmatpush.bf16.msra.mxu0 %v8031
    %12811 = vmatpush.bf16.msra.mxu0 %v8015
    %12812 = vmatpush.bf16.msra.mxu0 %v7999
    %12813 = vmatpush.bf16.msra.mxu0 %v7983
    %12814 = vmatpush.bf16.msra.mxu0 %v7967
    %12815 = vmatpush.bf16.msra.mxu0 %v7951
    %12816 = vmatmul.bf16.gmra.mxu0 %v1468
    %v12817 = vpop.f32.mrf.mxu0
    %v12818 = vadd.f32 %v12805, %v12817
    %v12819 = vpop.f32.mrf.mxu0
    %12820 = vdwg.mxu0
    %12821 = vmatpush.bf16.msra.mxu0 %v8191
    %12822 = vmatpush.bf16.msra.mxu0 %v8175
    %12823 = vmatpush.bf16.msra.mxu0 %v8159
    %12824 = vmatpush.bf16.msra.mxu0 %v8143
    %12825 = vmatpush.bf16.msra.mxu0 %v8127
    %12826 = vmatpush.bf16.msra.mxu0 %v8111
    %12827 = vmatpush.bf16.msra.mxu0 %v8095
    %12828 = vmatpush.bf16.msra.mxu0 %v8079
    %12829 = vmatmul.bf16.gmra.mxu0 %v1469
    %v12830 = vpop.f32.mrf.mxu0
    %v12831 = vadd.f32 %v12818, %v12830
    %v12832 = vpop.f32.mrf.mxu0
    %12833 = vdwg.mxu0
    %12834 = vmatpush.bf16.msra.mxu0 %v8319
    %12835 = vmatpush.bf16.msra.mxu0 %v8303
    %12836 = vmatpush.bf16.msra.mxu0 %v8287
    %12837 = vmatpush.bf16.msra.mxu0 %v8271
    %12838 = vmatpush.bf16.msra.mxu0 %v8255
    %12839 = vmatpush.bf16.msra.mxu0 %v8239
    %12840 = vmatpush.bf16.msra.mxu0 %v8223
    %12841 = vmatpush.bf16.msra.mxu0 %v8207
    %12842 = vmatmul.bf16.gmra.mxu0 %v1480
    %v12843 = vpop.f32.mrf.mxu0
    %v12844 = vadd.f32 %v12831, %v12843
    %v12845 = vpop.f32.mrf.mxu0
    %12846 = vdwg.mxu0
    %12847 = vmatpush.bf16.msra.mxu0 %v8447
    %12848 = vmatpush.bf16.msra.mxu0 %v8431
    %12849 = vmatpush.bf16.msra.mxu0 %v8415
    %12850 = vmatpush.bf16.msra.mxu0 %v8399
    %12851 = vmatpush.bf16.msra.mxu0 %v8383
    %12852 = vmatpush.bf16.msra.mxu0 %v8367
    %12853 = vmatpush.bf16.msra.mxu0 %v8351
    %12854 = vmatpush.bf16.msra.mxu0 %v8335
    %12855 = vmatmul.bf16.gmra.mxu0 %v1481
    %v12856 = vpop.f32.mrf.mxu0
    %v12857 = vadd.f32 %v12844, %v12856
    %v12858 = vpop.f32.mrf.mxu0
    %12859 = vdwg.mxu0
    %12860 = vmatpush.bf16.msra.mxu0 %v8575
    %12861 = vmatpush.bf16.msra.mxu0 %v8559
    %12862 = vmatpush.bf16.msra.mxu0 %v8543
    %12863 = vmatpush.bf16.msra.mxu0 %v8527
    %12864 = vmatpush.bf16.msra.mxu0 %v8511
    %12865 = vmatpush.bf16.msra.mxu0 %v8495
    %12866 = vmatpush.bf16.msra.mxu0 %v8479
    %12867 = vmatpush.bf16.msra.mxu0 %v8463
    %12868 = vmatmul.bf16.gmra.mxu0 %v1482
    %v12869 = vpop.f32.mrf.mxu0
    %v12870 = vadd.f32 %v12857, %v12869
    %v12871 = vpop.f32.mrf.mxu0
    %12872 = vdwg.mxu0
    %12873 = vmatpush.bf16.msra.mxu0 %v8703
    %12874 = vmatpush.bf16.msra.mxu0 %v8687
    %12875 = vmatpush.bf16.msra.mxu0 %v8671
    %12876 = vmatpush.bf16.msra.mxu0 %v8655
    %12877 = vmatpush.bf16.msra.mxu0 %v8639
    %12878 = vmatpush.bf16.msra.mxu0 %v8623
    %12879 = vmatpush.bf16.msra.mxu0 %v8607
    %12880 = vmatpush.bf16.msra.mxu0 %v8591
    %12881 = vmatmul.bf16.gmra.mxu0 %v1483
    %v12882 = vpop.f32.mrf.mxu0
    %v12883 = vadd.f32 %v12870, %v12882
    %v12884 = vpop.f32.mrf.mxu0
    %12885 = vdwg.mxu0
    %12886 = vmatpush.bf16.msra.mxu0 %v8831
    %12887 = vmatpush.bf16.msra.mxu0 %v8815
    %12888 = vmatpush.bf16.msra.mxu0 %v8799
    %12889 = vmatpush.bf16.msra.mxu0 %v8783
    %12890 = vmatpush.bf16.msra.mxu0 %v8767
    %12891 = vmatpush.bf16.msra.mxu0 %v8751
    %12892 = vmatpush.bf16.msra.mxu0 %v8735
    %12893 = vmatpush.bf16.msra.mxu0 %v8719
    %12894 = vmatmul.bf16.gmra.mxu0 %v1494
    %v12895 = vpop.f32.mrf.mxu0
    %v12896 = vadd.f32 %v12883, %v12895
    %v12897 = vpop.f32.mrf.mxu0
    %12898 = vdwg.mxu0
    %12899 = vmatpush.bf16.msra.mxu0 %v8959
    %12900 = vmatpush.bf16.msra.mxu0 %v8943
    %12901 = vmatpush.bf16.msra.mxu0 %v8927
    %12902 = vmatpush.bf16.msra.mxu0 %v8911
    %12903 = vmatpush.bf16.msra.mxu0 %v8895
    %12904 = vmatpush.bf16.msra.mxu0 %v8879
    %12905 = vmatpush.bf16.msra.mxu0 %v8863
    %12906 = vmatpush.bf16.msra.mxu0 %v8847
    %12907 = vmatmul.bf16.gmra.mxu0 %v1495
    %v12908 = vpop.f32.mrf.mxu0
    %v12909 = vadd.f32 %v12896, %v12908
    %v12910 = vpop.f32.mrf.mxu0
    %12911 = vdwg.mxu0
    %12912 = vmatpush.bf16.msra.mxu0 %v9087
    %12913 = vmatpush.bf16.msra.mxu0 %v9071
    %12914 = vmatpush.bf16.msra.mxu0 %v9055
    %12915 = vmatpush.bf16.msra.mxu0 %v9039
    %12916 = vmatpush.bf16.msra.mxu0 %v9023
    %12917 = vmatpush.bf16.msra.mxu0 %v9007
    %12918 = vmatpush.bf16.msra.mxu0 %v8991
    %12919 = vmatpush.bf16.msra.mxu0 %v8975
    %12920 = vmatmul.bf16.gmra.mxu0 %v1496
    %v12921 = vpop.f32.mrf.mxu0
    %v12922 = vadd.f32 %v12909, %v12921
    %v12923 = vpop.f32.mrf.mxu0
    %12924 = vdwg.mxu0
    %12925 = vmatpush.bf16.msra.mxu0 %v9215
    %12926 = vmatpush.bf16.msra.mxu0 %v9199
    %12927 = vmatpush.bf16.msra.mxu0 %v9183
    %12928 = vmatpush.bf16.msra.mxu0 %v9167
    %12929 = vmatpush.bf16.msra.mxu0 %v9151
    %12930 = vmatpush.bf16.msra.mxu0 %v9135
    %12931 = vmatpush.bf16.msra.mxu0 %v9119
    %12932 = vmatpush.bf16.msra.mxu0 %v9103
    %12933 = vmatmul.bf16.gmra.mxu0 %v1497
    %v12934 = vpop.f32.mrf.mxu0
    %v12935 = vadd.f32 %v12922, %v12934
    %v12936 = vpop.f32.mrf.mxu0
    %12937 = vdwg.mxu0
    %12938 = vmatpush.bf16.msra.mxu0 %v7808
    %12939 = vmatpush.bf16.msra.mxu0 %v7792
    %12940 = vmatpush.bf16.msra.mxu0 %v7776
    %12941 = vmatpush.bf16.msra.mxu0 %v7760
    %12942 = vmatpush.bf16.msra.mxu0 %v7744
    %12943 = vmatpush.bf16.msra.mxu0 %v7728
    %12944 = vmatpush.bf16.msra.mxu0 %v7712
    %12945 = vmatpush.bf16.msra.mxu0 %v7696
    %12946 = vmatmul.bf16.gmra.mxu0 %v1466
    %v12947 = vpop.f32.mrf.mxu0
    %v12948 = vadd.f32 %v3056, %v12947
    %v12949 = vpop.f32.mrf.mxu0
    %12950 = vdwg.mxu0
    %12951 = vmatpush.bf16.msra.mxu0 %v7936
    %12952 = vmatpush.bf16.msra.mxu0 %v7920
    %12953 = vmatpush.bf16.msra.mxu0 %v7904
    %12954 = vmatpush.bf16.msra.mxu0 %v7888
    %12955 = vmatpush.bf16.msra.mxu0 %v7872
    %12956 = vmatpush.bf16.msra.mxu0 %v7856
    %12957 = vmatpush.bf16.msra.mxu0 %v7840
    %12958 = vmatpush.bf16.msra.mxu0 %v7824
    %12959 = vmatmul.bf16.gmra.mxu0 %v1467
    %v12960 = vpop.f32.mrf.mxu0
    %v12961 = vadd.f32 %v12948, %v12960
    %v12962 = vpop.f32.mrf.mxu0
    %12963 = vdwg.mxu0
    %12964 = vmatpush.bf16.msra.mxu0 %v8064
    %12965 = vmatpush.bf16.msra.mxu0 %v8048
    %12966 = vmatpush.bf16.msra.mxu0 %v8032
    %12967 = vmatpush.bf16.msra.mxu0 %v8016
    %12968 = vmatpush.bf16.msra.mxu0 %v8000
    %12969 = vmatpush.bf16.msra.mxu0 %v7984
    %12970 = vmatpush.bf16.msra.mxu0 %v7968
    %12971 = vmatpush.bf16.msra.mxu0 %v7952
    %12972 = vmatmul.bf16.gmra.mxu0 %v1468
    %v12973 = vpop.f32.mrf.mxu0
    %v12974 = vadd.f32 %v12961, %v12973
    %v12975 = vpop.f32.mrf.mxu0
    %12976 = vdwg.mxu0
    %12977 = vmatpush.bf16.msra.mxu0 %v8192
    %12978 = vmatpush.bf16.msra.mxu0 %v8176
    %12979 = vmatpush.bf16.msra.mxu0 %v8160
    %12980 = vmatpush.bf16.msra.mxu0 %v8144
    %12981 = vmatpush.bf16.msra.mxu0 %v8128
    %12982 = vmatpush.bf16.msra.mxu0 %v8112
    %12983 = vmatpush.bf16.msra.mxu0 %v8096
    %12984 = vmatpush.bf16.msra.mxu0 %v8080
    %12985 = vmatmul.bf16.gmra.mxu0 %v1469
    %v12986 = vpop.f32.mrf.mxu0
    %v12987 = vadd.f32 %v12974, %v12986
    %v12988 = vpop.f32.mrf.mxu0
    %12989 = vdwg.mxu0
    %12990 = vmatpush.bf16.msra.mxu0 %v8320
    %12991 = vmatpush.bf16.msra.mxu0 %v8304
    %12992 = vmatpush.bf16.msra.mxu0 %v8288
    %12993 = vmatpush.bf16.msra.mxu0 %v8272
    %12994 = vmatpush.bf16.msra.mxu0 %v8256
    %12995 = vmatpush.bf16.msra.mxu0 %v8240
    %12996 = vmatpush.bf16.msra.mxu0 %v8224
    %12997 = vmatpush.bf16.msra.mxu0 %v8208
    %12998 = vmatmul.bf16.gmra.mxu0 %v1480
    %v12999 = vpop.f32.mrf.mxu0
    %v13000 = vadd.f32 %v12987, %v12999
    %v13001 = vpop.f32.mrf.mxu0
    %13002 = vdwg.mxu0
    %13003 = vmatpush.bf16.msra.mxu0 %v8448
    %13004 = vmatpush.bf16.msra.mxu0 %v8432
    %13005 = vmatpush.bf16.msra.mxu0 %v8416
    %13006 = vmatpush.bf16.msra.mxu0 %v8400
    %13007 = vmatpush.bf16.msra.mxu0 %v8384
    %13008 = vmatpush.bf16.msra.mxu0 %v8368
    %13009 = vmatpush.bf16.msra.mxu0 %v8352
    %13010 = vmatpush.bf16.msra.mxu0 %v8336
    %13011 = vmatmul.bf16.gmra.mxu0 %v1481
    %v13012 = vpop.f32.mrf.mxu0
    %v13013 = vadd.f32 %v13000, %v13012
    %v13014 = vpop.f32.mrf.mxu0
    %13015 = vdwg.mxu0
    %13016 = vmatpush.bf16.msra.mxu0 %v8576
    %13017 = vmatpush.bf16.msra.mxu0 %v8560
    %13018 = vmatpush.bf16.msra.mxu0 %v8544
    %13019 = vmatpush.bf16.msra.mxu0 %v8528
    %13020 = vmatpush.bf16.msra.mxu0 %v8512
    %13021 = vmatpush.bf16.msra.mxu0 %v8496
    %13022 = vmatpush.bf16.msra.mxu0 %v8480
    %13023 = vmatpush.bf16.msra.mxu0 %v8464
    %13024 = vmatmul.bf16.gmra.mxu0 %v1482
    %v13025 = vpop.f32.mrf.mxu0
    %v13026 = vadd.f32 %v13013, %v13025
    %v13027 = vpop.f32.mrf.mxu0
    %13028 = vdwg.mxu0
    %13029 = vmatpush.bf16.msra.mxu0 %v8704
    %13030 = vmatpush.bf16.msra.mxu0 %v8688
    %13031 = vmatpush.bf16.msra.mxu0 %v8672
    %13032 = vmatpush.bf16.msra.mxu0 %v8656
    %13033 = vmatpush.bf16.msra.mxu0 %v8640
    %13034 = vmatpush.bf16.msra.mxu0 %v8624
    %13035 = vmatpush.bf16.msra.mxu0 %v8608
    %13036 = vmatpush.bf16.msra.mxu0 %v8592
    %13037 = vmatmul.bf16.gmra.mxu0 %v1483
    %v13038 = vpop.f32.mrf.mxu0
    %v13039 = vadd.f32 %v13026, %v13038
    %v13040 = vpop.f32.mrf.mxu0
    %13041 = vdwg.mxu0
    %13042 = vmatpush.bf16.msra.mxu0 %v8832
    %13043 = vmatpush.bf16.msra.mxu0 %v8816
    %13044 = vmatpush.bf16.msra.mxu0 %v8800
    %13045 = vmatpush.bf16.msra.mxu0 %v8784
    %13046 = vmatpush.bf16.msra.mxu0 %v8768
    %13047 = vmatpush.bf16.msra.mxu0 %v8752
    %13048 = vmatpush.bf16.msra.mxu0 %v8736
    %13049 = vmatpush.bf16.msra.mxu0 %v8720
    %13050 = vmatmul.bf16.gmra.mxu0 %v1494
    %v13051 = vpop.f32.mrf.mxu0
    %v13052 = vadd.f32 %v13039, %v13051
    %v13053 = vpop.f32.mrf.mxu0
    %13054 = vdwg.mxu0
    %13055 = vmatpush.bf16.msra.mxu0 %v8960
    %13056 = vmatpush.bf16.msra.mxu0 %v8944
    %13057 = vmatpush.bf16.msra.mxu0 %v8928
    %13058 = vmatpush.bf16.msra.mxu0 %v8912
    %13059 = vmatpush.bf16.msra.mxu0 %v8896
    %13060 = vmatpush.bf16.msra.mxu0 %v8880
    %13061 = vmatpush.bf16.msra.mxu0 %v8864
    %13062 = vmatpush.bf16.msra.mxu0 %v8848
    %13063 = vmatmul.bf16.gmra.mxu0 %v1495
    %v13064 = vpop.f32.mrf.mxu0
    %v13065 = vadd.f32 %v13052, %v13064
    %v13066 = vpop.f32.mrf.mxu0
    %13067 = vdwg.mxu0
    %13068 = vmatpush.bf16.msra.mxu0 %v9088
    %13069 = vmatpush.bf16.msra.mxu0 %v9072
    %13070 = vmatpush.bf16.msra.mxu0 %v9056
    %13071 = vmatpush.bf16.msra.mxu0 %v9040
    %13072 = vmatpush.bf16.msra.mxu0 %v9024
    %13073 = vmatpush.bf16.msra.mxu0 %v9008
    %13074 = vmatpush.bf16.msra.mxu0 %v8992
    %13075 = vmatpush.bf16.msra.mxu0 %v8976
    %13076 = vmatmul.bf16.gmra.mxu0 %v1496
    %v13077 = vpop.f32.mrf.mxu0
    %v13078 = vadd.f32 %v13065, %v13077
    %v13079 = vpop.f32.mrf.mxu0
    %13080 = vdwg.mxu0
    %13081 = vmatpush.bf16.msra.mxu0 %v9216
    %13082 = vmatpush.bf16.msra.mxu0 %v9200
    %13083 = vmatpush.bf16.msra.mxu0 %v9184
    %13084 = vmatpush.bf16.msra.mxu0 %v9168
    %13085 = vmatpush.bf16.msra.mxu0 %v9152
    %13086 = vmatpush.bf16.msra.mxu0 %v9136
    %13087 = vmatpush.bf16.msra.mxu0 %v9120
    %13088 = vmatpush.bf16.msra.mxu0 %v9104
    %13089 = vmatmul.bf16.gmra.mxu0 %v1497
    %v13090 = vpop.f32.mrf.mxu0
    %v13091 = vadd.f32 %v13078, %v13090
    %v13092 = vpop.f32.mrf.mxu0
    %13093 = vdwg.mxu0
    %13094 = vmatpush.bf16.msra.mxu0 %v7809
    %13095 = vmatpush.bf16.msra.mxu0 %v7793
    %13096 = vmatpush.bf16.msra.mxu0 %v7777
    %13097 = vmatpush.bf16.msra.mxu0 %v7761
    %13098 = vmatpush.bf16.msra.mxu0 %v7745
    %13099 = vmatpush.bf16.msra.mxu0 %v7729
    %13100 = vmatpush.bf16.msra.mxu0 %v7713
    %13101 = vmatpush.bf16.msra.mxu0 %v7697
    %13102 = vmatmul.bf16.gmra.mxu0 %v1466
    %v13103 = vpop.f32.mrf.mxu0
    %v13104 = vadd.f32 %v3057, %v13103
    %v13105 = vpop.f32.mrf.mxu0
    %13106 = vdwg.mxu0
    %13107 = vmatpush.bf16.msra.mxu0 %v7937
    %13108 = vmatpush.bf16.msra.mxu0 %v7921
    %13109 = vmatpush.bf16.msra.mxu0 %v7905
    %13110 = vmatpush.bf16.msra.mxu0 %v7889
    %13111 = vmatpush.bf16.msra.mxu0 %v7873
    %13112 = vmatpush.bf16.msra.mxu0 %v7857
    %13113 = vmatpush.bf16.msra.mxu0 %v7841
    %13114 = vmatpush.bf16.msra.mxu0 %v7825
    %13115 = vmatmul.bf16.gmra.mxu0 %v1467
    %v13116 = vpop.f32.mrf.mxu0
    %v13117 = vadd.f32 %v13104, %v13116
    %v13118 = vpop.f32.mrf.mxu0
    %13119 = vdwg.mxu0
    %13120 = vmatpush.bf16.msra.mxu0 %v8065
    %13121 = vmatpush.bf16.msra.mxu0 %v8049
    %13122 = vmatpush.bf16.msra.mxu0 %v8033
    %13123 = vmatpush.bf16.msra.mxu0 %v8017
    %13124 = vmatpush.bf16.msra.mxu0 %v8001
    %13125 = vmatpush.bf16.msra.mxu0 %v7985
    %13126 = vmatpush.bf16.msra.mxu0 %v7969
    %13127 = vmatpush.bf16.msra.mxu0 %v7953
    %13128 = vmatmul.bf16.gmra.mxu0 %v1468
    %v13129 = vpop.f32.mrf.mxu0
    %v13130 = vadd.f32 %v13117, %v13129
    %v13131 = vpop.f32.mrf.mxu0
    %13132 = vdwg.mxu0
    %13133 = vmatpush.bf16.msra.mxu0 %v8193
    %13134 = vmatpush.bf16.msra.mxu0 %v8177
    %13135 = vmatpush.bf16.msra.mxu0 %v8161
    %13136 = vmatpush.bf16.msra.mxu0 %v8145
    %13137 = vmatpush.bf16.msra.mxu0 %v8129
    %13138 = vmatpush.bf16.msra.mxu0 %v8113
    %13139 = vmatpush.bf16.msra.mxu0 %v8097
    %13140 = vmatpush.bf16.msra.mxu0 %v8081
    %13141 = vmatmul.bf16.gmra.mxu0 %v1469
    %v13142 = vpop.f32.mrf.mxu0
    %v13143 = vadd.f32 %v13130, %v13142
    %v13144 = vpop.f32.mrf.mxu0
    %13145 = vdwg.mxu0
    %13146 = vmatpush.bf16.msra.mxu0 %v8321
    %13147 = vmatpush.bf16.msra.mxu0 %v8305
    %13148 = vmatpush.bf16.msra.mxu0 %v8289
    %13149 = vmatpush.bf16.msra.mxu0 %v8273
    %13150 = vmatpush.bf16.msra.mxu0 %v8257
    %13151 = vmatpush.bf16.msra.mxu0 %v8241
    %13152 = vmatpush.bf16.msra.mxu0 %v8225
    %13153 = vmatpush.bf16.msra.mxu0 %v8209
    %13154 = vmatmul.bf16.gmra.mxu0 %v1480
    %v13155 = vpop.f32.mrf.mxu0
    %v13156 = vadd.f32 %v13143, %v13155
    %v13157 = vpop.f32.mrf.mxu0
    %13158 = vdwg.mxu0
    %13159 = vmatpush.bf16.msra.mxu0 %v8449
    %13160 = vmatpush.bf16.msra.mxu0 %v8433
    %13161 = vmatpush.bf16.msra.mxu0 %v8417
    %13162 = vmatpush.bf16.msra.mxu0 %v8401
    %13163 = vmatpush.bf16.msra.mxu0 %v8385
    %13164 = vmatpush.bf16.msra.mxu0 %v8369
    %13165 = vmatpush.bf16.msra.mxu0 %v8353
    %13166 = vmatpush.bf16.msra.mxu0 %v8337
    %13167 = vmatmul.bf16.gmra.mxu0 %v1481
    %v13168 = vpop.f32.mrf.mxu0
    %v13169 = vadd.f32 %v13156, %v13168
    %v13170 = vpop.f32.mrf.mxu0
    %13171 = vdwg.mxu0
    %13172 = vmatpush.bf16.msra.mxu0 %v8577
    %13173 = vmatpush.bf16.msra.mxu0 %v8561
    %13174 = vmatpush.bf16.msra.mxu0 %v8545
    %13175 = vmatpush.bf16.msra.mxu0 %v8529
    %13176 = vmatpush.bf16.msra.mxu0 %v8513
    %13177 = vmatpush.bf16.msra.mxu0 %v8497
    %13178 = vmatpush.bf16.msra.mxu0 %v8481
    %13179 = vmatpush.bf16.msra.mxu0 %v8465
    %13180 = vmatmul.bf16.gmra.mxu0 %v1482
    %v13181 = vpop.f32.mrf.mxu0
    %v13182 = vadd.f32 %v13169, %v13181
    %v13183 = vpop.f32.mrf.mxu0
    %13184 = vdwg.mxu0
    %13185 = vmatpush.bf16.msra.mxu0 %v8705
    %13186 = vmatpush.bf16.msra.mxu0 %v8689
    %13187 = vmatpush.bf16.msra.mxu0 %v8673
    %13188 = vmatpush.bf16.msra.mxu0 %v8657
    %13189 = vmatpush.bf16.msra.mxu0 %v8641
    %13190 = vmatpush.bf16.msra.mxu0 %v8625
    %13191 = vmatpush.bf16.msra.mxu0 %v8609
    %13192 = vmatpush.bf16.msra.mxu0 %v8593
    %13193 = vmatmul.bf16.gmra.mxu0 %v1483
    %v13194 = vpop.f32.mrf.mxu0
    %v13195 = vadd.f32 %v13182, %v13194
    %v13196 = vpop.f32.mrf.mxu0
    %13197 = vdwg.mxu0
    %13198 = vmatpush.bf16.msra.mxu0 %v8833
    %13199 = vmatpush.bf16.msra.mxu0 %v8817
    %13200 = vmatpush.bf16.msra.mxu0 %v8801
    %13201 = vmatpush.bf16.msra.mxu0 %v8785
    %13202 = vmatpush.bf16.msra.mxu0 %v8769
    %13203 = vmatpush.bf16.msra.mxu0 %v8753
    %13204 = vmatpush.bf16.msra.mxu0 %v8737
    %13205 = vmatpush.bf16.msra.mxu0 %v8721
    %13206 = vmatmul.bf16.gmra.mxu0 %v1494
    %v13207 = vpop.f32.mrf.mxu0
    %v13208 = vadd.f32 %v13195, %v13207
    %v13209 = vpop.f32.mrf.mxu0
    %13210 = vdwg.mxu0
    %13211 = vmatpush.bf16.msra.mxu0 %v8961
    %13212 = vmatpush.bf16.msra.mxu0 %v8945
    %13213 = vmatpush.bf16.msra.mxu0 %v8929
    %13214 = vmatpush.bf16.msra.mxu0 %v8913
    %13215 = vmatpush.bf16.msra.mxu0 %v8897
    %13216 = vmatpush.bf16.msra.mxu0 %v8881
    %13217 = vmatpush.bf16.msra.mxu0 %v8865
    %13218 = vmatpush.bf16.msra.mxu0 %v8849
    %13219 = vmatmul.bf16.gmra.mxu0 %v1495
    %v13220 = vpop.f32.mrf.mxu0
    %v13221 = vadd.f32 %v13208, %v13220
    %v13222 = vpop.f32.mrf.mxu0
    %13223 = vdwg.mxu0
    %13224 = vmatpush.bf16.msra.mxu0 %v9089
    %13225 = vmatpush.bf16.msra.mxu0 %v9073
    %13226 = vmatpush.bf16.msra.mxu0 %v9057
    %13227 = vmatpush.bf16.msra.mxu0 %v9041
    %13228 = vmatpush.bf16.msra.mxu0 %v9025
    %13229 = vmatpush.bf16.msra.mxu0 %v9009
    %13230 = vmatpush.bf16.msra.mxu0 %v8993
    %13231 = vmatpush.bf16.msra.mxu0 %v8977
    %13232 = vmatmul.bf16.gmra.mxu0 %v1496
    %v13233 = vpop.f32.mrf.mxu0
    %v13234 = vadd.f32 %v13221, %v13233
    %v13235 = vpop.f32.mrf.mxu0
    %13236 = vdwg.mxu0
    %13237 = vmatpush.bf16.msra.mxu0 %v9217
    %13238 = vmatpush.bf16.msra.mxu0 %v9201
    %13239 = vmatpush.bf16.msra.mxu0 %v9185
    %13240 = vmatpush.bf16.msra.mxu0 %v9169
    %13241 = vmatpush.bf16.msra.mxu0 %v9153
    %13242 = vmatpush.bf16.msra.mxu0 %v9137
    %13243 = vmatpush.bf16.msra.mxu0 %v9121
    %13244 = vmatpush.bf16.msra.mxu0 %v9105
    %13245 = vmatmul.bf16.gmra.mxu0 %v1497
    %v13246 = vpop.f32.mrf.mxu0
    %v13247 = vadd.f32 %v13234, %v13246
    %v13248 = vpop.f32.mrf.mxu0
    %13249 = vdwg.mxu0
    %v13250 = vxor.u32 %v10907, 2147483648
    %v13251 = vxor.u32 %v11063, 2147483648
    %v13252 = vxor.u32 %v11219, 2147483648
    %v13253 = vxor.u32 %v11375, 2147483648
    %v13254 = vmul.f32 %v13250, 1.442695
    %v13255 = vpow.pop %v13254
    %v13256 = vmul.f32 %v13251, 1.442695
    %v13257 = vpow.pop %v13256
    %v13258 = vmul.f32 %v13252, 1.442695
    %v13259 = vpow.pop %v13258
    %v13260 = vmul.f32 %v13253, 1.442695
    %v13261 = vpow.pop %v13260
    %v13262 = vadd.f32 %v13255, 1.0
    %v13263 = vadd.f32 %v13257, 1.0
    %v13264 = vadd.f32 %v13259, 1.0
    %v13265 = vadd.f32 %v13261, 1.0
    %v13266 = vrcp.pop %v13262
    %v13267 = vmul.f32 %v13262, %v13266
    %v13268 = vsub.f32 1.0, %v13267
    %v13269 = vmul.f32 %v13266, %v13268
    %v13270 = vadd.f32 %v13266, %v13269
    %vm13271 = vweird.f32 %v13262
    %vm13272 = vweird.f32 %v13266
    %vm13273 = vmor %vm13271, %vm13272
    %v13274 = vsel %vm13273, %v13266, %v13270
    %v13275 = vand.u32 2147483647, %v13262
    %vm13276 = vcmp.eq.f32.partialorder %v13275, 8.507059e+37
    %v13277 = vand.u32 %v13262, 2147483648
    %v13278 = vor.u32 1.1754944e-38, %v13277
    %v13279 = vsel %vm13276, %v13278, %v13274
    %v13280 = vmul.f32 1.0, %v13279
    %v13281 = vrcp.pop %v13263
    %v13282 = vmul.f32 %v13263, %v13281
    %v13283 = vsub.f32 1.0, %v13282
    %v13284 = vmul.f32 %v13281, %v13283
    %v13285 = vadd.f32 %v13281, %v13284
    %vm13286 = vweird.f32 %v13263
    %vm13287 = vweird.f32 %v13281
    %vm13288 = vmor %vm13286, %vm13287
    %v13289 = vsel %vm13288, %v13281, %v13285
    %v13290 = vand.u32 2147483647, %v13263
    %vm13291 = vcmp.eq.f32.partialorder %v13290, 8.507059e+37
    %v13292 = vand.u32 %v13263, 2147483648
    %v13293 = vor.u32 1.1754944e-38, %v13292
    %v13294 = vsel %vm13291, %v13293, %v13289
    %v13295 = vmul.f32 1.0, %v13294
    %v13296 = vrcp.pop %v13264
    %v13297 = vmul.f32 %v13264, %v13296
    %v13298 = vsub.f32 1.0, %v13297
    %v13299 = vmul.f32 %v13296, %v13298
    %v13300 = vadd.f32 %v13296, %v13299
    %vm13301 = vweird.f32 %v13264
    %vm13302 = vweird.f32 %v13296
    %vm13303 = vmor %vm13301, %vm13302
    %v13304 = vsel %vm13303, %v13296, %v13300
    %v13305 = vand.u32 2147483647, %v13264
    %vm13306 = vcmp.eq.f32.partialorder %v13305, 8.507059e+37
    %v13307 = vand.u32 %v13264, 2147483648
    %v13308 = vor.u32 1.1754944e-38, %v13307
    %v13309 = vsel %vm13306, %v13308, %v13304
    %v13310 = vmul.f32 1.0, %v13309
    %v13311 = vrcp.pop %v13265
    %v13312 = vmul.f32 %v13265, %v13311
    %v13313 = vsub.f32 1.0, %v13312
    %v13314 = vmul.f32 %v13311, %v13313
    %v13315 = vadd.f32 %v13311, %v13314
    %vm13316 = vweird.f32 %v13265
    %vm13317 = vweird.f32 %v13311
    %vm13318 = vmor %vm13316, %vm13317
    %v13319 = vsel %vm13318, %v13311, %v13315
    %v13320 = vand.u32 2147483647, %v13265
    %vm13321 = vcmp.eq.f32.partialorder %v13320, 8.507059e+37
    %v13322 = vand.u32 %v13265, 2147483648
    %v13323 = vor.u32 1.1754944e-38, %v13322
    %v13324 = vsel %vm13321, %v13323, %v13319
    %v13325 = vmul.f32 1.0, %v13324
    %v13326 = vxor.u32 %v11531, 2147483648
    %v13327 = vxor.u32 %v11687, 2147483648
    %v13328 = vxor.u32 %v11843, 2147483648
    %v13329 = vxor.u32 %v11999, 2147483648
    %v13330 = vmul.f32 %v13326, 1.442695
    %v13331 = vpow.pop %v13330
    %v13332 = vmul.f32 %v13327, 1.442695
    %v13333 = vpow.pop %v13332
    %v13334 = vmul.f32 %v13328, 1.442695
    %v13335 = vpow.pop %v13334
    %v13336 = vmul.f32 %v13329, 1.442695
    %v13337 = vpow.pop %v13336
    %v13338 = vadd.f32 %v13331, 1.0
    %v13339 = vadd.f32 %v13333, 1.0
    %v13340 = vadd.f32 %v13335, 1.0
    %v13341 = vadd.f32 %v13337, 1.0
    %v13342 = vrcp.pop %v13338
    %v13343 = vmul.f32 %v13338, %v13342
    %v13344 = vsub.f32 1.0, %v13343
    %v13345 = vmul.f32 %v13342, %v13344
    %v13346 = vadd.f32 %v13342, %v13345
    %vm13347 = vweird.f32 %v13338
    %vm13348 = vweird.f32 %v13342
    %vm13349 = vmor %vm13347, %vm13348
    %v13350 = vsel %vm13349, %v13342, %v13346
    %v13351 = vand.u32 2147483647, %v13338
    %vm13352 = vcmp.eq.f32.partialorder %v13351, 8.507059e+37
    %v13353 = vand.u32 %v13338, 2147483648
    %v13354 = vor.u32 1.1754944e-38, %v13353
    %v13355 = vsel %vm13352, %v13354, %v13350
    %v13356 = vmul.f32 1.0, %v13355
    %v13357 = vrcp.pop %v13339
    %v13358 = vmul.f32 %v13339, %v13357
    %v13359 = vsub.f32 1.0, %v13358
    %v13360 = vmul.f32 %v13357, %v13359
    %v13361 = vadd.f32 %v13357, %v13360
    %vm13362 = vweird.f32 %v13339
    %vm13363 = vweird.f32 %v13357
    %vm13364 = vmor %vm13362, %vm13363
    %v13365 = vsel %vm13364, %v13357, %v13361
    %v13366 = vand.u32 2147483647, %v13339
    %vm13367 = vcmp.eq.f32.partialorder %v13366, 8.507059e+37
    %v13368 = vand.u32 %v13339, 2147483648
    %v13369 = vor.u32 1.1754944e-38, %v13368
    %v13370 = vsel %vm13367, %v13369, %v13365
    %v13371 = vmul.f32 1.0, %v13370
    %v13372 = vrcp.pop %v13340
    %v13373 = vmul.f32 %v13340, %v13372
    %v13374 = vsub.f32 1.0, %v13373
    %v13375 = vmul.f32 %v13372, %v13374
    %v13376 = vadd.f32 %v13372, %v13375
    %vm13377 = vweird.f32 %v13340
    %vm13378 = vweird.f32 %v13372
    %vm13379 = vmor %vm13377, %vm13378
    %v13380 = vsel %vm13379, %v13372, %v13376
    %v13381 = vand.u32 2147483647, %v13340
    %vm13382 = vcmp.eq.f32.partialorder %v13381, 8.507059e+37
    %v13383 = vand.u32 %v13340, 2147483648
    %v13384 = vor.u32 1.1754944e-38, %v13383
    %v13385 = vsel %vm13382, %v13384, %v13380
    %v13386 = vmul.f32 1.0, %v13385
    %v13387 = vrcp.pop %v13341
    %v13388 = vmul.f32 %v13341, %v13387
    %v13389 = vsub.f32 1.0, %v13388
    %v13390 = vmul.f32 %v13387, %v13389
    %v13391 = vadd.f32 %v13387, %v13390
    %vm13392 = vweird.f32 %v13341
    %vm13393 = vweird.f32 %v13387
    %vm13394 = vmor %vm13392, %vm13393
    %v13395 = vsel %vm13394, %v13387, %v13391
    %v13396 = vand.u32 2147483647, %v13341
    %vm13397 = vcmp.eq.f32.partialorder %v13396, 8.507059e+37
    %v13398 = vand.u32 %v13341, 2147483648
    %v13399 = vor.u32 1.1754944e-38, %v13398
    %v13400 = vsel %vm13397, %v13399, %v13395
    %v13401 = vmul.f32 1.0, %v13400
    %v13402 = vtanh.pop %v12155
    %v13403 = vtanh.pop %v12311
    %v13404 = vtanh.pop %v12467
    %v13405 = vtanh.pop %v12623
    %v13406 = vxor.u32 %v12779, 2147483648
    %v13407 = vxor.u32 %v12935, 2147483648
    %v13408 = vxor.u32 %v13091, 2147483648
    %v13409 = vxor.u32 %v13247, 2147483648
    %v13410 = vmul.f32 %v13406, 1.442695
    %v13411 = vpow.pop %v13410
    %v13412 = vmul.f32 %v13407, 1.442695
    %v13413 = vpow.pop %v13412
    %v13414 = vmul.f32 %v13408, 1.442695
    %v13415 = vpow.pop %v13414
    %v13416 = vmul.f32 %v13409, 1.442695
    %v13417 = vpow.pop %v13416
    %v13418 = vadd.f32 %v13411, 1.0
    %v13419 = vadd.f32 %v13413, 1.0
    %v13420 = vadd.f32 %v13415, 1.0
    %v13421 = vadd.f32 %v13417, 1.0
    %v13422 = vrcp.pop %v13418
    %v13423 = vmul.f32 %v13418, %v13422
    %v13424 = vsub.f32 1.0, %v13423
    %v13425 = vmul.f32 %v13422, %v13424
    %v13426 = vadd.f32 %v13422, %v13425
    %vm13427 = vweird.f32 %v13418
    %vm13428 = vweird.f32 %v13422
    %vm13429 = vmor %vm13427, %vm13428
    %v13430 = vsel %vm13429, %v13422, %v13426
    %v13431 = vand.u32 2147483647, %v13418
    %vm13432 = vcmp.eq.f32.partialorder %v13431, 8.507059e+37
    %v13433 = vand.u32 %v13418, 2147483648
    %v13434 = vor.u32 1.1754944e-38, %v13433
    %v13435 = vsel %vm13432, %v13434, %v13430
    %v13436 = vmul.f32 1.0, %v13435
    %v13437 = vrcp.pop %v13419
    %v13438 = vmul.f32 %v13419, %v13437
    %v13439 = vsub.f32 1.0, %v13438
    %v13440 = vmul.f32 %v13437, %v13439
    %v13441 = vadd.f32 %v13437, %v13440
    %vm13442 = vweird.f32 %v13419
    %vm13443 = vweird.f32 %v13437
    %vm13444 = vmor %vm13442, %vm13443
    %v13445 = vsel %vm13444, %v13437, %v13441
    %v13446 = vand.u32 2147483647, %v13419
    %vm13447 = vcmp.eq.f32.partialorder %v13446, 8.507059e+37
    %v13448 = vand.u32 %v13419, 2147483648
    %v13449 = vor.u32 1.1754944e-38, %v13448
    %v13450 = vsel %vm13447, %v13449, %v13445
    %v13451 = vmul.f32 1.0, %v13450
    %v13452 = vrcp.pop %v13420
    %v13453 = vmul.f32 %v13420, %v13452
    %v13454 = vsub.f32 1.0, %v13453
    %v13455 = vmul.f32 %v13452, %v13454
    %v13456 = vadd.f32 %v13452, %v13455
    %vm13457 = vweird.f32 %v13420
    %vm13458 = vweird.f32 %v13452
    %vm13459 = vmor %vm13457, %vm13458
    %v13460 = vsel %vm13459, %v13452, %v13456
    %v13461 = vand.u32 2147483647, %v13420
    %vm13462 = vcmp.eq.f32.partialorder %v13461, 8.507059e+37
    %v13463 = vand.u32 %v13420, 2147483648
    %v13464 = vor.u32 1.1754944e-38, %v13463
    %v13465 = vsel %vm13462, %v13464, %v13460
    %v13466 = vmul.f32 1.0, %v13465
    %v13467 = vrcp.pop %v13421
    %v13468 = vmul.f32 %v13421, %v13467
    %v13469 = vsub.f32 1.0, %v13468
    %v13470 = vmul.f32 %v13467, %v13469
    %v13471 = vadd.f32 %v13467, %v13470
    %vm13472 = vweird.f32 %v13421
    %vm13473 = vweird.f32 %v13467
    %vm13474 = vmor %vm13472, %vm13473
    %v13475 = vsel %vm13474, %v13467, %v13471
    %v13476 = vand.u32 2147483647, %v13421
    %vm13477 = vcmp.eq.f32.partialorder %v13476, 8.507059e+37
    %v13478 = vand.u32 %v13421, 2147483648
    %v13479 = vor.u32 1.1754944e-38, %v13478
    %v13480 = vsel %vm13477, %v13479, %v13475
    %v13481 = vmul.f32 1.0, %v13480
    %v13482 = vld [vmem:[#allocation3] sm:$0xff]
    %v13483 = vld [vmem:[#allocation3 + $0x8] sm:$0xff]
    %v13484 = vld [vmem:[#allocation3 + $0x10] sm:$0xff]
    %v13485 = vld [vmem:[#allocation3 + $0x18] sm:$0xff]
    %v13486 = vmul.f32 %v13356, %v13482
    %v13487 = vmul.f32 %v13371, %v13483
    %v13488 = vmul.f32 %v13386, %v13484
    %v13489 = vmul.f32 %v13401, %v13485
    %v13490 = vmul.f32 %v13280, %v13402
    %v13491 = vmul.f32 %v13295, %v13403
    %v13492 = vmul.f32 %v13310, %v13404
    %v13493 = vmul.f32 %v13325, %v13405
    %v13494 = vadd.f32 %v13486, %v13490
    %v13495 = vadd.f32 %v13487, %v13491
    %v13496 = vadd.f32 %v13488, %v13492
    %v13497 = vadd.f32 %v13489, %v13493
    %v13498 = vtanh.pop %v13494
    %v13499 = vtanh.pop %v13495
    %v13500 = vtanh.pop %v13496
    %v13501 = vtanh.pop %v13497
    %v13502 = vmul.f32 %v13436, %v13498
    %v13503 = vmul.f32 %v13451, %v13499
    %v13504 = vmul.f32 %v13466, %v13500
    %v13505 = vmul.f32 %v13481, %v13501
    %v13506 = vmax.f32 %v13502, 0.0
    %v13507 = vmax.f32 %v13503, 0.0
    %v13508 = vmax.f32 %v13504, 0.0
    %v13509 = vmax.f32 %v13505, 0.0
    %v13510 = vpack.c.bf16 %v13506, %v13506
    %v13511 = vpack.c.bf16 %v13507, %v13507
    %v13512 = vpack.c.bf16 %v13508, %v13508
    %v13513 = vpack.c.bf16 %v13509, %v13509
    %v13514 = vld [vmem:[#allocation14] sm:$0xf]
    %v13515 = vld [vmem:[#allocation14 + $0x4] sm:$0xf]
    %v13516 = vld [vmem:[#allocation14 + $0x8] sm:$0xf]
    %v13517 = vld [vmem:[#allocation14 + $0xc] sm:$0xf]
    %v13518 = vld [vmem:[#allocation14 + $0x10] sm:$0xf]
    %v13519 = vld [vmem:[#allocation14 + $0x14] sm:$0xf]
    %v13520 = vld [vmem:[#allocation14 + $0x18] sm:$0xf]
    %v13521 = vld [vmem:[#allocation14 + $0x1c] sm:$0xf]
    %v13522 = vld [vmem:[#allocation14 + $0x20] sm:$0xf]
    %v13523 = vld [vmem:[#allocation14 + $0x24] sm:$0xf]
    %v13524 = vld [vmem:[#allocation14 + $0x28] sm:$0xf]
    %v13525 = vld [vmem:[#allocation14 + $0x2c] sm:$0xf]
    %v13526 = vld [vmem:[#allocation14 + $0x30] sm:$0xf]
    %v13527 = vld [vmem:[#allocation14 + $0x34] sm:$0xf]
    %v13528 = vld [vmem:[#allocation14 + $0x38] sm:$0xf]
    %v13529 = vld [vmem:[#allocation14 + $0x3c] sm:$0xf]
    %v13530 = vld [vmem:[#allocation14 + $0x40] sm:$0xf]
    %v13531 = vld [vmem:[#allocation14 + $0x44] sm:$0xf]
    %v13532 = vld [vmem:[#allocation14 + $0x48] sm:$0xf]
    %v13533 = vld [vmem:[#allocation14 + $0x4c] sm:$0xf]
    %v13534 = vld [vmem:[#allocation14 + $0x50] sm:$0xf]
    %v13535 = vld [vmem:[#allocation14 + $0x54] sm:$0xf]
    %v13536 = vld [vmem:[#allocation14 + $0x58] sm:$0xf]
    %v13537 = vld [vmem:[#allocation14 + $0x5c] sm:$0xf]
    %v13538 = vld [vmem:[#allocation14 + $0x60] sm:$0xf]
    %v13539 = vld [vmem:[#allocation14 + $0x64] sm:$0xf]
    %v13540 = vld [vmem:[#allocation14 + $0x68] sm:$0xf]
    %v13541 = vld [vmem:[#allocation14 + $0x6c] sm:$0xf]
    %v13542 = vld [vmem:[#allocation14 + $0x70] sm:$0xf]
    %v13543 = vld [vmem:[#allocation14 + $0x74] sm:$0xf]
    %v13544 = vld [vmem:[#allocation14 + $0x78] sm:$0xf]
    %v13545 = vld [vmem:[#allocation14 + $0x7c] sm:$0xf]
    %v13546 = vld [vmem:[#allocation14 + $0x80] sm:$0xf]
    %v13547 = vld [vmem:[#allocation14 + $0x84] sm:$0xf]
    %v13548 = vld [vmem:[#allocation14 + $0x88] sm:$0xf]
    %v13549 = vld [vmem:[#allocation14 + $0x8c] sm:$0xf]
    %v13550 = vld [vmem:[#allocation14 + $0x90] sm:$0xf]
    %v13551 = vld [vmem:[#allocation14 + $0x94] sm:$0xf]
    %v13552 = vld [vmem:[#allocation14 + $0x98] sm:$0xf]
    %v13553 = vld [vmem:[#allocation14 + $0x9c] sm:$0xf]
    %v13554 = vld [vmem:[#allocation14 + $0xa0] sm:$0xf]
    %v13555 = vld [vmem:[#allocation14 + $0xa4] sm:$0xf]
    %v13556 = vld [vmem:[#allocation14 + $0xa8] sm:$0xf]
    %v13557 = vld [vmem:[#allocation14 + $0xac] sm:$0xf]
    %v13558 = vld [vmem:[#allocation14 + $0xb0] sm:$0xf]
    %v13559 = vld [vmem:[#allocation14 + $0xb4] sm:$0xf]
    %v13560 = vld [vmem:[#allocation14 + $0xb8] sm:$0xf]
    %v13561 = vld [vmem:[#allocation14 + $0xbc] sm:$0xf]
    %v13562 = vld [vmem:[#allocation14 + $0xc0] sm:$0xf]
    %v13563 = vld [vmem:[#allocation14 + $0xc4] sm:$0xf]
    %v13564 = vld [vmem:[#allocation14 + $0xc8] sm:$0xf]
    %v13565 = vld [vmem:[#allocation14 + $0xcc] sm:$0xf]
    %v13566 = vld [vmem:[#allocation14 + $0xd0] sm:$0xf]
    %v13567 = vld [vmem:[#allocation14 + $0xd4] sm:$0xf]
    %v13568 = vld [vmem:[#allocation14 + $0xd8] sm:$0xf]
    %v13569 = vld [vmem:[#allocation14 + $0xdc] sm:$0xf]
    %v13570 = vld [vmem:[#allocation14 + $0xe0] sm:$0xf]
    %v13571 = vld [vmem:[#allocation14 + $0xe4] sm:$0xf]
    %v13572 = vld [vmem:[#allocation14 + $0xe8] sm:$0xf]
    %v13573 = vld [vmem:[#allocation14 + $0xec] sm:$0xf]
    %v13574 = vld [vmem:[#allocation14 + $0xf0] sm:$0xf]
    %v13575 = vld [vmem:[#allocation14 + $0xf4] sm:$0xf]
    %v13576 = vld [vmem:[#allocation14 + $0xf8] sm:$0xf]
    %v13577 = vld [vmem:[#allocation14 + $0xfc] sm:$0xf]
    %v13578 = vld [vmem:[#allocation15] sm:$0x1]
    %v13580 = vperm.slane %v13578, 0
    %v13646 = vunpack.c.l.b16 %v13514
    %v13647 = vunpack.c.l.b16 %v13515
    %v13648 = vunpack.c.l.b16 %v13516
    %v13649 = vunpack.c.l.b16 %v13517
    %v13650 = vunpack.c.l.b16 %v13518
    %v13651 = vunpack.c.l.b16 %v13519
    %v13652 = vunpack.c.l.b16 %v13520
    %v13653 = vunpack.c.l.b16 %v13521
    %v13654 = vunpack.c.l.b16 %v13522
    %v13655 = vunpack.c.l.b16 %v13523
    %v13656 = vunpack.c.l.b16 %v13524
    %v13657 = vunpack.c.l.b16 %v13525
    %v13658 = vunpack.c.l.b16 %v13526
    %v13659 = vunpack.c.l.b16 %v13527
    %v13660 = vunpack.c.l.b16 %v13528
    %v13661 = vunpack.c.l.b16 %v13529
    %v13662 = vunpack.c.l.b16 %v13530
    %v13663 = vunpack.c.l.b16 %v13531
    %v13664 = vunpack.c.l.b16 %v13532
    %v13665 = vunpack.c.l.b16 %v13533
    %v13666 = vunpack.c.l.b16 %v13534
    %v13667 = vunpack.c.l.b16 %v13535
    %v13668 = vunpack.c.l.b16 %v13536
    %v13669 = vunpack.c.l.b16 %v13537
    %v13670 = vunpack.c.l.b16 %v13538
    %v13671 = vunpack.c.l.b16 %v13539
    %v13672 = vunpack.c.l.b16 %v13540
    %v13673 = vunpack.c.l.b16 %v13541
    %v13674 = vunpack.c.l.b16 %v13542
    %v13675 = vunpack.c.l.b16 %v13543
    %v13676 = vunpack.c.l.b16 %v13544
    %v13677 = vunpack.c.l.b16 %v13545
    %v13678 = vunpack.c.l.b16 %v13546
    %v13679 = vunpack.c.l.b16 %v13547
    %v13680 = vunpack.c.l.b16 %v13548
    %v13681 = vunpack.c.l.b16 %v13549
    %v13682 = vunpack.c.l.b16 %v13550
    %v13683 = vunpack.c.l.b16 %v13551
    %v13684 = vunpack.c.l.b16 %v13552
    %v13685 = vunpack.c.l.b16 %v13553
    %v13686 = vunpack.c.l.b16 %v13554
    %v13687 = vunpack.c.l.b16 %v13555
    %v13688 = vunpack.c.l.b16 %v13556
    %v13689 = vunpack.c.l.b16 %v13557
    %v13690 = vunpack.c.l.b16 %v13558
    %v13691 = vunpack.c.l.b16 %v13559
    %v13692 = vunpack.c.l.b16 %v13560
    %v13693 = vunpack.c.l.b16 %v13561
    %v13694 = vunpack.c.l.b16 %v13562
    %v13695 = vunpack.c.l.b16 %v13563
    %v13696 = vunpack.c.l.b16 %v13564
    %v13697 = vunpack.c.l.b16 %v13565
    %v13698 = vunpack.c.l.b16 %v13566
    %v13699 = vunpack.c.l.b16 %v13567
    %v13700 = vunpack.c.l.b16 %v13568
    %v13701 = vunpack.c.l.b16 %v13569
    %v13702 = vunpack.c.l.b16 %v13570
    %v13703 = vunpack.c.l.b16 %v13571
    %v13704 = vunpack.c.l.b16 %v13572
    %v13705 = vunpack.c.l.b16 %v13573
    %v13706 = vunpack.c.l.b16 %v13574
    %v13707 = vunpack.c.l.b16 %v13575
    %v13708 = vunpack.c.l.b16 %v13576
    %v13709 = vunpack.c.l.b16 %v13577
    %v13710 = vpack.c.b16 %v13647, %v13646
    %v13711 = vpack.c.b16 %v13649, %v13648
    %v13712 = vpack.c.b16 %v13651, %v13650
    %v13713 = vpack.c.b16 %v13653, %v13652
    %v13714 = vpack.c.b16 %v13655, %v13654
    %v13715 = vpack.c.b16 %v13657, %v13656
    %v13716 = vpack.c.b16 %v13659, %v13658
    %v13717 = vpack.c.b16 %v13661, %v13660
    %v13718 = vpack.c.b16 %v13663, %v13662
    %v13719 = vpack.c.b16 %v13665, %v13664
    %v13720 = vpack.c.b16 %v13667, %v13666
    %v13721 = vpack.c.b16 %v13669, %v13668
    %v13722 = vpack.c.b16 %v13671, %v13670
    %v13723 = vpack.c.b16 %v13673, %v13672
    %v13724 = vpack.c.b16 %v13675, %v13674
    %v13725 = vpack.c.b16 %v13677, %v13676
    %v13726 = vpack.c.b16 %v13679, %v13678
    %v13727 = vpack.c.b16 %v13681, %v13680
    %v13728 = vpack.c.b16 %v13683, %v13682
    %v13729 = vpack.c.b16 %v13685, %v13684
    %v13730 = vpack.c.b16 %v13687, %v13686
    %v13731 = vpack.c.b16 %v13689, %v13688
    %v13732 = vpack.c.b16 %v13691, %v13690
    %v13733 = vpack.c.b16 %v13693, %v13692
    %v13734 = vpack.c.b16 %v13695, %v13694
    %v13735 = vpack.c.b16 %v13697, %v13696
    %v13736 = vpack.c.b16 %v13699, %v13698
    %v13737 = vpack.c.b16 %v13701, %v13700
    %v13738 = vpack.c.b16 %v13703, %v13702
    %v13739 = vpack.c.b16 %v13705, %v13704
    %v13740 = vpack.c.b16 %v13707, %v13706
    %v13741 = vpack.c.b16 %v13709, %v13708
    %13774 = vmatpush.bf16.msra.mxu0 %v13717
    %13775 = vmatpush.bf16.msra.mxu0 %v13716
    %13776 = vmatpush.bf16.msra.mxu0 %v13715
    %13777 = vmatpush.bf16.msra.mxu0 %v13714
    %13778 = vmatpush.bf16.msra.mxu0 %v13713
    %13779 = vmatpush.bf16.msra.mxu0 %v13712
    %13780 = vmatpush.bf16.msra.mxu0 %v13711
    %13781 = vmatpush.bf16.msra.mxu0 %v13710
    %13782 = vmatmul.bf16.gmra.mxu0 %v13510
    %v13783 = vpop.f32.mrf.mxu0
    %v13784 = vadd.f32 %v13580, %v13783
    %v13785 = vpop.f32.mrf.mxu0
    %13786 = vdwg.mxu0
    %13787 = vmatpush.bf16.msra.mxu0 %v13725
    %13788 = vmatpush.bf16.msra.mxu0 %v13724
    %13789 = vmatpush.bf16.msra.mxu0 %v13723
    %13790 = vmatpush.bf16.msra.mxu0 %v13722
    %13791 = vmatpush.bf16.msra.mxu0 %v13721
    %13792 = vmatpush.bf16.msra.mxu0 %v13720
    %13793 = vmatpush.bf16.msra.mxu0 %v13719
    %13794 = vmatpush.bf16.msra.mxu0 %v13718
    %13795 = vmatmul.bf16.gmra.mxu0 %v13511
    %v13796 = vpop.f32.mrf.mxu0
    %v13797 = vadd.f32 %v13784, %v13796
    %v13798 = vpop.f32.mrf.mxu0
    %13799 = vdwg.mxu0
    %13800 = vmatpush.bf16.msra.mxu0 %v13733
    %13801 = vmatpush.bf16.msra.mxu0 %v13732
    %13802 = vmatpush.bf16.msra.mxu0 %v13731
    %13803 = vmatpush.bf16.msra.mxu0 %v13730
    %13804 = vmatpush.bf16.msra.mxu0 %v13729
    %13805 = vmatpush.bf16.msra.mxu0 %v13728
    %13806 = vmatpush.bf16.msra.mxu0 %v13727
    %13807 = vmatpush.bf16.msra.mxu0 %v13726
    %13808 = vmatmul.bf16.gmra.mxu0 %v13512
    %v13809 = vpop.f32.mrf.mxu0
    %v13810 = vadd.f32 %v13797, %v13809
    %v13811 = vpop.f32.mrf.mxu0
    %13812 = vdwg.mxu0
    %13813 = vmatpush.bf16.msra.mxu0 %v13741
    %13814 = vmatpush.bf16.msra.mxu0 %v13740
    %13815 = vmatpush.bf16.msra.mxu0 %v13739
    %13816 = vmatpush.bf16.msra.mxu0 %v13738
    %13817 = vmatpush.bf16.msra.mxu0 %v13737
    %13818 = vmatpush.bf16.msra.mxu0 %v13736
    %13819 = vmatpush.bf16.msra.mxu0 %v13735
    %13820 = vmatpush.bf16.msra.mxu0 %v13734
    %13821 = vmatmul.bf16.gmra.mxu0 %v13513
    %v13822 = vpop.f32.mrf.mxu0
    %v13823 = vadd.f32 %v13810, %v13822
    %v13824 = vpop.f32.mrf.mxu0
    %13825 = vdwg.mxu0
    %13826 = vst [vmem:[%s12] sm:$0xff] %v13823
    %13827 = vst [vmem:[%s13] sm:$0xff] %v13502
    %13828 = vst [vmem:[%s13 + $0x8] sm:$0xff] %v13503
    %13829 = vst [vmem:[%s13 + $0x10] sm:$0xff] %v13504
    %13830 = vst [vmem:[%s13 + $0x18] sm:$0xff] %v13505
    %13831 = vst [vmem:[%s14] sm:$0xff] %v13494
    %13832 = vst [vmem:[%s14 + $0x8] sm:$0xff] %v13495
    %13833 = vst [vmem:[%s14 + $0x10] sm:$0xff] %v13496
    %13834 = vst [vmem:[%s14 + $0x18] sm:$0xff] %v13497
    %13835 = vst [vmem:[#allocation2] sm:$0xff] %v13502
    %13836 = vst [vmem:[#allocation2 + $0x8] sm:$0xff] %v13503
    %13837 = vst [vmem:[#allocation2 + $0x10] sm:$0xff] %v13504
    %13838 = vst [vmem:[#allocation2 + $0x18] sm:$0xff] %v13505
    %13839 = vst [vmem:[#allocation3] sm:$0xff] %v13494
    %13840 = vst [vmem:[#allocation3 + $0x8] sm:$0xff] %v13495
    %13841 = vst [vmem:[#allocation3 + $0x10] sm:$0xff] %v13496
    %13842 = vst [vmem:[#allocation3 + $0x18] sm:$0xff] %v13497
    // Predicated region
    $region86: #{lstm_model_rollout.1} parent=1 // pred_check
      _
    $region87: #{lstm_model_rollout.1} parent=1 // pred_check_branch
      %13844 = sbr.rel (0) target = $region89
    $region88: #{lstm_model_rollout.1} parent=1 // pred_region
      _
    $region89: #{lstm_model_rollout.1} parent=1 // pred_fallthru
      _
    // Predicated region
    $region90: #{lstm_model_rollout.1} parent=1 // pred_check
      _
    $region91: #{lstm_model_rollout.1} parent=1 // pred_check_branch
      %13846 = sbr.rel (0) target = $region93
    $region92: #{lstm_model_rollout.1} parent=1 // pred_region
      _
    $region93: #{lstm_model_rollout.1} parent=1 // pred_fallthru
      _
    // Predicated region
    $region94: #{lstm_model_rollout.1} parent=1 // pred_check
      _
    $region95: #{lstm_model_rollout.1} parent=1 // pred_check_branch
      %13848 = sbr.rel (0) target = $region97
    $region96: #{lstm_model_rollout.1} parent=1 // pred_region
      _
    $region97: #{lstm_model_rollout.1} parent=1 // pred_fallthru
      _
    // Predicated region
    $region98: #{lstm_model_rollout.1} parent=1 // pred_check
      _
    $region99: #{lstm_model_rollout.1} parent=1 // pred_check_branch
      %13850 = sbr.rel (0) target = $region101
    $region100: #{lstm_model_rollout.1} parent=1 // pred_region
      _
    $region101: #{lstm_model_rollout.1} parent=1 // pred_fallthru
      _
    // Predicated region
    $region102: #{lstm_model_rollout.1} parent=1 // pred_check
      _
    $region103: #{lstm_model_rollout.1} parent=1 // pred_check_branch
      %13852 = sbr.rel (0) target = $region105
    $region104: #{lstm_model_rollout.1} parent=1 // pred_region
      _
    $region105: #{lstm_model_rollout.1} parent=1 // pred_fallthru
      _
    // Predicated region
    $region106: #{lstm_model_rollout.1} parent=1 // pred_check
      _
    $region107: #{lstm_model_rollout.1} parent=1 // pred_check_branch
      %13854 = sbr.rel (0) target = $region109
    $region108: #{lstm_model_rollout.1} parent=1 // pred_region
      _
    $region109: #{lstm_model_rollout.1} parent=1 // pred_fallthru
      _
    %13855 = vsyncpa [#allocation5], 1
    %13856 = vsyncpa [#allocation7], 1
    %13857 = vsyncpa [#allocation10], 1
    %13858 = vsyncpa [#allocation13], 1
    %13859 = vsyncpa [#allocation16], 1

</llo_original>
